<compile_context>
chip_gen: v6e
topology: v6e:2x2x1
jax: 0.10.0
libtpu: 0.0.40
codegen_flags: <defaults>
</compile_context>

<pallas_src>
import numpy as np

import jax
import jax.numpy as jnp
from jax import lax
from jax.experimental import pallas as pl
from jax.experimental.pallas import tpu as pltpu


def _round_up(x: int, m: int) -> int:
    return (x + m - 1) // m * m


def _rough_scorer_kernel(row_tbl, col_tbl, flag_tbl,          # scalar prefetch (SMEM)
                         rows_ref, cols_ref, w_ref, b_ref,    # VMEM inputs
                         topv_ref, topi_ref,                  # VMEM outputs
                         proj_ref, vals_ref, idx_ref):        # VMEM scratch
    tm = rows_ref.shape[0]
    tn = cols_ref.shape[1]
    k = vals_ref.shape[1]

    s = pl.program_id(0)          # work-list bucket ("parallel": megacore split)
    t = pl.program_id(1)          # position inside the bucket ("arbitrary")

    i = row_tbl[s, t]             # row-tile index
    j = col_tbl[s, t]             # column-tile index
    flag = flag_tbl[s, t]         # 0: no-op pad  1: compute  2: store  3: both

    neg_inf = jnp.float32(-jnp.inf)
    big = jnp.int32(jnp.iinfo(jnp.int32).max)

    # ---- once per row tile (its first column tile is always j == 0):
    #      bilinear projection + reset of the running top-k state.
    @pl.when(j == 0)
    def _init():
        proj = jnp.dot(rows_ref[...], w_ref[...],
                       preferred_element_type=jnp.float32)       # x @ W.T
        proj_ref[...] = (proj + b_ref[...]).astype(jnp.bfloat16)
        vals_ref[...] = jnp.full((tm, k), neg_inf, jnp.float32)
        # Sentinel indices 0..k-1: in range; the index-dedup in the merge
        # guarantees they can never produce duplicate output indices.
        idx_ref[...] = lax.broadcasted_iota(jnp.int32, (tm, k), 1)

    @pl.when(jnp.logical_or(flag == 1, flag == 3))
    def _compute():
        # scores = proj @ mentions_cols  (plain [M,K]x[K,N]; cols pre-transposed)
        scores = jnp.dot(proj_ref[...], cols_ref[...],
                         preferred_element_type=jnp.float32)      # [tm, tn] f32

        # Fused causal pair mask: column c of this tile is a valid antecedent
        # of local row r iff  j*tn + c < i*tm + r  <=>  c < limit[r].
        lane = lax.broadcasted_iota(jnp.int32, (tm, tn), 1)        # local col ids
        limit = (i * tm - j * tn) + lax.broadcasted_iota(jnp.int32, (tm, 1), 0)
        scores = jnp.where(lane < limit, scores, neg_inf)

        # ---- tile-local top-k: destructive k-step selection on the
        #      lane-aligned [tm, tn] tile (no concat with the running state).
        lane_k = lax.broadcasted_iota(jnp.int32, (tm, k), 1)
        loc_v = jnp.full((tm, k), neg_inf, jnp.float32)
        loc_i = jnp.zeros((tm, k), jnp.int32)
        work_v, work_i = scores, lane
        for step in range(k):                      # k is a small static int
            mx = jnp.max(work_v, axis=1, keepdims=True)                   # [tm, 1]
            sel = jnp.min(jnp.where(work_v == mx, work_i, big),
                          axis=1, keepdims=True)                          # [tm, 1]
            loc_v = jnp.where(lane_k == step, mx, loc_v)
            loc_i = jnp.where(lane_k == step, sel, loc_i)
            kill = work_i == sel                   # exactly one lane
            work_v = jnp.where(kill, neg_inf, work_v)
            work_i = jnp.where(kill, big, work_i)
        loc_i = loc_i + j * tn                     # global column indices

        # ---- merge running state with the tile-local top-k: tiny [tm, 2k]
        #      working set.  Killing every lane carrying the selected index
        #      removes (sentinel, real) duplicates -> distinct output indices.
        mv = jnp.concatenate([vals_ref[...], loc_v], axis=1)       # [tm, 2k]
        mi = jnp.concatenate([idx_ref[...], loc_i], axis=1)
        new_v = jnp.full((tm, k), neg_inf, jnp.float32)
        new_i = jnp.zeros((tm, k), jnp.int32)
        for step in range(k):
            mx = jnp.max(mv, axis=1, keepdims=True)
            sel = jnp.min(jnp.where(mv == mx, mi, big), axis=1, keepdims=True)
            new_v = jnp.where(lane_k == step, mx, new_v)
            new_i = jnp.where(lane_k == step, sel, new_i)
            kill = mi == sel
            mv = jnp.where(kill, neg_inf, mv)
            mi = jnp.where(kill, big, mi)
        vals_ref[...] = new_v
        idx_ref[...] = new_i

    # ---- single bulk store of this row tile's results at its last column tile.
    @pl.when(flag >= 2)
    def _store():
        topv_ref[...] = vals_ref[...]
        topi_ref[...] = idx_ref[...]


def _build_schedule(n, tm, tn, n_rows, n_cols, n_splits):
    """Lower-triangular (row_tile, col_tile) work list, split into n_splits
    balanced buckets.  flag: 0 = no-op pad, 1 = compute, 2 = store only,
    3 = compute + store."""
    r_tiles = n_rows // tm
    c_tiles = n_cols // tn
    per_row = []
    for i in range(r_tiles):
        last_row = min(i * tm + tm - 1, n - 1)      # last real row in the tile
        if last_row < 1:                            # no valid antecedent pairs
            per_row.append([(i, 0, 2)])
            continue
        ncols = min((last_row - 1) // tn + 1, c_tiles)
        entries = [(i, j, 1) for j in range(ncols)]
        entries[-1] = (i, ncols - 1, 3)
        per_row.append(entries)

    buckets = [[] for _ in range(n_splits)]
    for entries in sorted(per_row, key=len, reverse=True):   # greedy balance
        min(buckets, key=len).extend(entries)

    steps = max(len(b) for b in buckets)
    row_tbl = np.zeros((n_splits, steps), np.int32)
    col_tbl = np.zeros((n_splits, steps), np.int32)
    flag_tbl = np.zeros((n_splits, steps), np.int32)
    for b_idx, bucket in enumerate(buckets):
        pad = (bucket[-1][0], bucket[-1][1], 0)     # repeat last blocks, no-op
        bucket = bucket + [pad] * (steps - len(bucket))
        for t_idx, (ri, ci, fl) in enumerate(bucket):
            row_tbl[b_idx, t_idx] = ri
            col_tbl[b_idx, t_idx] = ci
            flag_tbl[b_idx, t_idx] = fl
    return row_tbl, col_tbl, flag_tbl, steps


def rough_scorer_forward(mentions, weight, bias, rough_k, *, tm=256, tn=512):
    """Returns (top_scores [N, K] f32, top_indices [N, K] i32), K = min(rough_k, N).

    Defaults (tm=256, tn=512) target v6e/v7x; on v5e prefer tm=tn=128..256.
    """
    n, f = mentions.shape
    k = min(int(rough_k), n)

    # bf16-native tile rounding: tm multiple of 16 (sublane packing), tn a
    # multiple of 128 (lane dim of the score tile), and tn >= k for the merge.
    tm = max(16, min(_round_up(tm, 16), _round_up(n, 16)))
    tn = max(128, min(_round_up(tn, 128), _round_up(n, 128)))
    tn = max(tn, _round_up(k, 128))
    # Keep >= 2 row tiles when possible so the "parallel" axis can feed both
    # TensorCores on megacore parts (v7x).
    if _round_up(n, tm) // tm < 2 and n > 16:
        tm = max(16, _round_up((n + 1) // 2, 16))

    n_rows = _round_up(n, tm)
    n_cols = _round_up(n, tn)
    r_tiles = n_rows // tm
    n_splits = 2 if r_tiles >= 2 else 1

    row_tbl, col_tbl, flag_tbl, steps = _build_schedule(
        n, tm, tn, n_rows, n_cols, n_splits)

    m_bf = mentions.astype(jnp.bfloat16)
    rows = jnp.pad(m_bf, ((0, n_rows - n), (0, 0)))              # [n_rows, f]
    cols_t = jnp.pad(m_bf.T, ((0, 0), (0, n_cols - n)))          # [f, n_cols]
    w_t = weight.T.astype(jnp.bfloat16)                          # [f_in, f_out]
    b2 = bias.reshape(1, f).astype(jnp.float32)

    grid_spec = pltpu.PrefetchScalarGridSpec(
        num_scalar_prefetch=3,
        grid=(n_splits, steps),
        in_specs=[
            pl.BlockSpec((tm, f), lambda s, t, rt, ct, ft: (rt[s, t], 0)),  # rows
            pl.BlockSpec((f, tn), lambda s, t, rt, ct, ft: (0, ct[s, t])),  # cols.T
            pl.BlockSpec((f, f), lambda s, t, rt, ct, ft: (0, 0)),          # W.T (resident)
            pl.BlockSpec((1, f), lambda s, t, rt, ct, ft: (0, 0)),          # bias (resident)
        ],
        out_specs=(
            pl.BlockSpec((tm, k), lambda s, t, rt, ct, ft: (rt[s, t], 0)),
            pl.BlockSpec((tm, k), lambda s, t, rt, ct, ft: (rt[s, t], 0)),
        ),
        scratch_shapes=[
            pltpu.VMEM((tm, f), jnp.bfloat16),   # cached row-tile projection
            pltpu.VMEM((tm, k), jnp.float32),    # running top-k values
            pltpu.VMEM((tm, k), jnp.int32),      # running top-k indices
        ],
    )

    top_v, top_i = pl.pallas_call(
        _rough_scorer_kernel,
        grid_spec=grid_spec,
        out_shape=(
            jax.ShapeDtypeStruct((n_rows, k), jnp.float32),
            jax.ShapeDtypeStruct((n_rows, k), jnp.int32),
        ),
        compiler_params=pltpu.CompilerParams(
            dimension_semantics=("parallel", "arbitrary")),
    )(jnp.asarray(row_tbl), jnp.asarray(col_tbl), jnp.asarray(flag_tbl),
      rows, cols_t, w_t, b2)

    return top_v[:n], top_i[:n]


if __name__ == "__main__":
    N_MENTIONS = 300
    FEATURES = 64
    ROUGH_K = 8

    key = jax.random.PRNGKey(0)
    k_m, k_w, k_b = jax.random.split(key, 3)

    mentions = jax.random.normal(k_m, (N_MENTIONS, FEATURES), dtype=jnp.float32)
    # Deterministic PyTorch-Linear-style init: U(-1/sqrt(F), 1/sqrt(F))
    bound = 1.0 / (FEATURES ** 0.5)
    weight = jax.random.uniform(
        k_w, (FEATURES, FEATURES), minval=-bound, maxval=bound, dtype=jnp.float32)
    bias = jax.random.uniform(
        k_b, (FEATURES,), minval=-bound, maxval=bound, dtype=jnp.float32)

    # Small tiles so the demo exercises the triangular multi-tile schedule,
    # the 2-way parallel split and row/column padding (production: defaults).
    top_scores, top_indices = rough_scorer_forward(
        mentions, weight, bias, ROUGH_K, tm=128, tn=128)
    jax.block_until_ready((top_scores, top_indices))

    k = min(ROUGH_K, N_MENTIONS)
    assert top_scores.shape == (N_MENTIONS, k)
    assert top_indices.shape == (N_MENTIONS, k)

    ts = np.asarray(top_scores)
    ti = np.asarray(top_indices)
    row_ids = np.arange(N_MENTIONS)

    # Precision-independent semantic checks (torch.topk-compatible behavior).
    assert np.all((ti >= 0) & (ti < N_MENTIONS))
    for r in range(N_MENTIONS):
        assert len(set(ti[r].tolist())) == k          # distinct indices per row
    finite = np.isfinite(ts)
    assert np.array_equal(finite.sum(axis=1), np.minimum(row_ids, k))
    assert np.all(ti[finite] < np.broadcast_to(row_ids[:, None], ti.shape)[finite])

    # Value consistency against an f32 reference (loose tol: bf16 MXU path).
    proj_ref = mentions @ weight.T + bias
    scores_ref = np.asarray(proj_ref @ mentions.T)
    rough_ref = np.where(row_ids[:, None] > row_ids[None, :], scores_ref, -np.inf)
    gathered = np.take_along_axis(rough_ref, ti, axis=1)
    fin = np.isfinite(gathered)
    assert np.all(np.isneginf(ts[~fin]))
    assert np.allclose(ts[fin], gathered[fin], rtol=0.05, atol=0.5)

    print("KERNEL_OK")
</pallas_src>

<mosaic_0001>
module attributes {stable_mosaic.version = 11 : i64} {
  func.func @_rough_scorer_kernel(%arg0: i32, %arg1: i32, %arg2: memref<2x3xi32, #tpu.memory_space<smem>>, %arg3: memref<2x3xi32, #tpu.memory_space<smem>>, %arg4: memref<2x3xi32, #tpu.memory_space<smem>>, %arg5: memref<128x64xbf16, #tpu.memory_space<vmem>>, %arg6: memref<64x128xbf16, #tpu.memory_space<vmem>>, %arg7: memref<64x64xbf16, #tpu.memory_space<vmem>>, %arg8: memref<1x64xf32, #tpu.memory_space<vmem>>, %arg9: memref<128x8xf32, #tpu.memory_space<vmem>>, %arg10: memref<128x8xi32, #tpu.memory_space<vmem>>, %arg11: memref<128x64xbf16, #tpu.memory_space<vmem>>, %arg12: memref<128x8xf32, #tpu.memory_space<vmem>>, %arg13: memref<128x8xi32, #tpu.memory_space<vmem>>) attributes {dimension_semantics = [#tpu.dimension_semantics<parallel>, #tpu.dimension_semantics<arbitrary>], iteration_bounds = array<i64: 2, 3>, scalar_prefetch = 3 : i64, scratch_operands = 3 : i64, tpu.core_type = #tpu.core_type<tc>, window_params = [{transform_indices = @transform_0, window_bounds = array<i64: 128, 64>}, {transform_indices = @transform_1, window_bounds = array<i64: 64, 128>}, {pipeline_mode = #tpu.pipeline_mode<synchronous>, transform_indices = @transform_2, window_bounds = array<i64: 64, 64>}, {pipeline_mode = #tpu.pipeline_mode<synchronous>, transform_indices = @transform_3, window_bounds = array<i64: 1, 64>}, {transform_indices = @transform_4, window_bounds = array<i64: 128, 8>}, {transform_indices = @transform_5, window_bounds = array<i64: 128, 8>}]} {
    %0 = arith.index_cast %arg0 : i32 to index
    %1 = arith.index_cast %arg1 : i32 to index
    %2 = memref.load %arg2[%0, %1] : memref<2x3xi32, #tpu.memory_space<smem>>
    %3 = arith.index_cast %arg0 : i32 to index
    %4 = arith.index_cast %arg1 : i32 to index
    %5 = memref.load %arg3[%3, %4] : memref<2x3xi32, #tpu.memory_space<smem>>
    %6 = arith.index_cast %arg0 : i32 to index
    %7 = arith.index_cast %arg1 : i32 to index
    %8 = memref.load %arg4[%6, %7] : memref<2x3xi32, #tpu.memory_space<smem>>
    %c0_i32 = arith.constant 0 : i32
    %9 = arith.cmpi eq, %5, %c0_i32 : i32
    %10 = arith.extui %9 : i1 to i32
    %cst = arith.constant 0xFF800000 : f32
    %c0_i32_0 = arith.constant 0 : i32
    %11 = arith.cmpi ne, %10, %c0_i32_0 : i32
    scf.if %11 {
      %c0 = arith.constant 0 : index
      %c0_4 = arith.constant 0 : index
      %20 = vector.load %arg5[%c0, %c0_4] : memref<128x64xbf16, #tpu.memory_space<vmem>>, vector<128x64xbf16>
      %c0_5 = arith.constant 0 : index
      %c0_6 = arith.constant 0 : index
      %21 = vector.load %arg7[%c0_5, %c0_6] : memref<64x64xbf16, #tpu.memory_space<vmem>>, vector<64x64xbf16>
      %cst_7 = arith.constant dense<0.000000e+00> : vector<128x64xf32>
      %22 = tpu.matmul %20, %21, %cst_7 {dimension_numbers = #tpu.dot_dimension_numbers<[1], [0], [0], [1], [0, 0, 1, 1], [], []>} : vector<128x64xbf16>, vector<64x64xbf16>, vector<128x64xf32> -> vector<128x64xf32>
      %c0_8 = arith.constant 0 : index
      %c0_9 = arith.constant 0 : index
      %23 = vector.load %arg8[%c0_8, %c0_9] : memref<1x64xf32, #tpu.memory_space<vmem>>, vector<1x64xf32>
      %24 = vector.broadcast %23 : vector<1x64xf32> to vector<128x64xf32>
      %25 = arith.addf %22, %24 : vector<128x64xf32>
      %26 = arith.truncf %25 : vector<128x64xf32> to vector<128x64xbf16>
      %c0_10 = arith.constant 0 : index
      %c0_11 = arith.constant 0 : index
      %27 = vector.load %arg11[%c0_10, %c0_11] : memref<128x64xbf16, #tpu.memory_space<vmem>>, vector<128x64xbf16>
      tpu.vector_store %arg11[%c0_10, %c0_11], %26 {strides = array<i32>} : memref<128x64xbf16, #tpu.memory_space<vmem>>, vector<128x64xbf16>,
      %28 = vector.broadcast %cst : f32 to vector<128x8xf32>
      %c0_12 = arith.constant 0 : index
      %c0_13 = arith.constant 0 : index
      %29 = vector.load %arg12[%c0_12, %c0_13] : memref<128x8xf32, #tpu.memory_space<vmem>>, vector<128x8xf32>
      tpu.vector_store %arg12[%c0_12, %c0_13], %28 {strides = array<i32>} : memref<128x8xf32, #tpu.memory_space<vmem>>, vector<128x8xf32>,
      %30 = tpu.iota {dimensions = array<i32: 1>} : vector<128x8xi32>
      %c0_14 = arith.constant 0 : index
      %c0_15 = arith.constant 0 : index
      %31 = vector.load %arg13[%c0_14, %c0_15] : memref<128x8xi32, #tpu.memory_space<vmem>>, vector<128x8xi32>
      tpu.vector_store %arg13[%c0_14, %c0_15], %30 {strides = array<i32>} : memref<128x8xi32, #tpu.memory_space<vmem>>, vector<128x8xi32>,
    } else {
    }
    %c1_i32 = arith.constant 1 : i32
    %12 = arith.cmpi eq, %8, %c1_i32 : i32
    %c3_i32 = arith.constant 3 : i32
    %13 = arith.cmpi eq, %8, %c3_i32 : i32
    %14 = arith.ori %12, %13 : i1
    %15 = arith.extui %14 : i1 to i32
    %cst_1 = arith.constant 0xFF800000 : f32
    %c2147483647_i32 = arith.constant 2147483647 : i32
    %c0_i32_2 = arith.constant 0 : i32
    %16 = arith.cmpi ne, %15, %c0_i32_2 : i32
    scf.if %16 {
      %c0 = arith.constant 0 : index
      %c0_4 = arith.constant 0 : index
      %20 = vector.load %arg11[%c0, %c0_4] : memref<128x64xbf16, #tpu.memory_space<vmem>>, vector<128x64xbf16>
      %c0_5 = arith.constant 0 : index
      %c0_6 = arith.constant 0 : index
      %21 = vector.load %arg6[%c0_5, %c0_6] : memref<64x128xbf16, #tpu.memory_space<vmem>>, vector<64x128xbf16>
      %cst_7 = arith.constant dense<0.000000e+00> : vector<128x128xf32>
      %22 = tpu.matmul %20, %21, %cst_7 {dimension_numbers = #tpu.dot_dimension_numbers<[1], [0], [0], [1], [0, 0, 1, 1], [], []>} : vector<128x64xbf16>, vector<64x128xbf16>, vector<128x128xf32> -> vector<128x128xf32>
      %23 = tpu.iota {dimensions = array<i32: 1>} : vector<128x128xi32>
      %c128_i32 = arith.constant 128 : i32
      %24 = arith.muli %2, %c128_i32 : i32
      %c128_i32_8 = arith.constant 128 : i32
      %25 = arith.muli %5, %c128_i32_8 : i32
      %26 = arith.subi %24, %25 : i32
      %27 = tpu.iota {dimensions = array<i32: 0>} : vector<128x1xi32>
      %28 = vector.broadcast %26 : i32 to vector<128x1xi32>
      %29 = arith.addi %28, %27 : vector<128x1xi32>
      %30 = vector.broadcast %29 : vector<128x1xi32> to vector<128x128xi32>
      %31 = arith.cmpi slt, %23, %30 : vector<128x128xi32>
      %32 = vector.broadcast %cst_1 : f32 to vector<128x128xf32>
      %33 = arith.select %31, %22, %32 : vector<128x128xi1>, vector<128x128xf32>
      %34 = tpu.iota {dimensions = array<i32: 1>} : vector<128x8xi32>
      %35 = vector.broadcast %cst_1 : f32 to vector<128x8xf32>
      %c0_i32_9 = arith.constant 0 : i32
      %36 = vector.broadcast %c0_i32_9 : i32 to vector<128x8xi32>
      %cst_10 = arith.constant dense<0xFF800000> : vector<128xf32>
      %37 = vector.multi_reduction <maximumf>, %33, %cst_10 [1] : vector<128x128xf32> to vector<128xf32>
      %38 = vector.shape_cast %37 : vector<128xf32> to vector<128x1xf32>
      %39 = vector.broadcast %38 : vector<128x1xf32> to vector<128x128xf32>
      %40 = arith.cmpf oeq, %33, %39 : vector<128x128xf32>
      %41 = vector.broadcast %c2147483647_i32 : i32 to vector<128x128xi32>
      %42 = arith.select %40, %23, %41 : vector<128x128xi1>, vector<128x128xi32>
      %cst_11 = arith.constant dense<2147483647> : vector<128xi32>
      %43 = vector.multi_reduction <minsi>, %42, %cst_11 [1] : vector<128x128xi32> to vector<128xi32>
      %44 = vector.shape_cast %43 : vector<128xi32> to vector<128x1xi32>
      %c0_i32_12 = arith.constant 0 : i32
      %45 = vector.broadcast %c0_i32_12 : i32 to vector<128x8xi32>
      %46 = arith.cmpi eq, %34, %45 : vector<128x8xi32>
      %47 = vector.shape_cast %38 : vector<128x1xf32> to vector<128x1xf32>
      %48 = vector.broadcast %47 : vector<128x1xf32> to vector<128x8xf32>
      %49 = arith.select %46, %48, %35 : vector<128x8xi1>, vector<128x8xf32>
      %c0_i32_13 = arith.constant 0 : i32
      %50 = vector.broadcast %c0_i32_13 : i32 to vector<128x8xi32>
      %51 = arith.cmpi eq, %34, %50 : vector<128x8xi32>
      %52 = vector.shape_cast %44 : vector<128x1xi32> to vector<128x1xi32>
      %53 = vector.broadcast %52 : vector<128x1xi32> to vector<128x8xi32>
      %54 = arith.select %51, %53, %36 : vector<128x8xi1>, vector<128x8xi32>
      %55 = vector.broadcast %44 : vector<128x1xi32> to vector<128x128xi32>
      %56 = arith.cmpi eq, %23, %55 : vector<128x128xi32>
      %57 = vector.broadcast %cst_1 : f32 to vector<128x128xf32>
      %58 = arith.select %56, %57, %33 : vector<128x128xi1>, vector<128x128xf32>
      %59 = vector.broadcast %c2147483647_i32 : i32 to vector<128x128xi32>
      %60 = arith.select %56, %59, %23 : vector<128x128xi1>, vector<128x128xi32>
      %cst_14 = arith.constant dense<0xFF800000> : vector<128xf32>
      %61 = vector.multi_reduction <maximumf>, %58, %cst_14 [1] : vector<128x128xf32> to vector<128xf32>
      %62 = vector.shape_cast %61 : vector<128xf32> to vector<128x1xf32>
      %63 = vector.broadcast %62 : vector<128x1xf32> to vector<128x128xf32>
      %64 = arith.cmpf oeq, %58, %63 : vector<128x128xf32>
      %65 = vector.broadcast %c2147483647_i32 : i32 to vector<128x128xi32>
      %66 = arith.select %64, %60, %65 : vector<128x128xi1>, vector<128x128xi32>
      %cst_15 = arith.constant dense<2147483647> : vector<128xi32>
      %67 = vector.multi_reduction <minsi>, %66, %cst_15 [1] : vector<128x128xi32> to vector<128xi32>
      %68 = vector.shape_cast %67 : vector<128xi32> to vector<128x1xi32>
      %c1_i32_16 = arith.constant 1 : i32
      %69 = vector.broadcast %c1_i32_16 : i32 to vector<128x8xi32>
      %70 = arith.cmpi eq, %34, %69 : vector<128x8xi32>
      %71 = vector.shape_cast %62 : vector<128x1xf32> to vector<128x1xf32>
      %72 = vector.broadcast %71 : vector<128x1xf32> to vector<128x8xf32>
      %73 = arith.select %70, %72, %49 : vector<128x8xi1>, vector<128x8xf32>
      %c1_i32_17 = arith.constant 1 : i32
      %74 = vector.broadcast %c1_i32_17 : i32 to vector<128x8xi32>
      %75 = arith.cmpi eq, %34, %74 : vector<128x8xi32>
      %76 = vector.shape_cast %68 : vector<128x1xi32> to vector<128x1xi32>
      %77 = vector.broadcast %76 : vector<128x1xi32> to vector<128x8xi32>
      %78 = arith.select %75, %77, %54 : vector<128x8xi1>, vector<128x8xi32>
      %79 = vector.broadcast %68 : vector<128x1xi32> to vector<128x128xi32>
      %80 = arith.cmpi eq, %60, %79 : vector<128x128xi32>
      %81 = vector.broadcast %cst_1 : f32 to vector<128x128xf32>
      %82 = arith.select %80, %81, %58 : vector<128x128xi1>, vector<128x128xf32>
      %83 = vector.broadcast %c2147483647_i32 : i32 to vector<128x128xi32>
      %84 = arith.select %80, %83, %60 : vector<128x128xi1>, vector<128x128xi32>
      %cst_18 = arith.constant dense<0xFF800000> : vector<128xf32>
      %85 = vector.multi_reduction <maximumf>, %82, %cst_18 [1] : vector<128x128xf32> to vector<128xf32>
      %86 = vector.shape_cast %85 : vector<128xf32> to vector<128x1xf32>
      %87 = vector.broadcast %86 : vector<128x1xf32> to vector<128x128xf32>
      %88 = arith.cmpf oeq, %82, %87 : vector<128x128xf32>
      %89 = vector.broadcast %c2147483647_i32 : i32 to vector<128x128xi32>
      %90 = arith.select %88, %84, %89 : vector<128x128xi1>, vector<128x128xi32>
      %cst_19 = arith.constant dense<2147483647> : vector<128xi32>
      %91 = vector.multi_reduction <minsi>, %90, %cst_19 [1] : vector<128x128xi32> to vector<128xi32>
      %92 = vector.shape_cast %91 : vector<128xi32> to vector<128x1xi32>
      %c2_i32_20 = arith.constant 2 : i32
      %93 = vector.broadcast %c2_i32_20 : i32 to vector<128x8xi32>
      %94 = arith.cmpi eq, %34, %93 : vector<128x8xi32>
      %95 = vector.shape_cast %86 : vector<128x1xf32> to vector<128x1xf32>
      %96 = vector.broadcast %95 : vector<128x1xf32> to vector<128x8xf32>
      %97 = arith.select %94, %96, %73 : vector<128x8xi1>, vector<128x8xf32>
      %c2_i32_21 = arith.constant 2 : i32
      %98 = vector.broadcast %c2_i32_21 : i32 to vector<128x8xi32>
      %99 = arith.cmpi eq, %34, %98 : vector<128x8xi32>
      %100 = vector.shape_cast %92 : vector<128x1xi32> to vector<128x1xi32>
      %101 = vector.broadcast %100 : vector<128x1xi32> to vector<128x8xi32>
      %102 = arith.select %99, %101, %78 : vector<128x8xi1>, vector<128x8xi32>
      %103 = vector.broadcast %92 : vector<128x1xi32> to vector<128x128xi32>
      %104 = arith.cmpi eq, %84, %103 : vector<128x128xi32>
      %105 = vector.broadcast %cst_1 : f32 to vector<128x128xf32>
      %106 = arith.select %104, %105, %82 : vector<128x128xi1>, vector<128x128xf32>
      %107 = vector.broadcast %c2147483647_i32 : i32 to vector<128x128xi32>
      %108 = arith.select %104, %107, %84 : vector<128x128xi1>, vector<128x128xi32>
      %cst_22 = arith.constant dense<0xFF800000> : vector<128xf32>
      %109 = vector.multi_reduction <maximumf>, %106, %cst_22 [1] : vector<128x128xf32> to vector<128xf32>
      %110 = vector.shape_cast %109 : vector<128xf32> to vector<128x1xf32>
      %111 = vector.broadcast %110 : vector<128x1xf32> to vector<128x128xf32>
      %112 = arith.cmpf oeq, %106, %111 : vector<128x128xf32>
      %113 = vector.broadcast %c2147483647_i32 : i32 to vector<128x128xi32>
      %114 = arith.select %112, %108, %113 : vector<128x128xi1>, vector<128x128xi32>
      %cst_23 = arith.constant dense<2147483647> : vector<128xi32>
      %115 = vector.multi_reduction <minsi>, %114, %cst_23 [1] : vector<128x128xi32> to vector<128xi32>
      %116 = vector.shape_cast %115 : vector<128xi32> to vector<128x1xi32>
      %c3_i32_24 = arith.constant 3 : i32
      %117 = vector.broadcast %c3_i32_24 : i32 to vector<128x8xi32>
      %118 = arith.cmpi eq, %34, %117 : vector<128x8xi32>
      %119 = vector.shape_cast %110 : vector<128x1xf32> to vector<128x1xf32>
      %120 = vector.broadcast %119 : vector<128x1xf32> to vector<128x8xf32>
      %121 = arith.select %118, %120, %97 : vector<128x8xi1>, vector<128x8xf32>
      %c3_i32_25 = arith.constant 3 : i32
      %122 = vector.broadcast %c3_i32_25 : i32 to vector<128x8xi32>
      %123 = arith.cmpi eq, %34, %122 : vector<128x8xi32>
      %124 = vector.shape_cast %116 : vector<128x1xi32> to vector<128x1xi32>
      %125 = vector.broadcast %124 : vector<128x1xi32> to vector<128x8xi32>
      %126 = arith.select %123, %125, %102 : vector<128x8xi1>, vector<128x8xi32>
      %127 = vector.broadcast %116 : vector<128x1xi32> to vector<128x128xi32>
      %128 = arith.cmpi eq, %108, %127 : vector<128x128xi32>
      %129 = vector.broadcast %cst_1 : f32 to vector<128x128xf32>
      %130 = arith.select %128, %129, %106 : vector<128x128xi1>, vector<128x128xf32>
      %131 = vector.broadcast %c2147483647_i32 : i32 to vector<128x128xi32>
      %132 = arith.select %128, %131, %108 : vector<128x128xi1>, vector<128x128xi32>
      %cst_26 = arith.constant dense<0xFF800000> : vector<128xf32>
      %133 = vector.multi_reduction <maximumf>, %130, %cst_26 [1] : vector<128x128xf32> to vector<128xf32>
      %134 = vector.shape_cast %133 : vector<128xf32> to vector<128x1xf32>
      %135 = vector.broadcast %134 : vector<128x1xf32> to vector<128x128xf32>
      %136 = arith.cmpf oeq, %130, %135 : vector<128x128xf32>
      %137 = vector.broadcast %c2147483647_i32 : i32 to vector<128x128xi32>
      %138 = arith.select %136, %132, %137 : vector<128x128xi1>, vector<128x128xi32>
      %cst_27 = arith.constant dense<2147483647> : vector<128xi32>
      %139 = vector.multi_reduction <minsi>, %138, %cst_27 [1] : vector<128x128xi32> to vector<128xi32>
      %140 = vector.shape_cast %139 : vector<128xi32> to vector<128x1xi32>
      %c4_i32 = arith.constant 4 : i32
      %141 = vector.broadcast %c4_i32 : i32 to vector<128x8xi32>
      %142 = arith.cmpi eq, %34, %141 : vector<128x8xi32>
      %143 = vector.shape_cast %134 : vector<128x1xf32> to vector<128x1xf32>
      %144 = vector.broadcast %143 : vector<128x1xf32> to vector<128x8xf32>
      %145 = arith.select %142, %144, %121 : vector<128x8xi1>, vector<128x8xf32>
      %c4_i32_28 = arith.constant 4 : i32
      %146 = vector.broadcast %c4_i32_28 : i32 to vector<128x8xi32>
      %147 = arith.cmpi eq, %34, %146 : vector<128x8xi32>
      %148 = vector.shape_cast %140 : vector<128x1xi32> to vector<128x1xi32>
      %149 = vector.broadcast %148 : vector<128x1xi32> to vector<128x8xi32>
      %150 = arith.select %147, %149, %126 : vector<128x8xi1>, vector<128x8xi32>
      %151 = vector.broadcast %140 : vector<128x1xi32> to vector<128x128xi32>
      %152 = arith.cmpi eq, %132, %151 : vector<128x128xi32>
      %153 = vector.broadcast %cst_1 : f32 to vector<128x128xf32>
      %154 = arith.select %152, %153, %130 : vector<128x128xi1>, vector<128x128xf32>
      %155 = vector.broadcast %c2147483647_i32 : i32 to vector<128x128xi32>
      %156 = arith.select %152, %155, %132 : vector<128x128xi1>, vector<128x128xi32>
      %cst_29 = arith.constant dense<0xFF800000> : vector<128xf32>
      %157 = vector.multi_reduction <maximumf>, %154, %cst_29 [1] : vector<128x128xf32> to vector<128xf32>
      %158 = vector.shape_cast %157 : vector<128xf32> to vector<128x1xf32>
      %159 = vector.broadcast %158 : vector<128x1xf32> to vector<128x128xf32>
      %160 = arith.cmpf oeq, %154, %159 : vector<128x128xf32>
      %161 = vector.broadcast %c2147483647_i32 : i32 to vector<128x128xi32>
      %162 = arith.select %160, %156, %161 : vector<128x128xi1>, vector<128x128xi32>
      %cst_30 = arith.constant dense<2147483647> : vector<128xi32>
      %163 = vector.multi_reduction <minsi>, %162, %cst_30 [1] : vector<128x128xi32> to vector<128xi32>
      %164 = vector.shape_cast %163 : vector<128xi32> to vector<128x1xi32>
      %c5_i32 = arith.constant 5 : i32
      %165 = vector.broadcast %c5_i32 : i32 to vector<128x8xi32>
      %166 = arith.cmpi eq, %34, %165 : vector<128x8xi32>
      %167 = vector.shape_cast %158 : vector<128x1xf32> to vector<128x1xf32>
      %168 = vector.broadcast %167 : vector<128x1xf32> to vector<128x8xf32>
      %169 = arith.select %166, %168, %145 : vector<128x8xi1>, vector<128x8xf32>
      %c5_i32_31 = arith.constant 5 : i32
      %170 = vector.broadcast %c5_i32_31 : i32 to vector<128x8xi32>
      %171 = arith.cmpi eq, %34, %170 : vector<128x8xi32>
      %172 = vector.shape_cast %164 : vector<128x1xi32> to vector<128x1xi32>
      %173 = vector.broadcast %172 : vector<128x1xi32> to vector<128x8xi32>
      %174 = arith.select %171, %173, %150 : vector<128x8xi1>, vector<128x8xi32>
      %175 = vector.broadcast %164 : vector<128x1xi32> to vector<128x128xi32>
      %176 = arith.cmpi eq, %156, %175 : vector<128x128xi32>
      %177 = vector.broadcast %cst_1 : f32 to vector<128x128xf32>
      %178 = arith.select %176, %177, %154 : vector<128x128xi1>, vector<128x128xf32>
      %179 = vector.broadcast %c2147483647_i32 : i32 to vector<128x128xi32>
      %180 = arith.select %176, %179, %156 : vector<128x128xi1>, vector<128x128xi32>
      %cst_32 = arith.constant dense<0xFF800000> : vector<128xf32>
      %181 = vector.multi_reduction <maximumf>, %178, %cst_32 [1] : vector<128x128xf32> to vector<128xf32>
      %182 = vector.shape_cast %181 : vector<128xf32> to vector<128x1xf32>
      %183 = vector.broadcast %182 : vector<128x1xf32> to vector<128x128xf32>
      %184 = arith.cmpf oeq, %178, %183 : vector<128x128xf32>
      %185 = vector.broadcast %c2147483647_i32 : i32 to vector<128x128xi32>
      %186 = arith.select %184, %180, %185 : vector<128x128xi1>, vector<128x128xi32>
      %cst_33 = arith.constant dense<2147483647> : vector<128xi32>
      %187 = vector.multi_reduction <minsi>, %186, %cst_33 [1] : vector<128x128xi32> to vector<128xi32>
      %188 = vector.shape_cast %187 : vector<128xi32> to vector<128x1xi32>
      %c6_i32 = arith.constant 6 : i32
      %189 = vector.broadcast %c6_i32 : i32 to vector<128x8xi32>
      %190 = arith.cmpi eq, %34, %189 : vector<128x8xi32>
      %191 = vector.shape_cast %182 : vector<128x1xf32> to vector<128x1xf32>
      %192 = vector.broadcast %191 : vector<128x1xf32> to vector<128x8xf32>
      %193 = arith.select %190, %192, %169 : vector<128x8xi1>, vector<128x8xf32>
      %c6_i32_34 = arith.constant 6 : i32
      %194 = vector.broadcast %c6_i32_34 : i32 to vector<128x8xi32>
      %195 = arith.cmpi eq, %34, %194 : vector<128x8xi32>
      %196 = vector.shape_cast %188 : vector<128x1xi32> to vector<128x1xi32>
      %197 = vector.broadcast %196 : vector<128x1xi32> to vector<128x8xi32>
      %198 = arith.select %195, %197, %174 : vector<128x8xi1>, vector<128x8xi32>
      %199 = vector.broadcast %188 : vector<128x1xi32> to vector<128x128xi32>
      %200 = arith.cmpi eq, %180, %199 : vector<128x128xi32>
      %201 = vector.broadcast %cst_1 : f32 to vector<128x128xf32>
      %202 = arith.select %200, %201, %178 : vector<128x128xi1>, vector<128x128xf32>
      %203 = vector.broadcast %c2147483647_i32 : i32 to vector<128x128xi32>
      %204 = arith.select %200, %203, %180 : vector<128x128xi1>, vector<128x128xi32>
      %cst_35 = arith.constant dense<0xFF800000> : vector<128xf32>
      %205 = vector.multi_reduction <maximumf>, %202, %cst_35 [1] : vector<128x128xf32> to vector<128xf32>
      %206 = vector.shape_cast %205 : vector<128xf32> to vector<128x1xf32>
      %207 = vector.broadcast %206 : vector<128x1xf32> to vector<128x128xf32>
      %208 = arith.cmpf oeq, %202, %207 : vector<128x128xf32>
      %209 = vector.broadcast %c2147483647_i32 : i32 to vector<128x128xi32>
      %210 = arith.select %208, %204, %209 : vector<128x128xi1>, vector<128x128xi32>
      %cst_36 = arith.constant dense<2147483647> : vector<128xi32>
      %211 = vector.multi_reduction <minsi>, %210, %cst_36 [1] : vector<128x128xi32> to vector<128xi32>
      %212 = vector.shape_cast %211 : vector<128xi32> to vector<128x1xi32>
      %c7_i32 = arith.constant 7 : i32
      %213 = vector.broadcast %c7_i32 : i32 to vector<128x8xi32>
      %214 = arith.cmpi eq, %34, %213 : vector<128x8xi32>
      %215 = vector.shape_cast %206 : vector<128x1xf32> to vector<128x1xf32>
      %216 = vector.broadcast %215 : vector<128x1xf32> to vector<128x8xf32>
      %217 = arith.select %214, %216, %193 : vector<128x8xi1>, vector<128x8xf32>
      %c7_i32_37 = arith.constant 7 : i32
      %218 = vector.broadcast %c7_i32_37 : i32 to vector<128x8xi32>
      %219 = arith.cmpi eq, %34, %218 : vector<128x8xi32>
      %220 = vector.shape_cast %212 : vector<128x1xi32> to vector<128x1xi32>
      %221 = vector.broadcast %220 : vector<128x1xi32> to vector<128x8xi32>
      %222 = arith.select %219, %221, %198 : vector<128x8xi1>, vector<128x8xi32>
      %c128_i32_38 = arith.constant 128 : i32
      %223 = arith.muli %5, %c128_i32_38 : i32
      %224 = vector.broadcast %223 : i32 to vector<128x8xi32>
      %225 = arith.addi %222, %224 : vector<128x8xi32>
      %c0_39 = arith.constant 0 : index
      %c0_40 = arith.constant 0 : index
      %226 = vector.load %arg12[%c0_39, %c0_40] : memref<128x8xf32, #tpu.memory_space<vmem>>, vector<128x8xf32>
      %227 = tpu.concatenate %226, %217 in 1 : vector<128x8xf32>, vector<128x8xf32> -> vector<128x16xf32>
      %c0_41 = arith.constant 0 : index
      %c0_42 = arith.constant 0 : index
      %228 = vector.load %arg13[%c0_41, %c0_42] : memref<128x8xi32, #tpu.memory_space<vmem>>, vector<128x8xi32>
      %229 = tpu.concatenate %228, %225 in 1 : vector<128x8xi32>, vector<128x8xi32> -> vector<128x16xi32>
      %230 = vector.broadcast %cst_1 : f32 to vector<128x8xf32>
      %c0_i32_43 = arith.constant 0 : i32
      %231 = vector.broadcast %c0_i32_43 : i32 to vector<128x8xi32>
      %cst_44 = arith.constant dense<0xFF800000> : vector<128xf32>
      %232 = vector.multi_reduction <maximumf>, %227, %cst_44 [1] : vector<128x16xf32> to vector<128xf32>
      %233 = vector.shape_cast %232 : vector<128xf32> to vector<128x1xf32>
      %234 = vector.broadcast %233 : vector<128x1xf32> to vector<128x16xf32>
      %235 = arith.cmpf oeq, %227, %234 : vector<128x16xf32>
      %236 = vector.broadcast %c2147483647_i32 : i32 to vector<128x16xi32>
      %237 = arith.select %235, %229, %236 : vector<128x16xi1>, vector<128x16xi32>
      %cst_45 = arith.constant dense<2147483647> : vector<128xi32>
      %238 = vector.multi_reduction <minsi>, %237, %cst_45 [1] : vector<128x16xi32> to vector<128xi32>
      %239 = vector.shape_cast %238 : vector<128xi32> to vector<128x1xi32>
      %c0_i32_46 = arith.constant 0 : i32
      %240 = vector.broadcast %c0_i32_46 : i32 to vector<128x8xi32>
      %241 = arith.cmpi eq, %34, %240 : vector<128x8xi32>
      %242 = vector.shape_cast %233 : vector<128x1xf32> to vector<128x1xf32>
      %243 = vector.broadcast %242 : vector<128x1xf32> to vector<128x8xf32>
      %244 = arith.select %241, %243, %230 : vector<128x8xi1>, vector<128x8xf32>
      %c0_i32_47 = arith.constant 0 : i32
      %245 = vector.broadcast %c0_i32_47 : i32 to vector<128x8xi32>
      %246 = arith.cmpi eq, %34, %245 : vector<128x8xi32>
      %247 = vector.shape_cast %239 : vector<128x1xi32> to vector<128x1xi32>
      %248 = vector.broadcast %247 : vector<128x1xi32> to vector<128x8xi32>
      %249 = arith.select %246, %248, %231 : vector<128x8xi1>, vector<128x8xi32>
      %250 = vector.broadcast %239 : vector<128x1xi32> to vector<128x16xi32>
      %251 = arith.cmpi eq, %229, %250 : vector<128x16xi32>
      %252 = vector.broadcast %cst_1 : f32 to vector<128x16xf32>
      %253 = arith.select %251, %252, %227 : vector<128x16xi1>, vector<128x16xf32>
      %254 = vector.broadcast %c2147483647_i32 : i32 to vector<128x16xi32>
      %255 = arith.select %251, %254, %229 : vector<128x16xi1>, vector<128x16xi32>
      %cst_48 = arith.constant dense<0xFF800000> : vector<128xf32>
      %256 = vector.multi_reduction <maximumf>, %253, %cst_48 [1] : vector<128x16xf32> to vector<128xf32>
      %257 = vector.shape_cast %256 : vector<128xf32> to vector<128x1xf32>
      %258 = vector.broadcast %257 : vector<128x1xf32> to vector<128x16xf32>
      %259 = arith.cmpf oeq, %253, %258 : vector<128x16xf32>
      %260 = vector.broadcast %c2147483647_i32 : i32 to vector<128x16xi32>
      %261 = arith.select %259, %255, %260 : vector<128x16xi1>, vector<128x16xi32>
      %cst_49 = arith.constant dense<2147483647> : vector<128xi32>
      %262 = vector.multi_reduction <minsi>, %261, %cst_49 [1] : vector<128x16xi32> to vector<128xi32>
      %263 = vector.shape_cast %262 : vector<128xi32> to vector<128x1xi32>
      %c1_i32_50 = arith.constant 1 : i32
      %264 = vector.broadcast %c1_i32_50 : i32 to vector<128x8xi32>
      %265 = arith.cmpi eq, %34, %264 : vector<128x8xi32>
      %266 = vector.shape_cast %257 : vector<128x1xf32> to vector<128x1xf32>
      %267 = vector.broadcast %266 : vector<128x1xf32> to vector<128x8xf32>
      %268 = arith.select %265, %267, %244 : vector<128x8xi1>, vector<128x8xf32>
      %c1_i32_51 = arith.constant 1 : i32
      %269 = vector.broadcast %c1_i32_51 : i32 to vector<128x8xi32>
      %270 = arith.cmpi eq, %34, %269 : vector<128x8xi32>
      %271 = vector.shape_cast %263 : vector<128x1xi32> to vector<128x1xi32>
      %272 = vector.broadcast %271 : vector<128x1xi32> to vector<128x8xi32>
      %273 = arith.select %270, %272, %249 : vector<128x8xi1>, vector<128x8xi32>
      %274 = vector.broadcast %263 : vector<128x1xi32> to vector<128x16xi32>
      %275 = arith.cmpi eq, %255, %274 : vector<128x16xi32>
      %276 = vector.broadcast %cst_1 : f32 to vector<128x16xf32>
      %277 = arith.select %275, %276, %253 : vector<128x16xi1>, vector<128x16xf32>
      %278 = vector.broadcast %c2147483647_i32 : i32 to vector<128x16xi32>
      %279 = arith.select %275, %278, %255 : vector<128x16xi1>, vector<128x16xi32>
      %cst_52 = arith.constant dense<0xFF800000> : vector<128xf32>
      %280 = vector.multi_reduction <maximumf>, %277, %cst_52 [1] : vector<128x16xf32> to vector<128xf32>
      %281 = vector.shape_cast %280 : vector<128xf32> to vector<128x1xf32>
      %282 = vector.broadcast %281 : vector<128x1xf32> to vector<128x16xf32>
      %283 = arith.cmpf oeq, %277, %282 : vector<128x16xf32>
      %284 = vector.broadcast %c2147483647_i32 : i32 to vector<128x16xi32>
      %285 = arith.select %283, %279, %284 : vector<128x16xi1>, vector<128x16xi32>
      %cst_53 = arith.constant dense<2147483647> : vector<128xi32>
      %286 = vector.multi_reduction <minsi>, %285, %cst_53 [1] : vector<128x16xi32> to vector<128xi32>
      %287 = vector.shape_cast %286 : vector<128xi32> to vector<128x1xi32>
      %c2_i32_54 = arith.constant 2 : i32
      %288 = vector.broadcast %c2_i32_54 : i32 to vector<128x8xi32>
      %289 = arith.cmpi eq, %34, %288 : vector<128x8xi32>
      %290 = vector.shape_cast %281 : vector<128x1xf32> to vector<128x1xf32>
      %291 = vector.broadcast %290 : vector<128x1xf32> to vector<128x8xf32>
      %292 = arith.select %289, %291, %268 : vector<128x8xi1>, vector<128x8xf32>
      %c2_i32_55 = arith.constant 2 : i32
      %293 = vector.broadcast %c2_i32_55 : i32 to vector<128x8xi32>
      %294 = arith.cmpi eq, %34, %293 : vector<128x8xi32>
      %295 = vector.shape_cast %287 : vector<128x1xi32> to vector<128x1xi32>
      %296 = vector.broadcast %295 : vector<128x1xi32> to vector<128x8xi32>
      %297 = arith.select %294, %296, %273 : vector<128x8xi1>, vector<128x8xi32>
      %298 = vector.broadcast %287 : vector<128x1xi32> to vector<128x16xi32>
      %299 = arith.cmpi eq, %279, %298 : vector<128x16xi32>
      %300 = vector.broadcast %cst_1 : f32 to vector<128x16xf32>
      %301 = arith.select %299, %300, %277 : vector<128x16xi1>, vector<128x16xf32>
      %302 = vector.broadcast %c2147483647_i32 : i32 to vector<128x16xi32>
      %303 = arith.select %299, %302, %279 : vector<128x16xi1>, vector<128x16xi32>
      %cst_56 = arith.constant dense<0xFF800000> : vector<128xf32>
      %304 = vector.multi_reduction <maximumf>, %301, %cst_56 [1] : vector<128x16xf32> to vector<128xf32>
      %305 = vector.shape_cast %304 : vector<128xf32> to vector<128x1xf32>
      %306 = vector.broadcast %305 : vector<128x1xf32> to vector<128x16xf32>
      %307 = arith.cmpf oeq, %301, %306 : vector<128x16xf32>
      %308 = vector.broadcast %c2147483647_i32 : i32 to vector<128x16xi32>
      %309 = arith.select %307, %303, %308 : vector<128x16xi1>, vector<128x16xi32>
      %cst_57 = arith.constant dense<2147483647> : vector<128xi32>
      %310 = vector.multi_reduction <minsi>, %309, %cst_57 [1] : vector<128x16xi32> to vector<128xi32>
      %311 = vector.shape_cast %310 : vector<128xi32> to vector<128x1xi32>
      %c3_i32_58 = arith.constant 3 : i32
      %312 = vector.broadcast %c3_i32_58 : i32 to vector<128x8xi32>
      %313 = arith.cmpi eq, %34, %312 : vector<128x8xi32>
      %314 = vector.shape_cast %305 : vector<128x1xf32> to vector<128x1xf32>
      %315 = vector.broadcast %314 : vector<128x1xf32> to vector<128x8xf32>
      %316 = arith.select %313, %315, %292 : vector<128x8xi1>, vector<128x8xf32>
      %c3_i32_59 = arith.constant 3 : i32
      %317 = vector.broadcast %c3_i32_59 : i32 to vector<128x8xi32>
      %318 = arith.cmpi eq, %34, %317 : vector<128x8xi32>
      %319 = vector.shape_cast %311 : vector<128x1xi32> to vector<128x1xi32>
      %320 = vector.broadcast %319 : vector<128x1xi32> to vector<128x8xi32>
      %321 = arith.select %318, %320, %297 : vector<128x8xi1>, vector<128x8xi32>
      %322 = vector.broadcast %311 : vector<128x1xi32> to vector<128x16xi32>
      %323 = arith.cmpi eq, %303, %322 : vector<128x16xi32>
      %324 = vector.broadcast %cst_1 : f32 to vector<128x16xf32>
      %325 = arith.select %323, %324, %301 : vector<128x16xi1>, vector<128x16xf32>
      %326 = vector.broadcast %c2147483647_i32 : i32 to vector<128x16xi32>
      %327 = arith.select %323, %326, %303 : vector<128x16xi1>, vector<128x16xi32>
      %cst_60 = arith.constant dense<0xFF800000> : vector<128xf32>
      %328 = vector.multi_reduction <maximumf>, %325, %cst_60 [1] : vector<128x16xf32> to vector<128xf32>
      %329 = vector.shape_cast %328 : vector<128xf32> to vector<128x1xf32>
      %330 = vector.broadcast %329 : vector<128x1xf32> to vector<128x16xf32>
      %331 = arith.cmpf oeq, %325, %330 : vector<128x16xf32>
      %332 = vector.broadcast %c2147483647_i32 : i32 to vector<128x16xi32>
      %333 = arith.select %331, %327, %332 : vector<128x16xi1>, vector<128x16xi32>
      %cst_61 = arith.constant dense<2147483647> : vector<128xi32>
      %334 = vector.multi_reduction <minsi>, %333, %cst_61 [1] : vector<128x16xi32> to vector<128xi32>
      %335 = vector.shape_cast %334 : vector<128xi32> to vector<128x1xi32>
      %c4_i32_62 = arith.constant 4 : i32
      %336 = vector.broadcast %c4_i32_62 : i32 to vector<128x8xi32>
      %337 = arith.cmpi eq, %34, %336 : vector<128x8xi32>
      %338 = vector.shape_cast %329 : vector<128x1xf32> to vector<128x1xf32>
      %339 = vector.broadcast %338 : vector<128x1xf32> to vector<128x8xf32>
      %340 = arith.select %337, %339, %316 : vector<128x8xi1>, vector<128x8xf32>
      %c4_i32_63 = arith.constant 4 : i32
      %341 = vector.broadcast %c4_i32_63 : i32 to vector<128x8xi32>
      %342 = arith.cmpi eq, %34, %341 : vector<128x8xi32>
      %343 = vector.shape_cast %335 : vector<128x1xi32> to vector<128x1xi32>
      %344 = vector.broadcast %343 : vector<128x1xi32> to vector<128x8xi32>
      %345 = arith.select %342, %344, %321 : vector<128x8xi1>, vector<128x8xi32>
      %346 = vector.broadcast %335 : vector<128x1xi32> to vector<128x16xi32>
      %347 = arith.cmpi eq, %327, %346 : vector<128x16xi32>
      %348 = vector.broadcast %cst_1 : f32 to vector<128x16xf32>
      %349 = arith.select %347, %348, %325 : vector<128x16xi1>, vector<128x16xf32>
      %350 = vector.broadcast %c2147483647_i32 : i32 to vector<128x16xi32>
      %351 = arith.select %347, %350, %327 : vector<128x16xi1>, vector<128x16xi32>
      %cst_64 = arith.constant dense<0xFF800000> : vector<128xf32>
      %352 = vector.multi_reduction <maximumf>, %349, %cst_64 [1] : vector<128x16xf32> to vector<128xf32>
      %353 = vector.shape_cast %352 : vector<128xf32> to vector<128x1xf32>
      %354 = vector.broadcast %353 : vector<128x1xf32> to vector<128x16xf32>
      %355 = arith.cmpf oeq, %349, %354 : vector<128x16xf32>
      %356 = vector.broadcast %c2147483647_i32 : i32 to vector<128x16xi32>
      %357 = arith.select %355, %351, %356 : vector<128x16xi1>, vector<128x16xi32>
      %cst_65 = arith.constant dense<2147483647> : vector<128xi32>
      %358 = vector.multi_reduction <minsi>, %357, %cst_65 [1] : vector<128x16xi32> to vector<128xi32>
      %359 = vector.shape_cast %358 : vector<128xi32> to vector<128x1xi32>
      %c5_i32_66 = arith.constant 5 : i32
      %360 = vector.broadcast %c5_i32_66 : i32 to vector<128x8xi32>
      %361 = arith.cmpi eq, %34, %360 : vector<128x8xi32>
      %362 = vector.shape_cast %353 : vector<128x1xf32> to vector<128x1xf32>
      %363 = vector.broadcast %362 : vector<128x1xf32> to vector<128x8xf32>
      %364 = arith.select %361, %363, %340 : vector<128x8xi1>, vector<128x8xf32>
      %c5_i32_67 = arith.constant 5 : i32
      %365 = vector.broadcast %c5_i32_67 : i32 to vector<128x8xi32>
      %366 = arith.cmpi eq, %34, %365 : vector<128x8xi32>
      %367 = vector.shape_cast %359 : vector<128x1xi32> to vector<128x1xi32>
      %368 = vector.broadcast %367 : vector<128x1xi32> to vector<128x8xi32>
      %369 = arith.select %366, %368, %345 : vector<128x8xi1>, vector<128x8xi32>
      %370 = vector.broadcast %359 : vector<128x1xi32> to vector<128x16xi32>
      %371 = arith.cmpi eq, %351, %370 : vector<128x16xi32>
      %372 = vector.broadcast %cst_1 : f32 to vector<128x16xf32>
      %373 = arith.select %371, %372, %349 : vector<128x16xi1>, vector<128x16xf32>
      %374 = vector.broadcast %c2147483647_i32 : i32 to vector<128x16xi32>
      %375 = arith.select %371, %374, %351 : vector<128x16xi1>, vector<128x16xi32>
      %cst_68 = arith.constant dense<0xFF800000> : vector<128xf32>
      %376 = vector.multi_reduction <maximumf>, %373, %cst_68 [1] : vector<128x16xf32> to vector<128xf32>
      %377 = vector.shape_cast %376 : vector<128xf32> to vector<128x1xf32>
      %378 = vector.broadcast %377 : vector<128x1xf32> to vector<128x16xf32>
      %379 = arith.cmpf oeq, %373, %378 : vector<128x16xf32>
      %380 = vector.broadcast %c2147483647_i32 : i32 to vector<128x16xi32>
      %381 = arith.select %379, %375, %380 : vector<128x16xi1>, vector<128x16xi32>
      %cst_69 = arith.constant dense<2147483647> : vector<128xi32>
      %382 = vector.multi_reduction <minsi>, %381, %cst_69 [1] : vector<128x16xi32> to vector<128xi32>
      %383 = vector.shape_cast %382 : vector<128xi32> to vector<128x1xi32>
      %c6_i32_70 = arith.constant 6 : i32
      %384 = vector.broadcast %c6_i32_70 : i32 to vector<128x8xi32>
      %385 = arith.cmpi eq, %34, %384 : vector<128x8xi32>
      %386 = vector.shape_cast %377 : vector<128x1xf32> to vector<128x1xf32>
      %387 = vector.broadcast %386 : vector<128x1xf32> to vector<128x8xf32>
      %388 = arith.select %385, %387, %364 : vector<128x8xi1>, vector<128x8xf32>
      %c6_i32_71 = arith.constant 6 : i32
      %389 = vector.broadcast %c6_i32_71 : i32 to vector<128x8xi32>
      %390 = arith.cmpi eq, %34, %389 : vector<128x8xi32>
      %391 = vector.shape_cast %383 : vector<128x1xi32> to vector<128x1xi32>
      %392 = vector.broadcast %391 : vector<128x1xi32> to vector<128x8xi32>
      %393 = arith.select %390, %392, %369 : vector<128x8xi1>, vector<128x8xi32>
      %394 = vector.broadcast %383 : vector<128x1xi32> to vector<128x16xi32>
      %395 = arith.cmpi eq, %375, %394 : vector<128x16xi32>
      %396 = vector.broadcast %cst_1 : f32 to vector<128x16xf32>
      %397 = arith.select %395, %396, %373 : vector<128x16xi1>, vector<128x16xf32>
      %398 = vector.broadcast %c2147483647_i32 : i32 to vector<128x16xi32>
      %399 = arith.select %395, %398, %375 : vector<128x16xi1>, vector<128x16xi32>
      %cst_72 = arith.constant dense<0xFF800000> : vector<128xf32>
      %400 = vector.multi_reduction <maximumf>, %397, %cst_72 [1] : vector<128x16xf32> to vector<128xf32>
      %401 = vector.shape_cast %400 : vector<128xf32> to vector<128x1xf32>
      %402 = vector.broadcast %401 : vector<128x1xf32> to vector<128x16xf32>
      %403 = arith.cmpf oeq, %397, %402 : vector<128x16xf32>
      %404 = vector.broadcast %c2147483647_i32 : i32 to vector<128x16xi32>
      %405 = arith.select %403, %399, %404 : vector<128x16xi1>, vector<128x16xi32>
      %cst_73 = arith.constant dense<2147483647> : vector<128xi32>
      %406 = vector.multi_reduction <minsi>, %405, %cst_73 [1] : vector<128x16xi32> to vector<128xi32>
      %407 = vector.shape_cast %406 : vector<128xi32> to vector<128x1xi32>
      %c7_i32_74 = arith.constant 7 : i32
      %408 = vector.broadcast %c7_i32_74 : i32 to vector<128x8xi32>
      %409 = arith.cmpi eq, %34, %408 : vector<128x8xi32>
      %410 = vector.shape_cast %401 : vector<128x1xf32> to vector<128x1xf32>
      %411 = vector.broadcast %410 : vector<128x1xf32> to vector<128x8xf32>
      %412 = arith.select %409, %411, %388 : vector<128x8xi1>, vector<128x8xf32>
      %c7_i32_75 = arith.constant 7 : i32
      %413 = vector.broadcast %c7_i32_75 : i32 to vector<128x8xi32>
      %414 = arith.cmpi eq, %34, %413 : vector<128x8xi32>
      %415 = vector.shape_cast %407 : vector<128x1xi32> to vector<128x1xi32>
      %416 = vector.broadcast %415 : vector<128x1xi32> to vector<128x8xi32>
      %417 = arith.select %414, %416, %393 : vector<128x8xi1>, vector<128x8xi32>
      %c0_76 = arith.constant 0 : index
      %c0_77 = arith.constant 0 : index
      %418 = vector.load %arg12[%c0_76, %c0_77] : memref<128x8xf32, #tpu.memory_space<vmem>>, vector<128x8xf32>
      tpu.vector_store %arg12[%c0_76, %c0_77], %412 {strides = array<i32>} : memref<128x8xf32, #tpu.memory_space<vmem>>, vector<128x8xf32>,
      %c0_78 = arith.constant 0 : index
      %c0_79 = arith.constant 0 : index
      %419 = vector.load %arg13[%c0_78, %c0_79] : memref<128x8xi32, #tpu.memory_space<vmem>>, vector<128x8xi32>
      tpu.vector_store %arg13[%c0_78, %c0_79], %417 {strides = array<i32>} : memref<128x8xi32, #tpu.memory_space<vmem>>, vector<128x8xi32>,
    } else {
    }
    %c2_i32 = arith.constant 2 : i32
    %17 = arith.cmpi sge, %8, %c2_i32 : i32
    %18 = arith.extui %17 : i1 to i32
    %c0_i32_3 = arith.constant 0 : i32
    %19 = arith.cmpi ne, %18, %c0_i32_3 : i32
    scf.if %19 {
      %c0 = arith.constant 0 : index
      %c0_4 = arith.constant 0 : index
      %20 = vector.load %arg12[%c0, %c0_4] : memref<128x8xf32, #tpu.memory_space<vmem>>, vector<128x8xf32>
      %c0_5 = arith.constant 0 : index
      %c0_6 = arith.constant 0 : index
      %21 = vector.load %arg9[%c0_5, %c0_6] : memref<128x8xf32, #tpu.memory_space<vmem>>, vector<128x8xf32>
      tpu.vector_store %arg9[%c0_5, %c0_6], %20 {strides = array<i32>} : memref<128x8xf32, #tpu.memory_space<vmem>>, vector<128x8xf32>,
      %c0_7 = arith.constant 0 : index
      %c0_8 = arith.constant 0 : index
      %22 = vector.load %arg13[%c0_7, %c0_8] : memref<128x8xi32, #tpu.memory_space<vmem>>, vector<128x8xi32>
      %c0_9 = arith.constant 0 : index
      %c0_10 = arith.constant 0 : index
      %23 = vector.load %arg10[%c0_9, %c0_10] : memref<128x8xi32, #tpu.memory_space<vmem>>, vector<128x8xi32>
      tpu.vector_store %arg10[%c0_9, %c0_10], %22 {strides = array<i32>} : memref<128x8xi32, #tpu.memory_space<vmem>>, vector<128x8xi32>,
    } else {
    }
    return
  }
  func.func @transform_0(%arg0: i32, %arg1: i32, %arg2: memref<2x3xi32, #tpu.memory_space<smem>>, %arg3: memref<2x3xi32, #tpu.memory_space<smem>>, %arg4: memref<2x3xi32, #tpu.memory_space<smem>>) -> (i32, i32) {
    %0 = arith.index_cast %arg0 : i32 to index
    %1 = arith.index_cast %arg1 : i32 to index
    %2 = memref.load %arg2[%0, %1] : memref<2x3xi32, #tpu.memory_space<smem>>
    %c0_i32 = arith.constant 0 : i32
    %c0_i32_0 = arith.constant 0 : i32
    return %2, %c0_i32 : i32, i32
  }
  func.func @transform_1(%arg0: i32, %arg1: i32, %arg2: memref<2x3xi32, #tpu.memory_space<smem>>, %arg3: memref<2x3xi32, #tpu.memory_space<smem>>, %arg4: memref<2x3xi32, #tpu.memory_space<smem>>) -> (i32, i32) {
    %0 = arith.index_cast %arg0 : i32 to index
    %1 = arith.index_cast %arg1 : i32 to index
    %2 = memref.load %arg3[%0, %1] : memref<2x3xi32, #tpu.memory_space<smem>>
    %c0_i32 = arith.constant 0 : i32
    %c0_i32_0 = arith.constant 0 : i32
    return %c0_i32, %2 : i32, i32
  }
  func.func @transform_2(%arg0: i32, %arg1: i32, %arg2: memref<2x3xi32, #tpu.memory_space<smem>>, %arg3: memref<2x3xi32, #tpu.memory_space<smem>>, %arg4: memref<2x3xi32, #tpu.memory_space<smem>>) -> (i32, i32) {
    %c0_i32 = arith.constant 0 : i32
    %c0_i32_0 = arith.constant 0 : i32
    %c0_i32_1 = arith.constant 0 : i32
    return %c0_i32, %c0_i32_0 : i32, i32
  }
  func.func @transform_3(%arg0: i32, %arg1: i32, %arg2: memref<2x3xi32, #tpu.memory_space<smem>>, %arg3: memref<2x3xi32, #tpu.memory_space<smem>>, %arg4: memref<2x3xi32, #tpu.memory_space<smem>>) -> (i32, i32) {
    %c0_i32 = arith.constant 0 : i32
    %c0_i32_0 = arith.constant 0 : i32
    %c0_i32_1 = arith.constant 0 : i32
    return %c0_i32, %c0_i32_0 : i32, i32
  }
  func.func @transform_4(%arg0: i32, %arg1: i32, %arg2: memref<2x3xi32, #tpu.memory_space<smem>>, %arg3: memref<2x3xi32, #tpu.memory_space<smem>>, %arg4: memref<2x3xi32, #tpu.memory_space<smem>>) -> (i32, i32) {
    %0 = arith.index_cast %arg0 : i32 to index
    %1 = arith.index_cast %arg1 : i32 to index
    %2 = memref.load %arg2[%0, %1] : memref<2x3xi32, #tpu.memory_space<smem>>
    %c0_i32 = arith.constant 0 : i32
    %c0_i32_0 = arith.constant 0 : i32
    return %2, %c0_i32 : i32, i32
  }
  func.func @transform_5(%arg0: i32, %arg1: i32, %arg2: memref<2x3xi32, #tpu.memory_space<smem>>, %arg3: memref<2x3xi32, #tpu.memory_space<smem>>, %arg4: memref<2x3xi32, #tpu.memory_space<smem>>) -> (i32, i32) {
    %0 = arith.index_cast %arg0 : i32 to index
    %1 = arith.index_cast %arg1 : i32 to index
    %2 = memref.load %arg2[%0, %1] : memref<2x3xi32, #tpu.memory_space<smem>>
    %c0_i32 = arith.constant 0 : i32
    %c0_i32_0 = arith.constant 0 : i32
    return %2, %c0_i32 : i32, i32
  }
}

</mosaic_0001>

<llo_original>
// kernel: tpu_custom_call.1
$region0: #{tpu_custom_call.1}
  #allocation0 [shape = 'u32[]', space=smem, size = 0x4, offset = 0x4, fixed_abs, tag = 'smem constant byte address 0x4 - core index']
  #allocation1 [shape = 'u32[144,128]{1,0:T(1,128)}', space=vmem, size = 0x12000, scoped, tag = 'internal scratch']
  #allocation2 [shape = 'bf16[128,64]{1,0:T(8,128)(2,1)}', space=vmem, size = 0x8000, scoped, tag = 'scratch operand']
  #allocation3 [shape = 'f32[128,8]{1,0:T(8,128)}', space=vmem, size = 0x10000, scoped, tag = 'scratch operand']
  #allocation4 [shape = 's32[128,8]{1,0:T(8,128)}', space=vmem, size = 0x10000, scoped, tag = 'scratch operand']
  #allocation5 [shape = 's32[1]{0}', space=sflag, size = 0x4, scoped, tag = 'scoped memory for tpu_custom_call.1']
  #allocation6 [shape = 'u8[1024]{0}', space=smem, size = 0x400, scoped, tag = 'prefetched SMEM operand 0']
  #allocation7 [shape = 'u8[1024]{0}', space=smem, size = 0x400, scoped, tag = 'prefetched SMEM operand 1']
  #allocation8 [shape = 'u8[1024]{0}', space=smem, size = 0x400, scoped, tag = 'prefetched SMEM operand 2']
  %s0 = inlined_call_operand.vmem [shape: s32[2,3], index: 0, kind: input, shape index: {}]
  %s1 = inlined_call_operand.vmem [shape: s32[2,3], index: 1, kind: input, shape index: {}]
  %s2 = inlined_call_operand.vmem [shape: s32[2,3], index: 2, kind: input, shape index: {}]
  %s3 = inlined_call_operand.vmem [shape: bf16[384,64], index: 3, kind: input, shape index: {}]
  %s4 = inlined_call_operand.vmem [shape: bf16[64,384], index: 4, kind: input, shape index: {}]
  %s5 = inlined_call_operand.vmem [shape: bf16[64,64], index: 5, kind: input, shape index: {}]
  %s6 = inlined_call_operand.vmem [shape: f32[1,64], index: 6, kind: input, shape index: {}]
  %s7 = inlined_call_operand.vmem [shape: f32[384,8], index: 7, kind: output, shape index: {0}]
  %s8 = inlined_call_operand.vmem [shape: s32[384,8], index: 8, kind: output, shape index: {1}]
  %9 = xla_tuple %s7, %s8
  %s10 = sld [smem:[#allocation0]]
  $region110: #{tpu_custom_call.1} parent=0
    _
  %s12 = ssub.s32 1, %s10
  %s13 = scalar_select 0, %s12, %s10
  %s14 = sshll.u32 %s0, 4
  %s15 = int_to_ptr.vmem [resolvable:$true] %s14
  %17 = dma.vmem_to_smem %s15, 32, [#allocation6], [#allocation5]
  %s18 = sshll.u32 %s1, 4
  %s19 = int_to_ptr.vmem [resolvable:$true] %s18
  %21 = dma.vmem_to_smem %s19, 32, [#allocation7], [#allocation5]
  %s22 = sshll.u32 %s2, 4
  %s23 = int_to_ptr.vmem [resolvable:$true] %s22
  %25 = dma.vmem_to_smem %s23, 32, [#allocation8], [#allocation5]
  %26 = dma.done [#allocation5], 96
  %27 = sfence
  $region1: #{tpu_custom_call.1} parent=0
    #allocation9 [shape = 'u8[32768]{0}', space=vmem, size = 0x8000, scoped, tag = 'input window, operand 4']
    loop: start=0, step=1, limit=8
    $region2: #{tpu_custom_call.1} parent=1 // loop_pre_header
      _
    $region3: #{tpu_custom_call.1} parent=1 // loop_header
      %s29 = sphi 0, %s33
      %p30 = scmp.ge.s32.totalorder %s29, 8
      %s36 = sphi 0, %s48
      %s37 = sphi 0, %s44
      %s38 = sphi 0, %s36
      %s39 = sphi 0, %s37
      %s40 = sphi 0, %s38
      %s41 = sphi 0, %s39
      %s67 = sphi 0, %s69
      %s70 = sphi 0, %s67
      %s71 = sphi 0, %s70
      %s87 = sphi 0, %s71
      %s109 = sphi 0, %s111
      %s112 = sphi 0, %s109
      %s113 = sphi 0, %s112
      %s129 = sphi 0, %s113
      %s133 = sphi 0, %s133
      %s135 = sphi 0, %s133
      %s136 = sphi 0, %s135
      %s150 = sphi 0, %s136
      %s154 = sphi 0, %s154
      %s156 = sphi 0, %s154
      %s157 = sphi 0, %s156
      %s171 = sphi 0, %s157
      %s193 = sphi 0, %s195
      %s196 = sphi 0, %s193
      %s197 = sphi 0, %s196
      %s213 = sphi 0, %s197
      %s235 = sphi 0, %s237
      %s238 = sphi 0, %s235
      %s239 = sphi 0, %s238
      %s255 = sphi 0, %s239
    $region4: #{tpu_custom_call.1} parent=1 // loop_header_branch
      %32 = sbr.rel (%p30) target = $region8
    $region5: #{tpu_custom_call.1} parent=1 // loop_body
      %s34 = ssub.s32 %s29, 1
      %s35 = ssub.s32 %s29, 2
      %s42 = sadd.s32 1, %s37
      %p43 = scmp.ge.s32.totalorder %s42, 3
      %s44 = scalar_select %p43, 0, %s42
      %s45 = sadd.s32 1, %s36
      %s46 = scalar_select %p43, %s45, %s36
      %p47 = scmp.ge.s32.totalorder %s46, 2
      %s48 = scalar_select %p47, 0, %s46
      %s49 = sshra.s32 %s37, 7
      %s50 = sand.u32 %s37, 127
      %s51 = sadd.s32 %s49, %s36
      %s52 = smul.u32 %s51, 128
      %s53 = sshra.s32 %s37, 7
      %s54 = sand.u32 %s37, 127
      %s55 = sadd.s32 %s52, %s54
      %s56 = sld [smem:[#allocation6 + %s55]]
      %s57 = sshra.s32 %s44, 7
      %s58 = sand.u32 %s44, 127
      %s59 = sadd.s32 %s57, %s48
      %s60 = smul.u32 %s59, 128
      %s61 = sshra.s32 %s44, 7
      %s62 = sand.u32 %s44, 127
      %s63 = sadd.s32 %s60, %s62
      %s64 = sld [smem:[#allocation6 + %s63]]
      %s65 = ssub.s32 %s56, %s64
      %p66 = scmp.eq.s32.totalorder %s65, 0
      %s68 = sadd.s32 %s67, 1
      %s69 = scalar_select %p66, %s67, %s68
      %p72 = pneg %p66
      %p73 = scmp.eq.s32.totalorder %s29, 5
      %p74 = por %p72, %p73
      %p75 = scmp.ne.s32.totalorder %s67, %s70
      %p76 = scmp.eq.s32.totalorder %s29, 0
      %p77 = por %p75, %p76
      %p78 = scmp.ne.s32.totalorder %s67, %s70
      %p79 = scmp.eq.s32.totalorder %s34, 5
      %p80 = por %p78, %p79
      %p81 = scmp.ne.s32.totalorder %s70, %s71
      %p82 = scmp.eq.s32.totalorder %s34, 0
      %p83 = por %p81, %p82
      %p84 = scmp.ne.s32.totalorder %s70, %s71
      %p85 = scmp.eq.s32.totalorder %s35, 5
      %p86 = por %p84, %p85
      %p88 = scmp.ne.s32.totalorder %s71, %s87
      %p89 = scmp.eq.s32.totalorder %s35, 0
      %p90 = por %p88, %p89
      %s91 = sshra.s32 %s37, 7
      %s92 = sand.u32 %s37, 127
      %s93 = sadd.s32 %s91, %s36
      %s94 = smul.u32 %s93, 128
      %s95 = sshra.s32 %s37, 7
      %s96 = sand.u32 %s37, 127
      %s97 = sadd.s32 %s94, %s96
      %s98 = sld [smem:[#allocation7 + %s97]]
      %s99 = sshra.s32 %s44, 7
      %s100 = sand.u32 %s44, 127
      %s101 = sadd.s32 %s99, %s48
      %s102 = smul.u32 %s101, 128
      %s103 = sshra.s32 %s44, 7
      %s104 = sand.u32 %s44, 127
      %s105 = sadd.s32 %s102, %s104
      %s106 = sld [smem:[#allocation7 + %s105]]
      %s107 = ssub.s32 %s98, %s106
      %p108 = scmp.eq.s32.totalorder %s107, 0
      %s110 = sadd.s32 %s109, 1
      %s111 = scalar_select %p108, %s109, %s110
      %p114 = pneg %p108
      %p115 = scmp.eq.s32.totalorder %s29, 5
      %p116 = por %p114, %p115
      %p117 = scmp.ne.s32.totalorder %s109, %s112
      %p118 = scmp.eq.s32.totalorder %s29, 0
      %p119 = por %p117, %p118
      %p120 = scmp.ne.s32.totalorder %s109, %s112
      %p121 = scmp.eq.s32.totalorder %s34, 5
      %p122 = por %p120, %p121
      %p123 = scmp.ne.s32.totalorder %s112, %s113
      %p124 = scmp.eq.s32.totalorder %s34, 0
      %p125 = por %p123, %p124
      %p126 = scmp.ne.s32.totalorder %s112, %s113
      %p127 = scmp.eq.s32.totalorder %s35, 5
      %p128 = por %p126, %p127
      %p130 = scmp.ne.s32.totalorder %s113, %s129
      %p131 = scmp.eq.s32.totalorder %s35, 0
      %p132 = por %p130, %p131
      %s134 = sadd.s32 %s133, 1
      %p137 = scmp.eq.s32.totalorder %s29, 5
      %p138 = scmp.ne.s32.totalorder %s133, %s135
      %p139 = scmp.eq.s32.totalorder %s29, 0
      %p140 = por %p138, %p139
      %p141 = scmp.ne.s32.totalorder %s133, %s135
      %p142 = scmp.eq.s32.totalorder %s34, 5
      %p143 = por %p141, %p142
      %p144 = scmp.ne.s32.totalorder %s135, %s136
      %p145 = scmp.eq.s32.totalorder %s34, 0
      %p146 = por %p144, %p145
      %p147 = scmp.ne.s32.totalorder %s135, %s136
      %p148 = scmp.eq.s32.totalorder %s35, 5
      %p149 = por %p147, %p148
      %p151 = scmp.ne.s32.totalorder %s136, %s150
      %p152 = scmp.eq.s32.totalorder %s35, 0
      %p153 = por %p151, %p152
      %s155 = sadd.s32 %s154, 1
      %p158 = scmp.eq.s32.totalorder %s29, 5
      %p159 = scmp.ne.s32.totalorder %s154, %s156
      %p160 = scmp.eq.s32.totalorder %s29, 0
      %p161 = por %p159, %p160
      %p162 = scmp.ne.s32.totalorder %s154, %s156
      %p163 = scmp.eq.s32.totalorder %s34, 5
      %p164 = por %p162, %p163
      %p165 = scmp.ne.s32.totalorder %s156, %s157
      %p166 = scmp.eq.s32.totalorder %s34, 0
      %p167 = por %p165, %p166
      %p168 = scmp.ne.s32.totalorder %s156, %s157
      %p169 = scmp.eq.s32.totalorder %s35, 5
      %p170 = por %p168, %p169
      %p172 = scmp.ne.s32.totalorder %s157, %s171
      %p173 = scmp.eq.s32.totalorder %s35, 0
      %p174 = por %p172, %p173
      %s175 = sshra.s32 %s37, 7
      %s176 = sand.u32 %s37, 127
      %s177 = sadd.s32 %s175, %s36
      %s178 = smul.u32 %s177, 128
      %s179 = sshra.s32 %s37, 7
      %s180 = sand.u32 %s37, 127
      %s181 = sadd.s32 %s178, %s180
      %s182 = sld [smem:[#allocation6 + %s181]]
      %s183 = sshra.s32 %s44, 7
      %s184 = sand.u32 %s44, 127
      %s185 = sadd.s32 %s183, %s48
      %s186 = smul.u32 %s185, 128
      %s187 = sshra.s32 %s44, 7
      %s188 = sand.u32 %s44, 127
      %s189 = sadd.s32 %s186, %s188
      %s190 = sld [smem:[#allocation6 + %s189]]
      %s191 = ssub.s32 %s182, %s190
      %p192 = scmp.eq.s32.totalorder %s191, 0
      %s194 = sadd.s32 %s193, 1
      %s195 = scalar_select %p192, %s193, %s194
      %p198 = pneg %p192
      %p199 = scmp.eq.s32.totalorder %s29, 5
      %p200 = por %p198, %p199
      %p201 = scmp.ne.s32.totalorder %s193, %s196
      %p202 = scmp.eq.s32.totalorder %s29, 0
      %p203 = por %p201, %p202
      %p204 = scmp.ne.s32.totalorder %s193, %s196
      %p205 = scmp.eq.s32.totalorder %s34, 5
      %p206 = por %p204, %p205
      %p207 = scmp.ne.s32.totalorder %s196, %s197
      %p208 = scmp.eq.s32.totalorder %s34, 0
      %p209 = por %p207, %p208
      %p210 = scmp.ne.s32.totalorder %s196, %s197
      %p211 = scmp.eq.s32.totalorder %s35, 5
      %p212 = por %p210, %p211
      %p214 = scmp.ne.s32.totalorder %s197, %s213
      %p215 = scmp.eq.s32.totalorder %s35, 0
      %p216 = por %p214, %p215
      %s217 = sshra.s32 %s37, 7
      %s218 = sand.u32 %s37, 127
      %s219 = sadd.s32 %s217, %s36
      %s220 = smul.u32 %s219, 128
      %s221 = sshra.s32 %s37, 7
      %s222 = sand.u32 %s37, 127
      %s223 = sadd.s32 %s220, %s222
      %s224 = sld [smem:[#allocation6 + %s223]]
      %s225 = sshra.s32 %s44, 7
      %s226 = sand.u32 %s44, 127
      %s227 = sadd.s32 %s225, %s48
      %s228 = smul.u32 %s227, 128
      %s229 = sshra.s32 %s44, 7
      %s230 = sand.u32 %s44, 127
      %s231 = sadd.s32 %s228, %s230
      %s232 = sld [smem:[#allocation6 + %s231]]
      %s233 = ssub.s32 %s224, %s232
      %p234 = scmp.eq.s32.totalorder %s233, 0
      %s236 = sadd.s32 %s235, 1
      %s237 = scalar_select %p234, %s235, %s236
      %p240 = pneg %p234
      %p241 = scmp.eq.s32.totalorder %s29, 5
      %p242 = por %p240, %p241
      %p243 = scmp.ne.s32.totalorder %s235, %s238
      %p244 = scmp.eq.s32.totalorder %s29, 0
      %p245 = por %p243, %p244
      %p246 = scmp.ne.s32.totalorder %s235, %s238
      %p247 = scmp.eq.s32.totalorder %s34, 5
      %p248 = por %p246, %p247
      %p249 = scmp.ne.s32.totalorder %s238, %s239
      %p250 = scmp.eq.s32.totalorder %s34, 0
      %p251 = por %p249, %p250
      %p252 = scmp.ne.s32.totalorder %s238, %s239
      %p253 = scmp.eq.s32.totalorder %s35, 5
      %p254 = por %p252, %p253
      %p256 = scmp.ne.s32.totalorder %s239, %s255
      %p257 = scmp.eq.s32.totalorder %s35, 0
      %p258 = por %p256, %p257
      %p259 = scmp.le.s32.totalorder 1, %s29
      %p260 = scmp.lt.s32.totalorder %s29, 7
      %p261 = pnand %p259, %p260
      %p262 = pneg %p261
      // Predicated region
      $region9: #{tpu_custom_call.1} parent=5 // pred_check
        _
      $region10: #{tpu_custom_call.1} parent=5 // pred_check_branch
        %264 = sbr.rel (%p261) target = $region12
      $region11: #{tpu_custom_call.1} parent=5 // pred_region
        %s265 = ssub.s32 %s29, 1
        // Predicated region
        $region13: #{tpu_custom_call.1} parent=11 // pred_check
          %p266 = pneg %p146
        $region14: #{tpu_custom_call.1} parent=11 // pred_check_branch
          %268 = sbr.rel (%p266) target = $region16
        $region15: #{tpu_custom_call.1} parent=11 // pred_region
          _
        $region16: #{tpu_custom_call.1} parent=11 // pred_fallthru
          _
        // Predicated region
        $region17: #{tpu_custom_call.1} parent=11 // pred_check
          %p269 = pneg %p167
        $region18: #{tpu_custom_call.1} parent=11 // pred_check_branch
          %271 = sbr.rel (%p269) target = $region20
        $region19: #{tpu_custom_call.1} parent=11 // pred_region
          _
        $region20: #{tpu_custom_call.1} parent=11 // pred_fallthru
          _
      $region12: #{tpu_custom_call.1} parent=5 // pred_fallthru
        _
      %p272 = scmp.lt.s32.totalorder %s29, 6
      // Predicated region
      $region21: #{tpu_custom_call.1} parent=5 // pred_check
        %p273 = pneg %p272
      $region22: #{tpu_custom_call.1} parent=5 // pred_check_branch
        %275 = sbr.rel (%p273) target = $region24
      $region23: #{tpu_custom_call.1} parent=5 // pred_region
        // Predicated region
        $region25: #{tpu_custom_call.1} parent=23 // pred_check
          %p276 = pneg %p77
        $region26: #{tpu_custom_call.1} parent=23 // pred_check_branch
          %278 = sbr.rel (%p276) target = $region28
        $region27: #{tpu_custom_call.1} parent=23 // pred_region
          %s279 = sshra.s32 %s37, 7
          %s280 = sand.u32 %s37, 127
          %s281 = sadd.s32 %s279, %s36
          %s282 = smul.u32 %s281, 128
          %s283 = sshra.s32 %s37, 7
          %s284 = sand.u32 %s37, 127
          %s285 = sadd.s32 %s282, %s284
          %s286 = sld [smem:[#allocation6 + %s285]]
          %s287 = smul.u32 16, %s286
          %p288 = scmp.lt.s32.totalorder %s287, 47
          %s289 = scalar_select %p288, %s287, 47
          %s290 = smul.addr %s289, 4
          %s291 = scalar_lea.vmem %s3, %s290
          %s292 = sshra.s32 %s37, 7
          %s293 = sand.u32 %s37, 127
          %s294 = sadd.s32 %s292, %s36
          %s295 = smul.u32 %s294, 128
          %s296 = sshra.s32 %s37, 7
          %s297 = sand.u32 %s37, 127
          %s298 = sadd.s32 %s295, %s297
          %s299 = sld [smem:[#allocation6 + %s298]]
          %s300 = smul.u32 16, %s299
        $region28: #{tpu_custom_call.1} parent=23 // pred_fallthru
          _
        // Predicated region
        $region29: #{tpu_custom_call.1} parent=23 // pred_check
          %p301 = pneg %p119
        $region30: #{tpu_custom_call.1} parent=23 // pred_check_branch
          %303 = sbr.rel (%p301) target = $region32
        $region31: #{tpu_custom_call.1} parent=23 // pred_region
          %s304 = sand.u32 %s109, 1
          %s305 = sand.u32 %s109, 1
          %s306 = smul.addr %s305, 32
          %s307 = scalar_lea.vmem [#allocation9], %s306
          %s308 = sshra.s32 %s37, 7
          %s309 = sand.u32 %s37, 127
          %s310 = sadd.s32 %s308, %s36
          %s311 = smul.u32 %s310, 128
          %s312 = sshra.s32 %s37, 7
          %s313 = sand.u32 %s37, 127
          %s314 = sadd.s32 %s311, %s313
          %s315 = sld [smem:[#allocation7 + %s314]]
          %s316 = smul.addr %s315, 4
          %s317 = scalar_lea.vmem %s4, %s316
          // Predicated region
          $region33: #{tpu_custom_call.1} parent=31 // pred_check
            _
          $region34: #{tpu_custom_call.1} parent=31 // pred_check_branch
            %319 = sbr.rel (0) target = $region36
          $region35: #{tpu_custom_call.1} parent=31 // pred_region
            // Predicated region
            $region37: #{tpu_custom_call.1} parent=35 // pred_check
              _
            $region38: #{tpu_custom_call.1} parent=35 // pred_check_branch
              %321 = sbr.rel target = $region40
            $region39: #{tpu_custom_call.1} parent=35 // pred_region
              // Predicated region
              $region52: #{tpu_custom_call.1} parent=39 // pred_check
                _
              $region53: #{tpu_custom_call.1} parent=39 // pred_check_branch
                %351 = sbr.rel (0) target = $region55
              $region54: #{tpu_custom_call.1} parent=39 // pred_region
                loop: start=0, step=1, limit=1
                $region56: #{tpu_custom_call.1} parent=54 // loop_pre_header
                  _
                $region57: #{tpu_custom_call.1} parent=54 // loop_header
                  %s353 = sphi 0, %s357
                  %p354 = scmp.ge.s32.totalorder %s353, 1
                  %s358 = sphi %s317, %s317
                  %s359 = sphi %s307, %s307
                $region58: #{tpu_custom_call.1} parent=54 // loop_header_branch
                  %356 = sbr.rel (%p354) target = $region62
                $region59: #{tpu_custom_call.1} parent=54 // loop_body
                  _
                $region60: #{tpu_custom_call.1} parent=54 // loop_footer
                  %s357 = sadd.s32 1, %s353
                $region61: #{tpu_custom_call.1} parent=54 // loop_footer_branch
                  %352 = sbr.rel target = $region57
                $region62: #{tpu_custom_call.1} parent=54 // loop_exit
                  _
                %s361 = ssub.s32 16, 1
                loop: start=0, step=1, limit=1
                $region63: #{tpu_custom_call.1} parent=54 // loop_pre_header
                  _
                $region64: #{tpu_custom_call.1} parent=54 // loop_header
                  %s363 = sphi 0, %s367
                  %p364 = scmp.ge.s32.totalorder %s363, 1
                  %s368 = sphi %s317, %s317
                  %s369 = sphi %s307, %s307
                $region65: #{tpu_custom_call.1} parent=54 // loop_header_branch
                  %366 = sbr.rel (%p364) target = $region69
                $region66: #{tpu_custom_call.1} parent=54 // loop_body
                  %v370 = vld [vmem:[%s368] sm:%s361]
                  %371 = vst [vmem:[%s369] sm:%s361] %v370
                  %v372 = vld [vmem:[%s368 + $0xc] sm:%s361]
                  %373 = vst [vmem:[%s369 + $0x4] sm:%s361] %v372
                  %v374 = vld [vmem:[%s368 + $0x18] sm:%s361]
                  %375 = vst [vmem:[%s369 + $0x8] sm:%s361] %v374
                  %v376 = vld [vmem:[%s368 + $0x24] sm:%s361]
                  %377 = vst [vmem:[%s369 + $0xc] sm:%s361] %v376
                  %v378 = vld [vmem:[%s368 + $0x30] sm:%s361]
                  %379 = vst [vmem:[%s369 + $0x10] sm:%s361] %v378
                  %v380 = vld [vmem:[%s368 + $0x3c] sm:%s361]
                  %381 = vst [vmem:[%s369 + $0x14] sm:%s361] %v380
                  %v382 = vld [vmem:[%s368 + $0x48] sm:%s361]
                  %383 = vst [vmem:[%s369 + $0x18] sm:%s361] %v382
                  %v384 = vld [vmem:[%s368 + $0x54] sm:%s361]
                  %385 = vst [vmem:[%s369 + $0x1c] sm:%s361] %v384
                $region67: #{tpu_custom_call.1} parent=54 // loop_footer
                  %s367 = sadd.s32 1, %s363
                $region68: #{tpu_custom_call.1} parent=54 // loop_footer_branch
                  %362 = sbr.rel target = $region64
                $region69: #{tpu_custom_call.1} parent=54 // loop_exit
                  _
              $region55: #{tpu_custom_call.1} parent=39 // pred_fallthru
                _
            $region40: #{tpu_custom_call.1} parent=35 // pred_fallthru
              _
            // Predicated region
            $region41: #{tpu_custom_call.1} parent=35 // pred_check
              _
            $region42: #{tpu_custom_call.1} parent=35 // pred_check_branch
              %323 = sbr.rel (0) target = $region44
            $region43: #{tpu_custom_call.1} parent=35 // pred_region
              %s325 = ssub.s32 16, 1
              loop: start=0, step=1, limit=1
              $region45: #{tpu_custom_call.1} parent=43 // loop_pre_header
                _
              $region46: #{tpu_custom_call.1} parent=43 // loop_header
                %s327 = sphi 0, %s331
                %p328 = scmp.ge.s32.totalorder %s327, 1
                %s332 = sphi %s317, %s317
                %s333 = sphi %s307, %s307
              $region47: #{tpu_custom_call.1} parent=43 // loop_header_branch
                %330 = sbr.rel (%p328) target = $region51
              $region48: #{tpu_custom_call.1} parent=43 // loop_body
                %v334 = vld [vmem:[%s332] sm:%s325]
                %335 = vst [vmem:[%s333] sm:%s325] %v334
                %v336 = vld [vmem:[%s332 + $0xc] sm:%s325]
                %337 = vst [vmem:[%s333 + $0x4] sm:%s325] %v336
                %v338 = vld [vmem:[%s332 + $0x18] sm:%s325]
                %339 = vst [vmem:[%s333 + $0x8] sm:%s325] %v338
                %v340 = vld [vmem:[%s332 + $0x24] sm:%s325]
                %341 = vst [vmem:[%s333 + $0xc] sm:%s325] %v340
                %v342 = vld [vmem:[%s332 + $0x30] sm:%s325]
                %343 = vst [vmem:[%s333 + $0x10] sm:%s325] %v342
                %v344 = vld [vmem:[%s332 + $0x3c] sm:%s325]
                %345 = vst [vmem:[%s333 + $0x14] sm:%s325] %v344
                %v346 = vld [vmem:[%s332 + $0x48] sm:%s325]
                %347 = vst [vmem:[%s333 + $0x18] sm:%s325] %v346
                %v348 = vld [vmem:[%s332 + $0x54] sm:%s325]
                %349 = vst [vmem:[%s333 + $0x1c] sm:%s325] %v348
              $region49: #{tpu_custom_call.1} parent=43 // loop_footer
                %s331 = sadd.s32 1, %s327
              $region50: #{tpu_custom_call.1} parent=43 // loop_footer_branch
                %326 = sbr.rel target = $region46
              $region51: #{tpu_custom_call.1} parent=43 // loop_exit
                _
            $region44: #{tpu_custom_call.1} parent=35 // pred_fallthru
              _
          $region36: #{tpu_custom_call.1} parent=31 // pred_fallthru
            _
          %386 = vnop
        $region32: #{tpu_custom_call.1} parent=23 // pred_fallthru
          _
      $region24: #{tpu_custom_call.1} parent=5 // pred_fallthru
        _
      %p387 = scmp.le.s32.totalorder 1, %s29
      %p388 = scmp.lt.s32.totalorder %s29, 7
      %p389 = pnand %p387, %p388
      %p390 = pneg %p389
      // Predicated region
      $region70: #{tpu_custom_call.1} parent=5 // pred_check
        _
      $region71: #{tpu_custom_call.1} parent=5 // pred_check_branch
        %392 = sbr.rel (%p389) target = $region73
      $region72: #{tpu_custom_call.1} parent=5 // pred_region
        %s393 = ssub.s32 %s29, 1
        %s394 = sand.u32 %s112, 1
        %s395 = sand.u32 %s112, 1
        %s396 = smul.addr %s395, 32
        %s397 = scalar_lea.vmem [#allocation9], %s396
        // Predicated region
        $region74: #{tpu_custom_call.1} parent=72 // pred_check
          %p398 = pneg %p125
        $region75: #{tpu_custom_call.1} parent=72 // pred_check_branch
          %400 = sbr.rel (%p398) target = $region77
        $region76: #{tpu_custom_call.1} parent=72 // pred_region
          _
        $region77: #{tpu_custom_call.1} parent=72 // pred_fallthru
          _
        %s401 = sshra.s32 %s39, 7
        %s402 = sand.u32 %s39, 127
        %s403 = sadd.s32 %s401, %s38
        %s404 = smul.u32 %s403, 128
        %s405 = sshra.s32 %s39, 7
        %s406 = sand.u32 %s39, 127
        %s407 = sadd.s32 %s404, %s406
        %s408 = sld [smem:[#allocation6 + %s407]]
        %s409 = smul.u32 16, %s408
        %p410 = scmp.lt.s32.totalorder %s409, 47
        %s411 = scalar_select %p410, %s409, 47
        %s412 = smul.addr %s411, 4
        %s413 = scalar_lea.vmem %s3, %s412
        %p414 = pneg %p83
        %p415 = pneg %p80
        %s416 = sand.u32 %s112, 1
        %s417 = sand.u32 %s112, 1
        %s418 = smul.addr %s417, 32
        %s419 = scalar_lea.vmem [#allocation9], %s418
        %p420 = pneg %p125
        %p421 = pneg %p122
        %p422 = pneg %p146
        %p423 = pneg %p143
        %p424 = pneg %p167
        %p425 = pneg %p164
        %p426 = pneg %p209
        %p427 = pneg %p206
        %s428 = sshra.s32 %s39, 7
        %s429 = sand.u32 %s39, 127
        %s430 = sadd.s32 %s428, %s38
        %s431 = smul.u32 %s430, 128
        %s432 = sshra.s32 %s39, 7
        %s433 = sand.u32 %s39, 127
        %s434 = sadd.s32 %s431, %s433
        %s435 = sld [smem:[#allocation6 + %s434]]
        %s436 = smul.u32 16, %s435
        %p437 = scmp.lt.s32.totalorder %s436, 47
        %s438 = scalar_select %p437, %s436, 47
        %s439 = smul.addr %s438, 8
        %s440 = scalar_lea.vmem %s7, %s439
        %p441 = pneg %p251
        %p442 = pneg %p248
        %s443 = sshra.s32 %s39, 7
        %s444 = sand.u32 %s39, 127
        %s445 = sadd.s32 %s443, %s38
        %s446 = smul.u32 %s445, 128
        %s447 = sshra.s32 %s39, 7
        %s448 = sand.u32 %s39, 127
        %s449 = sadd.s32 %s446, %s448
        %s450 = sld [smem:[#allocation6 + %s449]]
        %s451 = smul.u32 16, %s450
        %p452 = scmp.lt.s32.totalorder %s451, 47
        %s453 = scalar_select %p452, %s451, 47
        %s454 = smul.addr %s453, 8
        %s455 = scalar_lea.vmem %s8, %s454
        %s456 = sshra.s32 %s39, 7
        %s457 = sand.u32 %s39, 127
        %s458 = sadd.s32 %s456, %s38
        %s459 = smul.u32 %s458, 128
        %s460 = sshra.s32 %s39, 7
        %s461 = sand.u32 %s39, 127
        %s462 = sadd.s32 %s459, %s461
        %s463 = sld [smem:[#allocation6 + %s462]]
        %s464 = smul.u32 16, %s463
        %p465 = scmp.lt.s32.totalorder %s464, 47
        %s466 = scalar_select %p465, %s464, 47
        %s467 = smul.addr %s466, 4
        %s468 = scalar_lea.vmem %s3, %s467
        %s469 = sshra.s32 %s39, 7
        %s470 = sand.u32 %s39, 127
        %s471 = sadd.s32 %s469, %s38
        %s472 = smul.u32 %s471, 128
        %s473 = sshra.s32 %s39, 7
        %s474 = sand.u32 %s39, 127
        %s475 = sadd.s32 %s472, %s474
        %s476 = sld [smem:[#allocation6 + %s475]]
        %s477 = smul.u32 16, %s476
        %s478 = sshra.s32 %s39, 7
        %s479 = sand.u32 %s39, 127
        %s480 = sadd.s32 %s478, %s38
        %s481 = smul.u32 %s480, 128
        %s482 = sshra.s32 %s39, 7
        %s483 = sand.u32 %s39, 127
        %s484 = sadd.s32 %s481, %s483
        %s485 = sld [smem:[#allocation7 + %s484]]
        %s486 = sshra.s32 %s39, 7
        %s487 = sand.u32 %s39, 127
        %s488 = sadd.s32 %s486, %s38
        %s489 = smul.u32 %s488, 128
        %s490 = sshra.s32 %s39, 7
        %s491 = sand.u32 %s39, 127
        %s492 = sadd.s32 %s489, %s491
        %s493 = sld [smem:[#allocation6 + %s492]]
        %s494 = smul.u32 16, %s493
        %p495 = scmp.lt.s32.totalorder %s494, 47
        %s496 = scalar_select %p495, %s494, 47
        %s497 = smul.addr %s496, 8
        %s498 = scalar_lea.vmem %s7, %s497
        %s499 = sshra.s32 %s39, 7
        %s500 = sand.u32 %s39, 127
        %s501 = sadd.s32 %s499, %s38
        %s502 = smul.u32 %s501, 128
        %s503 = sshra.s32 %s39, 7
        %s504 = sand.u32 %s39, 127
        %s505 = sadd.s32 %s502, %s504
        %s506 = sld [smem:[#allocation6 + %s505]]
        %s507 = smul.u32 16, %s506
        %s508 = sshra.s32 %s39, 7
        %s509 = sand.u32 %s39, 127
        %s510 = sadd.s32 %s508, %s38
        %s511 = smul.u32 %s510, 128
        %s512 = sshra.s32 %s39, 7
        %s513 = sand.u32 %s39, 127
        %s514 = sadd.s32 %s511, %s513
        %s515 = sld [smem:[#allocation6 + %s514]]
        %s516 = smul.u32 16, %s515
        %p517 = scmp.lt.s32.totalorder %s516, 47
        %s518 = scalar_select %p517, %s516, 47
        %s519 = smul.addr %s518, 8
        %s520 = scalar_lea.vmem %s8, %s519
        %s521 = sshra.s32 %s39, 7
        %s522 = sand.u32 %s39, 127
        %s523 = sadd.s32 %s521, %s38
        %s524 = smul.u32 %s523, 128
        %s525 = sshra.s32 %s39, 7
        %s526 = sand.u32 %s39, 127
        %s527 = sadd.s32 %s524, %s526
        %s528 = sld [smem:[#allocation6 + %s527]]
        %s529 = smul.u32 16, %s528
        %s531 = sshra.s32 %s39, 7
        %s532 = sand.u32 %s39, 127
        %s533 = sadd.s32 %s531, %s38
        %s534 = smul.u32 %s533, 128
        %s535 = sshra.s32 %s39, 7
        %s536 = sand.u32 %s39, 127
        %s537 = sadd.s32 %s534, %s536
        %s538 = sld [smem:[#allocation6 + %s537]]
        %s539 = sld [smem:[#allocation7 + %s537]]
        %s540 = sld [smem:[#allocation8 + %s537]]
        %p541 = scmp.eq.s32.totalorder %s539, 0
        // Predicated region
        $region78: #{tpu_custom_call.1} parent=72 // pred_check
          %p542 = pneg %p541
        $region79: #{tpu_custom_call.1} parent=72 // pred_check_branch
          %544 = sbr.rel (%p542) target = $region81
        $region80: #{tpu_custom_call.1} parent=72 // pred_region
          %v545 = vld [vmem:[%s468] sm:$0xf]
          %v546 = vld [vmem:[%s468 + $0x4] sm:$0xf]
          %v547 = vld [vmem:[%s468 + $0x8] sm:$0xf]
          %v548 = vld [vmem:[%s468 + $0xc] sm:$0xf]
          %v549 = vld [vmem:[%s468 + $0x10] sm:$0xf]
          %v550 = vld [vmem:[%s468 + $0x14] sm:$0xf]
          %v551 = vld [vmem:[%s468 + $0x18] sm:$0xf]
          %v552 = vld [vmem:[%s468 + $0x1c] sm:$0xf]
          %v553 = vld [vmem:[%s468 + $0x20] sm:$0xf]
          %v554 = vld [vmem:[%s468 + $0x24] sm:$0xf]
          %v555 = vld [vmem:[%s468 + $0x28] sm:$0xf]
          %v556 = vld [vmem:[%s468 + $0x2c] sm:$0xf]
          %v557 = vld [vmem:[%s468 + $0x30] sm:$0xf]
          %v558 = vld [vmem:[%s468 + $0x34] sm:$0xf]
          %v559 = vld [vmem:[%s468 + $0x38] sm:$0xf]
          %v560 = vld [vmem:[%s468 + $0x3c] sm:$0xf]
          %v561 = vld [vmem:[%s5] sm:$0xf]
          %v562 = vld [vmem:[%s5 + $0x4] sm:$0xf]
          %v563 = vld [vmem:[%s5 + $0x8] sm:$0xf]
          %v564 = vld [vmem:[%s5 + $0xc] sm:$0xf]
          %v565 = vld [vmem:[%s5 + $0x10] sm:$0xf]
          %v566 = vld [vmem:[%s5 + $0x14] sm:$0xf]
          %v567 = vld [vmem:[%s5 + $0x18] sm:$0xf]
          %v568 = vld [vmem:[%s5 + $0x1c] sm:$0xf]
          %v569 = vld [vmem:[%s6] sm:$0x1]
          %v571 = vlaneseq
          %v572 = vshrl.u32 %v571, 7
          %v573 = vsub.s32 0, %v572
          %v574 = vrot.slane %v569, %v573
          %v592 = vunpack.c.l.b16 %v545
          %v593 = vunpack.c.l.b16 %v546
          %v594 = vunpack.c.l.b16 %v547
          %v595 = vunpack.c.l.b16 %v548
          %v596 = vunpack.c.l.b16 %v549
          %v597 = vunpack.c.l.b16 %v550
          %v598 = vunpack.c.l.b16 %v551
          %v599 = vunpack.c.l.b16 %v552
          %v600 = vunpack.c.l.b16 %v553
          %v601 = vunpack.c.l.b16 %v554
          %v602 = vunpack.c.l.b16 %v555
          %v603 = vunpack.c.l.b16 %v556
          %v604 = vunpack.c.l.b16 %v557
          %v605 = vunpack.c.l.b16 %v558
          %v606 = vunpack.c.l.b16 %v559
          %v607 = vunpack.c.l.b16 %v560
          %v608 = vpack.c.b16 %v593, %v592
          %v609 = vpack.c.b16 %v595, %v594
          %v610 = vpack.c.b16 %v597, %v596
          %v611 = vpack.c.b16 %v599, %v598
          %v612 = vpack.c.b16 %v601, %v600
          %v613 = vpack.c.b16 %v603, %v602
          %v614 = vpack.c.b16 %v605, %v604
          %v615 = vpack.c.b16 %v607, %v606
          %v624 = vunpack.c.l.b16 %v561
          %v625 = vunpack.c.l.b16 %v562
          %v626 = vunpack.c.l.b16 %v563
          %v627 = vunpack.c.l.b16 %v564
          %v628 = vunpack.c.l.b16 %v565
          %v629 = vunpack.c.l.b16 %v566
          %v630 = vunpack.c.l.b16 %v567
          %v631 = vunpack.c.l.b16 %v568
          %v632 = vpack.c.b16 %v625, %v624
          %v633 = vpack.c.b16 %v627, %v626
          %v634 = vpack.c.b16 %v629, %v628
          %v635 = vpack.c.b16 %v631, %v630
          %vm640 = vcmask 523264
          %v642 = vsel %vm640, %v608, 0
          %v645 = vsel %vm640, %v609, 0
          %v648 = vsel %vm640, %v610, 0
          %v651 = vsel %vm640, %v611, 0
          %v654 = vsel %vm640, %v612, 0
          %v657 = vsel %vm640, %v613, 0
          %v660 = vsel %vm640, %v614, 0
          %v663 = vsel %vm640, %v615, 0
          %665 = vmatprep.subr.bf16.mxu0 0
          %666 = vmatpush1.bf16.msra.mxu0 0
          %667 = vmatprep.subr.bf16.mxu0 0
          %668 = vmatpush1.bf16.msra.mxu0 0
          %669 = vmatprep.subr.bf16.mxu0 0
          %670 = vmatpush1.bf16.msra.mxu0 0
          %671 = vmatprep.subr.bf16.mxu0 0
          %672 = vmatpush1.bf16.msra.mxu0 0
          %673 = vmatprep.subr.bf16.mxu0 0
          %674 = vmatpush1.bf16.msra.mxu0 %v635
          %675 = vmatprep.subr.bf16.mxu0 0
          %676 = vmatpush1.bf16.msra.mxu0 %v634
          %677 = vmatprep.subr.bf16.mxu0 0
          %678 = vmatpush1.bf16.msra.mxu0 %v633
          %679 = vmatprep.subr.bf16.mxu0 0
          %680 = vmatpush1.bf16.msra.mxu0 %v632
          %681 = vmatprep.subr.bf16.mxu0 0
          %682 = vmatpush2.bf16.msra.mxu0 0
          %683 = vmatprep.subr.bf16.mxu0 0
          %684 = vmatpush2.bf16.msra.mxu0 0
          %685 = vmatprep.subr.bf16.mxu0 0
          %686 = vmatpush2.bf16.msra.mxu0 0
          %687 = vmatprep.subr.bf16.mxu0 0
          %688 = vmatpush2.bf16.msra.mxu0 0
          %689 = vmatprep.subr.bf16.mxu0 0
          %690 = vmatpush2.bf16.msra.mxu0 0
          %691 = vmatprep.subr.bf16.mxu0 0
          %692 = vmatpush2.bf16.msra.mxu0 0
          %693 = vmatprep.subr.bf16.mxu0 0
          %694 = vmatpush2.bf16.msra.mxu0 0
          %695 = vmatprep.subr.bf16.mxu0 0
          %696 = vmatpush2.bf16.msra.mxu0 0
          %697 = vmatprep.mubr.bf16.mxu0 0
          %698 = vmatmul.mubr.bf16.gmra.mxu0 %v642
          %v699 = vpop.f32.mrf.mxu0
          %v700 = vadd.f32 %v574, %v699
          %v701 = vpop.f32.mrf.mxu0
          %v702 = vpop.f32.mrf.mxu0
          %v703 = vadd.f32 %v574, %v702
          %v704 = vpop.f32.mrf.mxu0
          %705 = vmatprep.mubr.bf16.mxu0 0
          %706 = vmatmul.mubr.bf16.gmra.mxu0 %v645
          %v707 = vpop.f32.mrf.mxu0
          %v708 = vadd.f32 %v574, %v707
          %v709 = vpop.f32.mrf.mxu0
          %v710 = vpop.f32.mrf.mxu0
          %v711 = vadd.f32 %v574, %v710
          %v712 = vpop.f32.mrf.mxu0
          %713 = vmatprep.mubr.bf16.mxu0 0
          %714 = vmatmul.mubr.bf16.gmra.mxu0 %v648
          %v715 = vpop.f32.mrf.mxu0
          %v716 = vadd.f32 %v574, %v715
          %v717 = vpop.f32.mrf.mxu0
          %v718 = vpop.f32.mrf.mxu0
          %v719 = vadd.f32 %v574, %v718
          %v720 = vpop.f32.mrf.mxu0
          %721 = vmatprep.mubr.bf16.mxu0 0
          %722 = vmatmul.mubr.bf16.gmra.mxu0 %v651
          %v723 = vpop.f32.mrf.mxu0
          %v724 = vadd.f32 %v574, %v723
          %v725 = vpop.f32.mrf.mxu0
          %v726 = vpop.f32.mrf.mxu0
          %v727 = vadd.f32 %v574, %v726
          %v728 = vpop.f32.mrf.mxu0
          %729 = vmatprep.mubr.bf16.mxu0 0
          %730 = vmatmul.mubr.bf16.gmra.mxu0 %v654
          %v731 = vpop.f32.mrf.mxu0
          %v732 = vadd.f32 %v574, %v731
          %v733 = vpop.f32.mrf.mxu0
          %v734 = vpop.f32.mrf.mxu0
          %v735 = vadd.f32 %v574, %v734
          %v736 = vpop.f32.mrf.mxu0
          %737 = vmatprep.mubr.bf16.mxu0 0
          %738 = vmatmul.mubr.bf16.gmra.mxu0 %v657
          %v739 = vpop.f32.mrf.mxu0
          %v740 = vadd.f32 %v574, %v739
          %v741 = vpop.f32.mrf.mxu0
          %v742 = vpop.f32.mrf.mxu0
          %v743 = vadd.f32 %v574, %v742
          %v744 = vpop.f32.mrf.mxu0
          %745 = vmatprep.mubr.bf16.mxu0 0
          %746 = vmatmul.mubr.bf16.gmra.mxu0 %v660
          %v747 = vpop.f32.mrf.mxu0
          %v748 = vadd.f32 %v574, %v747
          %v749 = vpop.f32.mrf.mxu0
          %v750 = vpop.f32.mrf.mxu0
          %v751 = vadd.f32 %v574, %v750
          %v752 = vpop.f32.mrf.mxu0
          %753 = vmatprep.mubr.bf16.mxu0 0
          %754 = vmatmul.mubr.bf16.gmra.mxu0 %v663
          %v755 = vpop.f32.mrf.mxu0
          %v756 = vadd.f32 %v574, %v755
          %v757 = vpop.f32.mrf.mxu0
          %v758 = vpop.f32.mrf.mxu0
          %v759 = vadd.f32 %v574, %v758
          %v760 = vpop.f32.mrf.mxu0
          %761 = vdwg.mxu0
          %v762 = vpack.c.bf16 %v703, %v700
          %v763 = vpack.c.bf16 %v711, %v708
          %v764 = vpack.c.bf16 %v719, %v716
          %v765 = vpack.c.bf16 %v727, %v724
          %v766 = vpack.c.bf16 %v735, %v732
          %v767 = vpack.c.bf16 %v743, %v740
          %v768 = vpack.c.bf16 %v751, %v748
          %v769 = vpack.c.bf16 %v759, %v756
          %v778 = vunpack.c.l.b16 %v762
          %v779 = vunpack.c.h.b16 %v762
          %v780 = vunpack.c.l.b16 %v763
          %v781 = vunpack.c.h.b16 %v763
          %v782 = vunpack.c.l.b16 %v764
          %v783 = vunpack.c.h.b16 %v764
          %v784 = vunpack.c.l.b16 %v765
          %v785 = vunpack.c.h.b16 %v765
          %v786 = vunpack.c.l.b16 %v766
          %v787 = vunpack.c.h.b16 %v766
          %v788 = vunpack.c.l.b16 %v767
          %v789 = vunpack.c.h.b16 %v767
          %v790 = vunpack.c.l.b16 %v768
          %v791 = vunpack.c.h.b16 %v768
          %v792 = vunpack.c.l.b16 %v769
          %v793 = vunpack.c.h.b16 %v769
          %v794 = vpack.c.b16 %v778, %v778
          %v795 = vpack.c.b16 %v779, %v779
          %v796 = vpack.c.b16 %v780, %v780
          %v797 = vpack.c.b16 %v781, %v781
          %v798 = vpack.c.b16 %v782, %v782
          %v799 = vpack.c.b16 %v783, %v783
          %v800 = vpack.c.b16 %v784, %v784
          %v801 = vpack.c.b16 %v785, %v785
          %v802 = vpack.c.b16 %v786, %v786
          %v803 = vpack.c.b16 %v787, %v787
          %v804 = vpack.c.b16 %v788, %v788
          %v805 = vpack.c.b16 %v789, %v789
          %v806 = vpack.c.b16 %v790, %v790
          %v807 = vpack.c.b16 %v791, %v791
          %v808 = vpack.c.b16 %v792, %v792
          %v809 = vpack.c.b16 %v793, %v793
          %vm826 = vcmask 519168
          %827 = vst.msk [vmem:[#allocation2] sm:$0xf] %vm826, %v794
          %828 = vst.msk [vmem:[#allocation2 + $0x4] sm:$0xf] %vm826, %v795
          %829 = vst.msk [vmem:[#allocation2 + $0x8] sm:$0xf] %vm826, %v796
          %830 = vst.msk [vmem:[#allocation2 + $0xc] sm:$0xf] %vm826, %v797
          %831 = vst.msk [vmem:[#allocation2 + $0x10] sm:$0xf] %vm826, %v798
          %832 = vst.msk [vmem:[#allocation2 + $0x14] sm:$0xf] %vm826, %v799
          %833 = vst.msk [vmem:[#allocation2 + $0x18] sm:$0xf] %vm826, %v800
          %834 = vst.msk [vmem:[#allocation2 + $0x1c] sm:$0xf] %vm826, %v801
          %835 = vst.msk [vmem:[#allocation2 + $0x20] sm:$0xf] %vm826, %v802
          %836 = vst.msk [vmem:[#allocation2 + $0x24] sm:$0xf] %vm826, %v803
          %837 = vst.msk [vmem:[#allocation2 + $0x28] sm:$0xf] %vm826, %v804
          %838 = vst.msk [vmem:[#allocation2 + $0x2c] sm:$0xf] %vm826, %v805
          %839 = vst.msk [vmem:[#allocation2 + $0x30] sm:$0xf] %vm826, %v806
          %840 = vst.msk [vmem:[#allocation2 + $0x34] sm:$0xf] %vm826, %v807
          %841 = vst.msk [vmem:[#allocation2 + $0x38] sm:$0xf] %vm826, %v808
          %842 = vst.msk [vmem:[#allocation2 + $0x3c] sm:$0xf] %vm826, %v809
          %vm843 = vcmask 64512
          %844 = vst.msk [vmem:[#allocation3] sm:$0xff] %vm843, -inf
          %845 = vst.msk [vmem:[#allocation3 + $0x8] sm:$0xff] %vm843, -inf
          %846 = vst.msk [vmem:[#allocation3 + $0x10] sm:$0xff] %vm843, -inf
          %847 = vst.msk [vmem:[#allocation3 + $0x18] sm:$0xff] %vm843, -inf
          %848 = vst.msk [vmem:[#allocation3 + $0x20] sm:$0xff] %vm843, -inf
          %849 = vst.msk [vmem:[#allocation3 + $0x28] sm:$0xff] %vm843, -inf
          %850 = vst.msk [vmem:[#allocation3 + $0x30] sm:$0xff] %vm843, -inf
          %851 = vst.msk [vmem:[#allocation3 + $0x38] sm:$0xff] %vm843, -inf
          %852 = vst.msk [vmem:[#allocation3 + $0x40] sm:$0xff] %vm843, -inf
          %853 = vst.msk [vmem:[#allocation3 + $0x48] sm:$0xff] %vm843, -inf
          %854 = vst.msk [vmem:[#allocation3 + $0x50] sm:$0xff] %vm843, -inf
          %855 = vst.msk [vmem:[#allocation3 + $0x58] sm:$0xff] %vm843, -inf
          %856 = vst.msk [vmem:[#allocation3 + $0x60] sm:$0xff] %vm843, -inf
          %857 = vst.msk [vmem:[#allocation3 + $0x68] sm:$0xff] %vm843, -inf
          %858 = vst.msk [vmem:[#allocation3 + $0x70] sm:$0xff] %vm843, -inf
          %859 = vst.msk [vmem:[#allocation3 + $0x78] sm:$0xff] %vm843, -inf
          %v860 = vlaneseq
          %v861 = vand.u32 %v860, 127
          %862 = vst.msk [vmem:[#allocation4] sm:$0xff] %vm843, %v861
          %863 = vst.msk [vmem:[#allocation4 + $0x8] sm:$0xff] %vm843, %v861
          %864 = vst.msk [vmem:[#allocation4 + $0x10] sm:$0xff] %vm843, %v861
          %865 = vst.msk [vmem:[#allocation4 + $0x18] sm:$0xff] %vm843, %v861
          %866 = vst.msk [vmem:[#allocation4 + $0x20] sm:$0xff] %vm843, %v861
          %867 = vst.msk [vmem:[#allocation4 + $0x28] sm:$0xff] %vm843, %v861
          %868 = vst.msk [vmem:[#allocation4 + $0x30] sm:$0xff] %vm843, %v861
          %869 = vst.msk [vmem:[#allocation4 + $0x38] sm:$0xff] %vm843, %v861
          %870 = vst.msk [vmem:[#allocation4 + $0x40] sm:$0xff] %vm843, %v861
          %871 = vst.msk [vmem:[#allocation4 + $0x48] sm:$0xff] %vm843, %v861
          %872 = vst.msk [vmem:[#allocation4 + $0x50] sm:$0xff] %vm843, %v861
          %873 = vst.msk [vmem:[#allocation4 + $0x58] sm:$0xff] %vm843, %v861
          %874 = vst.msk [vmem:[#allocation4 + $0x60] sm:$0xff] %vm843, %v861
          %875 = vst.msk [vmem:[#allocation4 + $0x68] sm:$0xff] %vm843, %v861
          %876 = vst.msk [vmem:[#allocation4 + $0x70] sm:$0xff] %vm843, %v861
          %877 = vst.msk [vmem:[#allocation4 + $0x78] sm:$0xff] %vm843, %v861
        $region81: #{tpu_custom_call.1} parent=72 // pred_fallthru
          _
        %p878 = scmp.eq.s32.totalorder %s540, 1
        %p879 = scmp.eq.s32.totalorder %s540, 3
        %p880 = por %p878, %p879
        // Predicated region
        $region82: #{tpu_custom_call.1} parent=72 // pred_check
          %p881 = pneg %p880
        $region83: #{tpu_custom_call.1} parent=72 // pred_check_branch
          %883 = sbr.rel (%p881) target = $region85
        $region84: #{tpu_custom_call.1} parent=72 // pred_region
          %v884 = vld [vmem:[#allocation2] sm:$0xf]
          %v885 = vld [vmem:[#allocation2 + $0x4] sm:$0xf]
          %v886 = vld [vmem:[#allocation2 + $0x8] sm:$0xf]
          %v887 = vld [vmem:[#allocation2 + $0xc] sm:$0xf]
          %v888 = vld [vmem:[#allocation2 + $0x10] sm:$0xf]
          %v889 = vld [vmem:[#allocation2 + $0x14] sm:$0xf]
          %v890 = vld [vmem:[#allocation2 + $0x18] sm:$0xf]
          %v891 = vld [vmem:[#allocation2 + $0x1c] sm:$0xf]
          %v892 = vld [vmem:[#allocation2 + $0x20] sm:$0xf]
          %v893 = vld [vmem:[#allocation2 + $0x24] sm:$0xf]
          %v894 = vld [vmem:[#allocation2 + $0x28] sm:$0xf]
          %v895 = vld [vmem:[#allocation2 + $0x2c] sm:$0xf]
          %v896 = vld [vmem:[#allocation2 + $0x30] sm:$0xf]
          %v897 = vld [vmem:[#allocation2 + $0x34] sm:$0xf]
          %v898 = vld [vmem:[#allocation2 + $0x38] sm:$0xf]
          %v899 = vld [vmem:[#allocation2 + $0x3c] sm:$0xf]
          %v900 = vld [vmem:[%s397] sm:$0xf]
          %v901 = vld [vmem:[%s397 + $0x4] sm:$0xf]
          %v902 = vld [vmem:[%s397 + $0x8] sm:$0xf]
          %v903 = vld [vmem:[%s397 + $0xc] sm:$0xf]
          %v904 = vld [vmem:[%s397 + $0x10] sm:$0xf]
          %v905 = vld [vmem:[%s397 + $0x14] sm:$0xf]
          %v906 = vld [vmem:[%s397 + $0x18] sm:$0xf]
          %v907 = vld [vmem:[%s397 + $0x1c] sm:$0xf]
          %v924 = vunpack.c.l.b16 %v884
          %v925 = vunpack.c.l.b16 %v885
          %v926 = vunpack.c.l.b16 %v886
          %v927 = vunpack.c.l.b16 %v887
          %v928 = vunpack.c.l.b16 %v888
          %v929 = vunpack.c.l.b16 %v889
          %v930 = vunpack.c.l.b16 %v890
          %v931 = vunpack.c.l.b16 %v891
          %v932 = vunpack.c.l.b16 %v892
          %v933 = vunpack.c.l.b16 %v893
          %v934 = vunpack.c.l.b16 %v894
          %v935 = vunpack.c.l.b16 %v895
          %v936 = vunpack.c.l.b16 %v896
          %v937 = vunpack.c.l.b16 %v897
          %v938 = vunpack.c.l.b16 %v898
          %v939 = vunpack.c.l.b16 %v899
          %v940 = vpack.c.b16 %v925, %v924
          %v941 = vpack.c.b16 %v927, %v926
          %v942 = vpack.c.b16 %v929, %v928
          %v943 = vpack.c.b16 %v931, %v930
          %v944 = vpack.c.b16 %v933, %v932
          %v945 = vpack.c.b16 %v935, %v934
          %v946 = vpack.c.b16 %v937, %v936
          %v947 = vpack.c.b16 %v939, %v938
          %v956 = vunpack.c.l.b16 %v900
          %v957 = vunpack.c.l.b16 %v901
          %v958 = vunpack.c.l.b16 %v902
          %v959 = vunpack.c.l.b16 %v903
          %v960 = vunpack.c.l.b16 %v904
          %v961 = vunpack.c.l.b16 %v905
          %v962 = vunpack.c.l.b16 %v906
          %v963 = vunpack.c.l.b16 %v907
          %v964 = vpack.c.b16 %v957, %v956
          %v965 = vpack.c.b16 %v959, %v958
          %v966 = vpack.c.b16 %v961, %v960
          %v967 = vpack.c.b16 %v963, %v962
          %vm972 = vcmask 523264
          %v974 = vsel %vm972, %v940, 0
          %v977 = vsel %vm972, %v941, 0
          %v980 = vsel %vm972, %v942, 0
          %v983 = vsel %vm972, %v943, 0
          %v986 = vsel %vm972, %v944, 0
          %v989 = vsel %vm972, %v945, 0
          %v992 = vsel %vm972, %v946, 0
          %v995 = vsel %vm972, %v947, 0
          %997 = vmatprep.subr.bf16.mxu0 0
          %998 = vmatpush1.bf16.msra.mxu0 0
          %999 = vmatprep.subr.bf16.mxu0 0
          %1000 = vmatpush1.bf16.msra.mxu0 0
          %1001 = vmatprep.subr.bf16.mxu0 0
          %1002 = vmatpush1.bf16.msra.mxu0 0
          %1003 = vmatprep.subr.bf16.mxu0 0
          %1004 = vmatpush1.bf16.msra.mxu0 0
          %1005 = vmatprep.subr.bf16.mxu0 0
          %1006 = vmatpush1.bf16.msra.mxu0 %v967
          %1007 = vmatprep.subr.bf16.mxu0 0
          %1008 = vmatpush1.bf16.msra.mxu0 %v966
          %1009 = vmatprep.subr.bf16.mxu0 0
          %1010 = vmatpush1.bf16.msra.mxu0 %v965
          %1011 = vmatprep.subr.bf16.mxu0 0
          %1012 = vmatpush1.bf16.msra.mxu0 %v964
          %1013 = vmatprep.subr.bf16.mxu0 0
          %1014 = vmatpush2.bf16.msra.mxu0 0
          %1015 = vmatprep.subr.bf16.mxu0 0
          %1016 = vmatpush2.bf16.msra.mxu0 0
          %1017 = vmatprep.subr.bf16.mxu0 0
          %1018 = vmatpush2.bf16.msra.mxu0 0
          %1019 = vmatprep.subr.bf16.mxu0 0
          %1020 = vmatpush2.bf16.msra.mxu0 0
          %1021 = vmatprep.subr.bf16.mxu0 0
          %1022 = vmatpush2.bf16.msra.mxu0 0
          %1023 = vmatprep.subr.bf16.mxu0 0
          %1024 = vmatpush2.bf16.msra.mxu0 0
          %1025 = vmatprep.subr.bf16.mxu0 0
          %1026 = vmatpush2.bf16.msra.mxu0 0
          %1027 = vmatprep.subr.bf16.mxu0 0
          %1028 = vmatpush2.bf16.msra.mxu0 0
          %1029 = vmatprep.mubr.bf16.mxu0 0
          %1030 = vmatmul.mubr.bf16.gmra.mxu0 %v974
          %v1031 = vpop.f32.mrf.mxu0
          %v1032 = vadd.f32 0.0, %v1031
          %v1033 = vpop.f32.mrf.mxu0
          %v1034 = vpop.f32.mrf.mxu0
          %v1035 = vadd.f32 0.0, %v1034
          %v1036 = vpop.f32.mrf.mxu0
          %1037 = vmatprep.mubr.bf16.mxu0 0
          %1038 = vmatmul.mubr.bf16.gmra.mxu0 %v977
          %v1039 = vpop.f32.mrf.mxu0
          %v1040 = vadd.f32 0.0, %v1039
          %v1041 = vpop.f32.mrf.mxu0
          %v1042 = vpop.f32.mrf.mxu0
          %v1043 = vadd.f32 0.0, %v1042
          %v1044 = vpop.f32.mrf.mxu0
          %1045 = vmatprep.mubr.bf16.mxu0 0
          %1046 = vmatmul.mubr.bf16.gmra.mxu0 %v980
          %v1047 = vpop.f32.mrf.mxu0
          %v1048 = vadd.f32 0.0, %v1047
          %v1049 = vpop.f32.mrf.mxu0
          %v1050 = vpop.f32.mrf.mxu0
          %v1051 = vadd.f32 0.0, %v1050
          %v1052 = vpop.f32.mrf.mxu0
          %1053 = vmatprep.mubr.bf16.mxu0 0
          %1054 = vmatmul.mubr.bf16.gmra.mxu0 %v983
          %v1055 = vpop.f32.mrf.mxu0
          %v1056 = vadd.f32 0.0, %v1055
          %v1057 = vpop.f32.mrf.mxu0
          %v1058 = vpop.f32.mrf.mxu0
          %v1059 = vadd.f32 0.0, %v1058
          %v1060 = vpop.f32.mrf.mxu0
          %1061 = vmatprep.mubr.bf16.mxu0 0
          %1062 = vmatmul.mubr.bf16.gmra.mxu0 %v986
          %v1063 = vpop.f32.mrf.mxu0
          %v1064 = vadd.f32 0.0, %v1063
          %v1065 = vpop.f32.mrf.mxu0
          %v1066 = vpop.f32.mrf.mxu0
          %v1067 = vadd.f32 0.0, %v1066
          %v1068 = vpop.f32.mrf.mxu0
          %1069 = vmatprep.mubr.bf16.mxu0 0
          %1070 = vmatmul.mubr.bf16.gmra.mxu0 %v989
          %v1071 = vpop.f32.mrf.mxu0
          %v1072 = vadd.f32 0.0, %v1071
          %v1073 = vpop.f32.mrf.mxu0
          %v1074 = vpop.f32.mrf.mxu0
          %v1075 = vadd.f32 0.0, %v1074
          %v1076 = vpop.f32.mrf.mxu0
          %1077 = vmatprep.mubr.bf16.mxu0 0
          %1078 = vmatmul.mubr.bf16.gmra.mxu0 %v992
          %v1079 = vpop.f32.mrf.mxu0
          %v1080 = vadd.f32 0.0, %v1079
          %v1081 = vpop.f32.mrf.mxu0
          %v1082 = vpop.f32.mrf.mxu0
          %v1083 = vadd.f32 0.0, %v1082
          %v1084 = vpop.f32.mrf.mxu0
          %1085 = vmatprep.mubr.bf16.mxu0 0
          %1086 = vmatmul.mubr.bf16.gmra.mxu0 %v995
          %v1087 = vpop.f32.mrf.mxu0
          %v1088 = vadd.f32 0.0, %v1087
          %v1089 = vpop.f32.mrf.mxu0
          %v1090 = vpop.f32.mrf.mxu0
          %v1091 = vadd.f32 0.0, %v1090
          %v1092 = vpop.f32.mrf.mxu0
          %1093 = vdwg.mxu0
          %v1094 = vlaneseq
          %v1095 = vand.u32 %v1094, 127
          %s1096 = smul.u32 %s538, 128
          %s1097 = smul.u32 %s539, 128
          %s1098 = ssub.s32 %s1096, %s1097
          %v1099 = vlaneseq
          %v1100 = vshrl.u32 %v1099, 7
          %v1101 = vadd.s32 %v1100, 8
          %v1102 = vadd.s32 %v1100, 16
          %v1103 = vadd.s32 %v1100, 24
          %v1104 = vadd.s32 %v1100, 32
          %v1105 = vadd.s32 %v1100, 40
          %v1106 = vadd.s32 %v1100, 48
          %v1107 = vadd.s32 %v1100, 56
          %v1108 = vadd.s32 %v1100, 64
          %v1109 = vadd.s32 %v1100, 72
          %v1110 = vadd.s32 %v1100, 80
          %v1111 = vadd.s32 %v1100, 88
          %v1112 = vadd.s32 %v1100, 96
          %v1113 = vadd.s32 %v1100, 104
          %v1114 = vadd.s32 %v1100, 112
          %v1115 = vadd.s32 %v1100, 120
          %v1116 = vstv %s1098
          %v1117 = vadd.s32 %v1116, %v1100
          %v1118 = vadd.s32 %v1116, %v1101
          %v1119 = vadd.s32 %v1116, %v1102
          %v1120 = vadd.s32 %v1116, %v1103
          %v1121 = vadd.s32 %v1116, %v1104
          %v1122 = vadd.s32 %v1116, %v1105
          %v1123 = vadd.s32 %v1116, %v1106
          %v1124 = vadd.s32 %v1116, %v1107
          %v1125 = vadd.s32 %v1116, %v1108
          %v1126 = vadd.s32 %v1116, %v1109
          %v1127 = vadd.s32 %v1116, %v1110
          %v1128 = vadd.s32 %v1116, %v1111
          %v1129 = vadd.s32 %v1116, %v1112
          %v1130 = vadd.s32 %v1116, %v1113
          %v1131 = vadd.s32 %v1116, %v1114
          %v1132 = vadd.s32 %v1116, %v1115
          %vm1133 = vcmp.lt.s32.totalorder %v1095, %v1117
          %vm1134 = vcmp.lt.s32.totalorder %v1095, %v1118
          %vm1135 = vcmp.lt.s32.totalorder %v1095, %v1119
          %vm1136 = vcmp.lt.s32.totalorder %v1095, %v1120
          %vm1137 = vcmp.lt.s32.totalorder %v1095, %v1121
          %vm1138 = vcmp.lt.s32.totalorder %v1095, %v1122
          %vm1139 = vcmp.lt.s32.totalorder %v1095, %v1123
          %vm1140 = vcmp.lt.s32.totalorder %v1095, %v1124
          %vm1141 = vcmp.lt.s32.totalorder %v1095, %v1125
          %vm1142 = vcmp.lt.s32.totalorder %v1095, %v1126
          %vm1143 = vcmp.lt.s32.totalorder %v1095, %v1127
          %vm1144 = vcmp.lt.s32.totalorder %v1095, %v1128
          %vm1145 = vcmp.lt.s32.totalorder %v1095, %v1129
          %vm1146 = vcmp.lt.s32.totalorder %v1095, %v1130
          %vm1147 = vcmp.lt.s32.totalorder %v1095, %v1131
          %vm1148 = vcmp.lt.s32.totalorder %v1095, %v1132
          %v1149 = vsel %vm1133, %v1032, -inf
          %v1150 = vsel %vm1134, %v1035, -inf
          %v1151 = vsel %vm1135, %v1040, -inf
          %v1152 = vsel %vm1136, %v1043, -inf
          %v1153 = vsel %vm1137, %v1048, -inf
          %v1154 = vsel %vm1138, %v1051, -inf
          %v1155 = vsel %vm1139, %v1056, -inf
          %v1156 = vsel %vm1140, %v1059, -inf
          %v1157 = vsel %vm1141, %v1064, -inf
          %v1158 = vsel %vm1142, %v1067, -inf
          %v1159 = vsel %vm1143, %v1072, -inf
          %v1160 = vsel %vm1144, %v1075, -inf
          %v1161 = vsel %vm1145, %v1080, -inf
          %v1162 = vsel %vm1146, %v1083, -inf
          %v1163 = vsel %vm1147, %v1088, -inf
          %v1164 = vsel %vm1148, %v1091, -inf
          %1165 = vmax.xlane.f32.xlu0 %v1149
          %v1166 = vpop.xlane.xlu0 %1165
          %1167 = vmax.xlane.f32.xlu0 %v1150
          %v1168 = vpop.xlane.xlu0 %1167
          %1169 = vmax.xlane.f32.xlu0 %v1151
          %v1170 = vpop.xlane.xlu0 %1169
          %1171 = vmax.xlane.f32.xlu0 %v1152
          %v1172 = vpop.xlane.xlu0 %1171
          %1173 = vmax.xlane.f32.xlu0 %v1153
          %v1174 = vpop.xlane.xlu0 %1173
          %1175 = vmax.xlane.f32.xlu0 %v1154
          %v1176 = vpop.xlane.xlu0 %1175
          %1177 = vmax.xlane.f32.xlu0 %v1155
          %v1178 = vpop.xlane.xlu0 %1177
          %1179 = vmax.xlane.f32.xlu0 %v1156
          %v1180 = vpop.xlane.xlu0 %1179
          %1181 = vmax.xlane.f32.xlu0 %v1157
          %v1182 = vpop.xlane.xlu0 %1181
          %1183 = vmax.xlane.f32.xlu0 %v1158
          %v1184 = vpop.xlane.xlu0 %1183
          %1185 = vmax.xlane.f32.xlu0 %v1159
          %v1186 = vpop.xlane.xlu0 %1185
          %1187 = vmax.xlane.f32.xlu0 %v1160
          %v1188 = vpop.xlane.xlu0 %1187
          %1189 = vmax.xlane.f32.xlu0 %v1161
          %v1190 = vpop.xlane.xlu0 %1189
          %1191 = vmax.xlane.f32.xlu0 %v1162
          %v1192 = vpop.xlane.xlu0 %1191
          %1193 = vmax.xlane.f32.xlu0 %v1163
          %v1194 = vpop.xlane.xlu0 %1193
          %1195 = vmax.xlane.f32.xlu0 %v1164
          %v1196 = vpop.xlane.xlu0 %1195
          %vm1197 = vcmp.eq.f32.partialorder %v1149, %v1166
          %vm1198 = vcmp.eq.f32.partialorder %v1150, %v1168
          %vm1199 = vcmp.eq.f32.partialorder %v1151, %v1170
          %vm1200 = vcmp.eq.f32.partialorder %v1152, %v1172
          %vm1201 = vcmp.eq.f32.partialorder %v1153, %v1174
          %vm1202 = vcmp.eq.f32.partialorder %v1154, %v1176
          %vm1203 = vcmp.eq.f32.partialorder %v1155, %v1178
          %vm1204 = vcmp.eq.f32.partialorder %v1156, %v1180
          %vm1205 = vcmp.eq.f32.partialorder %v1157, %v1182
          %vm1206 = vcmp.eq.f32.partialorder %v1158, %v1184
          %vm1207 = vcmp.eq.f32.partialorder %v1159, %v1186
          %vm1208 = vcmp.eq.f32.partialorder %v1160, %v1188
          %vm1209 = vcmp.eq.f32.partialorder %v1161, %v1190
          %vm1210 = vcmp.eq.f32.partialorder %v1162, %v1192
          %vm1211 = vcmp.eq.f32.partialorder %v1163, %v1194
          %vm1212 = vcmp.eq.f32.partialorder %v1164, %v1196
          %v1213 = vsel %vm1197, %v1095, 2147483647
          %v1214 = vsel %vm1198, %v1095, 2147483647
          %v1215 = vsel %vm1199, %v1095, 2147483647
          %v1216 = vsel %vm1200, %v1095, 2147483647
          %v1217 = vsel %vm1201, %v1095, 2147483647
          %v1218 = vsel %vm1202, %v1095, 2147483647
          %v1219 = vsel %vm1203, %v1095, 2147483647
          %v1220 = vsel %vm1204, %v1095, 2147483647
          %v1221 = vsel %vm1205, %v1095, 2147483647
          %v1222 = vsel %vm1206, %v1095, 2147483647
          %v1223 = vsel %vm1207, %v1095, 2147483647
          %v1224 = vsel %vm1208, %v1095, 2147483647
          %v1225 = vsel %vm1209, %v1095, 2147483647
          %v1226 = vsel %vm1210, %v1095, 2147483647
          %v1227 = vsel %vm1211, %v1095, 2147483647
          %v1228 = vsel %vm1212, %v1095, 2147483647
          %v1229 = vand.u32 %v1213, 65535
          %v1230 = vshra.s32 %v1213, 16
          %v1231 = vcvt.s32.f32 %v1229
          %v1232 = vcvt.s32.f32 %v1230
          %1233 = vmin.xlane.f32.xlu0 %v1232
          %v1234 = vpop.xlane.xlu0 %1233
          %vm1235 = vcmp.eq.f32.partialorder %v1232, %v1234
          %v1236 = vsel %vm1235, %v1231, inf
          %1237 = vmin.xlane.f32.xlu0 %v1236
          %v1238 = vpop.xlane.xlu0 %1237
          %v1239 = vcvt.f32.s32 %v1238
          %v1240 = vcvt.f32.s32 %v1234
          %v1241 = vshll.u32 %v1240, 16
          %v1242 = vadd.s32 %v1241, %v1239
          %v1243 = vand.u32 %v1214, 65535
          %v1244 = vshra.s32 %v1214, 16
          %v1245 = vcvt.s32.f32 %v1243
          %v1246 = vcvt.s32.f32 %v1244
          %1247 = vmin.xlane.f32.xlu0 %v1246
          %v1248 = vpop.xlane.xlu0 %1247
          %vm1249 = vcmp.eq.f32.partialorder %v1246, %v1248
          %v1250 = vsel %vm1249, %v1245, inf
          %1251 = vmin.xlane.f32.xlu0 %v1250
          %v1252 = vpop.xlane.xlu0 %1251
          %v1253 = vcvt.f32.s32 %v1252
          %v1254 = vcvt.f32.s32 %v1248
          %v1255 = vshll.u32 %v1254, 16
          %v1256 = vadd.s32 %v1255, %v1253
          %v1257 = vand.u32 %v1215, 65535
          %v1258 = vshra.s32 %v1215, 16
          %v1259 = vcvt.s32.f32 %v1257
          %v1260 = vcvt.s32.f32 %v1258
          %1261 = vmin.xlane.f32.xlu0 %v1260
          %v1262 = vpop.xlane.xlu0 %1261
          %vm1263 = vcmp.eq.f32.partialorder %v1260, %v1262
          %v1264 = vsel %vm1263, %v1259, inf
          %1265 = vmin.xlane.f32.xlu0 %v1264
          %v1266 = vpop.xlane.xlu0 %1265
          %v1267 = vcvt.f32.s32 %v1266
          %v1268 = vcvt.f32.s32 %v1262
          %v1269 = vshll.u32 %v1268, 16
          %v1270 = vadd.s32 %v1269, %v1267
          %v1271 = vand.u32 %v1216, 65535
          %v1272 = vshra.s32 %v1216, 16
          %v1273 = vcvt.s32.f32 %v1271
          %v1274 = vcvt.s32.f32 %v1272
          %1275 = vmin.xlane.f32.xlu0 %v1274
          %v1276 = vpop.xlane.xlu0 %1275
          %vm1277 = vcmp.eq.f32.partialorder %v1274, %v1276
          %v1278 = vsel %vm1277, %v1273, inf
          %1279 = vmin.xlane.f32.xlu0 %v1278
          %v1280 = vpop.xlane.xlu0 %1279
          %v1281 = vcvt.f32.s32 %v1280
          %v1282 = vcvt.f32.s32 %v1276
          %v1283 = vshll.u32 %v1282, 16
          %v1284 = vadd.s32 %v1283, %v1281
          %v1285 = vand.u32 %v1217, 65535
          %v1286 = vshra.s32 %v1217, 16
          %v1287 = vcvt.s32.f32 %v1285
          %v1288 = vcvt.s32.f32 %v1286
          %1289 = vmin.xlane.f32.xlu0 %v1288
          %v1290 = vpop.xlane.xlu0 %1289
          %vm1291 = vcmp.eq.f32.partialorder %v1288, %v1290
          %v1292 = vsel %vm1291, %v1287, inf
          %1293 = vmin.xlane.f32.xlu0 %v1292
          %v1294 = vpop.xlane.xlu0 %1293
          %v1295 = vcvt.f32.s32 %v1294
          %v1296 = vcvt.f32.s32 %v1290
          %v1297 = vshll.u32 %v1296, 16
          %v1298 = vadd.s32 %v1297, %v1295
          %v1299 = vand.u32 %v1218, 65535
          %v1300 = vshra.s32 %v1218, 16
          %v1301 = vcvt.s32.f32 %v1299
          %v1302 = vcvt.s32.f32 %v1300
          %1303 = vmin.xlane.f32.xlu0 %v1302
          %v1304 = vpop.xlane.xlu0 %1303
          %vm1305 = vcmp.eq.f32.partialorder %v1302, %v1304
          %v1306 = vsel %vm1305, %v1301, inf
          %1307 = vmin.xlane.f32.xlu0 %v1306
          %v1308 = vpop.xlane.xlu0 %1307
          %v1309 = vcvt.f32.s32 %v1308
          %v1310 = vcvt.f32.s32 %v1304
          %v1311 = vshll.u32 %v1310, 16
          %v1312 = vadd.s32 %v1311, %v1309
          %v1313 = vand.u32 %v1219, 65535
          %v1314 = vshra.s32 %v1219, 16
          %v1315 = vcvt.s32.f32 %v1313
          %v1316 = vcvt.s32.f32 %v1314
          %1317 = vmin.xlane.f32.xlu0 %v1316
          %v1318 = vpop.xlane.xlu0 %1317
          %vm1319 = vcmp.eq.f32.partialorder %v1316, %v1318
          %v1320 = vsel %vm1319, %v1315, inf
          %1321 = vmin.xlane.f32.xlu0 %v1320
          %v1322 = vpop.xlane.xlu0 %1321
          %v1323 = vcvt.f32.s32 %v1322
          %v1324 = vcvt.f32.s32 %v1318
          %v1325 = vshll.u32 %v1324, 16
          %v1326 = vadd.s32 %v1325, %v1323
          %v1327 = vand.u32 %v1220, 65535
          %v1328 = vshra.s32 %v1220, 16
          %v1329 = vcvt.s32.f32 %v1327
          %v1330 = vcvt.s32.f32 %v1328
          %1331 = vmin.xlane.f32.xlu0 %v1330
          %v1332 = vpop.xlane.xlu0 %1331
          %vm1333 = vcmp.eq.f32.partialorder %v1330, %v1332
          %v1334 = vsel %vm1333, %v1329, inf
          %1335 = vmin.xlane.f32.xlu0 %v1334
          %v1336 = vpop.xlane.xlu0 %1335
          %v1337 = vcvt.f32.s32 %v1336
          %v1338 = vcvt.f32.s32 %v1332
          %v1339 = vshll.u32 %v1338, 16
          %v1340 = vadd.s32 %v1339, %v1337
          %v1341 = vand.u32 %v1221, 65535
          %v1342 = vshra.s32 %v1221, 16
          %v1343 = vcvt.s32.f32 %v1341
          %v1344 = vcvt.s32.f32 %v1342
          %1345 = vmin.xlane.f32.xlu0 %v1344
          %v1346 = vpop.xlane.xlu0 %1345
          %vm1347 = vcmp.eq.f32.partialorder %v1344, %v1346
          %v1348 = vsel %vm1347, %v1343, inf
          %1349 = vmin.xlane.f32.xlu0 %v1348
          %v1350 = vpop.xlane.xlu0 %1349
          %v1351 = vcvt.f32.s32 %v1350
          %v1352 = vcvt.f32.s32 %v1346
          %v1353 = vshll.u32 %v1352, 16
          %v1354 = vadd.s32 %v1353, %v1351
          %v1355 = vand.u32 %v1222, 65535
          %v1356 = vshra.s32 %v1222, 16
          %v1357 = vcvt.s32.f32 %v1355
          %v1358 = vcvt.s32.f32 %v1356
          %1359 = vmin.xlane.f32.xlu0 %v1358
          %v1360 = vpop.xlane.xlu0 %1359
          %vm1361 = vcmp.eq.f32.partialorder %v1358, %v1360
          %v1362 = vsel %vm1361, %v1357, inf
          %1363 = vmin.xlane.f32.xlu0 %v1362
          %v1364 = vpop.xlane.xlu0 %1363
          %v1365 = vcvt.f32.s32 %v1364
          %v1366 = vcvt.f32.s32 %v1360
          %v1367 = vshll.u32 %v1366, 16
          %v1368 = vadd.s32 %v1367, %v1365
          %v1369 = vand.u32 %v1223, 65535
          %v1370 = vshra.s32 %v1223, 16
          %v1371 = vcvt.s32.f32 %v1369
          %v1372 = vcvt.s32.f32 %v1370
          %1373 = vmin.xlane.f32.xlu0 %v1372
          %v1374 = vpop.xlane.xlu0 %1373
          %vm1375 = vcmp.eq.f32.partialorder %v1372, %v1374
          %v1376 = vsel %vm1375, %v1371, inf
          %1377 = vmin.xlane.f32.xlu0 %v1376
          %v1378 = vpop.xlane.xlu0 %1377
          %v1379 = vcvt.f32.s32 %v1378
          %v1380 = vcvt.f32.s32 %v1374
          %v1381 = vshll.u32 %v1380, 16
          %v1382 = vadd.s32 %v1381, %v1379
          %v1383 = vand.u32 %v1224, 65535
          %v1384 = vshra.s32 %v1224, 16
          %v1385 = vcvt.s32.f32 %v1383
          %v1386 = vcvt.s32.f32 %v1384
          %1387 = vmin.xlane.f32.xlu0 %v1386
          %v1388 = vpop.xlane.xlu0 %1387
          %vm1389 = vcmp.eq.f32.partialorder %v1386, %v1388
          %v1390 = vsel %vm1389, %v1385, inf
          %1391 = vmin.xlane.f32.xlu0 %v1390
          %v1392 = vpop.xlane.xlu0 %1391
          %v1393 = vcvt.f32.s32 %v1392
          %v1394 = vcvt.f32.s32 %v1388
          %v1395 = vshll.u32 %v1394, 16
          %v1396 = vadd.s32 %v1395, %v1393
          %v1397 = vand.u32 %v1225, 65535
          %v1398 = vshra.s32 %v1225, 16
          %v1399 = vcvt.s32.f32 %v1397
          %v1400 = vcvt.s32.f32 %v1398
          %1401 = vmin.xlane.f32.xlu0 %v1400
          %v1402 = vpop.xlane.xlu0 %1401
          %vm1403 = vcmp.eq.f32.partialorder %v1400, %v1402
          %v1404 = vsel %vm1403, %v1399, inf
          %1405 = vmin.xlane.f32.xlu0 %v1404
          %v1406 = vpop.xlane.xlu0 %1405
          %v1407 = vcvt.f32.s32 %v1406
          %v1408 = vcvt.f32.s32 %v1402
          %v1409 = vshll.u32 %v1408, 16
          %v1410 = vadd.s32 %v1409, %v1407
          %v1411 = vand.u32 %v1226, 65535
          %v1412 = vshra.s32 %v1226, 16
          %v1413 = vcvt.s32.f32 %v1411
          %v1414 = vcvt.s32.f32 %v1412
          %1415 = vmin.xlane.f32.xlu0 %v1414
          %v1416 = vpop.xlane.xlu0 %1415
          %vm1417 = vcmp.eq.f32.partialorder %v1414, %v1416
          %v1418 = vsel %vm1417, %v1413, inf
          %1419 = vmin.xlane.f32.xlu0 %v1418
          %v1420 = vpop.xlane.xlu0 %1419
          %v1421 = vcvt.f32.s32 %v1420
          %v1422 = vcvt.f32.s32 %v1416
          %v1423 = vshll.u32 %v1422, 16
          %v1424 = vadd.s32 %v1423, %v1421
          %v1425 = vand.u32 %v1227, 65535
          %v1426 = vshra.s32 %v1227, 16
          %v1427 = vcvt.s32.f32 %v1425
          %v1428 = vcvt.s32.f32 %v1426
          %1429 = vmin.xlane.f32.xlu0 %v1428
          %v1430 = vpop.xlane.xlu0 %1429
          %vm1431 = vcmp.eq.f32.partialorder %v1428, %v1430
          %v1432 = vsel %vm1431, %v1427, inf
          %1433 = vmin.xlane.f32.xlu0 %v1432
          %v1434 = vpop.xlane.xlu0 %1433
          %v1435 = vcvt.f32.s32 %v1434
          %v1436 = vcvt.f32.s32 %v1430
          %v1437 = vshll.u32 %v1436, 16
          %v1438 = vadd.s32 %v1437, %v1435
          %v1439 = vand.u32 %v1228, 65535
          %v1440 = vshra.s32 %v1228, 16
          %v1441 = vcvt.s32.f32 %v1439
          %v1442 = vcvt.s32.f32 %v1440
          %1443 = vmin.xlane.f32.xlu0 %v1442
          %v1444 = vpop.xlane.xlu0 %1443
          %vm1445 = vcmp.eq.f32.partialorder %v1442, %v1444
          %v1446 = vsel %vm1445, %v1441, inf
          %1447 = vmin.xlane.f32.xlu0 %v1446
          %v1448 = vpop.xlane.xlu0 %1447
          %v1449 = vcvt.f32.s32 %v1448
          %v1450 = vcvt.f32.s32 %v1444
          %v1451 = vshll.u32 %v1450, 16
          %v1452 = vadd.s32 %v1451, %v1449
          %vm1453 = vcmp.eq.s32.totalorder %v1095, 0
          %v1454 = vsel %vm1453, %v1166, -inf
          %v1455 = vsel %vm1453, %v1168, -inf
          %v1456 = vsel %vm1453, %v1170, -inf
          %v1457 = vsel %vm1453, %v1172, -inf
          %v1458 = vsel %vm1453, %v1174, -inf
          %v1459 = vsel %vm1453, %v1176, -inf
          %v1460 = vsel %vm1453, %v1178, -inf
          %v1461 = vsel %vm1453, %v1180, -inf
          %v1462 = vsel %vm1453, %v1182, -inf
          %v1463 = vsel %vm1453, %v1184, -inf
          %v1464 = vsel %vm1453, %v1186, -inf
          %v1465 = vsel %vm1453, %v1188, -inf
          %v1466 = vsel %vm1453, %v1190, -inf
          %v1467 = vsel %vm1453, %v1192, -inf
          %v1468 = vsel %vm1453, %v1194, -inf
          %v1469 = vsel %vm1453, %v1196, -inf
          %v1470 = vsel %vm1453, %v1242, 0
          %v1471 = vsel %vm1453, %v1256, 0
          %v1472 = vsel %vm1453, %v1270, 0
          %v1473 = vsel %vm1453, %v1284, 0
          %v1474 = vsel %vm1453, %v1298, 0
          %v1475 = vsel %vm1453, %v1312, 0
          %v1476 = vsel %vm1453, %v1326, 0
          %v1477 = vsel %vm1453, %v1340, 0
          %v1478 = vsel %vm1453, %v1354, 0
          %v1479 = vsel %vm1453, %v1368, 0
          %v1480 = vsel %vm1453, %v1382, 0
          %v1481 = vsel %vm1453, %v1396, 0
          %v1482 = vsel %vm1453, %v1410, 0
          %v1483 = vsel %vm1453, %v1424, 0
          %v1484 = vsel %vm1453, %v1438, 0
          %v1485 = vsel %vm1453, %v1452, 0
          %vm1486 = vcmp.eq.s32.totalorder %v1095, %v1242
          %vm1487 = vcmp.eq.s32.totalorder %v1095, %v1256
          %vm1488 = vcmp.eq.s32.totalorder %v1095, %v1270
          %vm1489 = vcmp.eq.s32.totalorder %v1095, %v1284
          %vm1490 = vcmp.eq.s32.totalorder %v1095, %v1298
          %vm1491 = vcmp.eq.s32.totalorder %v1095, %v1312
          %vm1492 = vcmp.eq.s32.totalorder %v1095, %v1326
          %vm1493 = vcmp.eq.s32.totalorder %v1095, %v1340
          %vm1494 = vcmp.eq.s32.totalorder %v1095, %v1354
          %vm1495 = vcmp.eq.s32.totalorder %v1095, %v1368
          %vm1496 = vcmp.eq.s32.totalorder %v1095, %v1382
          %vm1497 = vcmp.eq.s32.totalorder %v1095, %v1396
          %vm1498 = vcmp.eq.s32.totalorder %v1095, %v1410
          %vm1499 = vcmp.eq.s32.totalorder %v1095, %v1424
          %vm1500 = vcmp.eq.s32.totalorder %v1095, %v1438
          %vm1501 = vcmp.eq.s32.totalorder %v1095, %v1452
          %v1502 = vsel %vm1486, -inf, %v1149
          %v1503 = vsel %vm1487, -inf, %v1150
          %v1504 = vsel %vm1488, -inf, %v1151
          %v1505 = vsel %vm1489, -inf, %v1152
          %v1506 = vsel %vm1490, -inf, %v1153
          %v1507 = vsel %vm1491, -inf, %v1154
          %v1508 = vsel %vm1492, -inf, %v1155
          %v1509 = vsel %vm1493, -inf, %v1156
          %v1510 = vsel %vm1494, -inf, %v1157
          %v1511 = vsel %vm1495, -inf, %v1158
          %v1512 = vsel %vm1496, -inf, %v1159
          %v1513 = vsel %vm1497, -inf, %v1160
          %v1514 = vsel %vm1498, -inf, %v1161
          %v1515 = vsel %vm1499, -inf, %v1162
          %v1516 = vsel %vm1500, -inf, %v1163
          %v1517 = vsel %vm1501, -inf, %v1164
          %v1518 = vsel %vm1486, 2147483647, %v1095
          %v1519 = vsel %vm1487, 2147483647, %v1095
          %v1520 = vsel %vm1488, 2147483647, %v1095
          %v1521 = vsel %vm1489, 2147483647, %v1095
          %v1522 = vsel %vm1490, 2147483647, %v1095
          %v1523 = vsel %vm1491, 2147483647, %v1095
          %v1524 = vsel %vm1492, 2147483647, %v1095
          %v1525 = vsel %vm1493, 2147483647, %v1095
          %v1526 = vsel %vm1494, 2147483647, %v1095
          %v1527 = vsel %vm1495, 2147483647, %v1095
          %v1528 = vsel %vm1496, 2147483647, %v1095
          %v1529 = vsel %vm1497, 2147483647, %v1095
          %v1530 = vsel %vm1498, 2147483647, %v1095
          %v1531 = vsel %vm1499, 2147483647, %v1095
          %v1532 = vsel %vm1500, 2147483647, %v1095
          %v1533 = vsel %vm1501, 2147483647, %v1095
          %1534 = vmax.xlane.f32.xlu0 %v1502
          %v1535 = vpop.xlane.xlu0 %1534
          %1536 = vmax.xlane.f32.xlu0 %v1503
          %v1537 = vpop.xlane.xlu0 %1536
          %1538 = vmax.xlane.f32.xlu0 %v1504
          %v1539 = vpop.xlane.xlu0 %1538
          %1540 = vmax.xlane.f32.xlu0 %v1505
          %v1541 = vpop.xlane.xlu0 %1540
          %1542 = vmax.xlane.f32.xlu0 %v1506
          %v1543 = vpop.xlane.xlu0 %1542
          %1544 = vmax.xlane.f32.xlu0 %v1507
          %v1545 = vpop.xlane.xlu0 %1544
          %1546 = vmax.xlane.f32.xlu0 %v1508
          %v1547 = vpop.xlane.xlu0 %1546
          %1548 = vmax.xlane.f32.xlu0 %v1509
          %v1549 = vpop.xlane.xlu0 %1548
          %1550 = vmax.xlane.f32.xlu0 %v1510
          %v1551 = vpop.xlane.xlu0 %1550
          %1552 = vmax.xlane.f32.xlu0 %v1511
          %v1553 = vpop.xlane.xlu0 %1552
          %1554 = vmax.xlane.f32.xlu0 %v1512
          %v1555 = vpop.xlane.xlu0 %1554
          %1556 = vmax.xlane.f32.xlu0 %v1513
          %v1557 = vpop.xlane.xlu0 %1556
          %1558 = vmax.xlane.f32.xlu0 %v1514
          %v1559 = vpop.xlane.xlu0 %1558
          %1560 = vmax.xlane.f32.xlu0 %v1515
          %v1561 = vpop.xlane.xlu0 %1560
          %1562 = vmax.xlane.f32.xlu0 %v1516
          %v1563 = vpop.xlane.xlu0 %1562
          %1564 = vmax.xlane.f32.xlu0 %v1517
          %v1565 = vpop.xlane.xlu0 %1564
          %vm1566 = vcmp.eq.f32.partialorder %v1502, %v1535
          %vm1567 = vcmp.eq.f32.partialorder %v1503, %v1537
          %vm1568 = vcmp.eq.f32.partialorder %v1504, %v1539
          %vm1569 = vcmp.eq.f32.partialorder %v1505, %v1541
          %vm1570 = vcmp.eq.f32.partialorder %v1506, %v1543
          %vm1571 = vcmp.eq.f32.partialorder %v1507, %v1545
          %vm1572 = vcmp.eq.f32.partialorder %v1508, %v1547
          %vm1573 = vcmp.eq.f32.partialorder %v1509, %v1549
          %vm1574 = vcmp.eq.f32.partialorder %v1510, %v1551
          %vm1575 = vcmp.eq.f32.partialorder %v1511, %v1553
          %vm1576 = vcmp.eq.f32.partialorder %v1512, %v1555
          %vm1577 = vcmp.eq.f32.partialorder %v1513, %v1557
          %vm1578 = vcmp.eq.f32.partialorder %v1514, %v1559
          %vm1579 = vcmp.eq.f32.partialorder %v1515, %v1561
          %vm1580 = vcmp.eq.f32.partialorder %v1516, %v1563
          %vm1581 = vcmp.eq.f32.partialorder %v1517, %v1565
          %v1582 = vsel %vm1566, %v1518, 2147483647
          %v1583 = vsel %vm1567, %v1519, 2147483647
          %v1584 = vsel %vm1568, %v1520, 2147483647
          %v1585 = vsel %vm1569, %v1521, 2147483647
          %v1586 = vsel %vm1570, %v1522, 2147483647
          %v1587 = vsel %vm1571, %v1523, 2147483647
          %v1588 = vsel %vm1572, %v1524, 2147483647
          %v1589 = vsel %vm1573, %v1525, 2147483647
          %v1590 = vsel %vm1574, %v1526, 2147483647
          %v1591 = vsel %vm1575, %v1527, 2147483647
          %v1592 = vsel %vm1576, %v1528, 2147483647
          %v1593 = vsel %vm1577, %v1529, 2147483647
          %v1594 = vsel %vm1578, %v1530, 2147483647
          %v1595 = vsel %vm1579, %v1531, 2147483647
          %v1596 = vsel %vm1580, %v1532, 2147483647
          %v1597 = vsel %vm1581, %v1533, 2147483647
          %v1598 = vand.u32 %v1582, 65535
          %v1599 = vshra.s32 %v1582, 16
          %v1600 = vcvt.s32.f32 %v1598
          %v1601 = vcvt.s32.f32 %v1599
          %1602 = vmin.xlane.f32.xlu0 %v1601
          %v1603 = vpop.xlane.xlu0 %1602
          %vm1604 = vcmp.eq.f32.partialorder %v1601, %v1603
          %v1605 = vsel %vm1604, %v1600, inf
          %1606 = vmin.xlane.f32.xlu0 %v1605
          %v1607 = vpop.xlane.xlu0 %1606
          %v1608 = vcvt.f32.s32 %v1607
          %v1609 = vcvt.f32.s32 %v1603
          %v1610 = vshll.u32 %v1609, 16
          %v1611 = vadd.s32 %v1610, %v1608
          %v1612 = vand.u32 %v1583, 65535
          %v1613 = vshra.s32 %v1583, 16
          %v1614 = vcvt.s32.f32 %v1612
          %v1615 = vcvt.s32.f32 %v1613
          %1616 = vmin.xlane.f32.xlu0 %v1615
          %v1617 = vpop.xlane.xlu0 %1616
          %vm1618 = vcmp.eq.f32.partialorder %v1615, %v1617
          %v1619 = vsel %vm1618, %v1614, inf
          %1620 = vmin.xlane.f32.xlu0 %v1619
          %v1621 = vpop.xlane.xlu0 %1620
          %v1622 = vcvt.f32.s32 %v1621
          %v1623 = vcvt.f32.s32 %v1617
          %v1624 = vshll.u32 %v1623, 16
          %v1625 = vadd.s32 %v1624, %v1622
          %v1626 = vand.u32 %v1584, 65535
          %v1627 = vshra.s32 %v1584, 16
          %v1628 = vcvt.s32.f32 %v1626
          %v1629 = vcvt.s32.f32 %v1627
          %1630 = vmin.xlane.f32.xlu0 %v1629
          %v1631 = vpop.xlane.xlu0 %1630
          %vm1632 = vcmp.eq.f32.partialorder %v1629, %v1631
          %v1633 = vsel %vm1632, %v1628, inf
          %1634 = vmin.xlane.f32.xlu0 %v1633
          %v1635 = vpop.xlane.xlu0 %1634
          %v1636 = vcvt.f32.s32 %v1635
          %v1637 = vcvt.f32.s32 %v1631
          %v1638 = vshll.u32 %v1637, 16
          %v1639 = vadd.s32 %v1638, %v1636
          %v1640 = vand.u32 %v1585, 65535
          %v1641 = vshra.s32 %v1585, 16
          %v1642 = vcvt.s32.f32 %v1640
          %v1643 = vcvt.s32.f32 %v1641
          %1644 = vmin.xlane.f32.xlu0 %v1643
          %v1645 = vpop.xlane.xlu0 %1644
          %vm1646 = vcmp.eq.f32.partialorder %v1643, %v1645
          %v1647 = vsel %vm1646, %v1642, inf
          %1648 = vmin.xlane.f32.xlu0 %v1647
          %v1649 = vpop.xlane.xlu0 %1648
          %v1650 = vcvt.f32.s32 %v1649
          %v1651 = vcvt.f32.s32 %v1645
          %v1652 = vshll.u32 %v1651, 16
          %v1653 = vadd.s32 %v1652, %v1650
          %v1654 = vand.u32 %v1586, 65535
          %v1655 = vshra.s32 %v1586, 16
          %v1656 = vcvt.s32.f32 %v1654
          %v1657 = vcvt.s32.f32 %v1655
          %1658 = vmin.xlane.f32.xlu0 %v1657
          %v1659 = vpop.xlane.xlu0 %1658
          %vm1660 = vcmp.eq.f32.partialorder %v1657, %v1659
          %v1661 = vsel %vm1660, %v1656, inf
          %1662 = vmin.xlane.f32.xlu0 %v1661
          %v1663 = vpop.xlane.xlu0 %1662
          %v1664 = vcvt.f32.s32 %v1663
          %v1665 = vcvt.f32.s32 %v1659
          %v1666 = vshll.u32 %v1665, 16
          %v1667 = vadd.s32 %v1666, %v1664
          %v1668 = vand.u32 %v1587, 65535
          %v1669 = vshra.s32 %v1587, 16
          %v1670 = vcvt.s32.f32 %v1668
          %v1671 = vcvt.s32.f32 %v1669
          %1672 = vmin.xlane.f32.xlu0 %v1671
          %v1673 = vpop.xlane.xlu0 %1672
          %vm1674 = vcmp.eq.f32.partialorder %v1671, %v1673
          %v1675 = vsel %vm1674, %v1670, inf
          %1676 = vmin.xlane.f32.xlu0 %v1675
          %v1677 = vpop.xlane.xlu0 %1676
          %v1678 = vcvt.f32.s32 %v1677
          %v1679 = vcvt.f32.s32 %v1673
          %v1680 = vshll.u32 %v1679, 16
          %v1681 = vadd.s32 %v1680, %v1678
          %v1682 = vand.u32 %v1588, 65535
          %v1683 = vshra.s32 %v1588, 16
          %v1684 = vcvt.s32.f32 %v1682
          %v1685 = vcvt.s32.f32 %v1683
          %1686 = vmin.xlane.f32.xlu0 %v1685
          %v1687 = vpop.xlane.xlu0 %1686
          %vm1688 = vcmp.eq.f32.partialorder %v1685, %v1687
          %v1689 = vsel %vm1688, %v1684, inf
          %1690 = vmin.xlane.f32.xlu0 %v1689
          %v1691 = vpop.xlane.xlu0 %1690
          %v1692 = vcvt.f32.s32 %v1691
          %v1693 = vcvt.f32.s32 %v1687
          %v1694 = vshll.u32 %v1693, 16
          %v1695 = vadd.s32 %v1694, %v1692
          %v1696 = vand.u32 %v1589, 65535
          %v1697 = vshra.s32 %v1589, 16
          %v1698 = vcvt.s32.f32 %v1696
          %v1699 = vcvt.s32.f32 %v1697
          %1700 = vmin.xlane.f32.xlu0 %v1699
          %v1701 = vpop.xlane.xlu0 %1700
          %vm1702 = vcmp.eq.f32.partialorder %v1699, %v1701
          %v1703 = vsel %vm1702, %v1698, inf
          %1704 = vmin.xlane.f32.xlu0 %v1703
          %v1705 = vpop.xlane.xlu0 %1704
          %v1706 = vcvt.f32.s32 %v1705
          %v1707 = vcvt.f32.s32 %v1701
          %v1708 = vshll.u32 %v1707, 16
          %v1709 = vadd.s32 %v1708, %v1706
          %v1710 = vand.u32 %v1590, 65535
          %v1711 = vshra.s32 %v1590, 16
          %v1712 = vcvt.s32.f32 %v1710
          %v1713 = vcvt.s32.f32 %v1711
          %1714 = vmin.xlane.f32.xlu0 %v1713
          %v1715 = vpop.xlane.xlu0 %1714
          %vm1716 = vcmp.eq.f32.partialorder %v1713, %v1715
          %v1717 = vsel %vm1716, %v1712, inf
          %1718 = vmin.xlane.f32.xlu0 %v1717
          %v1719 = vpop.xlane.xlu0 %1718
          %v1720 = vcvt.f32.s32 %v1719
          %v1721 = vcvt.f32.s32 %v1715
          %v1722 = vshll.u32 %v1721, 16
          %v1723 = vadd.s32 %v1722, %v1720
          %v1724 = vand.u32 %v1591, 65535
          %v1725 = vshra.s32 %v1591, 16
          %v1726 = vcvt.s32.f32 %v1724
          %v1727 = vcvt.s32.f32 %v1725
          %1728 = vmin.xlane.f32.xlu0 %v1727
          %v1729 = vpop.xlane.xlu0 %1728
          %vm1730 = vcmp.eq.f32.partialorder %v1727, %v1729
          %v1731 = vsel %vm1730, %v1726, inf
          %1732 = vmin.xlane.f32.xlu0 %v1731
          %v1733 = vpop.xlane.xlu0 %1732
          %v1734 = vcvt.f32.s32 %v1733
          %v1735 = vcvt.f32.s32 %v1729
          %v1736 = vshll.u32 %v1735, 16
          %v1737 = vadd.s32 %v1736, %v1734
          %v1738 = vand.u32 %v1592, 65535
          %v1739 = vshra.s32 %v1592, 16
          %v1740 = vcvt.s32.f32 %v1738
          %v1741 = vcvt.s32.f32 %v1739
          %1742 = vmin.xlane.f32.xlu0 %v1741
          %v1743 = vpop.xlane.xlu0 %1742
          %vm1744 = vcmp.eq.f32.partialorder %v1741, %v1743
          %v1745 = vsel %vm1744, %v1740, inf
          %1746 = vmin.xlane.f32.xlu0 %v1745
          %v1747 = vpop.xlane.xlu0 %1746
          %v1748 = vcvt.f32.s32 %v1747
          %v1749 = vcvt.f32.s32 %v1743
          %v1750 = vshll.u32 %v1749, 16
          %v1751 = vadd.s32 %v1750, %v1748
          %v1752 = vand.u32 %v1593, 65535
          %v1753 = vshra.s32 %v1593, 16
          %v1754 = vcvt.s32.f32 %v1752
          %v1755 = vcvt.s32.f32 %v1753
          %1756 = vmin.xlane.f32.xlu0 %v1755
          %v1757 = vpop.xlane.xlu0 %1756
          %vm1758 = vcmp.eq.f32.partialorder %v1755, %v1757
          %v1759 = vsel %vm1758, %v1754, inf
          %1760 = vmin.xlane.f32.xlu0 %v1759
          %v1761 = vpop.xlane.xlu0 %1760
          %v1762 = vcvt.f32.s32 %v1761
          %v1763 = vcvt.f32.s32 %v1757
          %v1764 = vshll.u32 %v1763, 16
          %v1765 = vadd.s32 %v1764, %v1762
          %v1766 = vand.u32 %v1594, 65535
          %v1767 = vshra.s32 %v1594, 16
          %v1768 = vcvt.s32.f32 %v1766
          %v1769 = vcvt.s32.f32 %v1767
          %1770 = vmin.xlane.f32.xlu0 %v1769
          %v1771 = vpop.xlane.xlu0 %1770
          %vm1772 = vcmp.eq.f32.partialorder %v1769, %v1771
          %v1773 = vsel %vm1772, %v1768, inf
          %1774 = vmin.xlane.f32.xlu0 %v1773
          %v1775 = vpop.xlane.xlu0 %1774
          %v1776 = vcvt.f32.s32 %v1775
          %v1777 = vcvt.f32.s32 %v1771
          %v1778 = vshll.u32 %v1777, 16
          %v1779 = vadd.s32 %v1778, %v1776
          %v1780 = vand.u32 %v1595, 65535
          %v1781 = vshra.s32 %v1595, 16
          %v1782 = vcvt.s32.f32 %v1780
          %v1783 = vcvt.s32.f32 %v1781
          %1784 = vmin.xlane.f32.xlu0 %v1783
          %v1785 = vpop.xlane.xlu0 %1784
          %vm1786 = vcmp.eq.f32.partialorder %v1783, %v1785
          %v1787 = vsel %vm1786, %v1782, inf
          %1788 = vmin.xlane.f32.xlu0 %v1787
          %v1789 = vpop.xlane.xlu0 %1788
          %v1790 = vcvt.f32.s32 %v1789
          %v1791 = vcvt.f32.s32 %v1785
          %v1792 = vshll.u32 %v1791, 16
          %v1793 = vadd.s32 %v1792, %v1790
          %v1794 = vand.u32 %v1596, 65535
          %v1795 = vshra.s32 %v1596, 16
          %v1796 = vcvt.s32.f32 %v1794
          %v1797 = vcvt.s32.f32 %v1795
          %1798 = vmin.xlane.f32.xlu0 %v1797
          %v1799 = vpop.xlane.xlu0 %1798
          %vm1800 = vcmp.eq.f32.partialorder %v1797, %v1799
          %v1801 = vsel %vm1800, %v1796, inf
          %1802 = vmin.xlane.f32.xlu0 %v1801
          %v1803 = vpop.xlane.xlu0 %1802
          %v1804 = vcvt.f32.s32 %v1803
          %v1805 = vcvt.f32.s32 %v1799
          %v1806 = vshll.u32 %v1805, 16
          %v1807 = vadd.s32 %v1806, %v1804
          %v1808 = vand.u32 %v1597, 65535
          %v1809 = vshra.s32 %v1597, 16
          %v1810 = vcvt.s32.f32 %v1808
          %v1811 = vcvt.s32.f32 %v1809
          %1812 = vmin.xlane.f32.xlu0 %v1811
          %v1813 = vpop.xlane.xlu0 %1812
          %vm1814 = vcmp.eq.f32.partialorder %v1811, %v1813
          %v1815 = vsel %vm1814, %v1810, inf
          %1816 = vmin.xlane.f32.xlu0 %v1815
          %v1817 = vpop.xlane.xlu0 %1816
          %v1818 = vcvt.f32.s32 %v1817
          %v1819 = vcvt.f32.s32 %v1813
          %v1820 = vshll.u32 %v1819, 16
          %v1821 = vadd.s32 %v1820, %v1818
          %vm1822 = vcmp.eq.s32.totalorder %v1095, 1
          %v1823 = vsel %vm1822, %v1535, %v1454
          %v1824 = vsel %vm1822, %v1537, %v1455
          %v1825 = vsel %vm1822, %v1539, %v1456
          %v1826 = vsel %vm1822, %v1541, %v1457
          %v1827 = vsel %vm1822, %v1543, %v1458
          %v1828 = vsel %vm1822, %v1545, %v1459
          %v1829 = vsel %vm1822, %v1547, %v1460
          %v1830 = vsel %vm1822, %v1549, %v1461
          %v1831 = vsel %vm1822, %v1551, %v1462
          %v1832 = vsel %vm1822, %v1553, %v1463
          %v1833 = vsel %vm1822, %v1555, %v1464
          %v1834 = vsel %vm1822, %v1557, %v1465
          %v1835 = vsel %vm1822, %v1559, %v1466
          %v1836 = vsel %vm1822, %v1561, %v1467
          %v1837 = vsel %vm1822, %v1563, %v1468
          %v1838 = vsel %vm1822, %v1565, %v1469
          %v1839 = vsel %vm1822, %v1611, %v1470
          %v1840 = vsel %vm1822, %v1625, %v1471
          %v1841 = vsel %vm1822, %v1639, %v1472
          %v1842 = vsel %vm1822, %v1653, %v1473
          %v1843 = vsel %vm1822, %v1667, %v1474
          %v1844 = vsel %vm1822, %v1681, %v1475
          %v1845 = vsel %vm1822, %v1695, %v1476
          %v1846 = vsel %vm1822, %v1709, %v1477
          %v1847 = vsel %vm1822, %v1723, %v1478
          %v1848 = vsel %vm1822, %v1737, %v1479
          %v1849 = vsel %vm1822, %v1751, %v1480
          %v1850 = vsel %vm1822, %v1765, %v1481
          %v1851 = vsel %vm1822, %v1779, %v1482
          %v1852 = vsel %vm1822, %v1793, %v1483
          %v1853 = vsel %vm1822, %v1807, %v1484
          %v1854 = vsel %vm1822, %v1821, %v1485
          %vm1855 = vcmp.eq.s32.totalorder %v1518, %v1611
          %vm1856 = vcmp.eq.s32.totalorder %v1519, %v1625
          %vm1857 = vcmp.eq.s32.totalorder %v1520, %v1639
          %vm1858 = vcmp.eq.s32.totalorder %v1521, %v1653
          %vm1859 = vcmp.eq.s32.totalorder %v1522, %v1667
          %vm1860 = vcmp.eq.s32.totalorder %v1523, %v1681
          %vm1861 = vcmp.eq.s32.totalorder %v1524, %v1695
          %vm1862 = vcmp.eq.s32.totalorder %v1525, %v1709
          %vm1863 = vcmp.eq.s32.totalorder %v1526, %v1723
          %vm1864 = vcmp.eq.s32.totalorder %v1527, %v1737
          %vm1865 = vcmp.eq.s32.totalorder %v1528, %v1751
          %vm1866 = vcmp.eq.s32.totalorder %v1529, %v1765
          %vm1867 = vcmp.eq.s32.totalorder %v1530, %v1779
          %vm1868 = vcmp.eq.s32.totalorder %v1531, %v1793
          %vm1869 = vcmp.eq.s32.totalorder %v1532, %v1807
          %vm1870 = vcmp.eq.s32.totalorder %v1533, %v1821
          %v1871 = vsel %vm1855, -inf, %v1502
          %v1872 = vsel %vm1856, -inf, %v1503
          %v1873 = vsel %vm1857, -inf, %v1504
          %v1874 = vsel %vm1858, -inf, %v1505
          %v1875 = vsel %vm1859, -inf, %v1506
          %v1876 = vsel %vm1860, -inf, %v1507
          %v1877 = vsel %vm1861, -inf, %v1508
          %v1878 = vsel %vm1862, -inf, %v1509
          %v1879 = vsel %vm1863, -inf, %v1510
          %v1880 = vsel %vm1864, -inf, %v1511
          %v1881 = vsel %vm1865, -inf, %v1512
          %v1882 = vsel %vm1866, -inf, %v1513
          %v1883 = vsel %vm1867, -inf, %v1514
          %v1884 = vsel %vm1868, -inf, %v1515
          %v1885 = vsel %vm1869, -inf, %v1516
          %v1886 = vsel %vm1870, -inf, %v1517
          %v1887 = vsel %vm1855, 2147483647, %v1518
          %v1888 = vsel %vm1856, 2147483647, %v1519
          %v1889 = vsel %vm1857, 2147483647, %v1520
          %v1890 = vsel %vm1858, 2147483647, %v1521
          %v1891 = vsel %vm1859, 2147483647, %v1522
          %v1892 = vsel %vm1860, 2147483647, %v1523
          %v1893 = vsel %vm1861, 2147483647, %v1524
          %v1894 = vsel %vm1862, 2147483647, %v1525
          %v1895 = vsel %vm1863, 2147483647, %v1526
          %v1896 = vsel %vm1864, 2147483647, %v1527
          %v1897 = vsel %vm1865, 2147483647, %v1528
          %v1898 = vsel %vm1866, 2147483647, %v1529
          %v1899 = vsel %vm1867, 2147483647, %v1530
          %v1900 = vsel %vm1868, 2147483647, %v1531
          %v1901 = vsel %vm1869, 2147483647, %v1532
          %v1902 = vsel %vm1870, 2147483647, %v1533
          %1903 = vmax.xlane.f32.xlu0 %v1871
          %v1904 = vpop.xlane.xlu0 %1903
          %1905 = vmax.xlane.f32.xlu0 %v1872
          %v1906 = vpop.xlane.xlu0 %1905
          %1907 = vmax.xlane.f32.xlu0 %v1873
          %v1908 = vpop.xlane.xlu0 %1907
          %1909 = vmax.xlane.f32.xlu0 %v1874
          %v1910 = vpop.xlane.xlu0 %1909
          %1911 = vmax.xlane.f32.xlu0 %v1875
          %v1912 = vpop.xlane.xlu0 %1911
          %1913 = vmax.xlane.f32.xlu0 %v1876
          %v1914 = vpop.xlane.xlu0 %1913
          %1915 = vmax.xlane.f32.xlu0 %v1877
          %v1916 = vpop.xlane.xlu0 %1915
          %1917 = vmax.xlane.f32.xlu0 %v1878
          %v1918 = vpop.xlane.xlu0 %1917
          %1919 = vmax.xlane.f32.xlu0 %v1879
          %v1920 = vpop.xlane.xlu0 %1919
          %1921 = vmax.xlane.f32.xlu0 %v1880
          %v1922 = vpop.xlane.xlu0 %1921
          %1923 = vmax.xlane.f32.xlu0 %v1881
          %v1924 = vpop.xlane.xlu0 %1923
          %1925 = vmax.xlane.f32.xlu0 %v1882
          %v1926 = vpop.xlane.xlu0 %1925
          %1927 = vmax.xlane.f32.xlu0 %v1883
          %v1928 = vpop.xlane.xlu0 %1927
          %1929 = vmax.xlane.f32.xlu0 %v1884
          %v1930 = vpop.xlane.xlu0 %1929
          %1931 = vmax.xlane.f32.xlu0 %v1885
          %v1932 = vpop.xlane.xlu0 %1931
          %1933 = vmax.xlane.f32.xlu0 %v1886
          %v1934 = vpop.xlane.xlu0 %1933
          %vm1935 = vcmp.eq.f32.partialorder %v1871, %v1904
          %vm1936 = vcmp.eq.f32.partialorder %v1872, %v1906
          %vm1937 = vcmp.eq.f32.partialorder %v1873, %v1908
          %vm1938 = vcmp.eq.f32.partialorder %v1874, %v1910
          %vm1939 = vcmp.eq.f32.partialorder %v1875, %v1912
          %vm1940 = vcmp.eq.f32.partialorder %v1876, %v1914
          %vm1941 = vcmp.eq.f32.partialorder %v1877, %v1916
          %vm1942 = vcmp.eq.f32.partialorder %v1878, %v1918
          %vm1943 = vcmp.eq.f32.partialorder %v1879, %v1920
          %vm1944 = vcmp.eq.f32.partialorder %v1880, %v1922
          %vm1945 = vcmp.eq.f32.partialorder %v1881, %v1924
          %vm1946 = vcmp.eq.f32.partialorder %v1882, %v1926
          %vm1947 = vcmp.eq.f32.partialorder %v1883, %v1928
          %vm1948 = vcmp.eq.f32.partialorder %v1884, %v1930
          %vm1949 = vcmp.eq.f32.partialorder %v1885, %v1932
          %vm1950 = vcmp.eq.f32.partialorder %v1886, %v1934
          %v1951 = vsel %vm1935, %v1887, 2147483647
          %v1952 = vsel %vm1936, %v1888, 2147483647
          %v1953 = vsel %vm1937, %v1889, 2147483647
          %v1954 = vsel %vm1938, %v1890, 2147483647
          %v1955 = vsel %vm1939, %v1891, 2147483647
          %v1956 = vsel %vm1940, %v1892, 2147483647
          %v1957 = vsel %vm1941, %v1893, 2147483647
          %v1958 = vsel %vm1942, %v1894, 2147483647
          %v1959 = vsel %vm1943, %v1895, 2147483647
          %v1960 = vsel %vm1944, %v1896, 2147483647
          %v1961 = vsel %vm1945, %v1897, 2147483647
          %v1962 = vsel %vm1946, %v1898, 2147483647
          %v1963 = vsel %vm1947, %v1899, 2147483647
          %v1964 = vsel %vm1948, %v1900, 2147483647
          %v1965 = vsel %vm1949, %v1901, 2147483647
          %v1966 = vsel %vm1950, %v1902, 2147483647
          %v1967 = vand.u32 %v1951, 65535
          %v1968 = vshra.s32 %v1951, 16
          %v1969 = vcvt.s32.f32 %v1967
          %v1970 = vcvt.s32.f32 %v1968
          %1971 = vmin.xlane.f32.xlu0 %v1970
          %v1972 = vpop.xlane.xlu0 %1971
          %vm1973 = vcmp.eq.f32.partialorder %v1970, %v1972
          %v1974 = vsel %vm1973, %v1969, inf
          %1975 = vmin.xlane.f32.xlu0 %v1974
          %v1976 = vpop.xlane.xlu0 %1975
          %v1977 = vcvt.f32.s32 %v1976
          %v1978 = vcvt.f32.s32 %v1972
          %v1979 = vshll.u32 %v1978, 16
          %v1980 = vadd.s32 %v1979, %v1977
          %v1981 = vand.u32 %v1952, 65535
          %v1982 = vshra.s32 %v1952, 16
          %v1983 = vcvt.s32.f32 %v1981
          %v1984 = vcvt.s32.f32 %v1982
          %1985 = vmin.xlane.f32.xlu0 %v1984
          %v1986 = vpop.xlane.xlu0 %1985
          %vm1987 = vcmp.eq.f32.partialorder %v1984, %v1986
          %v1988 = vsel %vm1987, %v1983, inf
          %1989 = vmin.xlane.f32.xlu0 %v1988
          %v1990 = vpop.xlane.xlu0 %1989
          %v1991 = vcvt.f32.s32 %v1990
          %v1992 = vcvt.f32.s32 %v1986
          %v1993 = vshll.u32 %v1992, 16
          %v1994 = vadd.s32 %v1993, %v1991
          %v1995 = vand.u32 %v1953, 65535
          %v1996 = vshra.s32 %v1953, 16
          %v1997 = vcvt.s32.f32 %v1995
          %v1998 = vcvt.s32.f32 %v1996
          %1999 = vmin.xlane.f32.xlu0 %v1998
          %v2000 = vpop.xlane.xlu0 %1999
          %vm2001 = vcmp.eq.f32.partialorder %v1998, %v2000
          %v2002 = vsel %vm2001, %v1997, inf
          %2003 = vmin.xlane.f32.xlu0 %v2002
          %v2004 = vpop.xlane.xlu0 %2003
          %v2005 = vcvt.f32.s32 %v2004
          %v2006 = vcvt.f32.s32 %v2000
          %v2007 = vshll.u32 %v2006, 16
          %v2008 = vadd.s32 %v2007, %v2005
          %v2009 = vand.u32 %v1954, 65535
          %v2010 = vshra.s32 %v1954, 16
          %v2011 = vcvt.s32.f32 %v2009
          %v2012 = vcvt.s32.f32 %v2010
          %2013 = vmin.xlane.f32.xlu0 %v2012
          %v2014 = vpop.xlane.xlu0 %2013
          %vm2015 = vcmp.eq.f32.partialorder %v2012, %v2014
          %v2016 = vsel %vm2015, %v2011, inf
          %2017 = vmin.xlane.f32.xlu0 %v2016
          %v2018 = vpop.xlane.xlu0 %2017
          %v2019 = vcvt.f32.s32 %v2018
          %v2020 = vcvt.f32.s32 %v2014
          %v2021 = vshll.u32 %v2020, 16
          %v2022 = vadd.s32 %v2021, %v2019
          %v2023 = vand.u32 %v1955, 65535
          %v2024 = vshra.s32 %v1955, 16
          %v2025 = vcvt.s32.f32 %v2023
          %v2026 = vcvt.s32.f32 %v2024
          %2027 = vmin.xlane.f32.xlu0 %v2026
          %v2028 = vpop.xlane.xlu0 %2027
          %vm2029 = vcmp.eq.f32.partialorder %v2026, %v2028
          %v2030 = vsel %vm2029, %v2025, inf
          %2031 = vmin.xlane.f32.xlu0 %v2030
          %v2032 = vpop.xlane.xlu0 %2031
          %v2033 = vcvt.f32.s32 %v2032
          %v2034 = vcvt.f32.s32 %v2028
          %v2035 = vshll.u32 %v2034, 16
          %v2036 = vadd.s32 %v2035, %v2033
          %v2037 = vand.u32 %v1956, 65535
          %v2038 = vshra.s32 %v1956, 16
          %v2039 = vcvt.s32.f32 %v2037
          %v2040 = vcvt.s32.f32 %v2038
          %2041 = vmin.xlane.f32.xlu0 %v2040
          %v2042 = vpop.xlane.xlu0 %2041
          %vm2043 = vcmp.eq.f32.partialorder %v2040, %v2042
          %v2044 = vsel %vm2043, %v2039, inf
          %2045 = vmin.xlane.f32.xlu0 %v2044
          %v2046 = vpop.xlane.xlu0 %2045
          %v2047 = vcvt.f32.s32 %v2046
          %v2048 = vcvt.f32.s32 %v2042
          %v2049 = vshll.u32 %v2048, 16
          %v2050 = vadd.s32 %v2049, %v2047
          %v2051 = vand.u32 %v1957, 65535
          %v2052 = vshra.s32 %v1957, 16
          %v2053 = vcvt.s32.f32 %v2051
          %v2054 = vcvt.s32.f32 %v2052
          %2055 = vmin.xlane.f32.xlu0 %v2054
          %v2056 = vpop.xlane.xlu0 %2055
          %vm2057 = vcmp.eq.f32.partialorder %v2054, %v2056
          %v2058 = vsel %vm2057, %v2053, inf
          %2059 = vmin.xlane.f32.xlu0 %v2058
          %v2060 = vpop.xlane.xlu0 %2059
          %v2061 = vcvt.f32.s32 %v2060
          %v2062 = vcvt.f32.s32 %v2056
          %v2063 = vshll.u32 %v2062, 16
          %v2064 = vadd.s32 %v2063, %v2061
          %v2065 = vand.u32 %v1958, 65535
          %v2066 = vshra.s32 %v1958, 16
          %v2067 = vcvt.s32.f32 %v2065
          %v2068 = vcvt.s32.f32 %v2066
          %2069 = vmin.xlane.f32.xlu0 %v2068
          %v2070 = vpop.xlane.xlu0 %2069
          %vm2071 = vcmp.eq.f32.partialorder %v2068, %v2070
          %v2072 = vsel %vm2071, %v2067, inf
          %2073 = vmin.xlane.f32.xlu0 %v2072
          %v2074 = vpop.xlane.xlu0 %2073
          %v2075 = vcvt.f32.s32 %v2074
          %v2076 = vcvt.f32.s32 %v2070
          %v2077 = vshll.u32 %v2076, 16
          %v2078 = vadd.s32 %v2077, %v2075
          %v2079 = vand.u32 %v1959, 65535
          %v2080 = vshra.s32 %v1959, 16
          %v2081 = vcvt.s32.f32 %v2079
          %v2082 = vcvt.s32.f32 %v2080
          %2083 = vmin.xlane.f32.xlu0 %v2082
          %v2084 = vpop.xlane.xlu0 %2083
          %vm2085 = vcmp.eq.f32.partialorder %v2082, %v2084
          %v2086 = vsel %vm2085, %v2081, inf
          %2087 = vmin.xlane.f32.xlu0 %v2086
          %v2088 = vpop.xlane.xlu0 %2087
          %v2089 = vcvt.f32.s32 %v2088
          %v2090 = vcvt.f32.s32 %v2084
          %v2091 = vshll.u32 %v2090, 16
          %v2092 = vadd.s32 %v2091, %v2089
          %v2093 = vand.u32 %v1960, 65535
          %v2094 = vshra.s32 %v1960, 16
          %v2095 = vcvt.s32.f32 %v2093
          %v2096 = vcvt.s32.f32 %v2094
          %2097 = vmin.xlane.f32.xlu0 %v2096
          %v2098 = vpop.xlane.xlu0 %2097
          %vm2099 = vcmp.eq.f32.partialorder %v2096, %v2098
          %v2100 = vsel %vm2099, %v2095, inf
          %2101 = vmin.xlane.f32.xlu0 %v2100
          %v2102 = vpop.xlane.xlu0 %2101
          %v2103 = vcvt.f32.s32 %v2102
          %v2104 = vcvt.f32.s32 %v2098
          %v2105 = vshll.u32 %v2104, 16
          %v2106 = vadd.s32 %v2105, %v2103
          %v2107 = vand.u32 %v1961, 65535
          %v2108 = vshra.s32 %v1961, 16
          %v2109 = vcvt.s32.f32 %v2107
          %v2110 = vcvt.s32.f32 %v2108
          %2111 = vmin.xlane.f32.xlu0 %v2110
          %v2112 = vpop.xlane.xlu0 %2111
          %vm2113 = vcmp.eq.f32.partialorder %v2110, %v2112
          %v2114 = vsel %vm2113, %v2109, inf
          %2115 = vmin.xlane.f32.xlu0 %v2114
          %v2116 = vpop.xlane.xlu0 %2115
          %v2117 = vcvt.f32.s32 %v2116
          %v2118 = vcvt.f32.s32 %v2112
          %v2119 = vshll.u32 %v2118, 16
          %v2120 = vadd.s32 %v2119, %v2117
          %v2121 = vand.u32 %v1962, 65535
          %v2122 = vshra.s32 %v1962, 16
          %v2123 = vcvt.s32.f32 %v2121
          %v2124 = vcvt.s32.f32 %v2122
          %2125 = vmin.xlane.f32.xlu0 %v2124
          %v2126 = vpop.xlane.xlu0 %2125
          %vm2127 = vcmp.eq.f32.partialorder %v2124, %v2126
          %v2128 = vsel %vm2127, %v2123, inf
          %2129 = vmin.xlane.f32.xlu0 %v2128
          %v2130 = vpop.xlane.xlu0 %2129
          %v2131 = vcvt.f32.s32 %v2130
          %v2132 = vcvt.f32.s32 %v2126
          %v2133 = vshll.u32 %v2132, 16
          %v2134 = vadd.s32 %v2133, %v2131
          %v2135 = vand.u32 %v1963, 65535
          %v2136 = vshra.s32 %v1963, 16
          %v2137 = vcvt.s32.f32 %v2135
          %v2138 = vcvt.s32.f32 %v2136
          %2139 = vmin.xlane.f32.xlu0 %v2138
          %v2140 = vpop.xlane.xlu0 %2139
          %vm2141 = vcmp.eq.f32.partialorder %v2138, %v2140
          %v2142 = vsel %vm2141, %v2137, inf
          %2143 = vmin.xlane.f32.xlu0 %v2142
          %v2144 = vpop.xlane.xlu0 %2143
          %v2145 = vcvt.f32.s32 %v2144
          %v2146 = vcvt.f32.s32 %v2140
          %v2147 = vshll.u32 %v2146, 16
          %v2148 = vadd.s32 %v2147, %v2145
          %v2149 = vand.u32 %v1964, 65535
          %v2150 = vshra.s32 %v1964, 16
          %v2151 = vcvt.s32.f32 %v2149
          %v2152 = vcvt.s32.f32 %v2150
          %2153 = vmin.xlane.f32.xlu0 %v2152
          %v2154 = vpop.xlane.xlu0 %2153
          %vm2155 = vcmp.eq.f32.partialorder %v2152, %v2154
          %v2156 = vsel %vm2155, %v2151, inf
          %2157 = vmin.xlane.f32.xlu0 %v2156
          %v2158 = vpop.xlane.xlu0 %2157
          %v2159 = vcvt.f32.s32 %v2158
          %v2160 = vcvt.f32.s32 %v2154
          %v2161 = vshll.u32 %v2160, 16
          %v2162 = vadd.s32 %v2161, %v2159
          %v2163 = vand.u32 %v1965, 65535
          %v2164 = vshra.s32 %v1965, 16
          %v2165 = vcvt.s32.f32 %v2163
          %v2166 = vcvt.s32.f32 %v2164
          %2167 = vmin.xlane.f32.xlu0 %v2166
          %v2168 = vpop.xlane.xlu0 %2167
          %vm2169 = vcmp.eq.f32.partialorder %v2166, %v2168
          %v2170 = vsel %vm2169, %v2165, inf
          %2171 = vmin.xlane.f32.xlu0 %v2170
          %v2172 = vpop.xlane.xlu0 %2171
          %v2173 = vcvt.f32.s32 %v2172
          %v2174 = vcvt.f32.s32 %v2168
          %v2175 = vshll.u32 %v2174, 16
          %v2176 = vadd.s32 %v2175, %v2173
          %v2177 = vand.u32 %v1966, 65535
          %v2178 = vshra.s32 %v1966, 16
          %v2179 = vcvt.s32.f32 %v2177
          %v2180 = vcvt.s32.f32 %v2178
          %2181 = vmin.xlane.f32.xlu0 %v2180
          %v2182 = vpop.xlane.xlu0 %2181
          %vm2183 = vcmp.eq.f32.partialorder %v2180, %v2182
          %v2184 = vsel %vm2183, %v2179, inf
          %2185 = vmin.xlane.f32.xlu0 %v2184
          %v2186 = vpop.xlane.xlu0 %2185
          %v2187 = vcvt.f32.s32 %v2186
          %v2188 = vcvt.f32.s32 %v2182
          %v2189 = vshll.u32 %v2188, 16
          %v2190 = vadd.s32 %v2189, %v2187
          %vm2191 = vcmp.eq.s32.totalorder %v1095, 2
          %v2192 = vsel %vm2191, %v1904, %v1823
          %v2193 = vsel %vm2191, %v1906, %v1824
          %v2194 = vsel %vm2191, %v1908, %v1825
          %v2195 = vsel %vm2191, %v1910, %v1826
          %v2196 = vsel %vm2191, %v1912, %v1827
          %v2197 = vsel %vm2191, %v1914, %v1828
          %v2198 = vsel %vm2191, %v1916, %v1829
          %v2199 = vsel %vm2191, %v1918, %v1830
          %v2200 = vsel %vm2191, %v1920, %v1831
          %v2201 = vsel %vm2191, %v1922, %v1832
          %v2202 = vsel %vm2191, %v1924, %v1833
          %v2203 = vsel %vm2191, %v1926, %v1834
          %v2204 = vsel %vm2191, %v1928, %v1835
          %v2205 = vsel %vm2191, %v1930, %v1836
          %v2206 = vsel %vm2191, %v1932, %v1837
          %v2207 = vsel %vm2191, %v1934, %v1838
          %v2208 = vsel %vm2191, %v1980, %v1839
          %v2209 = vsel %vm2191, %v1994, %v1840
          %v2210 = vsel %vm2191, %v2008, %v1841
          %v2211 = vsel %vm2191, %v2022, %v1842
          %v2212 = vsel %vm2191, %v2036, %v1843
          %v2213 = vsel %vm2191, %v2050, %v1844
          %v2214 = vsel %vm2191, %v2064, %v1845
          %v2215 = vsel %vm2191, %v2078, %v1846
          %v2216 = vsel %vm2191, %v2092, %v1847
          %v2217 = vsel %vm2191, %v2106, %v1848
          %v2218 = vsel %vm2191, %v2120, %v1849
          %v2219 = vsel %vm2191, %v2134, %v1850
          %v2220 = vsel %vm2191, %v2148, %v1851
          %v2221 = vsel %vm2191, %v2162, %v1852
          %v2222 = vsel %vm2191, %v2176, %v1853
          %v2223 = vsel %vm2191, %v2190, %v1854
          %vm2224 = vcmp.eq.s32.totalorder %v1887, %v1980
          %vm2225 = vcmp.eq.s32.totalorder %v1888, %v1994
          %vm2226 = vcmp.eq.s32.totalorder %v1889, %v2008
          %vm2227 = vcmp.eq.s32.totalorder %v1890, %v2022
          %vm2228 = vcmp.eq.s32.totalorder %v1891, %v2036
          %vm2229 = vcmp.eq.s32.totalorder %v1892, %v2050
          %vm2230 = vcmp.eq.s32.totalorder %v1893, %v2064
          %vm2231 = vcmp.eq.s32.totalorder %v1894, %v2078
          %vm2232 = vcmp.eq.s32.totalorder %v1895, %v2092
          %vm2233 = vcmp.eq.s32.totalorder %v1896, %v2106
          %vm2234 = vcmp.eq.s32.totalorder %v1897, %v2120
          %vm2235 = vcmp.eq.s32.totalorder %v1898, %v2134
          %vm2236 = vcmp.eq.s32.totalorder %v1899, %v2148
          %vm2237 = vcmp.eq.s32.totalorder %v1900, %v2162
          %vm2238 = vcmp.eq.s32.totalorder %v1901, %v2176
          %vm2239 = vcmp.eq.s32.totalorder %v1902, %v2190
          %v2240 = vsel %vm2224, -inf, %v1871
          %v2241 = vsel %vm2225, -inf, %v1872
          %v2242 = vsel %vm2226, -inf, %v1873
          %v2243 = vsel %vm2227, -inf, %v1874
          %v2244 = vsel %vm2228, -inf, %v1875
          %v2245 = vsel %vm2229, -inf, %v1876
          %v2246 = vsel %vm2230, -inf, %v1877
          %v2247 = vsel %vm2231, -inf, %v1878
          %v2248 = vsel %vm2232, -inf, %v1879
          %v2249 = vsel %vm2233, -inf, %v1880
          %v2250 = vsel %vm2234, -inf, %v1881
          %v2251 = vsel %vm2235, -inf, %v1882
          %v2252 = vsel %vm2236, -inf, %v1883
          %v2253 = vsel %vm2237, -inf, %v1884
          %v2254 = vsel %vm2238, -inf, %v1885
          %v2255 = vsel %vm2239, -inf, %v1886
          %v2256 = vsel %vm2224, 2147483647, %v1887
          %v2257 = vsel %vm2225, 2147483647, %v1888
          %v2258 = vsel %vm2226, 2147483647, %v1889
          %v2259 = vsel %vm2227, 2147483647, %v1890
          %v2260 = vsel %vm2228, 2147483647, %v1891
          %v2261 = vsel %vm2229, 2147483647, %v1892
          %v2262 = vsel %vm2230, 2147483647, %v1893
          %v2263 = vsel %vm2231, 2147483647, %v1894
          %v2264 = vsel %vm2232, 2147483647, %v1895
          %v2265 = vsel %vm2233, 2147483647, %v1896
          %v2266 = vsel %vm2234, 2147483647, %v1897
          %v2267 = vsel %vm2235, 2147483647, %v1898
          %v2268 = vsel %vm2236, 2147483647, %v1899
          %v2269 = vsel %vm2237, 2147483647, %v1900
          %v2270 = vsel %vm2238, 2147483647, %v1901
          %v2271 = vsel %vm2239, 2147483647, %v1902
          %2272 = vmax.xlane.f32.xlu0 %v2240
          %v2273 = vpop.xlane.xlu0 %2272
          %2274 = vmax.xlane.f32.xlu0 %v2241
          %v2275 = vpop.xlane.xlu0 %2274
          %2276 = vmax.xlane.f32.xlu0 %v2242
          %v2277 = vpop.xlane.xlu0 %2276
          %2278 = vmax.xlane.f32.xlu0 %v2243
          %v2279 = vpop.xlane.xlu0 %2278
          %2280 = vmax.xlane.f32.xlu0 %v2244
          %v2281 = vpop.xlane.xlu0 %2280
          %2282 = vmax.xlane.f32.xlu0 %v2245
          %v2283 = vpop.xlane.xlu0 %2282
          %2284 = vmax.xlane.f32.xlu0 %v2246
          %v2285 = vpop.xlane.xlu0 %2284
          %2286 = vmax.xlane.f32.xlu0 %v2247
          %v2287 = vpop.xlane.xlu0 %2286
          %2288 = vmax.xlane.f32.xlu0 %v2248
          %v2289 = vpop.xlane.xlu0 %2288
          %2290 = vmax.xlane.f32.xlu0 %v2249
          %v2291 = vpop.xlane.xlu0 %2290
          %2292 = vmax.xlane.f32.xlu0 %v2250
          %v2293 = vpop.xlane.xlu0 %2292
          %2294 = vmax.xlane.f32.xlu0 %v2251
          %v2295 = vpop.xlane.xlu0 %2294
          %2296 = vmax.xlane.f32.xlu0 %v2252
          %v2297 = vpop.xlane.xlu0 %2296
          %2298 = vmax.xlane.f32.xlu0 %v2253
          %v2299 = vpop.xlane.xlu0 %2298
          %2300 = vmax.xlane.f32.xlu0 %v2254
          %v2301 = vpop.xlane.xlu0 %2300
          %2302 = vmax.xlane.f32.xlu0 %v2255
          %v2303 = vpop.xlane.xlu0 %2302
          %vm2304 = vcmp.eq.f32.partialorder %v2240, %v2273
          %vm2305 = vcmp.eq.f32.partialorder %v2241, %v2275
          %vm2306 = vcmp.eq.f32.partialorder %v2242, %v2277
          %vm2307 = vcmp.eq.f32.partialorder %v2243, %v2279
          %vm2308 = vcmp.eq.f32.partialorder %v2244, %v2281
          %vm2309 = vcmp.eq.f32.partialorder %v2245, %v2283
          %vm2310 = vcmp.eq.f32.partialorder %v2246, %v2285
          %vm2311 = vcmp.eq.f32.partialorder %v2247, %v2287
          %vm2312 = vcmp.eq.f32.partialorder %v2248, %v2289
          %vm2313 = vcmp.eq.f32.partialorder %v2249, %v2291
          %vm2314 = vcmp.eq.f32.partialorder %v2250, %v2293
          %vm2315 = vcmp.eq.f32.partialorder %v2251, %v2295
          %vm2316 = vcmp.eq.f32.partialorder %v2252, %v2297
          %vm2317 = vcmp.eq.f32.partialorder %v2253, %v2299
          %vm2318 = vcmp.eq.f32.partialorder %v2254, %v2301
          %vm2319 = vcmp.eq.f32.partialorder %v2255, %v2303
          %v2320 = vsel %vm2304, %v2256, 2147483647
          %v2321 = vsel %vm2305, %v2257, 2147483647
          %v2322 = vsel %vm2306, %v2258, 2147483647
          %v2323 = vsel %vm2307, %v2259, 2147483647
          %v2324 = vsel %vm2308, %v2260, 2147483647
          %v2325 = vsel %vm2309, %v2261, 2147483647
          %v2326 = vsel %vm2310, %v2262, 2147483647
          %v2327 = vsel %vm2311, %v2263, 2147483647
          %v2328 = vsel %vm2312, %v2264, 2147483647
          %v2329 = vsel %vm2313, %v2265, 2147483647
          %v2330 = vsel %vm2314, %v2266, 2147483647
          %v2331 = vsel %vm2315, %v2267, 2147483647
          %v2332 = vsel %vm2316, %v2268, 2147483647
          %v2333 = vsel %vm2317, %v2269, 2147483647
          %v2334 = vsel %vm2318, %v2270, 2147483647
          %v2335 = vsel %vm2319, %v2271, 2147483647
          %v2336 = vand.u32 %v2320, 65535
          %v2337 = vshra.s32 %v2320, 16
          %v2338 = vcvt.s32.f32 %v2336
          %v2339 = vcvt.s32.f32 %v2337
          %2340 = vmin.xlane.f32.xlu0 %v2339
          %v2341 = vpop.xlane.xlu0 %2340
          %vm2342 = vcmp.eq.f32.partialorder %v2339, %v2341
          %v2343 = vsel %vm2342, %v2338, inf
          %2344 = vmin.xlane.f32.xlu0 %v2343
          %v2345 = vpop.xlane.xlu0 %2344
          %v2346 = vcvt.f32.s32 %v2345
          %v2347 = vcvt.f32.s32 %v2341
          %v2348 = vshll.u32 %v2347, 16
          %v2349 = vadd.s32 %v2348, %v2346
          %v2350 = vand.u32 %v2321, 65535
          %v2351 = vshra.s32 %v2321, 16
          %v2352 = vcvt.s32.f32 %v2350
          %v2353 = vcvt.s32.f32 %v2351
          %2354 = vmin.xlane.f32.xlu0 %v2353
          %v2355 = vpop.xlane.xlu0 %2354
          %vm2356 = vcmp.eq.f32.partialorder %v2353, %v2355
          %v2357 = vsel %vm2356, %v2352, inf
          %2358 = vmin.xlane.f32.xlu0 %v2357
          %v2359 = vpop.xlane.xlu0 %2358
          %v2360 = vcvt.f32.s32 %v2359
          %v2361 = vcvt.f32.s32 %v2355
          %v2362 = vshll.u32 %v2361, 16
          %v2363 = vadd.s32 %v2362, %v2360
          %v2364 = vand.u32 %v2322, 65535
          %v2365 = vshra.s32 %v2322, 16
          %v2366 = vcvt.s32.f32 %v2364
          %v2367 = vcvt.s32.f32 %v2365
          %2368 = vmin.xlane.f32.xlu0 %v2367
          %v2369 = vpop.xlane.xlu0 %2368
          %vm2370 = vcmp.eq.f32.partialorder %v2367, %v2369
          %v2371 = vsel %vm2370, %v2366, inf
          %2372 = vmin.xlane.f32.xlu0 %v2371
          %v2373 = vpop.xlane.xlu0 %2372
          %v2374 = vcvt.f32.s32 %v2373
          %v2375 = vcvt.f32.s32 %v2369
          %v2376 = vshll.u32 %v2375, 16
          %v2377 = vadd.s32 %v2376, %v2374
          %v2378 = vand.u32 %v2323, 65535
          %v2379 = vshra.s32 %v2323, 16
          %v2380 = vcvt.s32.f32 %v2378
          %v2381 = vcvt.s32.f32 %v2379
          %2382 = vmin.xlane.f32.xlu0 %v2381
          %v2383 = vpop.xlane.xlu0 %2382
          %vm2384 = vcmp.eq.f32.partialorder %v2381, %v2383
          %v2385 = vsel %vm2384, %v2380, inf
          %2386 = vmin.xlane.f32.xlu0 %v2385
          %v2387 = vpop.xlane.xlu0 %2386
          %v2388 = vcvt.f32.s32 %v2387
          %v2389 = vcvt.f32.s32 %v2383
          %v2390 = vshll.u32 %v2389, 16
          %v2391 = vadd.s32 %v2390, %v2388
          %v2392 = vand.u32 %v2324, 65535
          %v2393 = vshra.s32 %v2324, 16
          %v2394 = vcvt.s32.f32 %v2392
          %v2395 = vcvt.s32.f32 %v2393
          %2396 = vmin.xlane.f32.xlu0 %v2395
          %v2397 = vpop.xlane.xlu0 %2396
          %vm2398 = vcmp.eq.f32.partialorder %v2395, %v2397
          %v2399 = vsel %vm2398, %v2394, inf
          %2400 = vmin.xlane.f32.xlu0 %v2399
          %v2401 = vpop.xlane.xlu0 %2400
          %v2402 = vcvt.f32.s32 %v2401
          %v2403 = vcvt.f32.s32 %v2397
          %v2404 = vshll.u32 %v2403, 16
          %v2405 = vadd.s32 %v2404, %v2402
          %v2406 = vand.u32 %v2325, 65535
          %v2407 = vshra.s32 %v2325, 16
          %v2408 = vcvt.s32.f32 %v2406
          %v2409 = vcvt.s32.f32 %v2407
          %2410 = vmin.xlane.f32.xlu0 %v2409
          %v2411 = vpop.xlane.xlu0 %2410
          %vm2412 = vcmp.eq.f32.partialorder %v2409, %v2411
          %v2413 = vsel %vm2412, %v2408, inf
          %2414 = vmin.xlane.f32.xlu0 %v2413
          %v2415 = vpop.xlane.xlu0 %2414
          %v2416 = vcvt.f32.s32 %v2415
          %v2417 = vcvt.f32.s32 %v2411
          %v2418 = vshll.u32 %v2417, 16
          %v2419 = vadd.s32 %v2418, %v2416
          %v2420 = vand.u32 %v2326, 65535
          %v2421 = vshra.s32 %v2326, 16
          %v2422 = vcvt.s32.f32 %v2420
          %v2423 = vcvt.s32.f32 %v2421
          %2424 = vmin.xlane.f32.xlu0 %v2423
          %v2425 = vpop.xlane.xlu0 %2424
          %vm2426 = vcmp.eq.f32.partialorder %v2423, %v2425
          %v2427 = vsel %vm2426, %v2422, inf
          %2428 = vmin.xlane.f32.xlu0 %v2427
          %v2429 = vpop.xlane.xlu0 %2428
          %v2430 = vcvt.f32.s32 %v2429
          %v2431 = vcvt.f32.s32 %v2425
          %v2432 = vshll.u32 %v2431, 16
          %v2433 = vadd.s32 %v2432, %v2430
          %v2434 = vand.u32 %v2327, 65535
          %v2435 = vshra.s32 %v2327, 16
          %v2436 = vcvt.s32.f32 %v2434
          %v2437 = vcvt.s32.f32 %v2435
          %2438 = vmin.xlane.f32.xlu0 %v2437
          %v2439 = vpop.xlane.xlu0 %2438
          %vm2440 = vcmp.eq.f32.partialorder %v2437, %v2439
          %v2441 = vsel %vm2440, %v2436, inf
          %2442 = vmin.xlane.f32.xlu0 %v2441
          %v2443 = vpop.xlane.xlu0 %2442
          %v2444 = vcvt.f32.s32 %v2443
          %v2445 = vcvt.f32.s32 %v2439
          %v2446 = vshll.u32 %v2445, 16
          %v2447 = vadd.s32 %v2446, %v2444
          %v2448 = vand.u32 %v2328, 65535
          %v2449 = vshra.s32 %v2328, 16
          %v2450 = vcvt.s32.f32 %v2448
          %v2451 = vcvt.s32.f32 %v2449
          %2452 = vmin.xlane.f32.xlu0 %v2451
          %v2453 = vpop.xlane.xlu0 %2452
          %vm2454 = vcmp.eq.f32.partialorder %v2451, %v2453
          %v2455 = vsel %vm2454, %v2450, inf
          %2456 = vmin.xlane.f32.xlu0 %v2455
          %v2457 = vpop.xlane.xlu0 %2456
          %v2458 = vcvt.f32.s32 %v2457
          %v2459 = vcvt.f32.s32 %v2453
          %v2460 = vshll.u32 %v2459, 16
          %v2461 = vadd.s32 %v2460, %v2458
          %v2462 = vand.u32 %v2329, 65535
          %v2463 = vshra.s32 %v2329, 16
          %v2464 = vcvt.s32.f32 %v2462
          %v2465 = vcvt.s32.f32 %v2463
          %2466 = vmin.xlane.f32.xlu0 %v2465
          %v2467 = vpop.xlane.xlu0 %2466
          %vm2468 = vcmp.eq.f32.partialorder %v2465, %v2467
          %v2469 = vsel %vm2468, %v2464, inf
          %2470 = vmin.xlane.f32.xlu0 %v2469
          %v2471 = vpop.xlane.xlu0 %2470
          %v2472 = vcvt.f32.s32 %v2471
          %v2473 = vcvt.f32.s32 %v2467
          %v2474 = vshll.u32 %v2473, 16
          %v2475 = vadd.s32 %v2474, %v2472
          %v2476 = vand.u32 %v2330, 65535
          %v2477 = vshra.s32 %v2330, 16
          %v2478 = vcvt.s32.f32 %v2476
          %v2479 = vcvt.s32.f32 %v2477
          %2480 = vmin.xlane.f32.xlu0 %v2479
          %v2481 = vpop.xlane.xlu0 %2480
          %vm2482 = vcmp.eq.f32.partialorder %v2479, %v2481
          %v2483 = vsel %vm2482, %v2478, inf
          %2484 = vmin.xlane.f32.xlu0 %v2483
          %v2485 = vpop.xlane.xlu0 %2484
          %v2486 = vcvt.f32.s32 %v2485
          %v2487 = vcvt.f32.s32 %v2481
          %v2488 = vshll.u32 %v2487, 16
          %v2489 = vadd.s32 %v2488, %v2486
          %v2490 = vand.u32 %v2331, 65535
          %v2491 = vshra.s32 %v2331, 16
          %v2492 = vcvt.s32.f32 %v2490
          %v2493 = vcvt.s32.f32 %v2491
          %2494 = vmin.xlane.f32.xlu0 %v2493
          %v2495 = vpop.xlane.xlu0 %2494
          %vm2496 = vcmp.eq.f32.partialorder %v2493, %v2495
          %v2497 = vsel %vm2496, %v2492, inf
          %2498 = vmin.xlane.f32.xlu0 %v2497
          %v2499 = vpop.xlane.xlu0 %2498
          %v2500 = vcvt.f32.s32 %v2499
          %v2501 = vcvt.f32.s32 %v2495
          %v2502 = vshll.u32 %v2501, 16
          %v2503 = vadd.s32 %v2502, %v2500
          %v2504 = vand.u32 %v2332, 65535
          %v2505 = vshra.s32 %v2332, 16
          %v2506 = vcvt.s32.f32 %v2504
          %v2507 = vcvt.s32.f32 %v2505
          %2508 = vmin.xlane.f32.xlu0 %v2507
          %v2509 = vpop.xlane.xlu0 %2508
          %vm2510 = vcmp.eq.f32.partialorder %v2507, %v2509
          %v2511 = vsel %vm2510, %v2506, inf
          %2512 = vmin.xlane.f32.xlu0 %v2511
          %v2513 = vpop.xlane.xlu0 %2512
          %v2514 = vcvt.f32.s32 %v2513
          %v2515 = vcvt.f32.s32 %v2509
          %v2516 = vshll.u32 %v2515, 16
          %v2517 = vadd.s32 %v2516, %v2514
          %v2518 = vand.u32 %v2333, 65535
          %v2519 = vshra.s32 %v2333, 16
          %v2520 = vcvt.s32.f32 %v2518
          %v2521 = vcvt.s32.f32 %v2519
          %2522 = vmin.xlane.f32.xlu0 %v2521
          %v2523 = vpop.xlane.xlu0 %2522
          %vm2524 = vcmp.eq.f32.partialorder %v2521, %v2523
          %v2525 = vsel %vm2524, %v2520, inf
          %2526 = vmin.xlane.f32.xlu0 %v2525
          %v2527 = vpop.xlane.xlu0 %2526
          %v2528 = vcvt.f32.s32 %v2527
          %v2529 = vcvt.f32.s32 %v2523
          %v2530 = vshll.u32 %v2529, 16
          %v2531 = vadd.s32 %v2530, %v2528
          %v2532 = vand.u32 %v2334, 65535
          %v2533 = vshra.s32 %v2334, 16
          %v2534 = vcvt.s32.f32 %v2532
          %v2535 = vcvt.s32.f32 %v2533
          %2536 = vmin.xlane.f32.xlu0 %v2535
          %v2537 = vpop.xlane.xlu0 %2536
          %vm2538 = vcmp.eq.f32.partialorder %v2535, %v2537
          %v2539 = vsel %vm2538, %v2534, inf
          %2540 = vmin.xlane.f32.xlu0 %v2539
          %v2541 = vpop.xlane.xlu0 %2540
          %v2542 = vcvt.f32.s32 %v2541
          %v2543 = vcvt.f32.s32 %v2537
          %v2544 = vshll.u32 %v2543, 16
          %v2545 = vadd.s32 %v2544, %v2542
          %v2546 = vand.u32 %v2335, 65535
          %v2547 = vshra.s32 %v2335, 16
          %v2548 = vcvt.s32.f32 %v2546
          %v2549 = vcvt.s32.f32 %v2547
          %2550 = vmin.xlane.f32.xlu0 %v2549
          %v2551 = vpop.xlane.xlu0 %2550
          %vm2552 = vcmp.eq.f32.partialorder %v2549, %v2551
          %v2553 = vsel %vm2552, %v2548, inf
          %2554 = vmin.xlane.f32.xlu0 %v2553
          %v2555 = vpop.xlane.xlu0 %2554
          %v2556 = vcvt.f32.s32 %v2555
          %v2557 = vcvt.f32.s32 %v2551
          %v2558 = vshll.u32 %v2557, 16
          %v2559 = vadd.s32 %v2558, %v2556
          %vm2560 = vcmp.eq.s32.totalorder %v1095, 3
          %v2561 = vsel %vm2560, %v2273, %v2192
          %v2562 = vsel %vm2560, %v2275, %v2193
          %v2563 = vsel %vm2560, %v2277, %v2194
          %v2564 = vsel %vm2560, %v2279, %v2195
          %v2565 = vsel %vm2560, %v2281, %v2196
          %v2566 = vsel %vm2560, %v2283, %v2197
          %v2567 = vsel %vm2560, %v2285, %v2198
          %v2568 = vsel %vm2560, %v2287, %v2199
          %v2569 = vsel %vm2560, %v2289, %v2200
          %v2570 = vsel %vm2560, %v2291, %v2201
          %v2571 = vsel %vm2560, %v2293, %v2202
          %v2572 = vsel %vm2560, %v2295, %v2203
          %v2573 = vsel %vm2560, %v2297, %v2204
          %v2574 = vsel %vm2560, %v2299, %v2205
          %v2575 = vsel %vm2560, %v2301, %v2206
          %v2576 = vsel %vm2560, %v2303, %v2207
          %v2577 = vsel %vm2560, %v2349, %v2208
          %v2578 = vsel %vm2560, %v2363, %v2209
          %v2579 = vsel %vm2560, %v2377, %v2210
          %v2580 = vsel %vm2560, %v2391, %v2211
          %v2581 = vsel %vm2560, %v2405, %v2212
          %v2582 = vsel %vm2560, %v2419, %v2213
          %v2583 = vsel %vm2560, %v2433, %v2214
          %v2584 = vsel %vm2560, %v2447, %v2215
          %v2585 = vsel %vm2560, %v2461, %v2216
          %v2586 = vsel %vm2560, %v2475, %v2217
          %v2587 = vsel %vm2560, %v2489, %v2218
          %v2588 = vsel %vm2560, %v2503, %v2219
          %v2589 = vsel %vm2560, %v2517, %v2220
          %v2590 = vsel %vm2560, %v2531, %v2221
          %v2591 = vsel %vm2560, %v2545, %v2222
          %v2592 = vsel %vm2560, %v2559, %v2223
          %vm2593 = vcmp.eq.s32.totalorder %v2256, %v2349
          %vm2594 = vcmp.eq.s32.totalorder %v2257, %v2363
          %vm2595 = vcmp.eq.s32.totalorder %v2258, %v2377
          %vm2596 = vcmp.eq.s32.totalorder %v2259, %v2391
          %vm2597 = vcmp.eq.s32.totalorder %v2260, %v2405
          %vm2598 = vcmp.eq.s32.totalorder %v2261, %v2419
          %vm2599 = vcmp.eq.s32.totalorder %v2262, %v2433
          %vm2600 = vcmp.eq.s32.totalorder %v2263, %v2447
          %vm2601 = vcmp.eq.s32.totalorder %v2264, %v2461
          %vm2602 = vcmp.eq.s32.totalorder %v2265, %v2475
          %vm2603 = vcmp.eq.s32.totalorder %v2266, %v2489
          %vm2604 = vcmp.eq.s32.totalorder %v2267, %v2503
          %vm2605 = vcmp.eq.s32.totalorder %v2268, %v2517
          %vm2606 = vcmp.eq.s32.totalorder %v2269, %v2531
          %vm2607 = vcmp.eq.s32.totalorder %v2270, %v2545
          %vm2608 = vcmp.eq.s32.totalorder %v2271, %v2559
          %v2609 = vsel %vm2593, -inf, %v2240
          %v2610 = vsel %vm2594, -inf, %v2241
          %v2611 = vsel %vm2595, -inf, %v2242
          %v2612 = vsel %vm2596, -inf, %v2243
          %v2613 = vsel %vm2597, -inf, %v2244
          %v2614 = vsel %vm2598, -inf, %v2245
          %v2615 = vsel %vm2599, -inf, %v2246
          %v2616 = vsel %vm2600, -inf, %v2247
          %v2617 = vsel %vm2601, -inf, %v2248
          %v2618 = vsel %vm2602, -inf, %v2249
          %v2619 = vsel %vm2603, -inf, %v2250
          %v2620 = vsel %vm2604, -inf, %v2251
          %v2621 = vsel %vm2605, -inf, %v2252
          %v2622 = vsel %vm2606, -inf, %v2253
          %v2623 = vsel %vm2607, -inf, %v2254
          %v2624 = vsel %vm2608, -inf, %v2255
          %v2625 = vsel %vm2593, 2147483647, %v2256
          %v2626 = vsel %vm2594, 2147483647, %v2257
          %v2627 = vsel %vm2595, 2147483647, %v2258
          %v2628 = vsel %vm2596, 2147483647, %v2259
          %v2629 = vsel %vm2597, 2147483647, %v2260
          %v2630 = vsel %vm2598, 2147483647, %v2261
          %v2631 = vsel %vm2599, 2147483647, %v2262
          %v2632 = vsel %vm2600, 2147483647, %v2263
          %v2633 = vsel %vm2601, 2147483647, %v2264
          %v2634 = vsel %vm2602, 2147483647, %v2265
          %v2635 = vsel %vm2603, 2147483647, %v2266
          %v2636 = vsel %vm2604, 2147483647, %v2267
          %v2637 = vsel %vm2605, 2147483647, %v2268
          %v2638 = vsel %vm2606, 2147483647, %v2269
          %v2639 = vsel %vm2607, 2147483647, %v2270
          %v2640 = vsel %vm2608, 2147483647, %v2271
          %2641 = vmax.xlane.f32.xlu0 %v2609
          %v2642 = vpop.xlane.xlu0 %2641
          %2643 = vmax.xlane.f32.xlu0 %v2610
          %v2644 = vpop.xlane.xlu0 %2643
          %2645 = vmax.xlane.f32.xlu0 %v2611
          %v2646 = vpop.xlane.xlu0 %2645
          %2647 = vmax.xlane.f32.xlu0 %v2612
          %v2648 = vpop.xlane.xlu0 %2647
          %2649 = vmax.xlane.f32.xlu0 %v2613
          %v2650 = vpop.xlane.xlu0 %2649
          %2651 = vmax.xlane.f32.xlu0 %v2614
          %v2652 = vpop.xlane.xlu0 %2651
          %2653 = vmax.xlane.f32.xlu0 %v2615
          %v2654 = vpop.xlane.xlu0 %2653
          %2655 = vmax.xlane.f32.xlu0 %v2616
          %v2656 = vpop.xlane.xlu0 %2655
          %2657 = vmax.xlane.f32.xlu0 %v2617
          %v2658 = vpop.xlane.xlu0 %2657
          %2659 = vmax.xlane.f32.xlu0 %v2618
          %v2660 = vpop.xlane.xlu0 %2659
          %2661 = vmax.xlane.f32.xlu0 %v2619
          %v2662 = vpop.xlane.xlu0 %2661
          %2663 = vmax.xlane.f32.xlu0 %v2620
          %v2664 = vpop.xlane.xlu0 %2663
          %2665 = vmax.xlane.f32.xlu0 %v2621
          %v2666 = vpop.xlane.xlu0 %2665
          %2667 = vmax.xlane.f32.xlu0 %v2622
          %v2668 = vpop.xlane.xlu0 %2667
          %2669 = vmax.xlane.f32.xlu0 %v2623
          %v2670 = vpop.xlane.xlu0 %2669
          %2671 = vmax.xlane.f32.xlu0 %v2624
          %v2672 = vpop.xlane.xlu0 %2671
          %vm2673 = vcmp.eq.f32.partialorder %v2609, %v2642
          %vm2674 = vcmp.eq.f32.partialorder %v2610, %v2644
          %vm2675 = vcmp.eq.f32.partialorder %v2611, %v2646
          %vm2676 = vcmp.eq.f32.partialorder %v2612, %v2648
          %vm2677 = vcmp.eq.f32.partialorder %v2613, %v2650
          %vm2678 = vcmp.eq.f32.partialorder %v2614, %v2652
          %vm2679 = vcmp.eq.f32.partialorder %v2615, %v2654
          %vm2680 = vcmp.eq.f32.partialorder %v2616, %v2656
          %vm2681 = vcmp.eq.f32.partialorder %v2617, %v2658
          %vm2682 = vcmp.eq.f32.partialorder %v2618, %v2660
          %vm2683 = vcmp.eq.f32.partialorder %v2619, %v2662
          %vm2684 = vcmp.eq.f32.partialorder %v2620, %v2664
          %vm2685 = vcmp.eq.f32.partialorder %v2621, %v2666
          %vm2686 = vcmp.eq.f32.partialorder %v2622, %v2668
          %vm2687 = vcmp.eq.f32.partialorder %v2623, %v2670
          %vm2688 = vcmp.eq.f32.partialorder %v2624, %v2672
          %v2689 = vsel %vm2673, %v2625, 2147483647
          %v2690 = vsel %vm2674, %v2626, 2147483647
          %v2691 = vsel %vm2675, %v2627, 2147483647
          %v2692 = vsel %vm2676, %v2628, 2147483647
          %v2693 = vsel %vm2677, %v2629, 2147483647
          %v2694 = vsel %vm2678, %v2630, 2147483647
          %v2695 = vsel %vm2679, %v2631, 2147483647
          %v2696 = vsel %vm2680, %v2632, 2147483647
          %v2697 = vsel %vm2681, %v2633, 2147483647
          %v2698 = vsel %vm2682, %v2634, 2147483647
          %v2699 = vsel %vm2683, %v2635, 2147483647
          %v2700 = vsel %vm2684, %v2636, 2147483647
          %v2701 = vsel %vm2685, %v2637, 2147483647
          %v2702 = vsel %vm2686, %v2638, 2147483647
          %v2703 = vsel %vm2687, %v2639, 2147483647
          %v2704 = vsel %vm2688, %v2640, 2147483647
          %v2705 = vand.u32 %v2689, 65535
          %v2706 = vshra.s32 %v2689, 16
          %v2707 = vcvt.s32.f32 %v2705
          %v2708 = vcvt.s32.f32 %v2706
          %2709 = vmin.xlane.f32.xlu0 %v2708
          %v2710 = vpop.xlane.xlu0 %2709
          %vm2711 = vcmp.eq.f32.partialorder %v2708, %v2710
          %v2712 = vsel %vm2711, %v2707, inf
          %2713 = vmin.xlane.f32.xlu0 %v2712
          %v2714 = vpop.xlane.xlu0 %2713
          %v2715 = vcvt.f32.s32 %v2714
          %v2716 = vcvt.f32.s32 %v2710
          %v2717 = vshll.u32 %v2716, 16
          %v2718 = vadd.s32 %v2717, %v2715
          %v2719 = vand.u32 %v2690, 65535
          %v2720 = vshra.s32 %v2690, 16
          %v2721 = vcvt.s32.f32 %v2719
          %v2722 = vcvt.s32.f32 %v2720
          %2723 = vmin.xlane.f32.xlu0 %v2722
          %v2724 = vpop.xlane.xlu0 %2723
          %vm2725 = vcmp.eq.f32.partialorder %v2722, %v2724
          %v2726 = vsel %vm2725, %v2721, inf
          %2727 = vmin.xlane.f32.xlu0 %v2726
          %v2728 = vpop.xlane.xlu0 %2727
          %v2729 = vcvt.f32.s32 %v2728
          %v2730 = vcvt.f32.s32 %v2724
          %v2731 = vshll.u32 %v2730, 16
          %v2732 = vadd.s32 %v2731, %v2729
          %v2733 = vand.u32 %v2691, 65535
          %v2734 = vshra.s32 %v2691, 16
          %v2735 = vcvt.s32.f32 %v2733
          %v2736 = vcvt.s32.f32 %v2734
          %2737 = vmin.xlane.f32.xlu0 %v2736
          %v2738 = vpop.xlane.xlu0 %2737
          %vm2739 = vcmp.eq.f32.partialorder %v2736, %v2738
          %v2740 = vsel %vm2739, %v2735, inf
          %2741 = vmin.xlane.f32.xlu0 %v2740
          %v2742 = vpop.xlane.xlu0 %2741
          %v2743 = vcvt.f32.s32 %v2742
          %v2744 = vcvt.f32.s32 %v2738
          %v2745 = vshll.u32 %v2744, 16
          %v2746 = vadd.s32 %v2745, %v2743
          %v2747 = vand.u32 %v2692, 65535
          %v2748 = vshra.s32 %v2692, 16
          %v2749 = vcvt.s32.f32 %v2747
          %v2750 = vcvt.s32.f32 %v2748
          %2751 = vmin.xlane.f32.xlu0 %v2750
          %v2752 = vpop.xlane.xlu0 %2751
          %vm2753 = vcmp.eq.f32.partialorder %v2750, %v2752
          %v2754 = vsel %vm2753, %v2749, inf
          %2755 = vmin.xlane.f32.xlu0 %v2754
          %v2756 = vpop.xlane.xlu0 %2755
          %v2757 = vcvt.f32.s32 %v2756
          %v2758 = vcvt.f32.s32 %v2752
          %v2759 = vshll.u32 %v2758, 16
          %v2760 = vadd.s32 %v2759, %v2757
          %v2761 = vand.u32 %v2693, 65535
          %v2762 = vshra.s32 %v2693, 16
          %v2763 = vcvt.s32.f32 %v2761
          %v2764 = vcvt.s32.f32 %v2762
          %2765 = vmin.xlane.f32.xlu0 %v2764
          %v2766 = vpop.xlane.xlu0 %2765
          %vm2767 = vcmp.eq.f32.partialorder %v2764, %v2766
          %v2768 = vsel %vm2767, %v2763, inf
          %2769 = vmin.xlane.f32.xlu0 %v2768
          %v2770 = vpop.xlane.xlu0 %2769
          %v2771 = vcvt.f32.s32 %v2770
          %v2772 = vcvt.f32.s32 %v2766
          %v2773 = vshll.u32 %v2772, 16
          %v2774 = vadd.s32 %v2773, %v2771
          %v2775 = vand.u32 %v2694, 65535
          %v2776 = vshra.s32 %v2694, 16
          %v2777 = vcvt.s32.f32 %v2775
          %v2778 = vcvt.s32.f32 %v2776
          %2779 = vmin.xlane.f32.xlu0 %v2778
          %v2780 = vpop.xlane.xlu0 %2779
          %vm2781 = vcmp.eq.f32.partialorder %v2778, %v2780
          %v2782 = vsel %vm2781, %v2777, inf
          %2783 = vmin.xlane.f32.xlu0 %v2782
          %v2784 = vpop.xlane.xlu0 %2783
          %v2785 = vcvt.f32.s32 %v2784
          %v2786 = vcvt.f32.s32 %v2780
          %v2787 = vshll.u32 %v2786, 16
          %v2788 = vadd.s32 %v2787, %v2785
          %v2789 = vand.u32 %v2695, 65535
          %v2790 = vshra.s32 %v2695, 16
          %v2791 = vcvt.s32.f32 %v2789
          %v2792 = vcvt.s32.f32 %v2790
          %2793 = vmin.xlane.f32.xlu0 %v2792
          %v2794 = vpop.xlane.xlu0 %2793
          %vm2795 = vcmp.eq.f32.partialorder %v2792, %v2794
          %v2796 = vsel %vm2795, %v2791, inf
          %2797 = vmin.xlane.f32.xlu0 %v2796
          %v2798 = vpop.xlane.xlu0 %2797
          %v2799 = vcvt.f32.s32 %v2798
          %v2800 = vcvt.f32.s32 %v2794
          %v2801 = vshll.u32 %v2800, 16
          %v2802 = vadd.s32 %v2801, %v2799
          %v2803 = vand.u32 %v2696, 65535
          %v2804 = vshra.s32 %v2696, 16
          %v2805 = vcvt.s32.f32 %v2803
          %v2806 = vcvt.s32.f32 %v2804
          %2807 = vmin.xlane.f32.xlu0 %v2806
          %v2808 = vpop.xlane.xlu0 %2807
          %vm2809 = vcmp.eq.f32.partialorder %v2806, %v2808
          %v2810 = vsel %vm2809, %v2805, inf
          %2811 = vmin.xlane.f32.xlu0 %v2810
          %v2812 = vpop.xlane.xlu0 %2811
          %v2813 = vcvt.f32.s32 %v2812
          %v2814 = vcvt.f32.s32 %v2808
          %v2815 = vshll.u32 %v2814, 16
          %v2816 = vadd.s32 %v2815, %v2813
          %v2817 = vand.u32 %v2697, 65535
          %v2818 = vshra.s32 %v2697, 16
          %v2819 = vcvt.s32.f32 %v2817
          %v2820 = vcvt.s32.f32 %v2818
          %2821 = vmin.xlane.f32.xlu0 %v2820
          %v2822 = vpop.xlane.xlu0 %2821
          %vm2823 = vcmp.eq.f32.partialorder %v2820, %v2822
          %v2824 = vsel %vm2823, %v2819, inf
          %2825 = vmin.xlane.f32.xlu0 %v2824
          %v2826 = vpop.xlane.xlu0 %2825
          %v2827 = vcvt.f32.s32 %v2826
          %v2828 = vcvt.f32.s32 %v2822
          %v2829 = vshll.u32 %v2828, 16
          %v2830 = vadd.s32 %v2829, %v2827
          %v2831 = vand.u32 %v2698, 65535
          %v2832 = vshra.s32 %v2698, 16
          %v2833 = vcvt.s32.f32 %v2831
          %v2834 = vcvt.s32.f32 %v2832
          %2835 = vmin.xlane.f32.xlu0 %v2834
          %v2836 = vpop.xlane.xlu0 %2835
          %vm2837 = vcmp.eq.f32.partialorder %v2834, %v2836
          %v2838 = vsel %vm2837, %v2833, inf
          %2839 = vmin.xlane.f32.xlu0 %v2838
          %v2840 = vpop.xlane.xlu0 %2839
          %v2841 = vcvt.f32.s32 %v2840
          %v2842 = vcvt.f32.s32 %v2836
          %v2843 = vshll.u32 %v2842, 16
          %v2844 = vadd.s32 %v2843, %v2841
          %v2845 = vand.u32 %v2699, 65535
          %v2846 = vshra.s32 %v2699, 16
          %v2847 = vcvt.s32.f32 %v2845
          %v2848 = vcvt.s32.f32 %v2846
          %2849 = vmin.xlane.f32.xlu0 %v2848
          %v2850 = vpop.xlane.xlu0 %2849
          %vm2851 = vcmp.eq.f32.partialorder %v2848, %v2850
          %v2852 = vsel %vm2851, %v2847, inf
          %2853 = vmin.xlane.f32.xlu0 %v2852
          %v2854 = vpop.xlane.xlu0 %2853
          %v2855 = vcvt.f32.s32 %v2854
          %v2856 = vcvt.f32.s32 %v2850
          %v2857 = vshll.u32 %v2856, 16
          %v2858 = vadd.s32 %v2857, %v2855
          %v2859 = vand.u32 %v2700, 65535
          %v2860 = vshra.s32 %v2700, 16
          %v2861 = vcvt.s32.f32 %v2859
          %v2862 = vcvt.s32.f32 %v2860
          %2863 = vmin.xlane.f32.xlu0 %v2862
          %v2864 = vpop.xlane.xlu0 %2863
          %vm2865 = vcmp.eq.f32.partialorder %v2862, %v2864
          %v2866 = vsel %vm2865, %v2861, inf
          %2867 = vmin.xlane.f32.xlu0 %v2866
          %v2868 = vpop.xlane.xlu0 %2867
          %v2869 = vcvt.f32.s32 %v2868
          %v2870 = vcvt.f32.s32 %v2864
          %v2871 = vshll.u32 %v2870, 16
          %v2872 = vadd.s32 %v2871, %v2869
          %v2873 = vand.u32 %v2701, 65535
          %v2874 = vshra.s32 %v2701, 16
          %v2875 = vcvt.s32.f32 %v2873
          %v2876 = vcvt.s32.f32 %v2874
          %2877 = vmin.xlane.f32.xlu0 %v2876
          %v2878 = vpop.xlane.xlu0 %2877
          %vm2879 = vcmp.eq.f32.partialorder %v2876, %v2878
          %v2880 = vsel %vm2879, %v2875, inf
          %2881 = vmin.xlane.f32.xlu0 %v2880
          %v2882 = vpop.xlane.xlu0 %2881
          %v2883 = vcvt.f32.s32 %v2882
          %v2884 = vcvt.f32.s32 %v2878
          %v2885 = vshll.u32 %v2884, 16
          %v2886 = vadd.s32 %v2885, %v2883
          %v2887 = vand.u32 %v2702, 65535
          %v2888 = vshra.s32 %v2702, 16
          %v2889 = vcvt.s32.f32 %v2887
          %v2890 = vcvt.s32.f32 %v2888
          %2891 = vmin.xlane.f32.xlu0 %v2890
          %v2892 = vpop.xlane.xlu0 %2891
          %vm2893 = vcmp.eq.f32.partialorder %v2890, %v2892
          %v2894 = vsel %vm2893, %v2889, inf
          %2895 = vmin.xlane.f32.xlu0 %v2894
          %v2896 = vpop.xlane.xlu0 %2895
          %v2897 = vcvt.f32.s32 %v2896
          %v2898 = vcvt.f32.s32 %v2892
          %v2899 = vshll.u32 %v2898, 16
          %v2900 = vadd.s32 %v2899, %v2897
          %v2901 = vand.u32 %v2703, 65535
          %v2902 = vshra.s32 %v2703, 16
          %v2903 = vcvt.s32.f32 %v2901
          %v2904 = vcvt.s32.f32 %v2902
          %2905 = vmin.xlane.f32.xlu0 %v2904
          %v2906 = vpop.xlane.xlu0 %2905
          %vm2907 = vcmp.eq.f32.partialorder %v2904, %v2906
          %v2908 = vsel %vm2907, %v2903, inf
          %2909 = vmin.xlane.f32.xlu0 %v2908
          %v2910 = vpop.xlane.xlu0 %2909
          %v2911 = vcvt.f32.s32 %v2910
          %v2912 = vcvt.f32.s32 %v2906
          %v2913 = vshll.u32 %v2912, 16
          %v2914 = vadd.s32 %v2913, %v2911
          %v2915 = vand.u32 %v2704, 65535
          %v2916 = vshra.s32 %v2704, 16
          %v2917 = vcvt.s32.f32 %v2915
          %v2918 = vcvt.s32.f32 %v2916
          %2919 = vmin.xlane.f32.xlu0 %v2918
          %v2920 = vpop.xlane.xlu0 %2919
          %vm2921 = vcmp.eq.f32.partialorder %v2918, %v2920
          %v2922 = vsel %vm2921, %v2917, inf
          %2923 = vmin.xlane.f32.xlu0 %v2922
          %v2924 = vpop.xlane.xlu0 %2923
          %v2925 = vcvt.f32.s32 %v2924
          %v2926 = vcvt.f32.s32 %v2920
          %v2927 = vshll.u32 %v2926, 16
          %v2928 = vadd.s32 %v2927, %v2925
          %vm2929 = vcmp.eq.s32.totalorder %v1095, 4
          %v2930 = vsel %vm2929, %v2642, %v2561
          %v2931 = vsel %vm2929, %v2644, %v2562
          %v2932 = vsel %vm2929, %v2646, %v2563
          %v2933 = vsel %vm2929, %v2648, %v2564
          %v2934 = vsel %vm2929, %v2650, %v2565
          %v2935 = vsel %vm2929, %v2652, %v2566
          %v2936 = vsel %vm2929, %v2654, %v2567
          %v2937 = vsel %vm2929, %v2656, %v2568
          %v2938 = vsel %vm2929, %v2658, %v2569
          %v2939 = vsel %vm2929, %v2660, %v2570
          %v2940 = vsel %vm2929, %v2662, %v2571
          %v2941 = vsel %vm2929, %v2664, %v2572
          %v2942 = vsel %vm2929, %v2666, %v2573
          %v2943 = vsel %vm2929, %v2668, %v2574
          %v2944 = vsel %vm2929, %v2670, %v2575
          %v2945 = vsel %vm2929, %v2672, %v2576
          %v2946 = vsel %vm2929, %v2718, %v2577
          %v2947 = vsel %vm2929, %v2732, %v2578
          %v2948 = vsel %vm2929, %v2746, %v2579
          %v2949 = vsel %vm2929, %v2760, %v2580
          %v2950 = vsel %vm2929, %v2774, %v2581
          %v2951 = vsel %vm2929, %v2788, %v2582
          %v2952 = vsel %vm2929, %v2802, %v2583
          %v2953 = vsel %vm2929, %v2816, %v2584
          %v2954 = vsel %vm2929, %v2830, %v2585
          %v2955 = vsel %vm2929, %v2844, %v2586
          %v2956 = vsel %vm2929, %v2858, %v2587
          %v2957 = vsel %vm2929, %v2872, %v2588
          %v2958 = vsel %vm2929, %v2886, %v2589
          %v2959 = vsel %vm2929, %v2900, %v2590
          %v2960 = vsel %vm2929, %v2914, %v2591
          %v2961 = vsel %vm2929, %v2928, %v2592
          %vm2962 = vcmp.eq.s32.totalorder %v2625, %v2718
          %vm2963 = vcmp.eq.s32.totalorder %v2626, %v2732
          %vm2964 = vcmp.eq.s32.totalorder %v2627, %v2746
          %vm2965 = vcmp.eq.s32.totalorder %v2628, %v2760
          %vm2966 = vcmp.eq.s32.totalorder %v2629, %v2774
          %vm2967 = vcmp.eq.s32.totalorder %v2630, %v2788
          %vm2968 = vcmp.eq.s32.totalorder %v2631, %v2802
          %vm2969 = vcmp.eq.s32.totalorder %v2632, %v2816
          %vm2970 = vcmp.eq.s32.totalorder %v2633, %v2830
          %vm2971 = vcmp.eq.s32.totalorder %v2634, %v2844
          %vm2972 = vcmp.eq.s32.totalorder %v2635, %v2858
          %vm2973 = vcmp.eq.s32.totalorder %v2636, %v2872
          %vm2974 = vcmp.eq.s32.totalorder %v2637, %v2886
          %vm2975 = vcmp.eq.s32.totalorder %v2638, %v2900
          %vm2976 = vcmp.eq.s32.totalorder %v2639, %v2914
          %vm2977 = vcmp.eq.s32.totalorder %v2640, %v2928
          %v2978 = vsel %vm2962, -inf, %v2609
          %v2979 = vsel %vm2963, -inf, %v2610
          %v2980 = vsel %vm2964, -inf, %v2611
          %v2981 = vsel %vm2965, -inf, %v2612
          %v2982 = vsel %vm2966, -inf, %v2613
          %v2983 = vsel %vm2967, -inf, %v2614
          %v2984 = vsel %vm2968, -inf, %v2615
          %v2985 = vsel %vm2969, -inf, %v2616
          %v2986 = vsel %vm2970, -inf, %v2617
          %v2987 = vsel %vm2971, -inf, %v2618
          %v2988 = vsel %vm2972, -inf, %v2619
          %v2989 = vsel %vm2973, -inf, %v2620
          %v2990 = vsel %vm2974, -inf, %v2621
          %v2991 = vsel %vm2975, -inf, %v2622
          %v2992 = vsel %vm2976, -inf, %v2623
          %v2993 = vsel %vm2977, -inf, %v2624
          %v2994 = vsel %vm2962, 2147483647, %v2625
          %v2995 = vsel %vm2963, 2147483647, %v2626
          %v2996 = vsel %vm2964, 2147483647, %v2627
          %v2997 = vsel %vm2965, 2147483647, %v2628
          %v2998 = vsel %vm2966, 2147483647, %v2629
          %v2999 = vsel %vm2967, 2147483647, %v2630
          %v3000 = vsel %vm2968, 2147483647, %v2631
          %v3001 = vsel %vm2969, 2147483647, %v2632
          %v3002 = vsel %vm2970, 2147483647, %v2633
          %v3003 = vsel %vm2971, 2147483647, %v2634
          %v3004 = vsel %vm2972, 2147483647, %v2635
          %v3005 = vsel %vm2973, 2147483647, %v2636
          %v3006 = vsel %vm2974, 2147483647, %v2637
          %v3007 = vsel %vm2975, 2147483647, %v2638
          %v3008 = vsel %vm2976, 2147483647, %v2639
          %v3009 = vsel %vm2977, 2147483647, %v2640
          %3010 = vmax.xlane.f32.xlu0 %v2978
          %v3011 = vpop.xlane.xlu0 %3010
          %3012 = vmax.xlane.f32.xlu0 %v2979
          %v3013 = vpop.xlane.xlu0 %3012
          %3014 = vmax.xlane.f32.xlu0 %v2980
          %v3015 = vpop.xlane.xlu0 %3014
          %3016 = vmax.xlane.f32.xlu0 %v2981
          %v3017 = vpop.xlane.xlu0 %3016
          %3018 = vmax.xlane.f32.xlu0 %v2982
          %v3019 = vpop.xlane.xlu0 %3018
          %3020 = vmax.xlane.f32.xlu0 %v2983
          %v3021 = vpop.xlane.xlu0 %3020
          %3022 = vmax.xlane.f32.xlu0 %v2984
          %v3023 = vpop.xlane.xlu0 %3022
          %3024 = vmax.xlane.f32.xlu0 %v2985
          %v3025 = vpop.xlane.xlu0 %3024
          %3026 = vmax.xlane.f32.xlu0 %v2986
          %v3027 = vpop.xlane.xlu0 %3026
          %3028 = vmax.xlane.f32.xlu0 %v2987
          %v3029 = vpop.xlane.xlu0 %3028
          %3030 = vmax.xlane.f32.xlu0 %v2988
          %v3031 = vpop.xlane.xlu0 %3030
          %3032 = vmax.xlane.f32.xlu0 %v2989
          %v3033 = vpop.xlane.xlu0 %3032
          %3034 = vmax.xlane.f32.xlu0 %v2990
          %v3035 = vpop.xlane.xlu0 %3034
          %3036 = vmax.xlane.f32.xlu0 %v2991
          %v3037 = vpop.xlane.xlu0 %3036
          %3038 = vmax.xlane.f32.xlu0 %v2992
          %v3039 = vpop.xlane.xlu0 %3038
          %3040 = vmax.xlane.f32.xlu0 %v2993
          %v3041 = vpop.xlane.xlu0 %3040
          %vm3042 = vcmp.eq.f32.partialorder %v2978, %v3011
          %vm3043 = vcmp.eq.f32.partialorder %v2979, %v3013
          %vm3044 = vcmp.eq.f32.partialorder %v2980, %v3015
          %vm3045 = vcmp.eq.f32.partialorder %v2981, %v3017
          %vm3046 = vcmp.eq.f32.partialorder %v2982, %v3019
          %vm3047 = vcmp.eq.f32.partialorder %v2983, %v3021
          %vm3048 = vcmp.eq.f32.partialorder %v2984, %v3023
          %vm3049 = vcmp.eq.f32.partialorder %v2985, %v3025
          %vm3050 = vcmp.eq.f32.partialorder %v2986, %v3027
          %vm3051 = vcmp.eq.f32.partialorder %v2987, %v3029
          %vm3052 = vcmp.eq.f32.partialorder %v2988, %v3031
          %vm3053 = vcmp.eq.f32.partialorder %v2989, %v3033
          %vm3054 = vcmp.eq.f32.partialorder %v2990, %v3035
          %vm3055 = vcmp.eq.f32.partialorder %v2991, %v3037
          %vm3056 = vcmp.eq.f32.partialorder %v2992, %v3039
          %vm3057 = vcmp.eq.f32.partialorder %v2993, %v3041
          %v3058 = vsel %vm3042, %v2994, 2147483647
          %v3059 = vsel %vm3043, %v2995, 2147483647
          %v3060 = vsel %vm3044, %v2996, 2147483647
          %v3061 = vsel %vm3045, %v2997, 2147483647
          %v3062 = vsel %vm3046, %v2998, 2147483647
          %v3063 = vsel %vm3047, %v2999, 2147483647
          %v3064 = vsel %vm3048, %v3000, 2147483647
          %v3065 = vsel %vm3049, %v3001, 2147483647
          %v3066 = vsel %vm3050, %v3002, 2147483647
          %v3067 = vsel %vm3051, %v3003, 2147483647
          %v3068 = vsel %vm3052, %v3004, 2147483647
          %v3069 = vsel %vm3053, %v3005, 2147483647
          %v3070 = vsel %vm3054, %v3006, 2147483647
          %v3071 = vsel %vm3055, %v3007, 2147483647
          %v3072 = vsel %vm3056, %v3008, 2147483647
          %v3073 = vsel %vm3057, %v3009, 2147483647
          %v3074 = vand.u32 %v3058, 65535
          %v3075 = vshra.s32 %v3058, 16
          %v3076 = vcvt.s32.f32 %v3074
          %v3077 = vcvt.s32.f32 %v3075
          %3078 = vmin.xlane.f32.xlu0 %v3077
          %v3079 = vpop.xlane.xlu0 %3078
          %vm3080 = vcmp.eq.f32.partialorder %v3077, %v3079
          %v3081 = vsel %vm3080, %v3076, inf
          %3082 = vmin.xlane.f32.xlu0 %v3081
          %v3083 = vpop.xlane.xlu0 %3082
          %v3084 = vcvt.f32.s32 %v3083
          %v3085 = vcvt.f32.s32 %v3079
          %v3086 = vshll.u32 %v3085, 16
          %v3087 = vadd.s32 %v3086, %v3084
          %v3088 = vand.u32 %v3059, 65535
          %v3089 = vshra.s32 %v3059, 16
          %v3090 = vcvt.s32.f32 %v3088
          %v3091 = vcvt.s32.f32 %v3089
          %3092 = vmin.xlane.f32.xlu0 %v3091
          %v3093 = vpop.xlane.xlu0 %3092
          %vm3094 = vcmp.eq.f32.partialorder %v3091, %v3093
          %v3095 = vsel %vm3094, %v3090, inf
          %3096 = vmin.xlane.f32.xlu0 %v3095
          %v3097 = vpop.xlane.xlu0 %3096
          %v3098 = vcvt.f32.s32 %v3097
          %v3099 = vcvt.f32.s32 %v3093
          %v3100 = vshll.u32 %v3099, 16
          %v3101 = vadd.s32 %v3100, %v3098
          %v3102 = vand.u32 %v3060, 65535
          %v3103 = vshra.s32 %v3060, 16
          %v3104 = vcvt.s32.f32 %v3102
          %v3105 = vcvt.s32.f32 %v3103
          %3106 = vmin.xlane.f32.xlu0 %v3105
          %v3107 = vpop.xlane.xlu0 %3106
          %vm3108 = vcmp.eq.f32.partialorder %v3105, %v3107
          %v3109 = vsel %vm3108, %v3104, inf
          %3110 = vmin.xlane.f32.xlu0 %v3109
          %v3111 = vpop.xlane.xlu0 %3110
          %v3112 = vcvt.f32.s32 %v3111
          %v3113 = vcvt.f32.s32 %v3107
          %v3114 = vshll.u32 %v3113, 16
          %v3115 = vadd.s32 %v3114, %v3112
          %v3116 = vand.u32 %v3061, 65535
          %v3117 = vshra.s32 %v3061, 16
          %v3118 = vcvt.s32.f32 %v3116
          %v3119 = vcvt.s32.f32 %v3117
          %3120 = vmin.xlane.f32.xlu0 %v3119
          %v3121 = vpop.xlane.xlu0 %3120
          %vm3122 = vcmp.eq.f32.partialorder %v3119, %v3121
          %v3123 = vsel %vm3122, %v3118, inf
          %3124 = vmin.xlane.f32.xlu0 %v3123
          %v3125 = vpop.xlane.xlu0 %3124
          %v3126 = vcvt.f32.s32 %v3125
          %v3127 = vcvt.f32.s32 %v3121
          %v3128 = vshll.u32 %v3127, 16
          %v3129 = vadd.s32 %v3128, %v3126
          %v3130 = vand.u32 %v3062, 65535
          %v3131 = vshra.s32 %v3062, 16
          %v3132 = vcvt.s32.f32 %v3130
          %v3133 = vcvt.s32.f32 %v3131
          %3134 = vmin.xlane.f32.xlu0 %v3133
          %v3135 = vpop.xlane.xlu0 %3134
          %vm3136 = vcmp.eq.f32.partialorder %v3133, %v3135
          %v3137 = vsel %vm3136, %v3132, inf
          %3138 = vmin.xlane.f32.xlu0 %v3137
          %v3139 = vpop.xlane.xlu0 %3138
          %v3140 = vcvt.f32.s32 %v3139
          %v3141 = vcvt.f32.s32 %v3135
          %v3142 = vshll.u32 %v3141, 16
          %v3143 = vadd.s32 %v3142, %v3140
          %v3144 = vand.u32 %v3063, 65535
          %v3145 = vshra.s32 %v3063, 16
          %v3146 = vcvt.s32.f32 %v3144
          %v3147 = vcvt.s32.f32 %v3145
          %3148 = vmin.xlane.f32.xlu0 %v3147
          %v3149 = vpop.xlane.xlu0 %3148
          %vm3150 = vcmp.eq.f32.partialorder %v3147, %v3149
          %v3151 = vsel %vm3150, %v3146, inf
          %3152 = vmin.xlane.f32.xlu0 %v3151
          %v3153 = vpop.xlane.xlu0 %3152
          %v3154 = vcvt.f32.s32 %v3153
          %v3155 = vcvt.f32.s32 %v3149
          %v3156 = vshll.u32 %v3155, 16
          %v3157 = vadd.s32 %v3156, %v3154
          %v3158 = vand.u32 %v3064, 65535
          %v3159 = vshra.s32 %v3064, 16
          %v3160 = vcvt.s32.f32 %v3158
          %v3161 = vcvt.s32.f32 %v3159
          %3162 = vmin.xlane.f32.xlu0 %v3161
          %v3163 = vpop.xlane.xlu0 %3162
          %vm3164 = vcmp.eq.f32.partialorder %v3161, %v3163
          %v3165 = vsel %vm3164, %v3160, inf
          %3166 = vmin.xlane.f32.xlu0 %v3165
          %v3167 = vpop.xlane.xlu0 %3166
          %v3168 = vcvt.f32.s32 %v3167
          %v3169 = vcvt.f32.s32 %v3163
          %v3170 = vshll.u32 %v3169, 16
          %v3171 = vadd.s32 %v3170, %v3168
          %v3172 = vand.u32 %v3065, 65535
          %v3173 = vshra.s32 %v3065, 16
          %v3174 = vcvt.s32.f32 %v3172
          %v3175 = vcvt.s32.f32 %v3173
          %3176 = vmin.xlane.f32.xlu0 %v3175
          %v3177 = vpop.xlane.xlu0 %3176
          %vm3178 = vcmp.eq.f32.partialorder %v3175, %v3177
          %v3179 = vsel %vm3178, %v3174, inf
          %3180 = vmin.xlane.f32.xlu0 %v3179
          %v3181 = vpop.xlane.xlu0 %3180
          %v3182 = vcvt.f32.s32 %v3181
          %v3183 = vcvt.f32.s32 %v3177
          %v3184 = vshll.u32 %v3183, 16
          %v3185 = vadd.s32 %v3184, %v3182
          %v3186 = vand.u32 %v3066, 65535
          %v3187 = vshra.s32 %v3066, 16
          %v3188 = vcvt.s32.f32 %v3186
          %v3189 = vcvt.s32.f32 %v3187
          %3190 = vmin.xlane.f32.xlu0 %v3189
          %v3191 = vpop.xlane.xlu0 %3190
          %vm3192 = vcmp.eq.f32.partialorder %v3189, %v3191
          %v3193 = vsel %vm3192, %v3188, inf
          %3194 = vmin.xlane.f32.xlu0 %v3193
          %v3195 = vpop.xlane.xlu0 %3194
          %v3196 = vcvt.f32.s32 %v3195
          %v3197 = vcvt.f32.s32 %v3191
          %v3198 = vshll.u32 %v3197, 16
          %v3199 = vadd.s32 %v3198, %v3196
          %v3200 = vand.u32 %v3067, 65535
          %v3201 = vshra.s32 %v3067, 16
          %v3202 = vcvt.s32.f32 %v3200
          %v3203 = vcvt.s32.f32 %v3201
          %3204 = vmin.xlane.f32.xlu0 %v3203
          %v3205 = vpop.xlane.xlu0 %3204
          %vm3206 = vcmp.eq.f32.partialorder %v3203, %v3205
          %v3207 = vsel %vm3206, %v3202, inf
          %3208 = vmin.xlane.f32.xlu0 %v3207
          %v3209 = vpop.xlane.xlu0 %3208
          %v3210 = vcvt.f32.s32 %v3209
          %v3211 = vcvt.f32.s32 %v3205
          %v3212 = vshll.u32 %v3211, 16
          %v3213 = vadd.s32 %v3212, %v3210
          %v3214 = vand.u32 %v3068, 65535
          %v3215 = vshra.s32 %v3068, 16
          %v3216 = vcvt.s32.f32 %v3214
          %v3217 = vcvt.s32.f32 %v3215
          %3218 = vmin.xlane.f32.xlu0 %v3217
          %v3219 = vpop.xlane.xlu0 %3218
          %vm3220 = vcmp.eq.f32.partialorder %v3217, %v3219
          %v3221 = vsel %vm3220, %v3216, inf
          %3222 = vmin.xlane.f32.xlu0 %v3221
          %v3223 = vpop.xlane.xlu0 %3222
          %v3224 = vcvt.f32.s32 %v3223
          %v3225 = vcvt.f32.s32 %v3219
          %v3226 = vshll.u32 %v3225, 16
          %v3227 = vadd.s32 %v3226, %v3224
          %v3228 = vand.u32 %v3069, 65535
          %v3229 = vshra.s32 %v3069, 16
          %v3230 = vcvt.s32.f32 %v3228
          %v3231 = vcvt.s32.f32 %v3229
          %3232 = vmin.xlane.f32.xlu0 %v3231
          %v3233 = vpop.xlane.xlu0 %3232
          %vm3234 = vcmp.eq.f32.partialorder %v3231, %v3233
          %v3235 = vsel %vm3234, %v3230, inf
          %3236 = vmin.xlane.f32.xlu0 %v3235
          %v3237 = vpop.xlane.xlu0 %3236
          %v3238 = vcvt.f32.s32 %v3237
          %v3239 = vcvt.f32.s32 %v3233
          %v3240 = vshll.u32 %v3239, 16
          %v3241 = vadd.s32 %v3240, %v3238
          %v3242 = vand.u32 %v3070, 65535
          %v3243 = vshra.s32 %v3070, 16
          %v3244 = vcvt.s32.f32 %v3242
          %v3245 = vcvt.s32.f32 %v3243
          %3246 = vmin.xlane.f32.xlu0 %v3245
          %v3247 = vpop.xlane.xlu0 %3246
          %vm3248 = vcmp.eq.f32.partialorder %v3245, %v3247
          %v3249 = vsel %vm3248, %v3244, inf
          %3250 = vmin.xlane.f32.xlu0 %v3249
          %v3251 = vpop.xlane.xlu0 %3250
          %v3252 = vcvt.f32.s32 %v3251
          %v3253 = vcvt.f32.s32 %v3247
          %v3254 = vshll.u32 %v3253, 16
          %v3255 = vadd.s32 %v3254, %v3252
          %v3256 = vand.u32 %v3071, 65535
          %v3257 = vshra.s32 %v3071, 16
          %v3258 = vcvt.s32.f32 %v3256
          %v3259 = vcvt.s32.f32 %v3257
          %3260 = vmin.xlane.f32.xlu0 %v3259
          %v3261 = vpop.xlane.xlu0 %3260
          %vm3262 = vcmp.eq.f32.partialorder %v3259, %v3261
          %v3263 = vsel %vm3262, %v3258, inf
          %3264 = vmin.xlane.f32.xlu0 %v3263
          %v3265 = vpop.xlane.xlu0 %3264
          %v3266 = vcvt.f32.s32 %v3265
          %v3267 = vcvt.f32.s32 %v3261
          %v3268 = vshll.u32 %v3267, 16
          %v3269 = vadd.s32 %v3268, %v3266
          %v3270 = vand.u32 %v3072, 65535
          %v3271 = vshra.s32 %v3072, 16
          %v3272 = vcvt.s32.f32 %v3270
          %v3273 = vcvt.s32.f32 %v3271
          %3274 = vmin.xlane.f32.xlu0 %v3273
          %v3275 = vpop.xlane.xlu0 %3274
          %vm3276 = vcmp.eq.f32.partialorder %v3273, %v3275
          %v3277 = vsel %vm3276, %v3272, inf
          %3278 = vmin.xlane.f32.xlu0 %v3277
          %v3279 = vpop.xlane.xlu0 %3278
          %v3280 = vcvt.f32.s32 %v3279
          %v3281 = vcvt.f32.s32 %v3275
          %v3282 = vshll.u32 %v3281, 16
          %v3283 = vadd.s32 %v3282, %v3280
          %v3284 = vand.u32 %v3073, 65535
          %v3285 = vshra.s32 %v3073, 16
          %v3286 = vcvt.s32.f32 %v3284
          %v3287 = vcvt.s32.f32 %v3285
          %3288 = vmin.xlane.f32.xlu0 %v3287
          %v3289 = vpop.xlane.xlu0 %3288
          %vm3290 = vcmp.eq.f32.partialorder %v3287, %v3289
          %v3291 = vsel %vm3290, %v3286, inf
          %3292 = vmin.xlane.f32.xlu0 %v3291
          %v3293 = vpop.xlane.xlu0 %3292
          %v3294 = vcvt.f32.s32 %v3293
          %v3295 = vcvt.f32.s32 %v3289
          %v3296 = vshll.u32 %v3295, 16
          %v3297 = vadd.s32 %v3296, %v3294
          %vm3298 = vcmp.eq.s32.totalorder %v1095, 5
          %v3299 = vsel %vm3298, %v3011, %v2930
          %v3300 = vsel %vm3298, %v3013, %v2931
          %v3301 = vsel %vm3298, %v3015, %v2932
          %v3302 = vsel %vm3298, %v3017, %v2933
          %v3303 = vsel %vm3298, %v3019, %v2934
          %v3304 = vsel %vm3298, %v3021, %v2935
          %v3305 = vsel %vm3298, %v3023, %v2936
          %v3306 = vsel %vm3298, %v3025, %v2937
          %v3307 = vsel %vm3298, %v3027, %v2938
          %v3308 = vsel %vm3298, %v3029, %v2939
          %v3309 = vsel %vm3298, %v3031, %v2940
          %v3310 = vsel %vm3298, %v3033, %v2941
          %v3311 = vsel %vm3298, %v3035, %v2942
          %v3312 = vsel %vm3298, %v3037, %v2943
          %v3313 = vsel %vm3298, %v3039, %v2944
          %v3314 = vsel %vm3298, %v3041, %v2945
          %v3315 = vsel %vm3298, %v3087, %v2946
          %v3316 = vsel %vm3298, %v3101, %v2947
          %v3317 = vsel %vm3298, %v3115, %v2948
          %v3318 = vsel %vm3298, %v3129, %v2949
          %v3319 = vsel %vm3298, %v3143, %v2950
          %v3320 = vsel %vm3298, %v3157, %v2951
          %v3321 = vsel %vm3298, %v3171, %v2952
          %v3322 = vsel %vm3298, %v3185, %v2953
          %v3323 = vsel %vm3298, %v3199, %v2954
          %v3324 = vsel %vm3298, %v3213, %v2955
          %v3325 = vsel %vm3298, %v3227, %v2956
          %v3326 = vsel %vm3298, %v3241, %v2957
          %v3327 = vsel %vm3298, %v3255, %v2958
          %v3328 = vsel %vm3298, %v3269, %v2959
          %v3329 = vsel %vm3298, %v3283, %v2960
          %v3330 = vsel %vm3298, %v3297, %v2961
          %vm3331 = vcmp.eq.s32.totalorder %v2994, %v3087
          %vm3332 = vcmp.eq.s32.totalorder %v2995, %v3101
          %vm3333 = vcmp.eq.s32.totalorder %v2996, %v3115
          %vm3334 = vcmp.eq.s32.totalorder %v2997, %v3129
          %vm3335 = vcmp.eq.s32.totalorder %v2998, %v3143
          %vm3336 = vcmp.eq.s32.totalorder %v2999, %v3157
          %vm3337 = vcmp.eq.s32.totalorder %v3000, %v3171
          %vm3338 = vcmp.eq.s32.totalorder %v3001, %v3185
          %vm3339 = vcmp.eq.s32.totalorder %v3002, %v3199
          %vm3340 = vcmp.eq.s32.totalorder %v3003, %v3213
          %vm3341 = vcmp.eq.s32.totalorder %v3004, %v3227
          %vm3342 = vcmp.eq.s32.totalorder %v3005, %v3241
          %vm3343 = vcmp.eq.s32.totalorder %v3006, %v3255
          %vm3344 = vcmp.eq.s32.totalorder %v3007, %v3269
          %vm3345 = vcmp.eq.s32.totalorder %v3008, %v3283
          %vm3346 = vcmp.eq.s32.totalorder %v3009, %v3297
          %v3347 = vsel %vm3331, -inf, %v2978
          %v3348 = vsel %vm3332, -inf, %v2979
          %v3349 = vsel %vm3333, -inf, %v2980
          %v3350 = vsel %vm3334, -inf, %v2981
          %v3351 = vsel %vm3335, -inf, %v2982
          %v3352 = vsel %vm3336, -inf, %v2983
          %v3353 = vsel %vm3337, -inf, %v2984
          %v3354 = vsel %vm3338, -inf, %v2985
          %v3355 = vsel %vm3339, -inf, %v2986
          %v3356 = vsel %vm3340, -inf, %v2987
          %v3357 = vsel %vm3341, -inf, %v2988
          %v3358 = vsel %vm3342, -inf, %v2989
          %v3359 = vsel %vm3343, -inf, %v2990
          %v3360 = vsel %vm3344, -inf, %v2991
          %v3361 = vsel %vm3345, -inf, %v2992
          %v3362 = vsel %vm3346, -inf, %v2993
          %v3363 = vsel %vm3331, 2147483647, %v2994
          %v3364 = vsel %vm3332, 2147483647, %v2995
          %v3365 = vsel %vm3333, 2147483647, %v2996
          %v3366 = vsel %vm3334, 2147483647, %v2997
          %v3367 = vsel %vm3335, 2147483647, %v2998
          %v3368 = vsel %vm3336, 2147483647, %v2999
          %v3369 = vsel %vm3337, 2147483647, %v3000
          %v3370 = vsel %vm3338, 2147483647, %v3001
          %v3371 = vsel %vm3339, 2147483647, %v3002
          %v3372 = vsel %vm3340, 2147483647, %v3003
          %v3373 = vsel %vm3341, 2147483647, %v3004
          %v3374 = vsel %vm3342, 2147483647, %v3005
          %v3375 = vsel %vm3343, 2147483647, %v3006
          %v3376 = vsel %vm3344, 2147483647, %v3007
          %v3377 = vsel %vm3345, 2147483647, %v3008
          %v3378 = vsel %vm3346, 2147483647, %v3009
          %3379 = vmax.xlane.f32.xlu0 %v3347
          %v3380 = vpop.xlane.xlu0 %3379
          %3381 = vmax.xlane.f32.xlu0 %v3348
          %v3382 = vpop.xlane.xlu0 %3381
          %3383 = vmax.xlane.f32.xlu0 %v3349
          %v3384 = vpop.xlane.xlu0 %3383
          %3385 = vmax.xlane.f32.xlu0 %v3350
          %v3386 = vpop.xlane.xlu0 %3385
          %3387 = vmax.xlane.f32.xlu0 %v3351
          %v3388 = vpop.xlane.xlu0 %3387
          %3389 = vmax.xlane.f32.xlu0 %v3352
          %v3390 = vpop.xlane.xlu0 %3389
          %3391 = vmax.xlane.f32.xlu0 %v3353
          %v3392 = vpop.xlane.xlu0 %3391
          %3393 = vmax.xlane.f32.xlu0 %v3354
          %v3394 = vpop.xlane.xlu0 %3393
          %3395 = vmax.xlane.f32.xlu0 %v3355
          %v3396 = vpop.xlane.xlu0 %3395
          %3397 = vmax.xlane.f32.xlu0 %v3356
          %v3398 = vpop.xlane.xlu0 %3397
          %3399 = vmax.xlane.f32.xlu0 %v3357
          %v3400 = vpop.xlane.xlu0 %3399
          %3401 = vmax.xlane.f32.xlu0 %v3358
          %v3402 = vpop.xlane.xlu0 %3401
          %3403 = vmax.xlane.f32.xlu0 %v3359
          %v3404 = vpop.xlane.xlu0 %3403
          %3405 = vmax.xlane.f32.xlu0 %v3360
          %v3406 = vpop.xlane.xlu0 %3405
          %3407 = vmax.xlane.f32.xlu0 %v3361
          %v3408 = vpop.xlane.xlu0 %3407
          %3409 = vmax.xlane.f32.xlu0 %v3362
          %v3410 = vpop.xlane.xlu0 %3409
          %vm3411 = vcmp.eq.f32.partialorder %v3347, %v3380
          %vm3412 = vcmp.eq.f32.partialorder %v3348, %v3382
          %vm3413 = vcmp.eq.f32.partialorder %v3349, %v3384
          %vm3414 = vcmp.eq.f32.partialorder %v3350, %v3386
          %vm3415 = vcmp.eq.f32.partialorder %v3351, %v3388
          %vm3416 = vcmp.eq.f32.partialorder %v3352, %v3390
          %vm3417 = vcmp.eq.f32.partialorder %v3353, %v3392
          %vm3418 = vcmp.eq.f32.partialorder %v3354, %v3394
          %vm3419 = vcmp.eq.f32.partialorder %v3355, %v3396
          %vm3420 = vcmp.eq.f32.partialorder %v3356, %v3398
          %vm3421 = vcmp.eq.f32.partialorder %v3357, %v3400
          %vm3422 = vcmp.eq.f32.partialorder %v3358, %v3402
          %vm3423 = vcmp.eq.f32.partialorder %v3359, %v3404
          %vm3424 = vcmp.eq.f32.partialorder %v3360, %v3406
          %vm3425 = vcmp.eq.f32.partialorder %v3361, %v3408
          %vm3426 = vcmp.eq.f32.partialorder %v3362, %v3410
          %v3427 = vsel %vm3411, %v3363, 2147483647
          %v3428 = vsel %vm3412, %v3364, 2147483647
          %v3429 = vsel %vm3413, %v3365, 2147483647
          %v3430 = vsel %vm3414, %v3366, 2147483647
          %v3431 = vsel %vm3415, %v3367, 2147483647
          %v3432 = vsel %vm3416, %v3368, 2147483647
          %v3433 = vsel %vm3417, %v3369, 2147483647
          %v3434 = vsel %vm3418, %v3370, 2147483647
          %v3435 = vsel %vm3419, %v3371, 2147483647
          %v3436 = vsel %vm3420, %v3372, 2147483647
          %v3437 = vsel %vm3421, %v3373, 2147483647
          %v3438 = vsel %vm3422, %v3374, 2147483647
          %v3439 = vsel %vm3423, %v3375, 2147483647
          %v3440 = vsel %vm3424, %v3376, 2147483647
          %v3441 = vsel %vm3425, %v3377, 2147483647
          %v3442 = vsel %vm3426, %v3378, 2147483647
          %v3443 = vand.u32 %v3427, 65535
          %v3444 = vshra.s32 %v3427, 16
          %v3445 = vcvt.s32.f32 %v3443
          %v3446 = vcvt.s32.f32 %v3444
          %3447 = vmin.xlane.f32.xlu0 %v3446
          %v3448 = vpop.xlane.xlu0 %3447
          %vm3449 = vcmp.eq.f32.partialorder %v3446, %v3448
          %v3450 = vsel %vm3449, %v3445, inf
          %3451 = vmin.xlane.f32.xlu0 %v3450
          %v3452 = vpop.xlane.xlu0 %3451
          %v3453 = vcvt.f32.s32 %v3452
          %v3454 = vcvt.f32.s32 %v3448
          %v3455 = vshll.u32 %v3454, 16
          %v3456 = vadd.s32 %v3455, %v3453
          %v3457 = vand.u32 %v3428, 65535
          %v3458 = vshra.s32 %v3428, 16
          %v3459 = vcvt.s32.f32 %v3457
          %v3460 = vcvt.s32.f32 %v3458
          %3461 = vmin.xlane.f32.xlu0 %v3460
          %v3462 = vpop.xlane.xlu0 %3461
          %vm3463 = vcmp.eq.f32.partialorder %v3460, %v3462
          %v3464 = vsel %vm3463, %v3459, inf
          %3465 = vmin.xlane.f32.xlu0 %v3464
          %v3466 = vpop.xlane.xlu0 %3465
          %v3467 = vcvt.f32.s32 %v3466
          %v3468 = vcvt.f32.s32 %v3462
          %v3469 = vshll.u32 %v3468, 16
          %v3470 = vadd.s32 %v3469, %v3467
          %v3471 = vand.u32 %v3429, 65535
          %v3472 = vshra.s32 %v3429, 16
          %v3473 = vcvt.s32.f32 %v3471
          %v3474 = vcvt.s32.f32 %v3472
          %3475 = vmin.xlane.f32.xlu0 %v3474
          %v3476 = vpop.xlane.xlu0 %3475
          %vm3477 = vcmp.eq.f32.partialorder %v3474, %v3476
          %v3478 = vsel %vm3477, %v3473, inf
          %3479 = vmin.xlane.f32.xlu0 %v3478
          %v3480 = vpop.xlane.xlu0 %3479
          %v3481 = vcvt.f32.s32 %v3480
          %v3482 = vcvt.f32.s32 %v3476
          %v3483 = vshll.u32 %v3482, 16
          %v3484 = vadd.s32 %v3483, %v3481
          %v3485 = vand.u32 %v3430, 65535
          %v3486 = vshra.s32 %v3430, 16
          %v3487 = vcvt.s32.f32 %v3485
          %v3488 = vcvt.s32.f32 %v3486
          %3489 = vmin.xlane.f32.xlu0 %v3488
          %v3490 = vpop.xlane.xlu0 %3489
          %vm3491 = vcmp.eq.f32.partialorder %v3488, %v3490
          %v3492 = vsel %vm3491, %v3487, inf
          %3493 = vmin.xlane.f32.xlu0 %v3492
          %v3494 = vpop.xlane.xlu0 %3493
          %v3495 = vcvt.f32.s32 %v3494
          %v3496 = vcvt.f32.s32 %v3490
          %v3497 = vshll.u32 %v3496, 16
          %v3498 = vadd.s32 %v3497, %v3495
          %v3499 = vand.u32 %v3431, 65535
          %v3500 = vshra.s32 %v3431, 16
          %v3501 = vcvt.s32.f32 %v3499
          %v3502 = vcvt.s32.f32 %v3500
          %3503 = vmin.xlane.f32.xlu0 %v3502
          %v3504 = vpop.xlane.xlu0 %3503
          %vm3505 = vcmp.eq.f32.partialorder %v3502, %v3504
          %v3506 = vsel %vm3505, %v3501, inf
          %3507 = vmin.xlane.f32.xlu0 %v3506
          %v3508 = vpop.xlane.xlu0 %3507
          %v3509 = vcvt.f32.s32 %v3508
          %v3510 = vcvt.f32.s32 %v3504
          %v3511 = vshll.u32 %v3510, 16
          %v3512 = vadd.s32 %v3511, %v3509
          %v3513 = vand.u32 %v3432, 65535
          %v3514 = vshra.s32 %v3432, 16
          %v3515 = vcvt.s32.f32 %v3513
          %v3516 = vcvt.s32.f32 %v3514
          %3517 = vmin.xlane.f32.xlu0 %v3516
          %v3518 = vpop.xlane.xlu0 %3517
          %vm3519 = vcmp.eq.f32.partialorder %v3516, %v3518
          %v3520 = vsel %vm3519, %v3515, inf
          %3521 = vmin.xlane.f32.xlu0 %v3520
          %v3522 = vpop.xlane.xlu0 %3521
          %v3523 = vcvt.f32.s32 %v3522
          %v3524 = vcvt.f32.s32 %v3518
          %v3525 = vshll.u32 %v3524, 16
          %v3526 = vadd.s32 %v3525, %v3523
          %v3527 = vand.u32 %v3433, 65535
          %v3528 = vshra.s32 %v3433, 16
          %v3529 = vcvt.s32.f32 %v3527
          %v3530 = vcvt.s32.f32 %v3528
          %3531 = vmin.xlane.f32.xlu0 %v3530
          %v3532 = vpop.xlane.xlu0 %3531
          %vm3533 = vcmp.eq.f32.partialorder %v3530, %v3532
          %v3534 = vsel %vm3533, %v3529, inf
          %3535 = vmin.xlane.f32.xlu0 %v3534
          %v3536 = vpop.xlane.xlu0 %3535
          %v3537 = vcvt.f32.s32 %v3536
          %v3538 = vcvt.f32.s32 %v3532
          %v3539 = vshll.u32 %v3538, 16
          %v3540 = vadd.s32 %v3539, %v3537
          %v3541 = vand.u32 %v3434, 65535
          %v3542 = vshra.s32 %v3434, 16
          %v3543 = vcvt.s32.f32 %v3541
          %v3544 = vcvt.s32.f32 %v3542
          %3545 = vmin.xlane.f32.xlu0 %v3544
          %v3546 = vpop.xlane.xlu0 %3545
          %vm3547 = vcmp.eq.f32.partialorder %v3544, %v3546
          %v3548 = vsel %vm3547, %v3543, inf
          %3549 = vmin.xlane.f32.xlu0 %v3548
          %v3550 = vpop.xlane.xlu0 %3549
          %v3551 = vcvt.f32.s32 %v3550
          %v3552 = vcvt.f32.s32 %v3546
          %v3553 = vshll.u32 %v3552, 16
          %v3554 = vadd.s32 %v3553, %v3551
          %v3555 = vand.u32 %v3435, 65535
          %v3556 = vshra.s32 %v3435, 16
          %v3557 = vcvt.s32.f32 %v3555
          %v3558 = vcvt.s32.f32 %v3556
          %3559 = vmin.xlane.f32.xlu0 %v3558
          %v3560 = vpop.xlane.xlu0 %3559
          %vm3561 = vcmp.eq.f32.partialorder %v3558, %v3560
          %v3562 = vsel %vm3561, %v3557, inf
          %3563 = vmin.xlane.f32.xlu0 %v3562
          %v3564 = vpop.xlane.xlu0 %3563
          %v3565 = vcvt.f32.s32 %v3564
          %v3566 = vcvt.f32.s32 %v3560
          %v3567 = vshll.u32 %v3566, 16
          %v3568 = vadd.s32 %v3567, %v3565
          %v3569 = vand.u32 %v3436, 65535
          %v3570 = vshra.s32 %v3436, 16
          %v3571 = vcvt.s32.f32 %v3569
          %v3572 = vcvt.s32.f32 %v3570
          %3573 = vmin.xlane.f32.xlu0 %v3572
          %v3574 = vpop.xlane.xlu0 %3573
          %vm3575 = vcmp.eq.f32.partialorder %v3572, %v3574
          %v3576 = vsel %vm3575, %v3571, inf
          %3577 = vmin.xlane.f32.xlu0 %v3576
          %v3578 = vpop.xlane.xlu0 %3577
          %v3579 = vcvt.f32.s32 %v3578
          %v3580 = vcvt.f32.s32 %v3574
          %v3581 = vshll.u32 %v3580, 16
          %v3582 = vadd.s32 %v3581, %v3579
          %v3583 = vand.u32 %v3437, 65535
          %v3584 = vshra.s32 %v3437, 16
          %v3585 = vcvt.s32.f32 %v3583
          %v3586 = vcvt.s32.f32 %v3584
          %3587 = vmin.xlane.f32.xlu0 %v3586
          %v3588 = vpop.xlane.xlu0 %3587
          %vm3589 = vcmp.eq.f32.partialorder %v3586, %v3588
          %v3590 = vsel %vm3589, %v3585, inf
          %3591 = vmin.xlane.f32.xlu0 %v3590
          %v3592 = vpop.xlane.xlu0 %3591
          %v3593 = vcvt.f32.s32 %v3592
          %v3594 = vcvt.f32.s32 %v3588
          %v3595 = vshll.u32 %v3594, 16
          %v3596 = vadd.s32 %v3595, %v3593
          %v3597 = vand.u32 %v3438, 65535
          %v3598 = vshra.s32 %v3438, 16
          %v3599 = vcvt.s32.f32 %v3597
          %v3600 = vcvt.s32.f32 %v3598
          %3601 = vmin.xlane.f32.xlu0 %v3600
          %v3602 = vpop.xlane.xlu0 %3601
          %vm3603 = vcmp.eq.f32.partialorder %v3600, %v3602
          %v3604 = vsel %vm3603, %v3599, inf
          %3605 = vmin.xlane.f32.xlu0 %v3604
          %v3606 = vpop.xlane.xlu0 %3605
          %v3607 = vcvt.f32.s32 %v3606
          %v3608 = vcvt.f32.s32 %v3602
          %v3609 = vshll.u32 %v3608, 16
          %v3610 = vadd.s32 %v3609, %v3607
          %v3611 = vand.u32 %v3439, 65535
          %v3612 = vshra.s32 %v3439, 16
          %v3613 = vcvt.s32.f32 %v3611
          %v3614 = vcvt.s32.f32 %v3612
          %3615 = vmin.xlane.f32.xlu0 %v3614
          %v3616 = vpop.xlane.xlu0 %3615
          %vm3617 = vcmp.eq.f32.partialorder %v3614, %v3616
          %v3618 = vsel %vm3617, %v3613, inf
          %3619 = vmin.xlane.f32.xlu0 %v3618
          %v3620 = vpop.xlane.xlu0 %3619
          %v3621 = vcvt.f32.s32 %v3620
          %v3622 = vcvt.f32.s32 %v3616
          %v3623 = vshll.u32 %v3622, 16
          %v3624 = vadd.s32 %v3623, %v3621
          %v3625 = vand.u32 %v3440, 65535
          %v3626 = vshra.s32 %v3440, 16
          %v3627 = vcvt.s32.f32 %v3625
          %v3628 = vcvt.s32.f32 %v3626
          %3629 = vmin.xlane.f32.xlu0 %v3628
          %v3630 = vpop.xlane.xlu0 %3629
          %vm3631 = vcmp.eq.f32.partialorder %v3628, %v3630
          %v3632 = vsel %vm3631, %v3627, inf
          %3633 = vmin.xlane.f32.xlu0 %v3632
          %v3634 = vpop.xlane.xlu0 %3633
          %v3635 = vcvt.f32.s32 %v3634
          %v3636 = vcvt.f32.s32 %v3630
          %v3637 = vshll.u32 %v3636, 16
          %v3638 = vadd.s32 %v3637, %v3635
          %v3639 = vand.u32 %v3441, 65535
          %v3640 = vshra.s32 %v3441, 16
          %v3641 = vcvt.s32.f32 %v3639
          %v3642 = vcvt.s32.f32 %v3640
          %3643 = vmin.xlane.f32.xlu0 %v3642
          %v3644 = vpop.xlane.xlu0 %3643
          %vm3645 = vcmp.eq.f32.partialorder %v3642, %v3644
          %v3646 = vsel %vm3645, %v3641, inf
          %3647 = vmin.xlane.f32.xlu0 %v3646
          %v3648 = vpop.xlane.xlu0 %3647
          %v3649 = vcvt.f32.s32 %v3648
          %v3650 = vcvt.f32.s32 %v3644
          %v3651 = vshll.u32 %v3650, 16
          %v3652 = vadd.s32 %v3651, %v3649
          %v3653 = vand.u32 %v3442, 65535
          %v3654 = vshra.s32 %v3442, 16
          %v3655 = vcvt.s32.f32 %v3653
          %v3656 = vcvt.s32.f32 %v3654
          %3657 = vmin.xlane.f32.xlu0 %v3656
          %v3658 = vpop.xlane.xlu0 %3657
          %vm3659 = vcmp.eq.f32.partialorder %v3656, %v3658
          %v3660 = vsel %vm3659, %v3655, inf
          %3661 = vmin.xlane.f32.xlu0 %v3660
          %v3662 = vpop.xlane.xlu0 %3661
          %v3663 = vcvt.f32.s32 %v3662
          %v3664 = vcvt.f32.s32 %v3658
          %v3665 = vshll.u32 %v3664, 16
          %v3666 = vadd.s32 %v3665, %v3663
          %vm3667 = vcmp.eq.s32.totalorder %v1095, 6
          %v3668 = vsel %vm3667, %v3380, %v3299
          %v3669 = vsel %vm3667, %v3382, %v3300
          %v3670 = vsel %vm3667, %v3384, %v3301
          %v3671 = vsel %vm3667, %v3386, %v3302
          %v3672 = vsel %vm3667, %v3388, %v3303
          %v3673 = vsel %vm3667, %v3390, %v3304
          %v3674 = vsel %vm3667, %v3392, %v3305
          %v3675 = vsel %vm3667, %v3394, %v3306
          %v3676 = vsel %vm3667, %v3396, %v3307
          %v3677 = vsel %vm3667, %v3398, %v3308
          %v3678 = vsel %vm3667, %v3400, %v3309
          %v3679 = vsel %vm3667, %v3402, %v3310
          %v3680 = vsel %vm3667, %v3404, %v3311
          %v3681 = vsel %vm3667, %v3406, %v3312
          %v3682 = vsel %vm3667, %v3408, %v3313
          %v3683 = vsel %vm3667, %v3410, %v3314
          %v3684 = vsel %vm3667, %v3456, %v3315
          %v3685 = vsel %vm3667, %v3470, %v3316
          %v3686 = vsel %vm3667, %v3484, %v3317
          %v3687 = vsel %vm3667, %v3498, %v3318
          %v3688 = vsel %vm3667, %v3512, %v3319
          %v3689 = vsel %vm3667, %v3526, %v3320
          %v3690 = vsel %vm3667, %v3540, %v3321
          %v3691 = vsel %vm3667, %v3554, %v3322
          %v3692 = vsel %vm3667, %v3568, %v3323
          %v3693 = vsel %vm3667, %v3582, %v3324
          %v3694 = vsel %vm3667, %v3596, %v3325
          %v3695 = vsel %vm3667, %v3610, %v3326
          %v3696 = vsel %vm3667, %v3624, %v3327
          %v3697 = vsel %vm3667, %v3638, %v3328
          %v3698 = vsel %vm3667, %v3652, %v3329
          %v3699 = vsel %vm3667, %v3666, %v3330
          %vm3700 = vcmp.eq.s32.totalorder %v3363, %v3456
          %vm3701 = vcmp.eq.s32.totalorder %v3364, %v3470
          %vm3702 = vcmp.eq.s32.totalorder %v3365, %v3484
          %vm3703 = vcmp.eq.s32.totalorder %v3366, %v3498
          %vm3704 = vcmp.eq.s32.totalorder %v3367, %v3512
          %vm3705 = vcmp.eq.s32.totalorder %v3368, %v3526
          %vm3706 = vcmp.eq.s32.totalorder %v3369, %v3540
          %vm3707 = vcmp.eq.s32.totalorder %v3370, %v3554
          %vm3708 = vcmp.eq.s32.totalorder %v3371, %v3568
          %vm3709 = vcmp.eq.s32.totalorder %v3372, %v3582
          %vm3710 = vcmp.eq.s32.totalorder %v3373, %v3596
          %vm3711 = vcmp.eq.s32.totalorder %v3374, %v3610
          %vm3712 = vcmp.eq.s32.totalorder %v3375, %v3624
          %vm3713 = vcmp.eq.s32.totalorder %v3376, %v3638
          %vm3714 = vcmp.eq.s32.totalorder %v3377, %v3652
          %vm3715 = vcmp.eq.s32.totalorder %v3378, %v3666
          %v3716 = vsel %vm3700, -inf, %v3347
          %v3717 = vsel %vm3701, -inf, %v3348
          %v3718 = vsel %vm3702, -inf, %v3349
          %v3719 = vsel %vm3703, -inf, %v3350
          %v3720 = vsel %vm3704, -inf, %v3351
          %v3721 = vsel %vm3705, -inf, %v3352
          %v3722 = vsel %vm3706, -inf, %v3353
          %v3723 = vsel %vm3707, -inf, %v3354
          %v3724 = vsel %vm3708, -inf, %v3355
          %v3725 = vsel %vm3709, -inf, %v3356
          %v3726 = vsel %vm3710, -inf, %v3357
          %v3727 = vsel %vm3711, -inf, %v3358
          %v3728 = vsel %vm3712, -inf, %v3359
          %v3729 = vsel %vm3713, -inf, %v3360
          %v3730 = vsel %vm3714, -inf, %v3361
          %v3731 = vsel %vm3715, -inf, %v3362
          %v3732 = vsel %vm3700, 2147483647, %v3363
          %v3733 = vsel %vm3701, 2147483647, %v3364
          %v3734 = vsel %vm3702, 2147483647, %v3365
          %v3735 = vsel %vm3703, 2147483647, %v3366
          %v3736 = vsel %vm3704, 2147483647, %v3367
          %v3737 = vsel %vm3705, 2147483647, %v3368
          %v3738 = vsel %vm3706, 2147483647, %v3369
          %v3739 = vsel %vm3707, 2147483647, %v3370
          %v3740 = vsel %vm3708, 2147483647, %v3371
          %v3741 = vsel %vm3709, 2147483647, %v3372
          %v3742 = vsel %vm3710, 2147483647, %v3373
          %v3743 = vsel %vm3711, 2147483647, %v3374
          %v3744 = vsel %vm3712, 2147483647, %v3375
          %v3745 = vsel %vm3713, 2147483647, %v3376
          %v3746 = vsel %vm3714, 2147483647, %v3377
          %v3747 = vsel %vm3715, 2147483647, %v3378
          %3748 = vmax.xlane.f32.xlu0 %v3716
          %v3749 = vpop.xlane.xlu0 %3748
          %3750 = vmax.xlane.f32.xlu0 %v3717
          %v3751 = vpop.xlane.xlu0 %3750
          %3752 = vmax.xlane.f32.xlu0 %v3718
          %v3753 = vpop.xlane.xlu0 %3752
          %3754 = vmax.xlane.f32.xlu0 %v3719
          %v3755 = vpop.xlane.xlu0 %3754
          %3756 = vmax.xlane.f32.xlu0 %v3720
          %v3757 = vpop.xlane.xlu0 %3756
          %3758 = vmax.xlane.f32.xlu0 %v3721
          %v3759 = vpop.xlane.xlu0 %3758
          %3760 = vmax.xlane.f32.xlu0 %v3722
          %v3761 = vpop.xlane.xlu0 %3760
          %3762 = vmax.xlane.f32.xlu0 %v3723
          %v3763 = vpop.xlane.xlu0 %3762
          %3764 = vmax.xlane.f32.xlu0 %v3724
          %v3765 = vpop.xlane.xlu0 %3764
          %3766 = vmax.xlane.f32.xlu0 %v3725
          %v3767 = vpop.xlane.xlu0 %3766
          %3768 = vmax.xlane.f32.xlu0 %v3726
          %v3769 = vpop.xlane.xlu0 %3768
          %3770 = vmax.xlane.f32.xlu0 %v3727
          %v3771 = vpop.xlane.xlu0 %3770
          %3772 = vmax.xlane.f32.xlu0 %v3728
          %v3773 = vpop.xlane.xlu0 %3772
          %3774 = vmax.xlane.f32.xlu0 %v3729
          %v3775 = vpop.xlane.xlu0 %3774
          %3776 = vmax.xlane.f32.xlu0 %v3730
          %v3777 = vpop.xlane.xlu0 %3776
          %3778 = vmax.xlane.f32.xlu0 %v3731
          %v3779 = vpop.xlane.xlu0 %3778
          %vm3780 = vcmp.eq.f32.partialorder %v3716, %v3749
          %vm3781 = vcmp.eq.f32.partialorder %v3717, %v3751
          %vm3782 = vcmp.eq.f32.partialorder %v3718, %v3753
          %vm3783 = vcmp.eq.f32.partialorder %v3719, %v3755
          %vm3784 = vcmp.eq.f32.partialorder %v3720, %v3757
          %vm3785 = vcmp.eq.f32.partialorder %v3721, %v3759
          %vm3786 = vcmp.eq.f32.partialorder %v3722, %v3761
          %vm3787 = vcmp.eq.f32.partialorder %v3723, %v3763
          %vm3788 = vcmp.eq.f32.partialorder %v3724, %v3765
          %vm3789 = vcmp.eq.f32.partialorder %v3725, %v3767
          %vm3790 = vcmp.eq.f32.partialorder %v3726, %v3769
          %vm3791 = vcmp.eq.f32.partialorder %v3727, %v3771
          %vm3792 = vcmp.eq.f32.partialorder %v3728, %v3773
          %vm3793 = vcmp.eq.f32.partialorder %v3729, %v3775
          %vm3794 = vcmp.eq.f32.partialorder %v3730, %v3777
          %vm3795 = vcmp.eq.f32.partialorder %v3731, %v3779
          %v3796 = vsel %vm3780, %v3732, 2147483647
          %v3797 = vsel %vm3781, %v3733, 2147483647
          %v3798 = vsel %vm3782, %v3734, 2147483647
          %v3799 = vsel %vm3783, %v3735, 2147483647
          %v3800 = vsel %vm3784, %v3736, 2147483647
          %v3801 = vsel %vm3785, %v3737, 2147483647
          %v3802 = vsel %vm3786, %v3738, 2147483647
          %v3803 = vsel %vm3787, %v3739, 2147483647
          %v3804 = vsel %vm3788, %v3740, 2147483647
          %v3805 = vsel %vm3789, %v3741, 2147483647
          %v3806 = vsel %vm3790, %v3742, 2147483647
          %v3807 = vsel %vm3791, %v3743, 2147483647
          %v3808 = vsel %vm3792, %v3744, 2147483647
          %v3809 = vsel %vm3793, %v3745, 2147483647
          %v3810 = vsel %vm3794, %v3746, 2147483647
          %v3811 = vsel %vm3795, %v3747, 2147483647
          %v3812 = vand.u32 %v3796, 65535
          %v3813 = vshra.s32 %v3796, 16
          %v3814 = vcvt.s32.f32 %v3812
          %v3815 = vcvt.s32.f32 %v3813
          %3816 = vmin.xlane.f32.xlu0 %v3815
          %v3817 = vpop.xlane.xlu0 %3816
          %vm3818 = vcmp.eq.f32.partialorder %v3815, %v3817
          %v3819 = vsel %vm3818, %v3814, inf
          %3820 = vmin.xlane.f32.xlu0 %v3819
          %v3821 = vpop.xlane.xlu0 %3820
          %v3822 = vcvt.f32.s32 %v3821
          %v3823 = vcvt.f32.s32 %v3817
          %v3824 = vshll.u32 %v3823, 16
          %v3825 = vadd.s32 %v3824, %v3822
          %v3826 = vand.u32 %v3797, 65535
          %v3827 = vshra.s32 %v3797, 16
          %v3828 = vcvt.s32.f32 %v3826
          %v3829 = vcvt.s32.f32 %v3827
          %3830 = vmin.xlane.f32.xlu0 %v3829
          %v3831 = vpop.xlane.xlu0 %3830
          %vm3832 = vcmp.eq.f32.partialorder %v3829, %v3831
          %v3833 = vsel %vm3832, %v3828, inf
          %3834 = vmin.xlane.f32.xlu0 %v3833
          %v3835 = vpop.xlane.xlu0 %3834
          %v3836 = vcvt.f32.s32 %v3835
          %v3837 = vcvt.f32.s32 %v3831
          %v3838 = vshll.u32 %v3837, 16
          %v3839 = vadd.s32 %v3838, %v3836
          %v3840 = vand.u32 %v3798, 65535
          %v3841 = vshra.s32 %v3798, 16
          %v3842 = vcvt.s32.f32 %v3840
          %v3843 = vcvt.s32.f32 %v3841
          %3844 = vmin.xlane.f32.xlu0 %v3843
          %v3845 = vpop.xlane.xlu0 %3844
          %vm3846 = vcmp.eq.f32.partialorder %v3843, %v3845
          %v3847 = vsel %vm3846, %v3842, inf
          %3848 = vmin.xlane.f32.xlu0 %v3847
          %v3849 = vpop.xlane.xlu0 %3848
          %v3850 = vcvt.f32.s32 %v3849
          %v3851 = vcvt.f32.s32 %v3845
          %v3852 = vshll.u32 %v3851, 16
          %v3853 = vadd.s32 %v3852, %v3850
          %v3854 = vand.u32 %v3799, 65535
          %v3855 = vshra.s32 %v3799, 16
          %v3856 = vcvt.s32.f32 %v3854
          %v3857 = vcvt.s32.f32 %v3855
          %3858 = vmin.xlane.f32.xlu0 %v3857
          %v3859 = vpop.xlane.xlu0 %3858
          %vm3860 = vcmp.eq.f32.partialorder %v3857, %v3859
          %v3861 = vsel %vm3860, %v3856, inf
          %3862 = vmin.xlane.f32.xlu0 %v3861
          %v3863 = vpop.xlane.xlu0 %3862
          %v3864 = vcvt.f32.s32 %v3863
          %v3865 = vcvt.f32.s32 %v3859
          %v3866 = vshll.u32 %v3865, 16
          %v3867 = vadd.s32 %v3866, %v3864
          %v3868 = vand.u32 %v3800, 65535
          %v3869 = vshra.s32 %v3800, 16
          %v3870 = vcvt.s32.f32 %v3868
          %v3871 = vcvt.s32.f32 %v3869
          %3872 = vmin.xlane.f32.xlu0 %v3871
          %v3873 = vpop.xlane.xlu0 %3872
          %vm3874 = vcmp.eq.f32.partialorder %v3871, %v3873
          %v3875 = vsel %vm3874, %v3870, inf
          %3876 = vmin.xlane.f32.xlu0 %v3875
          %v3877 = vpop.xlane.xlu0 %3876
          %v3878 = vcvt.f32.s32 %v3877
          %v3879 = vcvt.f32.s32 %v3873
          %v3880 = vshll.u32 %v3879, 16
          %v3881 = vadd.s32 %v3880, %v3878
          %v3882 = vand.u32 %v3801, 65535
          %v3883 = vshra.s32 %v3801, 16
          %v3884 = vcvt.s32.f32 %v3882
          %v3885 = vcvt.s32.f32 %v3883
          %3886 = vmin.xlane.f32.xlu0 %v3885
          %v3887 = vpop.xlane.xlu0 %3886
          %vm3888 = vcmp.eq.f32.partialorder %v3885, %v3887
          %v3889 = vsel %vm3888, %v3884, inf
          %3890 = vmin.xlane.f32.xlu0 %v3889
          %v3891 = vpop.xlane.xlu0 %3890
          %v3892 = vcvt.f32.s32 %v3891
          %v3893 = vcvt.f32.s32 %v3887
          %v3894 = vshll.u32 %v3893, 16
          %v3895 = vadd.s32 %v3894, %v3892
          %v3896 = vand.u32 %v3802, 65535
          %v3897 = vshra.s32 %v3802, 16
          %v3898 = vcvt.s32.f32 %v3896
          %v3899 = vcvt.s32.f32 %v3897
          %3900 = vmin.xlane.f32.xlu0 %v3899
          %v3901 = vpop.xlane.xlu0 %3900
          %vm3902 = vcmp.eq.f32.partialorder %v3899, %v3901
          %v3903 = vsel %vm3902, %v3898, inf
          %3904 = vmin.xlane.f32.xlu0 %v3903
          %v3905 = vpop.xlane.xlu0 %3904
          %v3906 = vcvt.f32.s32 %v3905
          %v3907 = vcvt.f32.s32 %v3901
          %v3908 = vshll.u32 %v3907, 16
          %v3909 = vadd.s32 %v3908, %v3906
          %v3910 = vand.u32 %v3803, 65535
          %v3911 = vshra.s32 %v3803, 16
          %v3912 = vcvt.s32.f32 %v3910
          %v3913 = vcvt.s32.f32 %v3911
          %3914 = vmin.xlane.f32.xlu0 %v3913
          %v3915 = vpop.xlane.xlu0 %3914
          %vm3916 = vcmp.eq.f32.partialorder %v3913, %v3915
          %v3917 = vsel %vm3916, %v3912, inf
          %3918 = vmin.xlane.f32.xlu0 %v3917
          %v3919 = vpop.xlane.xlu0 %3918
          %v3920 = vcvt.f32.s32 %v3919
          %v3921 = vcvt.f32.s32 %v3915
          %v3922 = vshll.u32 %v3921, 16
          %v3923 = vadd.s32 %v3922, %v3920
          %v3924 = vand.u32 %v3804, 65535
          %v3925 = vshra.s32 %v3804, 16
          %v3926 = vcvt.s32.f32 %v3924
          %v3927 = vcvt.s32.f32 %v3925
          %3928 = vmin.xlane.f32.xlu0 %v3927
          %v3929 = vpop.xlane.xlu0 %3928
          %vm3930 = vcmp.eq.f32.partialorder %v3927, %v3929
          %v3931 = vsel %vm3930, %v3926, inf
          %3932 = vmin.xlane.f32.xlu0 %v3931
          %v3933 = vpop.xlane.xlu0 %3932
          %v3934 = vcvt.f32.s32 %v3933
          %v3935 = vcvt.f32.s32 %v3929
          %v3936 = vshll.u32 %v3935, 16
          %v3937 = vadd.s32 %v3936, %v3934
          %v3938 = vand.u32 %v3805, 65535
          %v3939 = vshra.s32 %v3805, 16
          %v3940 = vcvt.s32.f32 %v3938
          %v3941 = vcvt.s32.f32 %v3939
          %3942 = vmin.xlane.f32.xlu0 %v3941
          %v3943 = vpop.xlane.xlu0 %3942
          %vm3944 = vcmp.eq.f32.partialorder %v3941, %v3943
          %v3945 = vsel %vm3944, %v3940, inf
          %3946 = vmin.xlane.f32.xlu0 %v3945
          %v3947 = vpop.xlane.xlu0 %3946
          %v3948 = vcvt.f32.s32 %v3947
          %v3949 = vcvt.f32.s32 %v3943
          %v3950 = vshll.u32 %v3949, 16
          %v3951 = vadd.s32 %v3950, %v3948
          %v3952 = vand.u32 %v3806, 65535
          %v3953 = vshra.s32 %v3806, 16
          %v3954 = vcvt.s32.f32 %v3952
          %v3955 = vcvt.s32.f32 %v3953
          %3956 = vmin.xlane.f32.xlu0 %v3955
          %v3957 = vpop.xlane.xlu0 %3956
          %vm3958 = vcmp.eq.f32.partialorder %v3955, %v3957
          %v3959 = vsel %vm3958, %v3954, inf
          %3960 = vmin.xlane.f32.xlu0 %v3959
          %v3961 = vpop.xlane.xlu0 %3960
          %v3962 = vcvt.f32.s32 %v3961
          %v3963 = vcvt.f32.s32 %v3957
          %v3964 = vshll.u32 %v3963, 16
          %v3965 = vadd.s32 %v3964, %v3962
          %v3966 = vand.u32 %v3807, 65535
          %v3967 = vshra.s32 %v3807, 16
          %v3968 = vcvt.s32.f32 %v3966
          %v3969 = vcvt.s32.f32 %v3967
          %3970 = vmin.xlane.f32.xlu0 %v3969
          %v3971 = vpop.xlane.xlu0 %3970
          %vm3972 = vcmp.eq.f32.partialorder %v3969, %v3971
          %v3973 = vsel %vm3972, %v3968, inf
          %3974 = vmin.xlane.f32.xlu0 %v3973
          %v3975 = vpop.xlane.xlu0 %3974
          %v3976 = vcvt.f32.s32 %v3975
          %v3977 = vcvt.f32.s32 %v3971
          %v3978 = vshll.u32 %v3977, 16
          %v3979 = vadd.s32 %v3978, %v3976
          %v3980 = vand.u32 %v3808, 65535
          %v3981 = vshra.s32 %v3808, 16
          %v3982 = vcvt.s32.f32 %v3980
          %v3983 = vcvt.s32.f32 %v3981
          %3984 = vmin.xlane.f32.xlu0 %v3983
          %v3985 = vpop.xlane.xlu0 %3984
          %vm3986 = vcmp.eq.f32.partialorder %v3983, %v3985
          %v3987 = vsel %vm3986, %v3982, inf
          %3988 = vmin.xlane.f32.xlu0 %v3987
          %v3989 = vpop.xlane.xlu0 %3988
          %v3990 = vcvt.f32.s32 %v3989
          %v3991 = vcvt.f32.s32 %v3985
          %v3992 = vshll.u32 %v3991, 16
          %v3993 = vadd.s32 %v3992, %v3990
          %v3994 = vand.u32 %v3809, 65535
          %v3995 = vshra.s32 %v3809, 16
          %v3996 = vcvt.s32.f32 %v3994
          %v3997 = vcvt.s32.f32 %v3995
          %3998 = vmin.xlane.f32.xlu0 %v3997
          %v3999 = vpop.xlane.xlu0 %3998
          %vm4000 = vcmp.eq.f32.partialorder %v3997, %v3999
          %v4001 = vsel %vm4000, %v3996, inf
          %4002 = vmin.xlane.f32.xlu0 %v4001
          %v4003 = vpop.xlane.xlu0 %4002
          %v4004 = vcvt.f32.s32 %v4003
          %v4005 = vcvt.f32.s32 %v3999
          %v4006 = vshll.u32 %v4005, 16
          %v4007 = vadd.s32 %v4006, %v4004
          %v4008 = vand.u32 %v3810, 65535
          %v4009 = vshra.s32 %v3810, 16
          %v4010 = vcvt.s32.f32 %v4008
          %v4011 = vcvt.s32.f32 %v4009
          %4012 = vmin.xlane.f32.xlu0 %v4011
          %v4013 = vpop.xlane.xlu0 %4012
          %vm4014 = vcmp.eq.f32.partialorder %v4011, %v4013
          %v4015 = vsel %vm4014, %v4010, inf
          %4016 = vmin.xlane.f32.xlu0 %v4015
          %v4017 = vpop.xlane.xlu0 %4016
          %v4018 = vcvt.f32.s32 %v4017
          %v4019 = vcvt.f32.s32 %v4013
          %v4020 = vshll.u32 %v4019, 16
          %v4021 = vadd.s32 %v4020, %v4018
          %v4022 = vand.u32 %v3811, 65535
          %v4023 = vshra.s32 %v3811, 16
          %v4024 = vcvt.s32.f32 %v4022
          %v4025 = vcvt.s32.f32 %v4023
          %4026 = vmin.xlane.f32.xlu0 %v4025
          %v4027 = vpop.xlane.xlu0 %4026
          %vm4028 = vcmp.eq.f32.partialorder %v4025, %v4027
          %v4029 = vsel %vm4028, %v4024, inf
          %4030 = vmin.xlane.f32.xlu0 %v4029
          %v4031 = vpop.xlane.xlu0 %4030
          %v4032 = vcvt.f32.s32 %v4031
          %v4033 = vcvt.f32.s32 %v4027
          %v4034 = vshll.u32 %v4033, 16
          %v4035 = vadd.s32 %v4034, %v4032
          %vm4036 = vcmp.eq.s32.totalorder %v1095, 7
          %v4037 = vsel %vm4036, %v3749, %v3668
          %v4038 = vsel %vm4036, %v3751, %v3669
          %v4039 = vsel %vm4036, %v3753, %v3670
          %v4040 = vsel %vm4036, %v3755, %v3671
          %v4041 = vsel %vm4036, %v3757, %v3672
          %v4042 = vsel %vm4036, %v3759, %v3673
          %v4043 = vsel %vm4036, %v3761, %v3674
          %v4044 = vsel %vm4036, %v3763, %v3675
          %v4045 = vsel %vm4036, %v3765, %v3676
          %v4046 = vsel %vm4036, %v3767, %v3677
          %v4047 = vsel %vm4036, %v3769, %v3678
          %v4048 = vsel %vm4036, %v3771, %v3679
          %v4049 = vsel %vm4036, %v3773, %v3680
          %v4050 = vsel %vm4036, %v3775, %v3681
          %v4051 = vsel %vm4036, %v3777, %v3682
          %v4052 = vsel %vm4036, %v3779, %v3683
          %v4053 = vsel %vm4036, %v3825, %v3684
          %v4054 = vsel %vm4036, %v3839, %v3685
          %v4055 = vsel %vm4036, %v3853, %v3686
          %v4056 = vsel %vm4036, %v3867, %v3687
          %v4057 = vsel %vm4036, %v3881, %v3688
          %v4058 = vsel %vm4036, %v3895, %v3689
          %v4059 = vsel %vm4036, %v3909, %v3690
          %v4060 = vsel %vm4036, %v3923, %v3691
          %v4061 = vsel %vm4036, %v3937, %v3692
          %v4062 = vsel %vm4036, %v3951, %v3693
          %v4063 = vsel %vm4036, %v3965, %v3694
          %v4064 = vsel %vm4036, %v3979, %v3695
          %v4065 = vsel %vm4036, %v3993, %v3696
          %v4066 = vsel %vm4036, %v4007, %v3697
          %v4067 = vsel %vm4036, %v4021, %v3698
          %v4068 = vsel %vm4036, %v4035, %v3699
          %v4069 = vstv %s1097
          %v4070 = vadd.s32 %v4053, %v4069
          %v4071 = vadd.s32 %v4054, %v4069
          %v4072 = vadd.s32 %v4055, %v4069
          %v4073 = vadd.s32 %v4056, %v4069
          %v4074 = vadd.s32 %v4057, %v4069
          %v4075 = vadd.s32 %v4058, %v4069
          %v4076 = vadd.s32 %v4059, %v4069
          %v4077 = vadd.s32 %v4060, %v4069
          %v4078 = vadd.s32 %v4061, %v4069
          %v4079 = vadd.s32 %v4062, %v4069
          %v4080 = vadd.s32 %v4063, %v4069
          %v4081 = vadd.s32 %v4064, %v4069
          %v4082 = vadd.s32 %v4065, %v4069
          %v4083 = vadd.s32 %v4066, %v4069
          %v4084 = vadd.s32 %v4067, %v4069
          %v4085 = vadd.s32 %v4068, %v4069
          %v4086 = vld [vmem:[#allocation3] sm:$0xff]
          %v4087 = vld [vmem:[#allocation3 + $0x8] sm:$0xff]
          %v4088 = vld [vmem:[#allocation3 + $0x10] sm:$0xff]
          %v4089 = vld [vmem:[#allocation3 + $0x18] sm:$0xff]
          %v4090 = vld [vmem:[#allocation3 + $0x20] sm:$0xff]
          %v4091 = vld [vmem:[#allocation3 + $0x28] sm:$0xff]
          %v4092 = vld [vmem:[#allocation3 + $0x30] sm:$0xff]
          %v4093 = vld [vmem:[#allocation3 + $0x38] sm:$0xff]
          %v4094 = vld [vmem:[#allocation3 + $0x40] sm:$0xff]
          %v4095 = vld [vmem:[#allocation3 + $0x48] sm:$0xff]
          %v4096 = vld [vmem:[#allocation3 + $0x50] sm:$0xff]
          %v4097 = vld [vmem:[#allocation3 + $0x58] sm:$0xff]
          %v4098 = vld [vmem:[#allocation3 + $0x60] sm:$0xff]
          %v4099 = vld [vmem:[#allocation3 + $0x68] sm:$0xff]
          %v4100 = vld [vmem:[#allocation3 + $0x70] sm:$0xff]
          %v4101 = vld [vmem:[#allocation3 + $0x78] sm:$0xff]
          %4118 = vrot.lane.b32.xlu0 %v4037, 8
          %v4119 = vpop.permute.xlu0 %4118
          %4120 = vrot.lane.b32.xlu0 %v4038, 8
          %v4121 = vpop.permute.xlu0 %4120
          %4122 = vrot.lane.b32.xlu0 %v4039, 8
          %v4123 = vpop.permute.xlu0 %4122
          %4124 = vrot.lane.b32.xlu0 %v4040, 8
          %v4125 = vpop.permute.xlu0 %4124
          %4126 = vrot.lane.b32.xlu0 %v4041, 8
          %v4127 = vpop.permute.xlu0 %4126
          %4128 = vrot.lane.b32.xlu0 %v4042, 8
          %v4129 = vpop.permute.xlu0 %4128
          %4130 = vrot.lane.b32.xlu0 %v4043, 8
          %v4131 = vpop.permute.xlu0 %4130
          %4132 = vrot.lane.b32.xlu0 %v4044, 8
          %v4133 = vpop.permute.xlu0 %4132
          %4134 = vrot.lane.b32.xlu0 %v4045, 8
          %v4135 = vpop.permute.xlu0 %4134
          %4136 = vrot.lane.b32.xlu0 %v4046, 8
          %v4137 = vpop.permute.xlu0 %4136
          %4138 = vrot.lane.b32.xlu0 %v4047, 8
          %v4139 = vpop.permute.xlu0 %4138
          %4140 = vrot.lane.b32.xlu0 %v4048, 8
          %v4141 = vpop.permute.xlu0 %4140
          %4142 = vrot.lane.b32.xlu0 %v4049, 8
          %v4143 = vpop.permute.xlu0 %4142
          %4144 = vrot.lane.b32.xlu0 %v4050, 8
          %v4145 = vpop.permute.xlu0 %4144
          %4146 = vrot.lane.b32.xlu0 %v4051, 8
          %v4147 = vpop.permute.xlu0 %4146
          %4148 = vrot.lane.b32.xlu0 %v4052, 8
          %v4149 = vpop.permute.xlu0 %4148
          %vm4166 = vcmask 64512
          %v4167 = vsel %vm4166, %v4086, %v4119
          %v4168 = vsel %vm4166, %v4087, %v4121
          %v4169 = vsel %vm4166, %v4088, %v4123
          %v4170 = vsel %vm4166, %v4089, %v4125
          %v4171 = vsel %vm4166, %v4090, %v4127
          %v4172 = vsel %vm4166, %v4091, %v4129
          %v4173 = vsel %vm4166, %v4092, %v4131
          %v4174 = vsel %vm4166, %v4093, %v4133
          %v4175 = vsel %vm4166, %v4094, %v4135
          %v4176 = vsel %vm4166, %v4095, %v4137
          %v4177 = vsel %vm4166, %v4096, %v4139
          %v4178 = vsel %vm4166, %v4097, %v4141
          %v4179 = vsel %vm4166, %v4098, %v4143
          %v4180 = vsel %vm4166, %v4099, %v4145
          %v4181 = vsel %vm4166, %v4100, %v4147
          %v4182 = vsel %vm4166, %v4101, %v4149
          %v4183 = vld [vmem:[#allocation4] sm:$0xff]
          %v4184 = vld [vmem:[#allocation4 + $0x8] sm:$0xff]
          %v4185 = vld [vmem:[#allocation4 + $0x10] sm:$0xff]
          %v4186 = vld [vmem:[#allocation4 + $0x18] sm:$0xff]
          %v4187 = vld [vmem:[#allocation4 + $0x20] sm:$0xff]
          %v4188 = vld [vmem:[#allocation4 + $0x28] sm:$0xff]
          %v4189 = vld [vmem:[#allocation4 + $0x30] sm:$0xff]
          %v4190 = vld [vmem:[#allocation4 + $0x38] sm:$0xff]
          %v4191 = vld [vmem:[#allocation4 + $0x40] sm:$0xff]
          %v4192 = vld [vmem:[#allocation4 + $0x48] sm:$0xff]
          %v4193 = vld [vmem:[#allocation4 + $0x50] sm:$0xff]
          %v4194 = vld [vmem:[#allocation4 + $0x58] sm:$0xff]
          %v4195 = vld [vmem:[#allocation4 + $0x60] sm:$0xff]
          %v4196 = vld [vmem:[#allocation4 + $0x68] sm:$0xff]
          %v4197 = vld [vmem:[#allocation4 + $0x70] sm:$0xff]
          %v4198 = vld [vmem:[#allocation4 + $0x78] sm:$0xff]
          %4199 = vrot.lane.b32.xlu0 %v4070, 8
          %v4200 = vpop.permute.xlu0 %4199
          %4201 = vrot.lane.b32.xlu0 %v4071, 8
          %v4202 = vpop.permute.xlu0 %4201
          %4203 = vrot.lane.b32.xlu0 %v4072, 8
          %v4204 = vpop.permute.xlu0 %4203
          %4205 = vrot.lane.b32.xlu0 %v4073, 8
          %v4206 = vpop.permute.xlu0 %4205
          %4207 = vrot.lane.b32.xlu0 %v4074, 8
          %v4208 = vpop.permute.xlu0 %4207
          %4209 = vrot.lane.b32.xlu0 %v4075, 8
          %v4210 = vpop.permute.xlu0 %4209
          %4211 = vrot.lane.b32.xlu0 %v4076, 8
          %v4212 = vpop.permute.xlu0 %4211
          %4213 = vrot.lane.b32.xlu0 %v4077, 8
          %v4214 = vpop.permute.xlu0 %4213
          %4215 = vrot.lane.b32.xlu0 %v4078, 8
          %v4216 = vpop.permute.xlu0 %4215
          %4217 = vrot.lane.b32.xlu0 %v4079, 8
          %v4218 = vpop.permute.xlu0 %4217
          %4219 = vrot.lane.b32.xlu0 %v4080, 8
          %v4220 = vpop.permute.xlu0 %4219
          %4221 = vrot.lane.b32.xlu0 %v4081, 8
          %v4222 = vpop.permute.xlu0 %4221
          %4223 = vrot.lane.b32.xlu0 %v4082, 8
          %v4224 = vpop.permute.xlu0 %4223
          %4225 = vrot.lane.b32.xlu0 %v4083, 8
          %v4226 = vpop.permute.xlu0 %4225
          %4227 = vrot.lane.b32.xlu0 %v4084, 8
          %v4228 = vpop.permute.xlu0 %4227
          %4229 = vrot.lane.b32.xlu0 %v4085, 8
          %v4230 = vpop.permute.xlu0 %4229
          %v4231 = vsel %vm4166, %v4183, %v4200
          %v4232 = vsel %vm4166, %v4184, %v4202
          %v4233 = vsel %vm4166, %v4185, %v4204
          %v4234 = vsel %vm4166, %v4186, %v4206
          %v4235 = vsel %vm4166, %v4187, %v4208
          %v4236 = vsel %vm4166, %v4188, %v4210
          %v4237 = vsel %vm4166, %v4189, %v4212
          %v4238 = vsel %vm4166, %v4190, %v4214
          %v4239 = vsel %vm4166, %v4191, %v4216
          %v4240 = vsel %vm4166, %v4192, %v4218
          %v4241 = vsel %vm4166, %v4193, %v4220
          %v4242 = vsel %vm4166, %v4194, %v4222
          %v4243 = vsel %vm4166, %v4195, %v4224
          %v4244 = vsel %vm4166, %v4196, %v4226
          %v4245 = vsel %vm4166, %v4197, %v4228
          %v4246 = vsel %vm4166, %v4198, %v4230
          %vm4247 = vcmask 130048
          %v4248 = vsel %vm4247, %v4167, -inf
          %4249 = vmax.xlane.f32.xlu0 %v4248
          %v4250 = vpop.xlane.xlu0 %4249
          %v4251 = vsel %vm4247, %v4168, -inf
          %4252 = vmax.xlane.f32.xlu0 %v4251
          %v4253 = vpop.xlane.xlu0 %4252
          %v4254 = vsel %vm4247, %v4169, -inf
          %4255 = vmax.xlane.f32.xlu0 %v4254
          %v4256 = vpop.xlane.xlu0 %4255
          %v4257 = vsel %vm4247, %v4170, -inf
          %4258 = vmax.xlane.f32.xlu0 %v4257
          %v4259 = vpop.xlane.xlu0 %4258
          %v4260 = vsel %vm4247, %v4171, -inf
          %4261 = vmax.xlane.f32.xlu0 %v4260
          %v4262 = vpop.xlane.xlu0 %4261
          %v4263 = vsel %vm4247, %v4172, -inf
          %4264 = vmax.xlane.f32.xlu0 %v4263
          %v4265 = vpop.xlane.xlu0 %4264
          %v4266 = vsel %vm4247, %v4173, -inf
          %4267 = vmax.xlane.f32.xlu0 %v4266
          %v4268 = vpop.xlane.xlu0 %4267
          %v4269 = vsel %vm4247, %v4174, -inf
          %4270 = vmax.xlane.f32.xlu0 %v4269
          %v4271 = vpop.xlane.xlu0 %4270
          %v4272 = vsel %vm4247, %v4175, -inf
          %4273 = vmax.xlane.f32.xlu0 %v4272
          %v4274 = vpop.xlane.xlu0 %4273
          %v4275 = vsel %vm4247, %v4176, -inf
          %4276 = vmax.xlane.f32.xlu0 %v4275
          %v4277 = vpop.xlane.xlu0 %4276
          %v4278 = vsel %vm4247, %v4177, -inf
          %4279 = vmax.xlane.f32.xlu0 %v4278
          %v4280 = vpop.xlane.xlu0 %4279
          %v4281 = vsel %vm4247, %v4178, -inf
          %4282 = vmax.xlane.f32.xlu0 %v4281
          %v4283 = vpop.xlane.xlu0 %4282
          %v4284 = vsel %vm4247, %v4179, -inf
          %4285 = vmax.xlane.f32.xlu0 %v4284
          %v4286 = vpop.xlane.xlu0 %4285
          %v4287 = vsel %vm4247, %v4180, -inf
          %4288 = vmax.xlane.f32.xlu0 %v4287
          %v4289 = vpop.xlane.xlu0 %4288
          %v4290 = vsel %vm4247, %v4181, -inf
          %4291 = vmax.xlane.f32.xlu0 %v4290
          %v4292 = vpop.xlane.xlu0 %4291
          %v4293 = vsel %vm4247, %v4182, -inf
          %4294 = vmax.xlane.f32.xlu0 %v4293
          %v4295 = vpop.xlane.xlu0 %4294
          %vm4296 = vcmp.eq.f32.partialorder %v4167, %v4250
          %vm4297 = vcmp.eq.f32.partialorder %v4168, %v4253
          %vm4298 = vcmp.eq.f32.partialorder %v4169, %v4256
          %vm4299 = vcmp.eq.f32.partialorder %v4170, %v4259
          %vm4300 = vcmp.eq.f32.partialorder %v4171, %v4262
          %vm4301 = vcmp.eq.f32.partialorder %v4172, %v4265
          %vm4302 = vcmp.eq.f32.partialorder %v4173, %v4268
          %vm4303 = vcmp.eq.f32.partialorder %v4174, %v4271
          %vm4304 = vcmp.eq.f32.partialorder %v4175, %v4274
          %vm4305 = vcmp.eq.f32.partialorder %v4176, %v4277
          %vm4306 = vcmp.eq.f32.partialorder %v4177, %v4280
          %vm4307 = vcmp.eq.f32.partialorder %v4178, %v4283
          %vm4308 = vcmp.eq.f32.partialorder %v4179, %v4286
          %vm4309 = vcmp.eq.f32.partialorder %v4180, %v4289
          %vm4310 = vcmp.eq.f32.partialorder %v4181, %v4292
          %vm4311 = vcmp.eq.f32.partialorder %v4182, %v4295
          %v4312 = vsel %vm4296, %v4231, 2147483647
          %v4313 = vsel %vm4297, %v4232, 2147483647
          %v4314 = vsel %vm4298, %v4233, 2147483647
          %v4315 = vsel %vm4299, %v4234, 2147483647
          %v4316 = vsel %vm4300, %v4235, 2147483647
          %v4317 = vsel %vm4301, %v4236, 2147483647
          %v4318 = vsel %vm4302, %v4237, 2147483647
          %v4319 = vsel %vm4303, %v4238, 2147483647
          %v4320 = vsel %vm4304, %v4239, 2147483647
          %v4321 = vsel %vm4305, %v4240, 2147483647
          %v4322 = vsel %vm4306, %v4241, 2147483647
          %v4323 = vsel %vm4307, %v4242, 2147483647
          %v4324 = vsel %vm4308, %v4243, 2147483647
          %v4325 = vsel %vm4309, %v4244, 2147483647
          %v4326 = vsel %vm4310, %v4245, 2147483647
          %v4327 = vsel %vm4311, %v4246, 2147483647
          %v4328 = vsel %vm4247, %v4312, 2147483647
          %v4329 = vand.u32 %v4328, 65535
          %v4330 = vshra.s32 %v4328, 16
          %v4331 = vcvt.s32.f32 %v4329
          %v4332 = vcvt.s32.f32 %v4330
          %4333 = vmin.xlane.f32.xlu0 %v4332
          %v4334 = vpop.xlane.xlu0 %4333
          %vm4335 = vcmp.eq.f32.partialorder %v4332, %v4334
          %v4336 = vsel %vm4335, %v4331, inf
          %4337 = vmin.xlane.f32.xlu0 %v4336
          %v4338 = vpop.xlane.xlu0 %4337
          %v4339 = vcvt.f32.s32 %v4338
          %v4340 = vcvt.f32.s32 %v4334
          %v4341 = vshll.u32 %v4340, 16
          %v4342 = vadd.s32 %v4341, %v4339
          %v4343 = vsel %vm4247, %v4313, 2147483647
          %v4344 = vand.u32 %v4343, 65535
          %v4345 = vshra.s32 %v4343, 16
          %v4346 = vcvt.s32.f32 %v4344
          %v4347 = vcvt.s32.f32 %v4345
          %4348 = vmin.xlane.f32.xlu0 %v4347
          %v4349 = vpop.xlane.xlu0 %4348
          %vm4350 = vcmp.eq.f32.partialorder %v4347, %v4349
          %v4351 = vsel %vm4350, %v4346, inf
          %4352 = vmin.xlane.f32.xlu0 %v4351
          %v4353 = vpop.xlane.xlu0 %4352
          %v4354 = vcvt.f32.s32 %v4353
          %v4355 = vcvt.f32.s32 %v4349
          %v4356 = vshll.u32 %v4355, 16
          %v4357 = vadd.s32 %v4356, %v4354
          %v4358 = vsel %vm4247, %v4314, 2147483647
          %v4359 = vand.u32 %v4358, 65535
          %v4360 = vshra.s32 %v4358, 16
          %v4361 = vcvt.s32.f32 %v4359
          %v4362 = vcvt.s32.f32 %v4360
          %4363 = vmin.xlane.f32.xlu0 %v4362
          %v4364 = vpop.xlane.xlu0 %4363
          %vm4365 = vcmp.eq.f32.partialorder %v4362, %v4364
          %v4366 = vsel %vm4365, %v4361, inf
          %4367 = vmin.xlane.f32.xlu0 %v4366
          %v4368 = vpop.xlane.xlu0 %4367
          %v4369 = vcvt.f32.s32 %v4368
          %v4370 = vcvt.f32.s32 %v4364
          %v4371 = vshll.u32 %v4370, 16
          %v4372 = vadd.s32 %v4371, %v4369
          %v4373 = vsel %vm4247, %v4315, 2147483647
          %v4374 = vand.u32 %v4373, 65535
          %v4375 = vshra.s32 %v4373, 16
          %v4376 = vcvt.s32.f32 %v4374
          %v4377 = vcvt.s32.f32 %v4375
          %4378 = vmin.xlane.f32.xlu0 %v4377
          %v4379 = vpop.xlane.xlu0 %4378
          %vm4380 = vcmp.eq.f32.partialorder %v4377, %v4379
          %v4381 = vsel %vm4380, %v4376, inf
          %4382 = vmin.xlane.f32.xlu0 %v4381
          %v4383 = vpop.xlane.xlu0 %4382
          %v4384 = vcvt.f32.s32 %v4383
          %v4385 = vcvt.f32.s32 %v4379
          %v4386 = vshll.u32 %v4385, 16
          %v4387 = vadd.s32 %v4386, %v4384
          %v4388 = vsel %vm4247, %v4316, 2147483647
          %v4389 = vand.u32 %v4388, 65535
          %v4390 = vshra.s32 %v4388, 16
          %v4391 = vcvt.s32.f32 %v4389
          %v4392 = vcvt.s32.f32 %v4390
          %4393 = vmin.xlane.f32.xlu0 %v4392
          %v4394 = vpop.xlane.xlu0 %4393
          %vm4395 = vcmp.eq.f32.partialorder %v4392, %v4394
          %v4396 = vsel %vm4395, %v4391, inf
          %4397 = vmin.xlane.f32.xlu0 %v4396
          %v4398 = vpop.xlane.xlu0 %4397
          %v4399 = vcvt.f32.s32 %v4398
          %v4400 = vcvt.f32.s32 %v4394
          %v4401 = vshll.u32 %v4400, 16
          %v4402 = vadd.s32 %v4401, %v4399
          %v4403 = vsel %vm4247, %v4317, 2147483647
          %v4404 = vand.u32 %v4403, 65535
          %v4405 = vshra.s32 %v4403, 16
          %v4406 = vcvt.s32.f32 %v4404
          %v4407 = vcvt.s32.f32 %v4405
          %4408 = vmin.xlane.f32.xlu0 %v4407
          %v4409 = vpop.xlane.xlu0 %4408
          %vm4410 = vcmp.eq.f32.partialorder %v4407, %v4409
          %v4411 = vsel %vm4410, %v4406, inf
          %4412 = vmin.xlane.f32.xlu0 %v4411
          %v4413 = vpop.xlane.xlu0 %4412
          %v4414 = vcvt.f32.s32 %v4413
          %v4415 = vcvt.f32.s32 %v4409
          %v4416 = vshll.u32 %v4415, 16
          %v4417 = vadd.s32 %v4416, %v4414
          %v4418 = vsel %vm4247, %v4318, 2147483647
          %v4419 = vand.u32 %v4418, 65535
          %v4420 = vshra.s32 %v4418, 16
          %v4421 = vcvt.s32.f32 %v4419
          %v4422 = vcvt.s32.f32 %v4420
          %4423 = vmin.xlane.f32.xlu0 %v4422
          %v4424 = vpop.xlane.xlu0 %4423
          %vm4425 = vcmp.eq.f32.partialorder %v4422, %v4424
          %v4426 = vsel %vm4425, %v4421, inf
          %4427 = vmin.xlane.f32.xlu0 %v4426
          %v4428 = vpop.xlane.xlu0 %4427
          %v4429 = vcvt.f32.s32 %v4428
          %v4430 = vcvt.f32.s32 %v4424
          %v4431 = vshll.u32 %v4430, 16
          %v4432 = vadd.s32 %v4431, %v4429
          %v4433 = vsel %vm4247, %v4319, 2147483647
          %v4434 = vand.u32 %v4433, 65535
          %v4435 = vshra.s32 %v4433, 16
          %v4436 = vcvt.s32.f32 %v4434
          %v4437 = vcvt.s32.f32 %v4435
          %4438 = vmin.xlane.f32.xlu0 %v4437
          %v4439 = vpop.xlane.xlu0 %4438
          %vm4440 = vcmp.eq.f32.partialorder %v4437, %v4439
          %v4441 = vsel %vm4440, %v4436, inf
          %4442 = vmin.xlane.f32.xlu0 %v4441
          %v4443 = vpop.xlane.xlu0 %4442
          %v4444 = vcvt.f32.s32 %v4443
          %v4445 = vcvt.f32.s32 %v4439
          %v4446 = vshll.u32 %v4445, 16
          %v4447 = vadd.s32 %v4446, %v4444
          %v4448 = vsel %vm4247, %v4320, 2147483647
          %v4449 = vand.u32 %v4448, 65535
          %v4450 = vshra.s32 %v4448, 16
          %v4451 = vcvt.s32.f32 %v4449
          %v4452 = vcvt.s32.f32 %v4450
          %4453 = vmin.xlane.f32.xlu0 %v4452
          %v4454 = vpop.xlane.xlu0 %4453
          %vm4455 = vcmp.eq.f32.partialorder %v4452, %v4454
          %v4456 = vsel %vm4455, %v4451, inf
          %4457 = vmin.xlane.f32.xlu0 %v4456
          %v4458 = vpop.xlane.xlu0 %4457
          %v4459 = vcvt.f32.s32 %v4458
          %v4460 = vcvt.f32.s32 %v4454
          %v4461 = vshll.u32 %v4460, 16
          %v4462 = vadd.s32 %v4461, %v4459
          %v4463 = vsel %vm4247, %v4321, 2147483647
          %v4464 = vand.u32 %v4463, 65535
          %v4465 = vshra.s32 %v4463, 16
          %v4466 = vcvt.s32.f32 %v4464
          %v4467 = vcvt.s32.f32 %v4465
          %4468 = vmin.xlane.f32.xlu0 %v4467
          %v4469 = vpop.xlane.xlu0 %4468
          %vm4470 = vcmp.eq.f32.partialorder %v4467, %v4469
          %v4471 = vsel %vm4470, %v4466, inf
          %4472 = vmin.xlane.f32.xlu0 %v4471
          %v4473 = vpop.xlane.xlu0 %4472
          %v4474 = vcvt.f32.s32 %v4473
          %v4475 = vcvt.f32.s32 %v4469
          %v4476 = vshll.u32 %v4475, 16
          %v4477 = vadd.s32 %v4476, %v4474
          %v4478 = vsel %vm4247, %v4322, 2147483647
          %v4479 = vand.u32 %v4478, 65535
          %v4480 = vshra.s32 %v4478, 16
          %v4481 = vcvt.s32.f32 %v4479
          %v4482 = vcvt.s32.f32 %v4480
          %4483 = vmin.xlane.f32.xlu0 %v4482
          %v4484 = vpop.xlane.xlu0 %4483
          %vm4485 = vcmp.eq.f32.partialorder %v4482, %v4484
          %v4486 = vsel %vm4485, %v4481, inf
          %4487 = vmin.xlane.f32.xlu0 %v4486
          %v4488 = vpop.xlane.xlu0 %4487
          %v4489 = vcvt.f32.s32 %v4488
          %v4490 = vcvt.f32.s32 %v4484
          %v4491 = vshll.u32 %v4490, 16
          %v4492 = vadd.s32 %v4491, %v4489
          %v4493 = vsel %vm4247, %v4323, 2147483647
          %v4494 = vand.u32 %v4493, 65535
          %v4495 = vshra.s32 %v4493, 16
          %v4496 = vcvt.s32.f32 %v4494
          %v4497 = vcvt.s32.f32 %v4495
          %4498 = vmin.xlane.f32.xlu0 %v4497
          %v4499 = vpop.xlane.xlu0 %4498
          %vm4500 = vcmp.eq.f32.partialorder %v4497, %v4499
          %v4501 = vsel %vm4500, %v4496, inf
          %4502 = vmin.xlane.f32.xlu0 %v4501
          %v4503 = vpop.xlane.xlu0 %4502
          %v4504 = vcvt.f32.s32 %v4503
          %v4505 = vcvt.f32.s32 %v4499
          %v4506 = vshll.u32 %v4505, 16
          %v4507 = vadd.s32 %v4506, %v4504
          %v4508 = vsel %vm4247, %v4324, 2147483647
          %v4509 = vand.u32 %v4508, 65535
          %v4510 = vshra.s32 %v4508, 16
          %v4511 = vcvt.s32.f32 %v4509
          %v4512 = vcvt.s32.f32 %v4510
          %4513 = vmin.xlane.f32.xlu0 %v4512
          %v4514 = vpop.xlane.xlu0 %4513
          %vm4515 = vcmp.eq.f32.partialorder %v4512, %v4514
          %v4516 = vsel %vm4515, %v4511, inf
          %4517 = vmin.xlane.f32.xlu0 %v4516
          %v4518 = vpop.xlane.xlu0 %4517
          %v4519 = vcvt.f32.s32 %v4518
          %v4520 = vcvt.f32.s32 %v4514
          %v4521 = vshll.u32 %v4520, 16
          %v4522 = vadd.s32 %v4521, %v4519
          %v4523 = vsel %vm4247, %v4325, 2147483647
          %v4524 = vand.u32 %v4523, 65535
          %v4525 = vshra.s32 %v4523, 16
          %v4526 = vcvt.s32.f32 %v4524
          %v4527 = vcvt.s32.f32 %v4525
          %4528 = vmin.xlane.f32.xlu0 %v4527
          %v4529 = vpop.xlane.xlu0 %4528
          %vm4530 = vcmp.eq.f32.partialorder %v4527, %v4529
          %v4531 = vsel %vm4530, %v4526, inf
          %4532 = vmin.xlane.f32.xlu0 %v4531
          %v4533 = vpop.xlane.xlu0 %4532
          %v4534 = vcvt.f32.s32 %v4533
          %v4535 = vcvt.f32.s32 %v4529
          %v4536 = vshll.u32 %v4535, 16
          %v4537 = vadd.s32 %v4536, %v4534
          %v4538 = vsel %vm4247, %v4326, 2147483647
          %v4539 = vand.u32 %v4538, 65535
          %v4540 = vshra.s32 %v4538, 16
          %v4541 = vcvt.s32.f32 %v4539
          %v4542 = vcvt.s32.f32 %v4540
          %4543 = vmin.xlane.f32.xlu0 %v4542
          %v4544 = vpop.xlane.xlu0 %4543
          %vm4545 = vcmp.eq.f32.partialorder %v4542, %v4544
          %v4546 = vsel %vm4545, %v4541, inf
          %4547 = vmin.xlane.f32.xlu0 %v4546
          %v4548 = vpop.xlane.xlu0 %4547
          %v4549 = vcvt.f32.s32 %v4548
          %v4550 = vcvt.f32.s32 %v4544
          %v4551 = vshll.u32 %v4550, 16
          %v4552 = vadd.s32 %v4551, %v4549
          %v4553 = vsel %vm4247, %v4327, 2147483647
          %v4554 = vand.u32 %v4553, 65535
          %v4555 = vshra.s32 %v4553, 16
          %v4556 = vcvt.s32.f32 %v4554
          %v4557 = vcvt.s32.f32 %v4555
          %4558 = vmin.xlane.f32.xlu0 %v4557
          %v4559 = vpop.xlane.xlu0 %4558
          %vm4560 = vcmp.eq.f32.partialorder %v4557, %v4559
          %v4561 = vsel %vm4560, %v4556, inf
          %4562 = vmin.xlane.f32.xlu0 %v4561
          %v4563 = vpop.xlane.xlu0 %4562
          %v4564 = vcvt.f32.s32 %v4563
          %v4565 = vcvt.f32.s32 %v4559
          %v4566 = vshll.u32 %v4565, 16
          %v4567 = vadd.s32 %v4566, %v4564
          %v4568 = vsel %vm1453, %v4250, -inf
          %v4569 = vsel %vm1453, %v4253, -inf
          %v4570 = vsel %vm1453, %v4256, -inf
          %v4571 = vsel %vm1453, %v4259, -inf
          %v4572 = vsel %vm1453, %v4262, -inf
          %v4573 = vsel %vm1453, %v4265, -inf
          %v4574 = vsel %vm1453, %v4268, -inf
          %v4575 = vsel %vm1453, %v4271, -inf
          %v4576 = vsel %vm1453, %v4274, -inf
          %v4577 = vsel %vm1453, %v4277, -inf
          %v4578 = vsel %vm1453, %v4280, -inf
          %v4579 = vsel %vm1453, %v4283, -inf
          %v4580 = vsel %vm1453, %v4286, -inf
          %v4581 = vsel %vm1453, %v4289, -inf
          %v4582 = vsel %vm1453, %v4292, -inf
          %v4583 = vsel %vm1453, %v4295, -inf
          %v4584 = vsel %vm1453, %v4342, 0
          %v4585 = vsel %vm1453, %v4357, 0
          %v4586 = vsel %vm1453, %v4372, 0
          %v4587 = vsel %vm1453, %v4387, 0
          %v4588 = vsel %vm1453, %v4402, 0
          %v4589 = vsel %vm1453, %v4417, 0
          %v4590 = vsel %vm1453, %v4432, 0
          %v4591 = vsel %vm1453, %v4447, 0
          %v4592 = vsel %vm1453, %v4462, 0
          %v4593 = vsel %vm1453, %v4477, 0
          %v4594 = vsel %vm1453, %v4492, 0
          %v4595 = vsel %vm1453, %v4507, 0
          %v4596 = vsel %vm1453, %v4522, 0
          %v4597 = vsel %vm1453, %v4537, 0
          %v4598 = vsel %vm1453, %v4552, 0
          %v4599 = vsel %vm1453, %v4567, 0
          %vm4600 = vcmp.eq.s32.totalorder %v4231, %v4342
          %vm4601 = vcmp.eq.s32.totalorder %v4232, %v4357
          %vm4602 = vcmp.eq.s32.totalorder %v4233, %v4372
          %vm4603 = vcmp.eq.s32.totalorder %v4234, %v4387
          %vm4604 = vcmp.eq.s32.totalorder %v4235, %v4402
          %vm4605 = vcmp.eq.s32.totalorder %v4236, %v4417
          %vm4606 = vcmp.eq.s32.totalorder %v4237, %v4432
          %vm4607 = vcmp.eq.s32.totalorder %v4238, %v4447
          %vm4608 = vcmp.eq.s32.totalorder %v4239, %v4462
          %vm4609 = vcmp.eq.s32.totalorder %v4240, %v4477
          %vm4610 = vcmp.eq.s32.totalorder %v4241, %v4492
          %vm4611 = vcmp.eq.s32.totalorder %v4242, %v4507
          %vm4612 = vcmp.eq.s32.totalorder %v4243, %v4522
          %vm4613 = vcmp.eq.s32.totalorder %v4244, %v4537
          %vm4614 = vcmp.eq.s32.totalorder %v4245, %v4552
          %vm4615 = vcmp.eq.s32.totalorder %v4246, %v4567
          %v4616 = vsel %vm4600, -inf, %v4167
          %v4617 = vsel %vm4601, -inf, %v4168
          %v4618 = vsel %vm4602, -inf, %v4169
          %v4619 = vsel %vm4603, -inf, %v4170
          %v4620 = vsel %vm4604, -inf, %v4171
          %v4621 = vsel %vm4605, -inf, %v4172
          %v4622 = vsel %vm4606, -inf, %v4173
          %v4623 = vsel %vm4607, -inf, %v4174
          %v4624 = vsel %vm4608, -inf, %v4175
          %v4625 = vsel %vm4609, -inf, %v4176
          %v4626 = vsel %vm4610, -inf, %v4177
          %v4627 = vsel %vm4611, -inf, %v4178
          %v4628 = vsel %vm4612, -inf, %v4179
          %v4629 = vsel %vm4613, -inf, %v4180
          %v4630 = vsel %vm4614, -inf, %v4181
          %v4631 = vsel %vm4615, -inf, %v4182
          %v4632 = vsel %vm4600, 2147483647, %v4231
          %v4633 = vsel %vm4601, 2147483647, %v4232
          %v4634 = vsel %vm4602, 2147483647, %v4233
          %v4635 = vsel %vm4603, 2147483647, %v4234
          %v4636 = vsel %vm4604, 2147483647, %v4235
          %v4637 = vsel %vm4605, 2147483647, %v4236
          %v4638 = vsel %vm4606, 2147483647, %v4237
          %v4639 = vsel %vm4607, 2147483647, %v4238
          %v4640 = vsel %vm4608, 2147483647, %v4239
          %v4641 = vsel %vm4609, 2147483647, %v4240
          %v4642 = vsel %vm4610, 2147483647, %v4241
          %v4643 = vsel %vm4611, 2147483647, %v4242
          %v4644 = vsel %vm4612, 2147483647, %v4243
          %v4645 = vsel %vm4613, 2147483647, %v4244
          %v4646 = vsel %vm4614, 2147483647, %v4245
          %v4647 = vsel %vm4615, 2147483647, %v4246
          %v4648 = vsel %vm4247, %v4616, -inf
          %4649 = vmax.xlane.f32.xlu0 %v4648
          %v4650 = vpop.xlane.xlu0 %4649
          %v4651 = vsel %vm4247, %v4617, -inf
          %4652 = vmax.xlane.f32.xlu0 %v4651
          %v4653 = vpop.xlane.xlu0 %4652
          %v4654 = vsel %vm4247, %v4618, -inf
          %4655 = vmax.xlane.f32.xlu0 %v4654
          %v4656 = vpop.xlane.xlu0 %4655
          %v4657 = vsel %vm4247, %v4619, -inf
          %4658 = vmax.xlane.f32.xlu0 %v4657
          %v4659 = vpop.xlane.xlu0 %4658
          %v4660 = vsel %vm4247, %v4620, -inf
          %4661 = vmax.xlane.f32.xlu0 %v4660
          %v4662 = vpop.xlane.xlu0 %4661
          %v4663 = vsel %vm4247, %v4621, -inf
          %4664 = vmax.xlane.f32.xlu0 %v4663
          %v4665 = vpop.xlane.xlu0 %4664
          %v4666 = vsel %vm4247, %v4622, -inf
          %4667 = vmax.xlane.f32.xlu0 %v4666
          %v4668 = vpop.xlane.xlu0 %4667
          %v4669 = vsel %vm4247, %v4623, -inf
          %4670 = vmax.xlane.f32.xlu0 %v4669
          %v4671 = vpop.xlane.xlu0 %4670
          %v4672 = vsel %vm4247, %v4624, -inf
          %4673 = vmax.xlane.f32.xlu0 %v4672
          %v4674 = vpop.xlane.xlu0 %4673
          %v4675 = vsel %vm4247, %v4625, -inf
          %4676 = vmax.xlane.f32.xlu0 %v4675
          %v4677 = vpop.xlane.xlu0 %4676
          %v4678 = vsel %vm4247, %v4626, -inf
          %4679 = vmax.xlane.f32.xlu0 %v4678
          %v4680 = vpop.xlane.xlu0 %4679
          %v4681 = vsel %vm4247, %v4627, -inf
          %4682 = vmax.xlane.f32.xlu0 %v4681
          %v4683 = vpop.xlane.xlu0 %4682
          %v4684 = vsel %vm4247, %v4628, -inf
          %4685 = vmax.xlane.f32.xlu0 %v4684
          %v4686 = vpop.xlane.xlu0 %4685
          %v4687 = vsel %vm4247, %v4629, -inf
          %4688 = vmax.xlane.f32.xlu0 %v4687
          %v4689 = vpop.xlane.xlu0 %4688
          %v4690 = vsel %vm4247, %v4630, -inf
          %4691 = vmax.xlane.f32.xlu0 %v4690
          %v4692 = vpop.xlane.xlu0 %4691
          %v4693 = vsel %vm4247, %v4631, -inf
          %4694 = vmax.xlane.f32.xlu0 %v4693
          %v4695 = vpop.xlane.xlu0 %4694
          %vm4696 = vcmp.eq.f32.partialorder %v4616, %v4650
          %vm4697 = vcmp.eq.f32.partialorder %v4617, %v4653
          %vm4698 = vcmp.eq.f32.partialorder %v4618, %v4656
          %vm4699 = vcmp.eq.f32.partialorder %v4619, %v4659
          %vm4700 = vcmp.eq.f32.partialorder %v4620, %v4662
          %vm4701 = vcmp.eq.f32.partialorder %v4621, %v4665
          %vm4702 = vcmp.eq.f32.partialorder %v4622, %v4668
          %vm4703 = vcmp.eq.f32.partialorder %v4623, %v4671
          %vm4704 = vcmp.eq.f32.partialorder %v4624, %v4674
          %vm4705 = vcmp.eq.f32.partialorder %v4625, %v4677
          %vm4706 = vcmp.eq.f32.partialorder %v4626, %v4680
          %vm4707 = vcmp.eq.f32.partialorder %v4627, %v4683
          %vm4708 = vcmp.eq.f32.partialorder %v4628, %v4686
          %vm4709 = vcmp.eq.f32.partialorder %v4629, %v4689
          %vm4710 = vcmp.eq.f32.partialorder %v4630, %v4692
          %vm4711 = vcmp.eq.f32.partialorder %v4631, %v4695
          %v4712 = vsel %vm4696, %v4632, 2147483647
          %v4713 = vsel %vm4697, %v4633, 2147483647
          %v4714 = vsel %vm4698, %v4634, 2147483647
          %v4715 = vsel %vm4699, %v4635, 2147483647
          %v4716 = vsel %vm4700, %v4636, 2147483647
          %v4717 = vsel %vm4701, %v4637, 2147483647
          %v4718 = vsel %vm4702, %v4638, 2147483647
          %v4719 = vsel %vm4703, %v4639, 2147483647
          %v4720 = vsel %vm4704, %v4640, 2147483647
          %v4721 = vsel %vm4705, %v4641, 2147483647
          %v4722 = vsel %vm4706, %v4642, 2147483647
          %v4723 = vsel %vm4707, %v4643, 2147483647
          %v4724 = vsel %vm4708, %v4644, 2147483647
          %v4725 = vsel %vm4709, %v4645, 2147483647
          %v4726 = vsel %vm4710, %v4646, 2147483647
          %v4727 = vsel %vm4711, %v4647, 2147483647
          %v4728 = vsel %vm4247, %v4712, 2147483647
          %v4729 = vand.u32 %v4728, 65535
          %v4730 = vshra.s32 %v4728, 16
          %v4731 = vcvt.s32.f32 %v4729
          %v4732 = vcvt.s32.f32 %v4730
          %4733 = vmin.xlane.f32.xlu0 %v4732
          %v4734 = vpop.xlane.xlu0 %4733
          %vm4735 = vcmp.eq.f32.partialorder %v4732, %v4734
          %v4736 = vsel %vm4735, %v4731, inf
          %4737 = vmin.xlane.f32.xlu0 %v4736
          %v4738 = vpop.xlane.xlu0 %4737
          %v4739 = vcvt.f32.s32 %v4738
          %v4740 = vcvt.f32.s32 %v4734
          %v4741 = vshll.u32 %v4740, 16
          %v4742 = vadd.s32 %v4741, %v4739
          %v4743 = vsel %vm4247, %v4713, 2147483647
          %v4744 = vand.u32 %v4743, 65535
          %v4745 = vshra.s32 %v4743, 16
          %v4746 = vcvt.s32.f32 %v4744
          %v4747 = vcvt.s32.f32 %v4745
          %4748 = vmin.xlane.f32.xlu0 %v4747
          %v4749 = vpop.xlane.xlu0 %4748
          %vm4750 = vcmp.eq.f32.partialorder %v4747, %v4749
          %v4751 = vsel %vm4750, %v4746, inf
          %4752 = vmin.xlane.f32.xlu0 %v4751
          %v4753 = vpop.xlane.xlu0 %4752
          %v4754 = vcvt.f32.s32 %v4753
          %v4755 = vcvt.f32.s32 %v4749
          %v4756 = vshll.u32 %v4755, 16
          %v4757 = vadd.s32 %v4756, %v4754
          %v4758 = vsel %vm4247, %v4714, 2147483647
          %v4759 = vand.u32 %v4758, 65535
          %v4760 = vshra.s32 %v4758, 16
          %v4761 = vcvt.s32.f32 %v4759
          %v4762 = vcvt.s32.f32 %v4760
          %4763 = vmin.xlane.f32.xlu0 %v4762
          %v4764 = vpop.xlane.xlu0 %4763
          %vm4765 = vcmp.eq.f32.partialorder %v4762, %v4764
          %v4766 = vsel %vm4765, %v4761, inf
          %4767 = vmin.xlane.f32.xlu0 %v4766
          %v4768 = vpop.xlane.xlu0 %4767
          %v4769 = vcvt.f32.s32 %v4768
          %v4770 = vcvt.f32.s32 %v4764
          %v4771 = vshll.u32 %v4770, 16
          %v4772 = vadd.s32 %v4771, %v4769
          %v4773 = vsel %vm4247, %v4715, 2147483647
          %v4774 = vand.u32 %v4773, 65535
          %v4775 = vshra.s32 %v4773, 16
          %v4776 = vcvt.s32.f32 %v4774
          %v4777 = vcvt.s32.f32 %v4775
          %4778 = vmin.xlane.f32.xlu0 %v4777
          %v4779 = vpop.xlane.xlu0 %4778
          %vm4780 = vcmp.eq.f32.partialorder %v4777, %v4779
          %v4781 = vsel %vm4780, %v4776, inf
          %4782 = vmin.xlane.f32.xlu0 %v4781
          %v4783 = vpop.xlane.xlu0 %4782
          %v4784 = vcvt.f32.s32 %v4783
          %v4785 = vcvt.f32.s32 %v4779
          %v4786 = vshll.u32 %v4785, 16
          %v4787 = vadd.s32 %v4786, %v4784
          %v4788 = vsel %vm4247, %v4716, 2147483647
          %v4789 = vand.u32 %v4788, 65535
          %v4790 = vshra.s32 %v4788, 16
          %v4791 = vcvt.s32.f32 %v4789
          %v4792 = vcvt.s32.f32 %v4790
          %4793 = vmin.xlane.f32.xlu0 %v4792
          %v4794 = vpop.xlane.xlu0 %4793
          %vm4795 = vcmp.eq.f32.partialorder %v4792, %v4794
          %v4796 = vsel %vm4795, %v4791, inf
          %4797 = vmin.xlane.f32.xlu0 %v4796
          %v4798 = vpop.xlane.xlu0 %4797
          %v4799 = vcvt.f32.s32 %v4798
          %v4800 = vcvt.f32.s32 %v4794
          %v4801 = vshll.u32 %v4800, 16
          %v4802 = vadd.s32 %v4801, %v4799
          %v4803 = vsel %vm4247, %v4717, 2147483647
          %v4804 = vand.u32 %v4803, 65535
          %v4805 = vshra.s32 %v4803, 16
          %v4806 = vcvt.s32.f32 %v4804
          %v4807 = vcvt.s32.f32 %v4805
          %4808 = vmin.xlane.f32.xlu0 %v4807
          %v4809 = vpop.xlane.xlu0 %4808
          %vm4810 = vcmp.eq.f32.partialorder %v4807, %v4809
          %v4811 = vsel %vm4810, %v4806, inf
          %4812 = vmin.xlane.f32.xlu0 %v4811
          %v4813 = vpop.xlane.xlu0 %4812
          %v4814 = vcvt.f32.s32 %v4813
          %v4815 = vcvt.f32.s32 %v4809
          %v4816 = vshll.u32 %v4815, 16
          %v4817 = vadd.s32 %v4816, %v4814
          %v4818 = vsel %vm4247, %v4718, 2147483647
          %v4819 = vand.u32 %v4818, 65535
          %v4820 = vshra.s32 %v4818, 16
          %v4821 = vcvt.s32.f32 %v4819
          %v4822 = vcvt.s32.f32 %v4820
          %4823 = vmin.xlane.f32.xlu0 %v4822
          %v4824 = vpop.xlane.xlu0 %4823
          %vm4825 = vcmp.eq.f32.partialorder %v4822, %v4824
          %v4826 = vsel %vm4825, %v4821, inf
          %4827 = vmin.xlane.f32.xlu0 %v4826
          %v4828 = vpop.xlane.xlu0 %4827
          %v4829 = vcvt.f32.s32 %v4828
          %v4830 = vcvt.f32.s32 %v4824
          %v4831 = vshll.u32 %v4830, 16
          %v4832 = vadd.s32 %v4831, %v4829
          %v4833 = vsel %vm4247, %v4719, 2147483647
          %v4834 = vand.u32 %v4833, 65535
          %v4835 = vshra.s32 %v4833, 16
          %v4836 = vcvt.s32.f32 %v4834
          %v4837 = vcvt.s32.f32 %v4835
          %4838 = vmin.xlane.f32.xlu0 %v4837
          %v4839 = vpop.xlane.xlu0 %4838
          %vm4840 = vcmp.eq.f32.partialorder %v4837, %v4839
          %v4841 = vsel %vm4840, %v4836, inf
          %4842 = vmin.xlane.f32.xlu0 %v4841
          %v4843 = vpop.xlane.xlu0 %4842
          %v4844 = vcvt.f32.s32 %v4843
          %v4845 = vcvt.f32.s32 %v4839
          %v4846 = vshll.u32 %v4845, 16
          %v4847 = vadd.s32 %v4846, %v4844
          %v4848 = vsel %vm4247, %v4720, 2147483647
          %v4849 = vand.u32 %v4848, 65535
          %v4850 = vshra.s32 %v4848, 16
          %v4851 = vcvt.s32.f32 %v4849
          %v4852 = vcvt.s32.f32 %v4850
          %4853 = vmin.xlane.f32.xlu0 %v4852
          %v4854 = vpop.xlane.xlu0 %4853
          %vm4855 = vcmp.eq.f32.partialorder %v4852, %v4854
          %v4856 = vsel %vm4855, %v4851, inf
          %4857 = vmin.xlane.f32.xlu0 %v4856
          %v4858 = vpop.xlane.xlu0 %4857
          %v4859 = vcvt.f32.s32 %v4858
          %v4860 = vcvt.f32.s32 %v4854
          %v4861 = vshll.u32 %v4860, 16
          %v4862 = vadd.s32 %v4861, %v4859
          %v4863 = vsel %vm4247, %v4721, 2147483647
          %v4864 = vand.u32 %v4863, 65535
          %v4865 = vshra.s32 %v4863, 16
          %v4866 = vcvt.s32.f32 %v4864
          %v4867 = vcvt.s32.f32 %v4865
          %4868 = vmin.xlane.f32.xlu0 %v4867
          %v4869 = vpop.xlane.xlu0 %4868
          %vm4870 = vcmp.eq.f32.partialorder %v4867, %v4869
          %v4871 = vsel %vm4870, %v4866, inf
          %4872 = vmin.xlane.f32.xlu0 %v4871
          %v4873 = vpop.xlane.xlu0 %4872
          %v4874 = vcvt.f32.s32 %v4873
          %v4875 = vcvt.f32.s32 %v4869
          %v4876 = vshll.u32 %v4875, 16
          %v4877 = vadd.s32 %v4876, %v4874
          %v4878 = vsel %vm4247, %v4722, 2147483647
          %v4879 = vand.u32 %v4878, 65535
          %v4880 = vshra.s32 %v4878, 16
          %v4881 = vcvt.s32.f32 %v4879
          %v4882 = vcvt.s32.f32 %v4880
          %4883 = vmin.xlane.f32.xlu0 %v4882
          %v4884 = vpop.xlane.xlu0 %4883
          %vm4885 = vcmp.eq.f32.partialorder %v4882, %v4884
          %v4886 = vsel %vm4885, %v4881, inf
          %4887 = vmin.xlane.f32.xlu0 %v4886
          %v4888 = vpop.xlane.xlu0 %4887
          %v4889 = vcvt.f32.s32 %v4888
          %v4890 = vcvt.f32.s32 %v4884
          %v4891 = vshll.u32 %v4890, 16
          %v4892 = vadd.s32 %v4891, %v4889
          %v4893 = vsel %vm4247, %v4723, 2147483647
          %v4894 = vand.u32 %v4893, 65535
          %v4895 = vshra.s32 %v4893, 16
          %v4896 = vcvt.s32.f32 %v4894
          %v4897 = vcvt.s32.f32 %v4895
          %4898 = vmin.xlane.f32.xlu0 %v4897
          %v4899 = vpop.xlane.xlu0 %4898
          %vm4900 = vcmp.eq.f32.partialorder %v4897, %v4899
          %v4901 = vsel %vm4900, %v4896, inf
          %4902 = vmin.xlane.f32.xlu0 %v4901
          %v4903 = vpop.xlane.xlu0 %4902
          %v4904 = vcvt.f32.s32 %v4903
          %v4905 = vcvt.f32.s32 %v4899
          %v4906 = vshll.u32 %v4905, 16
          %v4907 = vadd.s32 %v4906, %v4904
          %v4908 = vsel %vm4247, %v4724, 2147483647
          %v4909 = vand.u32 %v4908, 65535
          %v4910 = vshra.s32 %v4908, 16
          %v4911 = vcvt.s32.f32 %v4909
          %v4912 = vcvt.s32.f32 %v4910
          %4913 = vmin.xlane.f32.xlu0 %v4912
          %v4914 = vpop.xlane.xlu0 %4913
          %vm4915 = vcmp.eq.f32.partialorder %v4912, %v4914
          %v4916 = vsel %vm4915, %v4911, inf
          %4917 = vmin.xlane.f32.xlu0 %v4916
          %v4918 = vpop.xlane.xlu0 %4917
          %v4919 = vcvt.f32.s32 %v4918
          %v4920 = vcvt.f32.s32 %v4914
          %v4921 = vshll.u32 %v4920, 16
          %v4922 = vadd.s32 %v4921, %v4919
          %v4923 = vsel %vm4247, %v4725, 2147483647
          %v4924 = vand.u32 %v4923, 65535
          %v4925 = vshra.s32 %v4923, 16
          %v4926 = vcvt.s32.f32 %v4924
          %v4927 = vcvt.s32.f32 %v4925
          %4928 = vmin.xlane.f32.xlu0 %v4927
          %v4929 = vpop.xlane.xlu0 %4928
          %vm4930 = vcmp.eq.f32.partialorder %v4927, %v4929
          %v4931 = vsel %vm4930, %v4926, inf
          %4932 = vmin.xlane.f32.xlu0 %v4931
          %v4933 = vpop.xlane.xlu0 %4932
          %v4934 = vcvt.f32.s32 %v4933
          %v4935 = vcvt.f32.s32 %v4929
          %v4936 = vshll.u32 %v4935, 16
          %v4937 = vadd.s32 %v4936, %v4934
          %v4938 = vsel %vm4247, %v4726, 2147483647
          %v4939 = vand.u32 %v4938, 65535
          %v4940 = vshra.s32 %v4938, 16
          %v4941 = vcvt.s32.f32 %v4939
          %v4942 = vcvt.s32.f32 %v4940
          %4943 = vmin.xlane.f32.xlu0 %v4942
          %v4944 = vpop.xlane.xlu0 %4943
          %vm4945 = vcmp.eq.f32.partialorder %v4942, %v4944
          %v4946 = vsel %vm4945, %v4941, inf
          %4947 = vmin.xlane.f32.xlu0 %v4946
          %v4948 = vpop.xlane.xlu0 %4947
          %v4949 = vcvt.f32.s32 %v4948
          %v4950 = vcvt.f32.s32 %v4944
          %v4951 = vshll.u32 %v4950, 16
          %v4952 = vadd.s32 %v4951, %v4949
          %v4953 = vsel %vm4247, %v4727, 2147483647
          %v4954 = vand.u32 %v4953, 65535
          %v4955 = vshra.s32 %v4953, 16
          %v4956 = vcvt.s32.f32 %v4954
          %v4957 = vcvt.s32.f32 %v4955
          %4958 = vmin.xlane.f32.xlu0 %v4957
          %v4959 = vpop.xlane.xlu0 %4958
          %vm4960 = vcmp.eq.f32.partialorder %v4957, %v4959
          %v4961 = vsel %vm4960, %v4956, inf
          %4962 = vmin.xlane.f32.xlu0 %v4961
          %v4963 = vpop.xlane.xlu0 %4962
          %v4964 = vcvt.f32.s32 %v4963
          %v4965 = vcvt.f32.s32 %v4959
          %v4966 = vshll.u32 %v4965, 16
          %v4967 = vadd.s32 %v4966, %v4964
          %v4968 = vsel %vm1822, %v4650, %v4568
          %v4969 = vsel %vm1822, %v4653, %v4569
          %v4970 = vsel %vm1822, %v4656, %v4570
          %v4971 = vsel %vm1822, %v4659, %v4571
          %v4972 = vsel %vm1822, %v4662, %v4572
          %v4973 = vsel %vm1822, %v4665, %v4573
          %v4974 = vsel %vm1822, %v4668, %v4574
          %v4975 = vsel %vm1822, %v4671, %v4575
          %v4976 = vsel %vm1822, %v4674, %v4576
          %v4977 = vsel %vm1822, %v4677, %v4577
          %v4978 = vsel %vm1822, %v4680, %v4578
          %v4979 = vsel %vm1822, %v4683, %v4579
          %v4980 = vsel %vm1822, %v4686, %v4580
          %v4981 = vsel %vm1822, %v4689, %v4581
          %v4982 = vsel %vm1822, %v4692, %v4582
          %v4983 = vsel %vm1822, %v4695, %v4583
          %v4984 = vsel %vm1822, %v4742, %v4584
          %v4985 = vsel %vm1822, %v4757, %v4585
          %v4986 = vsel %vm1822, %v4772, %v4586
          %v4987 = vsel %vm1822, %v4787, %v4587
          %v4988 = vsel %vm1822, %v4802, %v4588
          %v4989 = vsel %vm1822, %v4817, %v4589
          %v4990 = vsel %vm1822, %v4832, %v4590
          %v4991 = vsel %vm1822, %v4847, %v4591
          %v4992 = vsel %vm1822, %v4862, %v4592
          %v4993 = vsel %vm1822, %v4877, %v4593
          %v4994 = vsel %vm1822, %v4892, %v4594
          %v4995 = vsel %vm1822, %v4907, %v4595
          %v4996 = vsel %vm1822, %v4922, %v4596
          %v4997 = vsel %vm1822, %v4937, %v4597
          %v4998 = vsel %vm1822, %v4952, %v4598
          %v4999 = vsel %vm1822, %v4967, %v4599
          %vm5000 = vcmp.eq.s32.totalorder %v4632, %v4742
          %vm5001 = vcmp.eq.s32.totalorder %v4633, %v4757
          %vm5002 = vcmp.eq.s32.totalorder %v4634, %v4772
          %vm5003 = vcmp.eq.s32.totalorder %v4635, %v4787
          %vm5004 = vcmp.eq.s32.totalorder %v4636, %v4802
          %vm5005 = vcmp.eq.s32.totalorder %v4637, %v4817
          %vm5006 = vcmp.eq.s32.totalorder %v4638, %v4832
          %vm5007 = vcmp.eq.s32.totalorder %v4639, %v4847
          %vm5008 = vcmp.eq.s32.totalorder %v4640, %v4862
          %vm5009 = vcmp.eq.s32.totalorder %v4641, %v4877
          %vm5010 = vcmp.eq.s32.totalorder %v4642, %v4892
          %vm5011 = vcmp.eq.s32.totalorder %v4643, %v4907
          %vm5012 = vcmp.eq.s32.totalorder %v4644, %v4922
          %vm5013 = vcmp.eq.s32.totalorder %v4645, %v4937
          %vm5014 = vcmp.eq.s32.totalorder %v4646, %v4952
          %vm5015 = vcmp.eq.s32.totalorder %v4647, %v4967
          %v5016 = vsel %vm5000, -inf, %v4616
          %v5017 = vsel %vm5001, -inf, %v4617
          %v5018 = vsel %vm5002, -inf, %v4618
          %v5019 = vsel %vm5003, -inf, %v4619
          %v5020 = vsel %vm5004, -inf, %v4620
          %v5021 = vsel %vm5005, -inf, %v4621
          %v5022 = vsel %vm5006, -inf, %v4622
          %v5023 = vsel %vm5007, -inf, %v4623
          %v5024 = vsel %vm5008, -inf, %v4624
          %v5025 = vsel %vm5009, -inf, %v4625
          %v5026 = vsel %vm5010, -inf, %v4626
          %v5027 = vsel %vm5011, -inf, %v4627
          %v5028 = vsel %vm5012, -inf, %v4628
          %v5029 = vsel %vm5013, -inf, %v4629
          %v5030 = vsel %vm5014, -inf, %v4630
          %v5031 = vsel %vm5015, -inf, %v4631
          %v5032 = vsel %vm5000, 2147483647, %v4632
          %v5033 = vsel %vm5001, 2147483647, %v4633
          %v5034 = vsel %vm5002, 2147483647, %v4634
          %v5035 = vsel %vm5003, 2147483647, %v4635
          %v5036 = vsel %vm5004, 2147483647, %v4636
          %v5037 = vsel %vm5005, 2147483647, %v4637
          %v5038 = vsel %vm5006, 2147483647, %v4638
          %v5039 = vsel %vm5007, 2147483647, %v4639
          %v5040 = vsel %vm5008, 2147483647, %v4640
          %v5041 = vsel %vm5009, 2147483647, %v4641
          %v5042 = vsel %vm5010, 2147483647, %v4642
          %v5043 = vsel %vm5011, 2147483647, %v4643
          %v5044 = vsel %vm5012, 2147483647, %v4644
          %v5045 = vsel %vm5013, 2147483647, %v4645
          %v5046 = vsel %vm5014, 2147483647, %v4646
          %v5047 = vsel %vm5015, 2147483647, %v4647
          %v5048 = vsel %vm4247, %v5016, -inf
          %5049 = vmax.xlane.f32.xlu0 %v5048
          %v5050 = vpop.xlane.xlu0 %5049
          %v5051 = vsel %vm4247, %v5017, -inf
          %5052 = vmax.xlane.f32.xlu0 %v5051
          %v5053 = vpop.xlane.xlu0 %5052
          %v5054 = vsel %vm4247, %v5018, -inf
          %5055 = vmax.xlane.f32.xlu0 %v5054
          %v5056 = vpop.xlane.xlu0 %5055
          %v5057 = vsel %vm4247, %v5019, -inf
          %5058 = vmax.xlane.f32.xlu0 %v5057
          %v5059 = vpop.xlane.xlu0 %5058
          %v5060 = vsel %vm4247, %v5020, -inf
          %5061 = vmax.xlane.f32.xlu0 %v5060
          %v5062 = vpop.xlane.xlu0 %5061
          %v5063 = vsel %vm4247, %v5021, -inf
          %5064 = vmax.xlane.f32.xlu0 %v5063
          %v5065 = vpop.xlane.xlu0 %5064
          %v5066 = vsel %vm4247, %v5022, -inf
          %5067 = vmax.xlane.f32.xlu0 %v5066
          %v5068 = vpop.xlane.xlu0 %5067
          %v5069 = vsel %vm4247, %v5023, -inf
          %5070 = vmax.xlane.f32.xlu0 %v5069
          %v5071 = vpop.xlane.xlu0 %5070
          %v5072 = vsel %vm4247, %v5024, -inf
          %5073 = vmax.xlane.f32.xlu0 %v5072
          %v5074 = vpop.xlane.xlu0 %5073
          %v5075 = vsel %vm4247, %v5025, -inf
          %5076 = vmax.xlane.f32.xlu0 %v5075
          %v5077 = vpop.xlane.xlu0 %5076
          %v5078 = vsel %vm4247, %v5026, -inf
          %5079 = vmax.xlane.f32.xlu0 %v5078
          %v5080 = vpop.xlane.xlu0 %5079
          %v5081 = vsel %vm4247, %v5027, -inf
          %5082 = vmax.xlane.f32.xlu0 %v5081
          %v5083 = vpop.xlane.xlu0 %5082
          %v5084 = vsel %vm4247, %v5028, -inf
          %5085 = vmax.xlane.f32.xlu0 %v5084
          %v5086 = vpop.xlane.xlu0 %5085
          %v5087 = vsel %vm4247, %v5029, -inf
          %5088 = vmax.xlane.f32.xlu0 %v5087
          %v5089 = vpop.xlane.xlu0 %5088
          %v5090 = vsel %vm4247, %v5030, -inf
          %5091 = vmax.xlane.f32.xlu0 %v5090
          %v5092 = vpop.xlane.xlu0 %5091
          %v5093 = vsel %vm4247, %v5031, -inf
          %5094 = vmax.xlane.f32.xlu0 %v5093
          %v5095 = vpop.xlane.xlu0 %5094
          %vm5096 = vcmp.eq.f32.partialorder %v5016, %v5050
          %vm5097 = vcmp.eq.f32.partialorder %v5017, %v5053
          %vm5098 = vcmp.eq.f32.partialorder %v5018, %v5056
          %vm5099 = vcmp.eq.f32.partialorder %v5019, %v5059
          %vm5100 = vcmp.eq.f32.partialorder %v5020, %v5062
          %vm5101 = vcmp.eq.f32.partialorder %v5021, %v5065
          %vm5102 = vcmp.eq.f32.partialorder %v5022, %v5068
          %vm5103 = vcmp.eq.f32.partialorder %v5023, %v5071
          %vm5104 = vcmp.eq.f32.partialorder %v5024, %v5074
          %vm5105 = vcmp.eq.f32.partialorder %v5025, %v5077
          %vm5106 = vcmp.eq.f32.partialorder %v5026, %v5080
          %vm5107 = vcmp.eq.f32.partialorder %v5027, %v5083
          %vm5108 = vcmp.eq.f32.partialorder %v5028, %v5086
          %vm5109 = vcmp.eq.f32.partialorder %v5029, %v5089
          %vm5110 = vcmp.eq.f32.partialorder %v5030, %v5092
          %vm5111 = vcmp.eq.f32.partialorder %v5031, %v5095
          %v5112 = vsel %vm5096, %v5032, 2147483647
          %v5113 = vsel %vm5097, %v5033, 2147483647
          %v5114 = vsel %vm5098, %v5034, 2147483647
          %v5115 = vsel %vm5099, %v5035, 2147483647
          %v5116 = vsel %vm5100, %v5036, 2147483647
          %v5117 = vsel %vm5101, %v5037, 2147483647
          %v5118 = vsel %vm5102, %v5038, 2147483647
          %v5119 = vsel %vm5103, %v5039, 2147483647
          %v5120 = vsel %vm5104, %v5040, 2147483647
          %v5121 = vsel %vm5105, %v5041, 2147483647
          %v5122 = vsel %vm5106, %v5042, 2147483647
          %v5123 = vsel %vm5107, %v5043, 2147483647
          %v5124 = vsel %vm5108, %v5044, 2147483647
          %v5125 = vsel %vm5109, %v5045, 2147483647
          %v5126 = vsel %vm5110, %v5046, 2147483647
          %v5127 = vsel %vm5111, %v5047, 2147483647
          %v5128 = vsel %vm4247, %v5112, 2147483647
          %v5129 = vand.u32 %v5128, 65535
          %v5130 = vshra.s32 %v5128, 16
          %v5131 = vcvt.s32.f32 %v5129
          %v5132 = vcvt.s32.f32 %v5130
          %5133 = vmin.xlane.f32.xlu0 %v5132
          %v5134 = vpop.xlane.xlu0 %5133
          %vm5135 = vcmp.eq.f32.partialorder %v5132, %v5134
          %v5136 = vsel %vm5135, %v5131, inf
          %5137 = vmin.xlane.f32.xlu0 %v5136
          %v5138 = vpop.xlane.xlu0 %5137
          %v5139 = vcvt.f32.s32 %v5138
          %v5140 = vcvt.f32.s32 %v5134
          %v5141 = vshll.u32 %v5140, 16
          %v5142 = vadd.s32 %v5141, %v5139
          %v5143 = vsel %vm4247, %v5113, 2147483647
          %v5144 = vand.u32 %v5143, 65535
          %v5145 = vshra.s32 %v5143, 16
          %v5146 = vcvt.s32.f32 %v5144
          %v5147 = vcvt.s32.f32 %v5145
          %5148 = vmin.xlane.f32.xlu0 %v5147
          %v5149 = vpop.xlane.xlu0 %5148
          %vm5150 = vcmp.eq.f32.partialorder %v5147, %v5149
          %v5151 = vsel %vm5150, %v5146, inf
          %5152 = vmin.xlane.f32.xlu0 %v5151
          %v5153 = vpop.xlane.xlu0 %5152
          %v5154 = vcvt.f32.s32 %v5153
          %v5155 = vcvt.f32.s32 %v5149
          %v5156 = vshll.u32 %v5155, 16
          %v5157 = vadd.s32 %v5156, %v5154
          %v5158 = vsel %vm4247, %v5114, 2147483647
          %v5159 = vand.u32 %v5158, 65535
          %v5160 = vshra.s32 %v5158, 16
          %v5161 = vcvt.s32.f32 %v5159
          %v5162 = vcvt.s32.f32 %v5160
          %5163 = vmin.xlane.f32.xlu0 %v5162
          %v5164 = vpop.xlane.xlu0 %5163
          %vm5165 = vcmp.eq.f32.partialorder %v5162, %v5164
          %v5166 = vsel %vm5165, %v5161, inf
          %5167 = vmin.xlane.f32.xlu0 %v5166
          %v5168 = vpop.xlane.xlu0 %5167
          %v5169 = vcvt.f32.s32 %v5168
          %v5170 = vcvt.f32.s32 %v5164
          %v5171 = vshll.u32 %v5170, 16
          %v5172 = vadd.s32 %v5171, %v5169
          %v5173 = vsel %vm4247, %v5115, 2147483647
          %v5174 = vand.u32 %v5173, 65535
          %v5175 = vshra.s32 %v5173, 16
          %v5176 = vcvt.s32.f32 %v5174
          %v5177 = vcvt.s32.f32 %v5175
          %5178 = vmin.xlane.f32.xlu0 %v5177
          %v5179 = vpop.xlane.xlu0 %5178
          %vm5180 = vcmp.eq.f32.partialorder %v5177, %v5179
          %v5181 = vsel %vm5180, %v5176, inf
          %5182 = vmin.xlane.f32.xlu0 %v5181
          %v5183 = vpop.xlane.xlu0 %5182
          %v5184 = vcvt.f32.s32 %v5183
          %v5185 = vcvt.f32.s32 %v5179
          %v5186 = vshll.u32 %v5185, 16
          %v5187 = vadd.s32 %v5186, %v5184
          %v5188 = vsel %vm4247, %v5116, 2147483647
          %v5189 = vand.u32 %v5188, 65535
          %v5190 = vshra.s32 %v5188, 16
          %v5191 = vcvt.s32.f32 %v5189
          %v5192 = vcvt.s32.f32 %v5190
          %5193 = vmin.xlane.f32.xlu0 %v5192
          %v5194 = vpop.xlane.xlu0 %5193
          %vm5195 = vcmp.eq.f32.partialorder %v5192, %v5194
          %v5196 = vsel %vm5195, %v5191, inf
          %5197 = vmin.xlane.f32.xlu0 %v5196
          %v5198 = vpop.xlane.xlu0 %5197
          %v5199 = vcvt.f32.s32 %v5198
          %v5200 = vcvt.f32.s32 %v5194
          %v5201 = vshll.u32 %v5200, 16
          %v5202 = vadd.s32 %v5201, %v5199
          %v5203 = vsel %vm4247, %v5117, 2147483647
          %v5204 = vand.u32 %v5203, 65535
          %v5205 = vshra.s32 %v5203, 16
          %v5206 = vcvt.s32.f32 %v5204
          %v5207 = vcvt.s32.f32 %v5205
          %5208 = vmin.xlane.f32.xlu0 %v5207
          %v5209 = vpop.xlane.xlu0 %5208
          %vm5210 = vcmp.eq.f32.partialorder %v5207, %v5209
          %v5211 = vsel %vm5210, %v5206, inf
          %5212 = vmin.xlane.f32.xlu0 %v5211
          %v5213 = vpop.xlane.xlu0 %5212
          %v5214 = vcvt.f32.s32 %v5213
          %v5215 = vcvt.f32.s32 %v5209
          %v5216 = vshll.u32 %v5215, 16
          %v5217 = vadd.s32 %v5216, %v5214
          %v5218 = vsel %vm4247, %v5118, 2147483647
          %v5219 = vand.u32 %v5218, 65535
          %v5220 = vshra.s32 %v5218, 16
          %v5221 = vcvt.s32.f32 %v5219
          %v5222 = vcvt.s32.f32 %v5220
          %5223 = vmin.xlane.f32.xlu0 %v5222
          %v5224 = vpop.xlane.xlu0 %5223
          %vm5225 = vcmp.eq.f32.partialorder %v5222, %v5224
          %v5226 = vsel %vm5225, %v5221, inf
          %5227 = vmin.xlane.f32.xlu0 %v5226
          %v5228 = vpop.xlane.xlu0 %5227
          %v5229 = vcvt.f32.s32 %v5228
          %v5230 = vcvt.f32.s32 %v5224
          %v5231 = vshll.u32 %v5230, 16
          %v5232 = vadd.s32 %v5231, %v5229
          %v5233 = vsel %vm4247, %v5119, 2147483647
          %v5234 = vand.u32 %v5233, 65535
          %v5235 = vshra.s32 %v5233, 16
          %v5236 = vcvt.s32.f32 %v5234
          %v5237 = vcvt.s32.f32 %v5235
          %5238 = vmin.xlane.f32.xlu0 %v5237
          %v5239 = vpop.xlane.xlu0 %5238
          %vm5240 = vcmp.eq.f32.partialorder %v5237, %v5239
          %v5241 = vsel %vm5240, %v5236, inf
          %5242 = vmin.xlane.f32.xlu0 %v5241
          %v5243 = vpop.xlane.xlu0 %5242
          %v5244 = vcvt.f32.s32 %v5243
          %v5245 = vcvt.f32.s32 %v5239
          %v5246 = vshll.u32 %v5245, 16
          %v5247 = vadd.s32 %v5246, %v5244
          %v5248 = vsel %vm4247, %v5120, 2147483647
          %v5249 = vand.u32 %v5248, 65535
          %v5250 = vshra.s32 %v5248, 16
          %v5251 = vcvt.s32.f32 %v5249
          %v5252 = vcvt.s32.f32 %v5250
          %5253 = vmin.xlane.f32.xlu0 %v5252
          %v5254 = vpop.xlane.xlu0 %5253
          %vm5255 = vcmp.eq.f32.partialorder %v5252, %v5254
          %v5256 = vsel %vm5255, %v5251, inf
          %5257 = vmin.xlane.f32.xlu0 %v5256
          %v5258 = vpop.xlane.xlu0 %5257
          %v5259 = vcvt.f32.s32 %v5258
          %v5260 = vcvt.f32.s32 %v5254
          %v5261 = vshll.u32 %v5260, 16
          %v5262 = vadd.s32 %v5261, %v5259
          %v5263 = vsel %vm4247, %v5121, 2147483647
          %v5264 = vand.u32 %v5263, 65535
          %v5265 = vshra.s32 %v5263, 16
          %v5266 = vcvt.s32.f32 %v5264
          %v5267 = vcvt.s32.f32 %v5265
          %5268 = vmin.xlane.f32.xlu0 %v5267
          %v5269 = vpop.xlane.xlu0 %5268
          %vm5270 = vcmp.eq.f32.partialorder %v5267, %v5269
          %v5271 = vsel %vm5270, %v5266, inf
          %5272 = vmin.xlane.f32.xlu0 %v5271
          %v5273 = vpop.xlane.xlu0 %5272
          %v5274 = vcvt.f32.s32 %v5273
          %v5275 = vcvt.f32.s32 %v5269
          %v5276 = vshll.u32 %v5275, 16
          %v5277 = vadd.s32 %v5276, %v5274
          %v5278 = vsel %vm4247, %v5122, 2147483647
          %v5279 = vand.u32 %v5278, 65535
          %v5280 = vshra.s32 %v5278, 16
          %v5281 = vcvt.s32.f32 %v5279
          %v5282 = vcvt.s32.f32 %v5280
          %5283 = vmin.xlane.f32.xlu0 %v5282
          %v5284 = vpop.xlane.xlu0 %5283
          %vm5285 = vcmp.eq.f32.partialorder %v5282, %v5284
          %v5286 = vsel %vm5285, %v5281, inf
          %5287 = vmin.xlane.f32.xlu0 %v5286
          %v5288 = vpop.xlane.xlu0 %5287
          %v5289 = vcvt.f32.s32 %v5288
          %v5290 = vcvt.f32.s32 %v5284
          %v5291 = vshll.u32 %v5290, 16
          %v5292 = vadd.s32 %v5291, %v5289
          %v5293 = vsel %vm4247, %v5123, 2147483647
          %v5294 = vand.u32 %v5293, 65535
          %v5295 = vshra.s32 %v5293, 16
          %v5296 = vcvt.s32.f32 %v5294
          %v5297 = vcvt.s32.f32 %v5295
          %5298 = vmin.xlane.f32.xlu0 %v5297
          %v5299 = vpop.xlane.xlu0 %5298
          %vm5300 = vcmp.eq.f32.partialorder %v5297, %v5299
          %v5301 = vsel %vm5300, %v5296, inf
          %5302 = vmin.xlane.f32.xlu0 %v5301
          %v5303 = vpop.xlane.xlu0 %5302
          %v5304 = vcvt.f32.s32 %v5303
          %v5305 = vcvt.f32.s32 %v5299
          %v5306 = vshll.u32 %v5305, 16
          %v5307 = vadd.s32 %v5306, %v5304
          %v5308 = vsel %vm4247, %v5124, 2147483647
          %v5309 = vand.u32 %v5308, 65535
          %v5310 = vshra.s32 %v5308, 16
          %v5311 = vcvt.s32.f32 %v5309
          %v5312 = vcvt.s32.f32 %v5310
          %5313 = vmin.xlane.f32.xlu0 %v5312
          %v5314 = vpop.xlane.xlu0 %5313
          %vm5315 = vcmp.eq.f32.partialorder %v5312, %v5314
          %v5316 = vsel %vm5315, %v5311, inf
          %5317 = vmin.xlane.f32.xlu0 %v5316
          %v5318 = vpop.xlane.xlu0 %5317
          %v5319 = vcvt.f32.s32 %v5318
          %v5320 = vcvt.f32.s32 %v5314
          %v5321 = vshll.u32 %v5320, 16
          %v5322 = vadd.s32 %v5321, %v5319
          %v5323 = vsel %vm4247, %v5125, 2147483647
          %v5324 = vand.u32 %v5323, 65535
          %v5325 = vshra.s32 %v5323, 16
          %v5326 = vcvt.s32.f32 %v5324
          %v5327 = vcvt.s32.f32 %v5325
          %5328 = vmin.xlane.f32.xlu0 %v5327
          %v5329 = vpop.xlane.xlu0 %5328
          %vm5330 = vcmp.eq.f32.partialorder %v5327, %v5329
          %v5331 = vsel %vm5330, %v5326, inf
          %5332 = vmin.xlane.f32.xlu0 %v5331
          %v5333 = vpop.xlane.xlu0 %5332
          %v5334 = vcvt.f32.s32 %v5333
          %v5335 = vcvt.f32.s32 %v5329
          %v5336 = vshll.u32 %v5335, 16
          %v5337 = vadd.s32 %v5336, %v5334
          %v5338 = vsel %vm4247, %v5126, 2147483647
          %v5339 = vand.u32 %v5338, 65535
          %v5340 = vshra.s32 %v5338, 16
          %v5341 = vcvt.s32.f32 %v5339
          %v5342 = vcvt.s32.f32 %v5340
          %5343 = vmin.xlane.f32.xlu0 %v5342
          %v5344 = vpop.xlane.xlu0 %5343
          %vm5345 = vcmp.eq.f32.partialorder %v5342, %v5344
          %v5346 = vsel %vm5345, %v5341, inf
          %5347 = vmin.xlane.f32.xlu0 %v5346
          %v5348 = vpop.xlane.xlu0 %5347
          %v5349 = vcvt.f32.s32 %v5348
          %v5350 = vcvt.f32.s32 %v5344
          %v5351 = vshll.u32 %v5350, 16
          %v5352 = vadd.s32 %v5351, %v5349
          %v5353 = vsel %vm4247, %v5127, 2147483647
          %v5354 = vand.u32 %v5353, 65535
          %v5355 = vshra.s32 %v5353, 16
          %v5356 = vcvt.s32.f32 %v5354
          %v5357 = vcvt.s32.f32 %v5355
          %5358 = vmin.xlane.f32.xlu0 %v5357
          %v5359 = vpop.xlane.xlu0 %5358
          %vm5360 = vcmp.eq.f32.partialorder %v5357, %v5359
          %v5361 = vsel %vm5360, %v5356, inf
          %5362 = vmin.xlane.f32.xlu0 %v5361
          %v5363 = vpop.xlane.xlu0 %5362
          %v5364 = vcvt.f32.s32 %v5363
          %v5365 = vcvt.f32.s32 %v5359
          %v5366 = vshll.u32 %v5365, 16
          %v5367 = vadd.s32 %v5366, %v5364
          %v5368 = vsel %vm2191, %v5050, %v4968
          %v5369 = vsel %vm2191, %v5053, %v4969
          %v5370 = vsel %vm2191, %v5056, %v4970
          %v5371 = vsel %vm2191, %v5059, %v4971
          %v5372 = vsel %vm2191, %v5062, %v4972
          %v5373 = vsel %vm2191, %v5065, %v4973
          %v5374 = vsel %vm2191, %v5068, %v4974
          %v5375 = vsel %vm2191, %v5071, %v4975
          %v5376 = vsel %vm2191, %v5074, %v4976
          %v5377 = vsel %vm2191, %v5077, %v4977
          %v5378 = vsel %vm2191, %v5080, %v4978
          %v5379 = vsel %vm2191, %v5083, %v4979
          %v5380 = vsel %vm2191, %v5086, %v4980
          %v5381 = vsel %vm2191, %v5089, %v4981
          %v5382 = vsel %vm2191, %v5092, %v4982
          %v5383 = vsel %vm2191, %v5095, %v4983
          %v5384 = vsel %vm2191, %v5142, %v4984
          %v5385 = vsel %vm2191, %v5157, %v4985
          %v5386 = vsel %vm2191, %v5172, %v4986
          %v5387 = vsel %vm2191, %v5187, %v4987
          %v5388 = vsel %vm2191, %v5202, %v4988
          %v5389 = vsel %vm2191, %v5217, %v4989
          %v5390 = vsel %vm2191, %v5232, %v4990
          %v5391 = vsel %vm2191, %v5247, %v4991
          %v5392 = vsel %vm2191, %v5262, %v4992
          %v5393 = vsel %vm2191, %v5277, %v4993
          %v5394 = vsel %vm2191, %v5292, %v4994
          %v5395 = vsel %vm2191, %v5307, %v4995
          %v5396 = vsel %vm2191, %v5322, %v4996
          %v5397 = vsel %vm2191, %v5337, %v4997
          %v5398 = vsel %vm2191, %v5352, %v4998
          %v5399 = vsel %vm2191, %v5367, %v4999
          %vm5400 = vcmp.eq.s32.totalorder %v5032, %v5142
          %vm5401 = vcmp.eq.s32.totalorder %v5033, %v5157
          %vm5402 = vcmp.eq.s32.totalorder %v5034, %v5172
          %vm5403 = vcmp.eq.s32.totalorder %v5035, %v5187
          %vm5404 = vcmp.eq.s32.totalorder %v5036, %v5202
          %vm5405 = vcmp.eq.s32.totalorder %v5037, %v5217
          %vm5406 = vcmp.eq.s32.totalorder %v5038, %v5232
          %vm5407 = vcmp.eq.s32.totalorder %v5039, %v5247
          %vm5408 = vcmp.eq.s32.totalorder %v5040, %v5262
          %vm5409 = vcmp.eq.s32.totalorder %v5041, %v5277
          %vm5410 = vcmp.eq.s32.totalorder %v5042, %v5292
          %vm5411 = vcmp.eq.s32.totalorder %v5043, %v5307
          %vm5412 = vcmp.eq.s32.totalorder %v5044, %v5322
          %vm5413 = vcmp.eq.s32.totalorder %v5045, %v5337
          %vm5414 = vcmp.eq.s32.totalorder %v5046, %v5352
          %vm5415 = vcmp.eq.s32.totalorder %v5047, %v5367
          %v5416 = vsel %vm5400, -inf, %v5016
          %v5417 = vsel %vm5401, -inf, %v5017
          %v5418 = vsel %vm5402, -inf, %v5018
          %v5419 = vsel %vm5403, -inf, %v5019
          %v5420 = vsel %vm5404, -inf, %v5020
          %v5421 = vsel %vm5405, -inf, %v5021
          %v5422 = vsel %vm5406, -inf, %v5022
          %v5423 = vsel %vm5407, -inf, %v5023
          %v5424 = vsel %vm5408, -inf, %v5024
          %v5425 = vsel %vm5409, -inf, %v5025
          %v5426 = vsel %vm5410, -inf, %v5026
          %v5427 = vsel %vm5411, -inf, %v5027
          %v5428 = vsel %vm5412, -inf, %v5028
          %v5429 = vsel %vm5413, -inf, %v5029
          %v5430 = vsel %vm5414, -inf, %v5030
          %v5431 = vsel %vm5415, -inf, %v5031
          %v5432 = vsel %vm5400, 2147483647, %v5032
          %v5433 = vsel %vm5401, 2147483647, %v5033
          %v5434 = vsel %vm5402, 2147483647, %v5034
          %v5435 = vsel %vm5403, 2147483647, %v5035
          %v5436 = vsel %vm5404, 2147483647, %v5036
          %v5437 = vsel %vm5405, 2147483647, %v5037
          %v5438 = vsel %vm5406, 2147483647, %v5038
          %v5439 = vsel %vm5407, 2147483647, %v5039
          %v5440 = vsel %vm5408, 2147483647, %v5040
          %v5441 = vsel %vm5409, 2147483647, %v5041
          %v5442 = vsel %vm5410, 2147483647, %v5042
          %v5443 = vsel %vm5411, 2147483647, %v5043
          %v5444 = vsel %vm5412, 2147483647, %v5044
          %v5445 = vsel %vm5413, 2147483647, %v5045
          %v5446 = vsel %vm5414, 2147483647, %v5046
          %v5447 = vsel %vm5415, 2147483647, %v5047
          %v5448 = vsel %vm4247, %v5416, -inf
          %5449 = vmax.xlane.f32.xlu0 %v5448
          %v5450 = vpop.xlane.xlu0 %5449
          %v5451 = vsel %vm4247, %v5417, -inf
          %5452 = vmax.xlane.f32.xlu0 %v5451
          %v5453 = vpop.xlane.xlu0 %5452
          %v5454 = vsel %vm4247, %v5418, -inf
          %5455 = vmax.xlane.f32.xlu0 %v5454
          %v5456 = vpop.xlane.xlu0 %5455
          %v5457 = vsel %vm4247, %v5419, -inf
          %5458 = vmax.xlane.f32.xlu0 %v5457
          %v5459 = vpop.xlane.xlu0 %5458
          %v5460 = vsel %vm4247, %v5420, -inf
          %5461 = vmax.xlane.f32.xlu0 %v5460
          %v5462 = vpop.xlane.xlu0 %5461
          %v5463 = vsel %vm4247, %v5421, -inf
          %5464 = vmax.xlane.f32.xlu0 %v5463
          %v5465 = vpop.xlane.xlu0 %5464
          %v5466 = vsel %vm4247, %v5422, -inf
          %5467 = vmax.xlane.f32.xlu0 %v5466
          %v5468 = vpop.xlane.xlu0 %5467
          %v5469 = vsel %vm4247, %v5423, -inf
          %5470 = vmax.xlane.f32.xlu0 %v5469
          %v5471 = vpop.xlane.xlu0 %5470
          %v5472 = vsel %vm4247, %v5424, -inf
          %5473 = vmax.xlane.f32.xlu0 %v5472
          %v5474 = vpop.xlane.xlu0 %5473
          %v5475 = vsel %vm4247, %v5425, -inf
          %5476 = vmax.xlane.f32.xlu0 %v5475
          %v5477 = vpop.xlane.xlu0 %5476
          %v5478 = vsel %vm4247, %v5426, -inf
          %5479 = vmax.xlane.f32.xlu0 %v5478
          %v5480 = vpop.xlane.xlu0 %5479
          %v5481 = vsel %vm4247, %v5427, -inf
          %5482 = vmax.xlane.f32.xlu0 %v5481
          %v5483 = vpop.xlane.xlu0 %5482
          %v5484 = vsel %vm4247, %v5428, -inf
          %5485 = vmax.xlane.f32.xlu0 %v5484
          %v5486 = vpop.xlane.xlu0 %5485
          %v5487 = vsel %vm4247, %v5429, -inf
          %5488 = vmax.xlane.f32.xlu0 %v5487
          %v5489 = vpop.xlane.xlu0 %5488
          %v5490 = vsel %vm4247, %v5430, -inf
          %5491 = vmax.xlane.f32.xlu0 %v5490
          %v5492 = vpop.xlane.xlu0 %5491
          %v5493 = vsel %vm4247, %v5431, -inf
          %5494 = vmax.xlane.f32.xlu0 %v5493
          %v5495 = vpop.xlane.xlu0 %5494
          %vm5496 = vcmp.eq.f32.partialorder %v5416, %v5450
          %vm5497 = vcmp.eq.f32.partialorder %v5417, %v5453
          %vm5498 = vcmp.eq.f32.partialorder %v5418, %v5456
          %vm5499 = vcmp.eq.f32.partialorder %v5419, %v5459
          %vm5500 = vcmp.eq.f32.partialorder %v5420, %v5462
          %vm5501 = vcmp.eq.f32.partialorder %v5421, %v5465
          %vm5502 = vcmp.eq.f32.partialorder %v5422, %v5468
          %vm5503 = vcmp.eq.f32.partialorder %v5423, %v5471
          %vm5504 = vcmp.eq.f32.partialorder %v5424, %v5474
          %vm5505 = vcmp.eq.f32.partialorder %v5425, %v5477
          %vm5506 = vcmp.eq.f32.partialorder %v5426, %v5480
          %vm5507 = vcmp.eq.f32.partialorder %v5427, %v5483
          %vm5508 = vcmp.eq.f32.partialorder %v5428, %v5486
          %vm5509 = vcmp.eq.f32.partialorder %v5429, %v5489
          %vm5510 = vcmp.eq.f32.partialorder %v5430, %v5492
          %vm5511 = vcmp.eq.f32.partialorder %v5431, %v5495
          %v5512 = vsel %vm5496, %v5432, 2147483647
          %v5513 = vsel %vm5497, %v5433, 2147483647
          %v5514 = vsel %vm5498, %v5434, 2147483647
          %v5515 = vsel %vm5499, %v5435, 2147483647
          %v5516 = vsel %vm5500, %v5436, 2147483647
          %v5517 = vsel %vm5501, %v5437, 2147483647
          %v5518 = vsel %vm5502, %v5438, 2147483647
          %v5519 = vsel %vm5503, %v5439, 2147483647
          %v5520 = vsel %vm5504, %v5440, 2147483647
          %v5521 = vsel %vm5505, %v5441, 2147483647
          %v5522 = vsel %vm5506, %v5442, 2147483647
          %v5523 = vsel %vm5507, %v5443, 2147483647
          %v5524 = vsel %vm5508, %v5444, 2147483647
          %v5525 = vsel %vm5509, %v5445, 2147483647
          %v5526 = vsel %vm5510, %v5446, 2147483647
          %v5527 = vsel %vm5511, %v5447, 2147483647
          %v5528 = vsel %vm4247, %v5512, 2147483647
          %v5529 = vand.u32 %v5528, 65535
          %v5530 = vshra.s32 %v5528, 16
          %v5531 = vcvt.s32.f32 %v5529
          %v5532 = vcvt.s32.f32 %v5530
          %5533 = vmin.xlane.f32.xlu0 %v5532
          %v5534 = vpop.xlane.xlu0 %5533
          %vm5535 = vcmp.eq.f32.partialorder %v5532, %v5534
          %v5536 = vsel %vm5535, %v5531, inf
          %5537 = vmin.xlane.f32.xlu0 %v5536
          %v5538 = vpop.xlane.xlu0 %5537
          %v5539 = vcvt.f32.s32 %v5538
          %v5540 = vcvt.f32.s32 %v5534
          %v5541 = vshll.u32 %v5540, 16
          %v5542 = vadd.s32 %v5541, %v5539
          %v5543 = vsel %vm4247, %v5513, 2147483647
          %v5544 = vand.u32 %v5543, 65535
          %v5545 = vshra.s32 %v5543, 16
          %v5546 = vcvt.s32.f32 %v5544
          %v5547 = vcvt.s32.f32 %v5545
          %5548 = vmin.xlane.f32.xlu0 %v5547
          %v5549 = vpop.xlane.xlu0 %5548
          %vm5550 = vcmp.eq.f32.partialorder %v5547, %v5549
          %v5551 = vsel %vm5550, %v5546, inf
          %5552 = vmin.xlane.f32.xlu0 %v5551
          %v5553 = vpop.xlane.xlu0 %5552
          %v5554 = vcvt.f32.s32 %v5553
          %v5555 = vcvt.f32.s32 %v5549
          %v5556 = vshll.u32 %v5555, 16
          %v5557 = vadd.s32 %v5556, %v5554
          %v5558 = vsel %vm4247, %v5514, 2147483647
          %v5559 = vand.u32 %v5558, 65535
          %v5560 = vshra.s32 %v5558, 16
          %v5561 = vcvt.s32.f32 %v5559
          %v5562 = vcvt.s32.f32 %v5560
          %5563 = vmin.xlane.f32.xlu0 %v5562
          %v5564 = vpop.xlane.xlu0 %5563
          %vm5565 = vcmp.eq.f32.partialorder %v5562, %v5564
          %v5566 = vsel %vm5565, %v5561, inf
          %5567 = vmin.xlane.f32.xlu0 %v5566
          %v5568 = vpop.xlane.xlu0 %5567
          %v5569 = vcvt.f32.s32 %v5568
          %v5570 = vcvt.f32.s32 %v5564
          %v5571 = vshll.u32 %v5570, 16
          %v5572 = vadd.s32 %v5571, %v5569
          %v5573 = vsel %vm4247, %v5515, 2147483647
          %v5574 = vand.u32 %v5573, 65535
          %v5575 = vshra.s32 %v5573, 16
          %v5576 = vcvt.s32.f32 %v5574
          %v5577 = vcvt.s32.f32 %v5575
          %5578 = vmin.xlane.f32.xlu0 %v5577
          %v5579 = vpop.xlane.xlu0 %5578
          %vm5580 = vcmp.eq.f32.partialorder %v5577, %v5579
          %v5581 = vsel %vm5580, %v5576, inf
          %5582 = vmin.xlane.f32.xlu0 %v5581
          %v5583 = vpop.xlane.xlu0 %5582
          %v5584 = vcvt.f32.s32 %v5583
          %v5585 = vcvt.f32.s32 %v5579
          %v5586 = vshll.u32 %v5585, 16
          %v5587 = vadd.s32 %v5586, %v5584
          %v5588 = vsel %vm4247, %v5516, 2147483647
          %v5589 = vand.u32 %v5588, 65535
          %v5590 = vshra.s32 %v5588, 16
          %v5591 = vcvt.s32.f32 %v5589
          %v5592 = vcvt.s32.f32 %v5590
          %5593 = vmin.xlane.f32.xlu0 %v5592
          %v5594 = vpop.xlane.xlu0 %5593
          %vm5595 = vcmp.eq.f32.partialorder %v5592, %v5594
          %v5596 = vsel %vm5595, %v5591, inf
          %5597 = vmin.xlane.f32.xlu0 %v5596
          %v5598 = vpop.xlane.xlu0 %5597
          %v5599 = vcvt.f32.s32 %v5598
          %v5600 = vcvt.f32.s32 %v5594
          %v5601 = vshll.u32 %v5600, 16
          %v5602 = vadd.s32 %v5601, %v5599
          %v5603 = vsel %vm4247, %v5517, 2147483647
          %v5604 = vand.u32 %v5603, 65535
          %v5605 = vshra.s32 %v5603, 16
          %v5606 = vcvt.s32.f32 %v5604
          %v5607 = vcvt.s32.f32 %v5605
          %5608 = vmin.xlane.f32.xlu0 %v5607
          %v5609 = vpop.xlane.xlu0 %5608
          %vm5610 = vcmp.eq.f32.partialorder %v5607, %v5609
          %v5611 = vsel %vm5610, %v5606, inf
          %5612 = vmin.xlane.f32.xlu0 %v5611
          %v5613 = vpop.xlane.xlu0 %5612
          %v5614 = vcvt.f32.s32 %v5613
          %v5615 = vcvt.f32.s32 %v5609
          %v5616 = vshll.u32 %v5615, 16
          %v5617 = vadd.s32 %v5616, %v5614
          %v5618 = vsel %vm4247, %v5518, 2147483647
          %v5619 = vand.u32 %v5618, 65535
          %v5620 = vshra.s32 %v5618, 16
          %v5621 = vcvt.s32.f32 %v5619
          %v5622 = vcvt.s32.f32 %v5620
          %5623 = vmin.xlane.f32.xlu0 %v5622
          %v5624 = vpop.xlane.xlu0 %5623
          %vm5625 = vcmp.eq.f32.partialorder %v5622, %v5624
          %v5626 = vsel %vm5625, %v5621, inf
          %5627 = vmin.xlane.f32.xlu0 %v5626
          %v5628 = vpop.xlane.xlu0 %5627
          %v5629 = vcvt.f32.s32 %v5628
          %v5630 = vcvt.f32.s32 %v5624
          %v5631 = vshll.u32 %v5630, 16
          %v5632 = vadd.s32 %v5631, %v5629
          %v5633 = vsel %vm4247, %v5519, 2147483647
          %v5634 = vand.u32 %v5633, 65535
          %v5635 = vshra.s32 %v5633, 16
          %v5636 = vcvt.s32.f32 %v5634
          %v5637 = vcvt.s32.f32 %v5635
          %5638 = vmin.xlane.f32.xlu0 %v5637
          %v5639 = vpop.xlane.xlu0 %5638
          %vm5640 = vcmp.eq.f32.partialorder %v5637, %v5639
          %v5641 = vsel %vm5640, %v5636, inf
          %5642 = vmin.xlane.f32.xlu0 %v5641
          %v5643 = vpop.xlane.xlu0 %5642
          %v5644 = vcvt.f32.s32 %v5643
          %v5645 = vcvt.f32.s32 %v5639
          %v5646 = vshll.u32 %v5645, 16
          %v5647 = vadd.s32 %v5646, %v5644
          %v5648 = vsel %vm4247, %v5520, 2147483647
          %v5649 = vand.u32 %v5648, 65535
          %v5650 = vshra.s32 %v5648, 16
          %v5651 = vcvt.s32.f32 %v5649
          %v5652 = vcvt.s32.f32 %v5650
          %5653 = vmin.xlane.f32.xlu0 %v5652
          %v5654 = vpop.xlane.xlu0 %5653
          %vm5655 = vcmp.eq.f32.partialorder %v5652, %v5654
          %v5656 = vsel %vm5655, %v5651, inf
          %5657 = vmin.xlane.f32.xlu0 %v5656
          %v5658 = vpop.xlane.xlu0 %5657
          %v5659 = vcvt.f32.s32 %v5658
          %v5660 = vcvt.f32.s32 %v5654
          %v5661 = vshll.u32 %v5660, 16
          %v5662 = vadd.s32 %v5661, %v5659
          %v5663 = vsel %vm4247, %v5521, 2147483647
          %v5664 = vand.u32 %v5663, 65535
          %v5665 = vshra.s32 %v5663, 16
          %v5666 = vcvt.s32.f32 %v5664
          %v5667 = vcvt.s32.f32 %v5665
          %5668 = vmin.xlane.f32.xlu0 %v5667
          %v5669 = vpop.xlane.xlu0 %5668
          %vm5670 = vcmp.eq.f32.partialorder %v5667, %v5669
          %v5671 = vsel %vm5670, %v5666, inf
          %5672 = vmin.xlane.f32.xlu0 %v5671
          %v5673 = vpop.xlane.xlu0 %5672
          %v5674 = vcvt.f32.s32 %v5673
          %v5675 = vcvt.f32.s32 %v5669
          %v5676 = vshll.u32 %v5675, 16
          %v5677 = vadd.s32 %v5676, %v5674
          %v5678 = vsel %vm4247, %v5522, 2147483647
          %v5679 = vand.u32 %v5678, 65535
          %v5680 = vshra.s32 %v5678, 16
          %v5681 = vcvt.s32.f32 %v5679
          %v5682 = vcvt.s32.f32 %v5680
          %5683 = vmin.xlane.f32.xlu0 %v5682
          %v5684 = vpop.xlane.xlu0 %5683
          %vm5685 = vcmp.eq.f32.partialorder %v5682, %v5684
          %v5686 = vsel %vm5685, %v5681, inf
          %5687 = vmin.xlane.f32.xlu0 %v5686
          %v5688 = vpop.xlane.xlu0 %5687
          %v5689 = vcvt.f32.s32 %v5688
          %v5690 = vcvt.f32.s32 %v5684
          %v5691 = vshll.u32 %v5690, 16
          %v5692 = vadd.s32 %v5691, %v5689
          %v5693 = vsel %vm4247, %v5523, 2147483647
          %v5694 = vand.u32 %v5693, 65535
          %v5695 = vshra.s32 %v5693, 16
          %v5696 = vcvt.s32.f32 %v5694
          %v5697 = vcvt.s32.f32 %v5695
          %5698 = vmin.xlane.f32.xlu0 %v5697
          %v5699 = vpop.xlane.xlu0 %5698
          %vm5700 = vcmp.eq.f32.partialorder %v5697, %v5699
          %v5701 = vsel %vm5700, %v5696, inf
          %5702 = vmin.xlane.f32.xlu0 %v5701
          %v5703 = vpop.xlane.xlu0 %5702
          %v5704 = vcvt.f32.s32 %v5703
          %v5705 = vcvt.f32.s32 %v5699
          %v5706 = vshll.u32 %v5705, 16
          %v5707 = vadd.s32 %v5706, %v5704
          %v5708 = vsel %vm4247, %v5524, 2147483647
          %v5709 = vand.u32 %v5708, 65535
          %v5710 = vshra.s32 %v5708, 16
          %v5711 = vcvt.s32.f32 %v5709
          %v5712 = vcvt.s32.f32 %v5710
          %5713 = vmin.xlane.f32.xlu0 %v5712
          %v5714 = vpop.xlane.xlu0 %5713
          %vm5715 = vcmp.eq.f32.partialorder %v5712, %v5714
          %v5716 = vsel %vm5715, %v5711, inf
          %5717 = vmin.xlane.f32.xlu0 %v5716
          %v5718 = vpop.xlane.xlu0 %5717
          %v5719 = vcvt.f32.s32 %v5718
          %v5720 = vcvt.f32.s32 %v5714
          %v5721 = vshll.u32 %v5720, 16
          %v5722 = vadd.s32 %v5721, %v5719
          %v5723 = vsel %vm4247, %v5525, 2147483647
          %v5724 = vand.u32 %v5723, 65535
          %v5725 = vshra.s32 %v5723, 16
          %v5726 = vcvt.s32.f32 %v5724
          %v5727 = vcvt.s32.f32 %v5725
          %5728 = vmin.xlane.f32.xlu0 %v5727
          %v5729 = vpop.xlane.xlu0 %5728
          %vm5730 = vcmp.eq.f32.partialorder %v5727, %v5729
          %v5731 = vsel %vm5730, %v5726, inf
          %5732 = vmin.xlane.f32.xlu0 %v5731
          %v5733 = vpop.xlane.xlu0 %5732
          %v5734 = vcvt.f32.s32 %v5733
          %v5735 = vcvt.f32.s32 %v5729
          %v5736 = vshll.u32 %v5735, 16
          %v5737 = vadd.s32 %v5736, %v5734
          %v5738 = vsel %vm4247, %v5526, 2147483647
          %v5739 = vand.u32 %v5738, 65535
          %v5740 = vshra.s32 %v5738, 16
          %v5741 = vcvt.s32.f32 %v5739
          %v5742 = vcvt.s32.f32 %v5740
          %5743 = vmin.xlane.f32.xlu0 %v5742
          %v5744 = vpop.xlane.xlu0 %5743
          %vm5745 = vcmp.eq.f32.partialorder %v5742, %v5744
          %v5746 = vsel %vm5745, %v5741, inf
          %5747 = vmin.xlane.f32.xlu0 %v5746
          %v5748 = vpop.xlane.xlu0 %5747
          %v5749 = vcvt.f32.s32 %v5748
          %v5750 = vcvt.f32.s32 %v5744
          %v5751 = vshll.u32 %v5750, 16
          %v5752 = vadd.s32 %v5751, %v5749
          %v5753 = vsel %vm4247, %v5527, 2147483647
          %v5754 = vand.u32 %v5753, 65535
          %v5755 = vshra.s32 %v5753, 16
          %v5756 = vcvt.s32.f32 %v5754
          %v5757 = vcvt.s32.f32 %v5755
          %5758 = vmin.xlane.f32.xlu0 %v5757
          %v5759 = vpop.xlane.xlu0 %5758
          %vm5760 = vcmp.eq.f32.partialorder %v5757, %v5759
          %v5761 = vsel %vm5760, %v5756, inf
          %5762 = vmin.xlane.f32.xlu0 %v5761
          %v5763 = vpop.xlane.xlu0 %5762
          %v5764 = vcvt.f32.s32 %v5763
          %v5765 = vcvt.f32.s32 %v5759
          %v5766 = vshll.u32 %v5765, 16
          %v5767 = vadd.s32 %v5766, %v5764
          %v5768 = vsel %vm2560, %v5450, %v5368
          %v5769 = vsel %vm2560, %v5453, %v5369
          %v5770 = vsel %vm2560, %v5456, %v5370
          %v5771 = vsel %vm2560, %v5459, %v5371
          %v5772 = vsel %vm2560, %v5462, %v5372
          %v5773 = vsel %vm2560, %v5465, %v5373
          %v5774 = vsel %vm2560, %v5468, %v5374
          %v5775 = vsel %vm2560, %v5471, %v5375
          %v5776 = vsel %vm2560, %v5474, %v5376
          %v5777 = vsel %vm2560, %v5477, %v5377
          %v5778 = vsel %vm2560, %v5480, %v5378
          %v5779 = vsel %vm2560, %v5483, %v5379
          %v5780 = vsel %vm2560, %v5486, %v5380
          %v5781 = vsel %vm2560, %v5489, %v5381
          %v5782 = vsel %vm2560, %v5492, %v5382
          %v5783 = vsel %vm2560, %v5495, %v5383
          %v5784 = vsel %vm2560, %v5542, %v5384
          %v5785 = vsel %vm2560, %v5557, %v5385
          %v5786 = vsel %vm2560, %v5572, %v5386
          %v5787 = vsel %vm2560, %v5587, %v5387
          %v5788 = vsel %vm2560, %v5602, %v5388
          %v5789 = vsel %vm2560, %v5617, %v5389
          %v5790 = vsel %vm2560, %v5632, %v5390
          %v5791 = vsel %vm2560, %v5647, %v5391
          %v5792 = vsel %vm2560, %v5662, %v5392
          %v5793 = vsel %vm2560, %v5677, %v5393
          %v5794 = vsel %vm2560, %v5692, %v5394
          %v5795 = vsel %vm2560, %v5707, %v5395
          %v5796 = vsel %vm2560, %v5722, %v5396
          %v5797 = vsel %vm2560, %v5737, %v5397
          %v5798 = vsel %vm2560, %v5752, %v5398
          %v5799 = vsel %vm2560, %v5767, %v5399
          %vm5800 = vcmp.eq.s32.totalorder %v5432, %v5542
          %vm5801 = vcmp.eq.s32.totalorder %v5433, %v5557
          %vm5802 = vcmp.eq.s32.totalorder %v5434, %v5572
          %vm5803 = vcmp.eq.s32.totalorder %v5435, %v5587
          %vm5804 = vcmp.eq.s32.totalorder %v5436, %v5602
          %vm5805 = vcmp.eq.s32.totalorder %v5437, %v5617
          %vm5806 = vcmp.eq.s32.totalorder %v5438, %v5632
          %vm5807 = vcmp.eq.s32.totalorder %v5439, %v5647
          %vm5808 = vcmp.eq.s32.totalorder %v5440, %v5662
          %vm5809 = vcmp.eq.s32.totalorder %v5441, %v5677
          %vm5810 = vcmp.eq.s32.totalorder %v5442, %v5692
          %vm5811 = vcmp.eq.s32.totalorder %v5443, %v5707
          %vm5812 = vcmp.eq.s32.totalorder %v5444, %v5722
          %vm5813 = vcmp.eq.s32.totalorder %v5445, %v5737
          %vm5814 = vcmp.eq.s32.totalorder %v5446, %v5752
          %vm5815 = vcmp.eq.s32.totalorder %v5447, %v5767
          %v5816 = vsel %vm5800, -inf, %v5416
          %v5817 = vsel %vm5801, -inf, %v5417
          %v5818 = vsel %vm5802, -inf, %v5418
          %v5819 = vsel %vm5803, -inf, %v5419
          %v5820 = vsel %vm5804, -inf, %v5420
          %v5821 = vsel %vm5805, -inf, %v5421
          %v5822 = vsel %vm5806, -inf, %v5422
          %v5823 = vsel %vm5807, -inf, %v5423
          %v5824 = vsel %vm5808, -inf, %v5424
          %v5825 = vsel %vm5809, -inf, %v5425
          %v5826 = vsel %vm5810, -inf, %v5426
          %v5827 = vsel %vm5811, -inf, %v5427
          %v5828 = vsel %vm5812, -inf, %v5428
          %v5829 = vsel %vm5813, -inf, %v5429
          %v5830 = vsel %vm5814, -inf, %v5430
          %v5831 = vsel %vm5815, -inf, %v5431
          %v5832 = vsel %vm5800, 2147483647, %v5432
          %v5833 = vsel %vm5801, 2147483647, %v5433
          %v5834 = vsel %vm5802, 2147483647, %v5434
          %v5835 = vsel %vm5803, 2147483647, %v5435
          %v5836 = vsel %vm5804, 2147483647, %v5436
          %v5837 = vsel %vm5805, 2147483647, %v5437
          %v5838 = vsel %vm5806, 2147483647, %v5438
          %v5839 = vsel %vm5807, 2147483647, %v5439
          %v5840 = vsel %vm5808, 2147483647, %v5440
          %v5841 = vsel %vm5809, 2147483647, %v5441
          %v5842 = vsel %vm5810, 2147483647, %v5442
          %v5843 = vsel %vm5811, 2147483647, %v5443
          %v5844 = vsel %vm5812, 2147483647, %v5444
          %v5845 = vsel %vm5813, 2147483647, %v5445
          %v5846 = vsel %vm5814, 2147483647, %v5446
          %v5847 = vsel %vm5815, 2147483647, %v5447
          %v5848 = vsel %vm4247, %v5816, -inf
          %5849 = vmax.xlane.f32.xlu0 %v5848
          %v5850 = vpop.xlane.xlu0 %5849
          %v5851 = vsel %vm4247, %v5817, -inf
          %5852 = vmax.xlane.f32.xlu0 %v5851
          %v5853 = vpop.xlane.xlu0 %5852
          %v5854 = vsel %vm4247, %v5818, -inf
          %5855 = vmax.xlane.f32.xlu0 %v5854
          %v5856 = vpop.xlane.xlu0 %5855
          %v5857 = vsel %vm4247, %v5819, -inf
          %5858 = vmax.xlane.f32.xlu0 %v5857
          %v5859 = vpop.xlane.xlu0 %5858
          %v5860 = vsel %vm4247, %v5820, -inf
          %5861 = vmax.xlane.f32.xlu0 %v5860
          %v5862 = vpop.xlane.xlu0 %5861
          %v5863 = vsel %vm4247, %v5821, -inf
          %5864 = vmax.xlane.f32.xlu0 %v5863
          %v5865 = vpop.xlane.xlu0 %5864
          %v5866 = vsel %vm4247, %v5822, -inf
          %5867 = vmax.xlane.f32.xlu0 %v5866
          %v5868 = vpop.xlane.xlu0 %5867
          %v5869 = vsel %vm4247, %v5823, -inf
          %5870 = vmax.xlane.f32.xlu0 %v5869
          %v5871 = vpop.xlane.xlu0 %5870
          %v5872 = vsel %vm4247, %v5824, -inf
          %5873 = vmax.xlane.f32.xlu0 %v5872
          %v5874 = vpop.xlane.xlu0 %5873
          %v5875 = vsel %vm4247, %v5825, -inf
          %5876 = vmax.xlane.f32.xlu0 %v5875
          %v5877 = vpop.xlane.xlu0 %5876
          %v5878 = vsel %vm4247, %v5826, -inf
          %5879 = vmax.xlane.f32.xlu0 %v5878
          %v5880 = vpop.xlane.xlu0 %5879
          %v5881 = vsel %vm4247, %v5827, -inf
          %5882 = vmax.xlane.f32.xlu0 %v5881
          %v5883 = vpop.xlane.xlu0 %5882
          %v5884 = vsel %vm4247, %v5828, -inf
          %5885 = vmax.xlane.f32.xlu0 %v5884
          %v5886 = vpop.xlane.xlu0 %5885
          %v5887 = vsel %vm4247, %v5829, -inf
          %5888 = vmax.xlane.f32.xlu0 %v5887
          %v5889 = vpop.xlane.xlu0 %5888
          %v5890 = vsel %vm4247, %v5830, -inf
          %5891 = vmax.xlane.f32.xlu0 %v5890
          %v5892 = vpop.xlane.xlu0 %5891
          %v5893 = vsel %vm4247, %v5831, -inf
          %5894 = vmax.xlane.f32.xlu0 %v5893
          %v5895 = vpop.xlane.xlu0 %5894
          %vm5896 = vcmp.eq.f32.partialorder %v5816, %v5850
          %vm5897 = vcmp.eq.f32.partialorder %v5817, %v5853
          %vm5898 = vcmp.eq.f32.partialorder %v5818, %v5856
          %vm5899 = vcmp.eq.f32.partialorder %v5819, %v5859
          %vm5900 = vcmp.eq.f32.partialorder %v5820, %v5862
          %vm5901 = vcmp.eq.f32.partialorder %v5821, %v5865
          %vm5902 = vcmp.eq.f32.partialorder %v5822, %v5868
          %vm5903 = vcmp.eq.f32.partialorder %v5823, %v5871
          %vm5904 = vcmp.eq.f32.partialorder %v5824, %v5874
          %vm5905 = vcmp.eq.f32.partialorder %v5825, %v5877
          %vm5906 = vcmp.eq.f32.partialorder %v5826, %v5880
          %vm5907 = vcmp.eq.f32.partialorder %v5827, %v5883
          %vm5908 = vcmp.eq.f32.partialorder %v5828, %v5886
          %vm5909 = vcmp.eq.f32.partialorder %v5829, %v5889
          %vm5910 = vcmp.eq.f32.partialorder %v5830, %v5892
          %vm5911 = vcmp.eq.f32.partialorder %v5831, %v5895
          %v5912 = vsel %vm5896, %v5832, 2147483647
          %v5913 = vsel %vm5897, %v5833, 2147483647
          %v5914 = vsel %vm5898, %v5834, 2147483647
          %v5915 = vsel %vm5899, %v5835, 2147483647
          %v5916 = vsel %vm5900, %v5836, 2147483647
          %v5917 = vsel %vm5901, %v5837, 2147483647
          %v5918 = vsel %vm5902, %v5838, 2147483647
          %v5919 = vsel %vm5903, %v5839, 2147483647
          %v5920 = vsel %vm5904, %v5840, 2147483647
          %v5921 = vsel %vm5905, %v5841, 2147483647
          %v5922 = vsel %vm5906, %v5842, 2147483647
          %v5923 = vsel %vm5907, %v5843, 2147483647
          %v5924 = vsel %vm5908, %v5844, 2147483647
          %v5925 = vsel %vm5909, %v5845, 2147483647
          %v5926 = vsel %vm5910, %v5846, 2147483647
          %v5927 = vsel %vm5911, %v5847, 2147483647
          %v5928 = vsel %vm4247, %v5912, 2147483647
          %v5929 = vand.u32 %v5928, 65535
          %v5930 = vshra.s32 %v5928, 16
          %v5931 = vcvt.s32.f32 %v5929
          %v5932 = vcvt.s32.f32 %v5930
          %5933 = vmin.xlane.f32.xlu0 %v5932
          %v5934 = vpop.xlane.xlu0 %5933
          %vm5935 = vcmp.eq.f32.partialorder %v5932, %v5934
          %v5936 = vsel %vm5935, %v5931, inf
          %5937 = vmin.xlane.f32.xlu0 %v5936
          %v5938 = vpop.xlane.xlu0 %5937
          %v5939 = vcvt.f32.s32 %v5938
          %v5940 = vcvt.f32.s32 %v5934
          %v5941 = vshll.u32 %v5940, 16
          %v5942 = vadd.s32 %v5941, %v5939
          %v5943 = vsel %vm4247, %v5913, 2147483647
          %v5944 = vand.u32 %v5943, 65535
          %v5945 = vshra.s32 %v5943, 16
          %v5946 = vcvt.s32.f32 %v5944
          %v5947 = vcvt.s32.f32 %v5945
          %5948 = vmin.xlane.f32.xlu0 %v5947
          %v5949 = vpop.xlane.xlu0 %5948
          %vm5950 = vcmp.eq.f32.partialorder %v5947, %v5949
          %v5951 = vsel %vm5950, %v5946, inf
          %5952 = vmin.xlane.f32.xlu0 %v5951
          %v5953 = vpop.xlane.xlu0 %5952
          %v5954 = vcvt.f32.s32 %v5953
          %v5955 = vcvt.f32.s32 %v5949
          %v5956 = vshll.u32 %v5955, 16
          %v5957 = vadd.s32 %v5956, %v5954
          %v5958 = vsel %vm4247, %v5914, 2147483647
          %v5959 = vand.u32 %v5958, 65535
          %v5960 = vshra.s32 %v5958, 16
          %v5961 = vcvt.s32.f32 %v5959
          %v5962 = vcvt.s32.f32 %v5960
          %5963 = vmin.xlane.f32.xlu0 %v5962
          %v5964 = vpop.xlane.xlu0 %5963
          %vm5965 = vcmp.eq.f32.partialorder %v5962, %v5964
          %v5966 = vsel %vm5965, %v5961, inf
          %5967 = vmin.xlane.f32.xlu0 %v5966
          %v5968 = vpop.xlane.xlu0 %5967
          %v5969 = vcvt.f32.s32 %v5968
          %v5970 = vcvt.f32.s32 %v5964
          %v5971 = vshll.u32 %v5970, 16
          %v5972 = vadd.s32 %v5971, %v5969
          %v5973 = vsel %vm4247, %v5915, 2147483647
          %v5974 = vand.u32 %v5973, 65535
          %v5975 = vshra.s32 %v5973, 16
          %v5976 = vcvt.s32.f32 %v5974
          %v5977 = vcvt.s32.f32 %v5975
          %5978 = vmin.xlane.f32.xlu0 %v5977
          %v5979 = vpop.xlane.xlu0 %5978
          %vm5980 = vcmp.eq.f32.partialorder %v5977, %v5979
          %v5981 = vsel %vm5980, %v5976, inf
          %5982 = vmin.xlane.f32.xlu0 %v5981
          %v5983 = vpop.xlane.xlu0 %5982
          %v5984 = vcvt.f32.s32 %v5983
          %v5985 = vcvt.f32.s32 %v5979
          %v5986 = vshll.u32 %v5985, 16
          %v5987 = vadd.s32 %v5986, %v5984
          %v5988 = vsel %vm4247, %v5916, 2147483647
          %v5989 = vand.u32 %v5988, 65535
          %v5990 = vshra.s32 %v5988, 16
          %v5991 = vcvt.s32.f32 %v5989
          %v5992 = vcvt.s32.f32 %v5990
          %5993 = vmin.xlane.f32.xlu0 %v5992
          %v5994 = vpop.xlane.xlu0 %5993
          %vm5995 = vcmp.eq.f32.partialorder %v5992, %v5994
          %v5996 = vsel %vm5995, %v5991, inf
          %5997 = vmin.xlane.f32.xlu0 %v5996
          %v5998 = vpop.xlane.xlu0 %5997
          %v5999 = vcvt.f32.s32 %v5998
          %v6000 = vcvt.f32.s32 %v5994
          %v6001 = vshll.u32 %v6000, 16
          %v6002 = vadd.s32 %v6001, %v5999
          %v6003 = vsel %vm4247, %v5917, 2147483647
          %v6004 = vand.u32 %v6003, 65535
          %v6005 = vshra.s32 %v6003, 16
          %v6006 = vcvt.s32.f32 %v6004
          %v6007 = vcvt.s32.f32 %v6005
          %6008 = vmin.xlane.f32.xlu0 %v6007
          %v6009 = vpop.xlane.xlu0 %6008
          %vm6010 = vcmp.eq.f32.partialorder %v6007, %v6009
          %v6011 = vsel %vm6010, %v6006, inf
          %6012 = vmin.xlane.f32.xlu0 %v6011
          %v6013 = vpop.xlane.xlu0 %6012
          %v6014 = vcvt.f32.s32 %v6013
          %v6015 = vcvt.f32.s32 %v6009
          %v6016 = vshll.u32 %v6015, 16
          %v6017 = vadd.s32 %v6016, %v6014
          %v6018 = vsel %vm4247, %v5918, 2147483647
          %v6019 = vand.u32 %v6018, 65535
          %v6020 = vshra.s32 %v6018, 16
          %v6021 = vcvt.s32.f32 %v6019
          %v6022 = vcvt.s32.f32 %v6020
          %6023 = vmin.xlane.f32.xlu0 %v6022
          %v6024 = vpop.xlane.xlu0 %6023
          %vm6025 = vcmp.eq.f32.partialorder %v6022, %v6024
          %v6026 = vsel %vm6025, %v6021, inf
          %6027 = vmin.xlane.f32.xlu0 %v6026
          %v6028 = vpop.xlane.xlu0 %6027
          %v6029 = vcvt.f32.s32 %v6028
          %v6030 = vcvt.f32.s32 %v6024
          %v6031 = vshll.u32 %v6030, 16
          %v6032 = vadd.s32 %v6031, %v6029
          %v6033 = vsel %vm4247, %v5919, 2147483647
          %v6034 = vand.u32 %v6033, 65535
          %v6035 = vshra.s32 %v6033, 16
          %v6036 = vcvt.s32.f32 %v6034
          %v6037 = vcvt.s32.f32 %v6035
          %6038 = vmin.xlane.f32.xlu0 %v6037
          %v6039 = vpop.xlane.xlu0 %6038
          %vm6040 = vcmp.eq.f32.partialorder %v6037, %v6039
          %v6041 = vsel %vm6040, %v6036, inf
          %6042 = vmin.xlane.f32.xlu0 %v6041
          %v6043 = vpop.xlane.xlu0 %6042
          %v6044 = vcvt.f32.s32 %v6043
          %v6045 = vcvt.f32.s32 %v6039
          %v6046 = vshll.u32 %v6045, 16
          %v6047 = vadd.s32 %v6046, %v6044
          %v6048 = vsel %vm4247, %v5920, 2147483647
          %v6049 = vand.u32 %v6048, 65535
          %v6050 = vshra.s32 %v6048, 16
          %v6051 = vcvt.s32.f32 %v6049
          %v6052 = vcvt.s32.f32 %v6050
          %6053 = vmin.xlane.f32.xlu0 %v6052
          %v6054 = vpop.xlane.xlu0 %6053
          %vm6055 = vcmp.eq.f32.partialorder %v6052, %v6054
          %v6056 = vsel %vm6055, %v6051, inf
          %6057 = vmin.xlane.f32.xlu0 %v6056
          %v6058 = vpop.xlane.xlu0 %6057
          %v6059 = vcvt.f32.s32 %v6058
          %v6060 = vcvt.f32.s32 %v6054
          %v6061 = vshll.u32 %v6060, 16
          %v6062 = vadd.s32 %v6061, %v6059
          %v6063 = vsel %vm4247, %v5921, 2147483647
          %v6064 = vand.u32 %v6063, 65535
          %v6065 = vshra.s32 %v6063, 16
          %v6066 = vcvt.s32.f32 %v6064
          %v6067 = vcvt.s32.f32 %v6065
          %6068 = vmin.xlane.f32.xlu0 %v6067
          %v6069 = vpop.xlane.xlu0 %6068
          %vm6070 = vcmp.eq.f32.partialorder %v6067, %v6069
          %v6071 = vsel %vm6070, %v6066, inf
          %6072 = vmin.xlane.f32.xlu0 %v6071
          %v6073 = vpop.xlane.xlu0 %6072
          %v6074 = vcvt.f32.s32 %v6073
          %v6075 = vcvt.f32.s32 %v6069
          %v6076 = vshll.u32 %v6075, 16
          %v6077 = vadd.s32 %v6076, %v6074
          %v6078 = vsel %vm4247, %v5922, 2147483647
          %v6079 = vand.u32 %v6078, 65535
          %v6080 = vshra.s32 %v6078, 16
          %v6081 = vcvt.s32.f32 %v6079
          %v6082 = vcvt.s32.f32 %v6080
          %6083 = vmin.xlane.f32.xlu0 %v6082
          %v6084 = vpop.xlane.xlu0 %6083
          %vm6085 = vcmp.eq.f32.partialorder %v6082, %v6084
          %v6086 = vsel %vm6085, %v6081, inf
          %6087 = vmin.xlane.f32.xlu0 %v6086
          %v6088 = vpop.xlane.xlu0 %6087
          %v6089 = vcvt.f32.s32 %v6088
          %v6090 = vcvt.f32.s32 %v6084
          %v6091 = vshll.u32 %v6090, 16
          %v6092 = vadd.s32 %v6091, %v6089
          %v6093 = vsel %vm4247, %v5923, 2147483647
          %v6094 = vand.u32 %v6093, 65535
          %v6095 = vshra.s32 %v6093, 16
          %v6096 = vcvt.s32.f32 %v6094
          %v6097 = vcvt.s32.f32 %v6095
          %6098 = vmin.xlane.f32.xlu0 %v6097
          %v6099 = vpop.xlane.xlu0 %6098
          %vm6100 = vcmp.eq.f32.partialorder %v6097, %v6099
          %v6101 = vsel %vm6100, %v6096, inf
          %6102 = vmin.xlane.f32.xlu0 %v6101
          %v6103 = vpop.xlane.xlu0 %6102
          %v6104 = vcvt.f32.s32 %v6103
          %v6105 = vcvt.f32.s32 %v6099
          %v6106 = vshll.u32 %v6105, 16
          %v6107 = vadd.s32 %v6106, %v6104
          %v6108 = vsel %vm4247, %v5924, 2147483647
          %v6109 = vand.u32 %v6108, 65535
          %v6110 = vshra.s32 %v6108, 16
          %v6111 = vcvt.s32.f32 %v6109
          %v6112 = vcvt.s32.f32 %v6110
          %6113 = vmin.xlane.f32.xlu0 %v6112
          %v6114 = vpop.xlane.xlu0 %6113
          %vm6115 = vcmp.eq.f32.partialorder %v6112, %v6114
          %v6116 = vsel %vm6115, %v6111, inf
          %6117 = vmin.xlane.f32.xlu0 %v6116
          %v6118 = vpop.xlane.xlu0 %6117
          %v6119 = vcvt.f32.s32 %v6118
          %v6120 = vcvt.f32.s32 %v6114
          %v6121 = vshll.u32 %v6120, 16
          %v6122 = vadd.s32 %v6121, %v6119
          %v6123 = vsel %vm4247, %v5925, 2147483647
          %v6124 = vand.u32 %v6123, 65535
          %v6125 = vshra.s32 %v6123, 16
          %v6126 = vcvt.s32.f32 %v6124
          %v6127 = vcvt.s32.f32 %v6125
          %6128 = vmin.xlane.f32.xlu0 %v6127
          %v6129 = vpop.xlane.xlu0 %6128
          %vm6130 = vcmp.eq.f32.partialorder %v6127, %v6129
          %v6131 = vsel %vm6130, %v6126, inf
          %6132 = vmin.xlane.f32.xlu0 %v6131
          %v6133 = vpop.xlane.xlu0 %6132
          %v6134 = vcvt.f32.s32 %v6133
          %v6135 = vcvt.f32.s32 %v6129
          %v6136 = vshll.u32 %v6135, 16
          %v6137 = vadd.s32 %v6136, %v6134
          %v6138 = vsel %vm4247, %v5926, 2147483647
          %v6139 = vand.u32 %v6138, 65535
          %v6140 = vshra.s32 %v6138, 16
          %v6141 = vcvt.s32.f32 %v6139
          %v6142 = vcvt.s32.f32 %v6140
          %6143 = vmin.xlane.f32.xlu0 %v6142
          %v6144 = vpop.xlane.xlu0 %6143
          %vm6145 = vcmp.eq.f32.partialorder %v6142, %v6144
          %v6146 = vsel %vm6145, %v6141, inf
          %6147 = vmin.xlane.f32.xlu0 %v6146
          %v6148 = vpop.xlane.xlu0 %6147
          %v6149 = vcvt.f32.s32 %v6148
          %v6150 = vcvt.f32.s32 %v6144
          %v6151 = vshll.u32 %v6150, 16
          %v6152 = vadd.s32 %v6151, %v6149
          %v6153 = vsel %vm4247, %v5927, 2147483647
          %v6154 = vand.u32 %v6153, 65535
          %v6155 = vshra.s32 %v6153, 16
          %v6156 = vcvt.s32.f32 %v6154
          %v6157 = vcvt.s32.f32 %v6155
          %6158 = vmin.xlane.f32.xlu0 %v6157
          %v6159 = vpop.xlane.xlu0 %6158
          %vm6160 = vcmp.eq.f32.partialorder %v6157, %v6159
          %v6161 = vsel %vm6160, %v6156, inf
          %6162 = vmin.xlane.f32.xlu0 %v6161
          %v6163 = vpop.xlane.xlu0 %6162
          %v6164 = vcvt.f32.s32 %v6163
          %v6165 = vcvt.f32.s32 %v6159
          %v6166 = vshll.u32 %v6165, 16
          %v6167 = vadd.s32 %v6166, %v6164
          %v6168 = vsel %vm2929, %v5850, %v5768
          %v6169 = vsel %vm2929, %v5853, %v5769
          %v6170 = vsel %vm2929, %v5856, %v5770
          %v6171 = vsel %vm2929, %v5859, %v5771
          %v6172 = vsel %vm2929, %v5862, %v5772
          %v6173 = vsel %vm2929, %v5865, %v5773
          %v6174 = vsel %vm2929, %v5868, %v5774
          %v6175 = vsel %vm2929, %v5871, %v5775
          %v6176 = vsel %vm2929, %v5874, %v5776
          %v6177 = vsel %vm2929, %v5877, %v5777
          %v6178 = vsel %vm2929, %v5880, %v5778
          %v6179 = vsel %vm2929, %v5883, %v5779
          %v6180 = vsel %vm2929, %v5886, %v5780
          %v6181 = vsel %vm2929, %v5889, %v5781
          %v6182 = vsel %vm2929, %v5892, %v5782
          %v6183 = vsel %vm2929, %v5895, %v5783
          %v6184 = vsel %vm2929, %v5942, %v5784
          %v6185 = vsel %vm2929, %v5957, %v5785
          %v6186 = vsel %vm2929, %v5972, %v5786
          %v6187 = vsel %vm2929, %v5987, %v5787
          %v6188 = vsel %vm2929, %v6002, %v5788
          %v6189 = vsel %vm2929, %v6017, %v5789
          %v6190 = vsel %vm2929, %v6032, %v5790
          %v6191 = vsel %vm2929, %v6047, %v5791
          %v6192 = vsel %vm2929, %v6062, %v5792
          %v6193 = vsel %vm2929, %v6077, %v5793
          %v6194 = vsel %vm2929, %v6092, %v5794
          %v6195 = vsel %vm2929, %v6107, %v5795
          %v6196 = vsel %vm2929, %v6122, %v5796
          %v6197 = vsel %vm2929, %v6137, %v5797
          %v6198 = vsel %vm2929, %v6152, %v5798
          %v6199 = vsel %vm2929, %v6167, %v5799
          %vm6200 = vcmp.eq.s32.totalorder %v5832, %v5942
          %vm6201 = vcmp.eq.s32.totalorder %v5833, %v5957
          %vm6202 = vcmp.eq.s32.totalorder %v5834, %v5972
          %vm6203 = vcmp.eq.s32.totalorder %v5835, %v5987
          %vm6204 = vcmp.eq.s32.totalorder %v5836, %v6002
          %vm6205 = vcmp.eq.s32.totalorder %v5837, %v6017
          %vm6206 = vcmp.eq.s32.totalorder %v5838, %v6032
          %vm6207 = vcmp.eq.s32.totalorder %v5839, %v6047
          %vm6208 = vcmp.eq.s32.totalorder %v5840, %v6062
          %vm6209 = vcmp.eq.s32.totalorder %v5841, %v6077
          %vm6210 = vcmp.eq.s32.totalorder %v5842, %v6092
          %vm6211 = vcmp.eq.s32.totalorder %v5843, %v6107
          %vm6212 = vcmp.eq.s32.totalorder %v5844, %v6122
          %vm6213 = vcmp.eq.s32.totalorder %v5845, %v6137
          %vm6214 = vcmp.eq.s32.totalorder %v5846, %v6152
          %vm6215 = vcmp.eq.s32.totalorder %v5847, %v6167
          %v6216 = vsel %vm6200, -inf, %v5816
          %v6217 = vsel %vm6201, -inf, %v5817
          %v6218 = vsel %vm6202, -inf, %v5818
          %v6219 = vsel %vm6203, -inf, %v5819
          %v6220 = vsel %vm6204, -inf, %v5820
          %v6221 = vsel %vm6205, -inf, %v5821
          %v6222 = vsel %vm6206, -inf, %v5822
          %v6223 = vsel %vm6207, -inf, %v5823
          %v6224 = vsel %vm6208, -inf, %v5824
          %v6225 = vsel %vm6209, -inf, %v5825
          %v6226 = vsel %vm6210, -inf, %v5826
          %v6227 = vsel %vm6211, -inf, %v5827
          %v6228 = vsel %vm6212, -inf, %v5828
          %v6229 = vsel %vm6213, -inf, %v5829
          %v6230 = vsel %vm6214, -inf, %v5830
          %v6231 = vsel %vm6215, -inf, %v5831
          %v6232 = vsel %vm6200, 2147483647, %v5832
          %v6233 = vsel %vm6201, 2147483647, %v5833
          %v6234 = vsel %vm6202, 2147483647, %v5834
          %v6235 = vsel %vm6203, 2147483647, %v5835
          %v6236 = vsel %vm6204, 2147483647, %v5836
          %v6237 = vsel %vm6205, 2147483647, %v5837
          %v6238 = vsel %vm6206, 2147483647, %v5838
          %v6239 = vsel %vm6207, 2147483647, %v5839
          %v6240 = vsel %vm6208, 2147483647, %v5840
          %v6241 = vsel %vm6209, 2147483647, %v5841
          %v6242 = vsel %vm6210, 2147483647, %v5842
          %v6243 = vsel %vm6211, 2147483647, %v5843
          %v6244 = vsel %vm6212, 2147483647, %v5844
          %v6245 = vsel %vm6213, 2147483647, %v5845
          %v6246 = vsel %vm6214, 2147483647, %v5846
          %v6247 = vsel %vm6215, 2147483647, %v5847
          %v6248 = vsel %vm4247, %v6216, -inf
          %6249 = vmax.xlane.f32.xlu0 %v6248
          %v6250 = vpop.xlane.xlu0 %6249
          %v6251 = vsel %vm4247, %v6217, -inf
          %6252 = vmax.xlane.f32.xlu0 %v6251
          %v6253 = vpop.xlane.xlu0 %6252
          %v6254 = vsel %vm4247, %v6218, -inf
          %6255 = vmax.xlane.f32.xlu0 %v6254
          %v6256 = vpop.xlane.xlu0 %6255
          %v6257 = vsel %vm4247, %v6219, -inf
          %6258 = vmax.xlane.f32.xlu0 %v6257
          %v6259 = vpop.xlane.xlu0 %6258
          %v6260 = vsel %vm4247, %v6220, -inf
          %6261 = vmax.xlane.f32.xlu0 %v6260
          %v6262 = vpop.xlane.xlu0 %6261
          %v6263 = vsel %vm4247, %v6221, -inf
          %6264 = vmax.xlane.f32.xlu0 %v6263
          %v6265 = vpop.xlane.xlu0 %6264
          %v6266 = vsel %vm4247, %v6222, -inf
          %6267 = vmax.xlane.f32.xlu0 %v6266
          %v6268 = vpop.xlane.xlu0 %6267
          %v6269 = vsel %vm4247, %v6223, -inf
          %6270 = vmax.xlane.f32.xlu0 %v6269
          %v6271 = vpop.xlane.xlu0 %6270
          %v6272 = vsel %vm4247, %v6224, -inf
          %6273 = vmax.xlane.f32.xlu0 %v6272
          %v6274 = vpop.xlane.xlu0 %6273
          %v6275 = vsel %vm4247, %v6225, -inf
          %6276 = vmax.xlane.f32.xlu0 %v6275
          %v6277 = vpop.xlane.xlu0 %6276
          %v6278 = vsel %vm4247, %v6226, -inf
          %6279 = vmax.xlane.f32.xlu0 %v6278
          %v6280 = vpop.xlane.xlu0 %6279
          %v6281 = vsel %vm4247, %v6227, -inf
          %6282 = vmax.xlane.f32.xlu0 %v6281
          %v6283 = vpop.xlane.xlu0 %6282
          %v6284 = vsel %vm4247, %v6228, -inf
          %6285 = vmax.xlane.f32.xlu0 %v6284
          %v6286 = vpop.xlane.xlu0 %6285
          %v6287 = vsel %vm4247, %v6229, -inf
          %6288 = vmax.xlane.f32.xlu0 %v6287
          %v6289 = vpop.xlane.xlu0 %6288
          %v6290 = vsel %vm4247, %v6230, -inf
          %6291 = vmax.xlane.f32.xlu0 %v6290
          %v6292 = vpop.xlane.xlu0 %6291
          %v6293 = vsel %vm4247, %v6231, -inf
          %6294 = vmax.xlane.f32.xlu0 %v6293
          %v6295 = vpop.xlane.xlu0 %6294
          %vm6296 = vcmp.eq.f32.partialorder %v6216, %v6250
          %vm6297 = vcmp.eq.f32.partialorder %v6217, %v6253
          %vm6298 = vcmp.eq.f32.partialorder %v6218, %v6256
          %vm6299 = vcmp.eq.f32.partialorder %v6219, %v6259
          %vm6300 = vcmp.eq.f32.partialorder %v6220, %v6262
          %vm6301 = vcmp.eq.f32.partialorder %v6221, %v6265
          %vm6302 = vcmp.eq.f32.partialorder %v6222, %v6268
          %vm6303 = vcmp.eq.f32.partialorder %v6223, %v6271
          %vm6304 = vcmp.eq.f32.partialorder %v6224, %v6274
          %vm6305 = vcmp.eq.f32.partialorder %v6225, %v6277
          %vm6306 = vcmp.eq.f32.partialorder %v6226, %v6280
          %vm6307 = vcmp.eq.f32.partialorder %v6227, %v6283
          %vm6308 = vcmp.eq.f32.partialorder %v6228, %v6286
          %vm6309 = vcmp.eq.f32.partialorder %v6229, %v6289
          %vm6310 = vcmp.eq.f32.partialorder %v6230, %v6292
          %vm6311 = vcmp.eq.f32.partialorder %v6231, %v6295
          %v6312 = vsel %vm6296, %v6232, 2147483647
          %v6313 = vsel %vm6297, %v6233, 2147483647
          %v6314 = vsel %vm6298, %v6234, 2147483647
          %v6315 = vsel %vm6299, %v6235, 2147483647
          %v6316 = vsel %vm6300, %v6236, 2147483647
          %v6317 = vsel %vm6301, %v6237, 2147483647
          %v6318 = vsel %vm6302, %v6238, 2147483647
          %v6319 = vsel %vm6303, %v6239, 2147483647
          %v6320 = vsel %vm6304, %v6240, 2147483647
          %v6321 = vsel %vm6305, %v6241, 2147483647
          %v6322 = vsel %vm6306, %v6242, 2147483647
          %v6323 = vsel %vm6307, %v6243, 2147483647
          %v6324 = vsel %vm6308, %v6244, 2147483647
          %v6325 = vsel %vm6309, %v6245, 2147483647
          %v6326 = vsel %vm6310, %v6246, 2147483647
          %v6327 = vsel %vm6311, %v6247, 2147483647
          %v6328 = vsel %vm4247, %v6312, 2147483647
          %v6329 = vand.u32 %v6328, 65535
          %v6330 = vshra.s32 %v6328, 16
          %v6331 = vcvt.s32.f32 %v6329
          %v6332 = vcvt.s32.f32 %v6330
          %6333 = vmin.xlane.f32.xlu0 %v6332
          %v6334 = vpop.xlane.xlu0 %6333
          %vm6335 = vcmp.eq.f32.partialorder %v6332, %v6334
          %v6336 = vsel %vm6335, %v6331, inf
          %6337 = vmin.xlane.f32.xlu0 %v6336
          %v6338 = vpop.xlane.xlu0 %6337
          %v6339 = vcvt.f32.s32 %v6338
          %v6340 = vcvt.f32.s32 %v6334
          %v6341 = vshll.u32 %v6340, 16
          %v6342 = vadd.s32 %v6341, %v6339
          %v6343 = vsel %vm4247, %v6313, 2147483647
          %v6344 = vand.u32 %v6343, 65535
          %v6345 = vshra.s32 %v6343, 16
          %v6346 = vcvt.s32.f32 %v6344
          %v6347 = vcvt.s32.f32 %v6345
          %6348 = vmin.xlane.f32.xlu0 %v6347
          %v6349 = vpop.xlane.xlu0 %6348
          %vm6350 = vcmp.eq.f32.partialorder %v6347, %v6349
          %v6351 = vsel %vm6350, %v6346, inf
          %6352 = vmin.xlane.f32.xlu0 %v6351
          %v6353 = vpop.xlane.xlu0 %6352
          %v6354 = vcvt.f32.s32 %v6353
          %v6355 = vcvt.f32.s32 %v6349
          %v6356 = vshll.u32 %v6355, 16
          %v6357 = vadd.s32 %v6356, %v6354
          %v6358 = vsel %vm4247, %v6314, 2147483647
          %v6359 = vand.u32 %v6358, 65535
          %v6360 = vshra.s32 %v6358, 16
          %v6361 = vcvt.s32.f32 %v6359
          %v6362 = vcvt.s32.f32 %v6360
          %6363 = vmin.xlane.f32.xlu0 %v6362
          %v6364 = vpop.xlane.xlu0 %6363
          %vm6365 = vcmp.eq.f32.partialorder %v6362, %v6364
          %v6366 = vsel %vm6365, %v6361, inf
          %6367 = vmin.xlane.f32.xlu0 %v6366
          %v6368 = vpop.xlane.xlu0 %6367
          %v6369 = vcvt.f32.s32 %v6368
          %v6370 = vcvt.f32.s32 %v6364
          %v6371 = vshll.u32 %v6370, 16
          %v6372 = vadd.s32 %v6371, %v6369
          %v6373 = vsel %vm4247, %v6315, 2147483647
          %v6374 = vand.u32 %v6373, 65535
          %v6375 = vshra.s32 %v6373, 16
          %v6376 = vcvt.s32.f32 %v6374
          %v6377 = vcvt.s32.f32 %v6375
          %6378 = vmin.xlane.f32.xlu0 %v6377
          %v6379 = vpop.xlane.xlu0 %6378
          %vm6380 = vcmp.eq.f32.partialorder %v6377, %v6379
          %v6381 = vsel %vm6380, %v6376, inf
          %6382 = vmin.xlane.f32.xlu0 %v6381
          %v6383 = vpop.xlane.xlu0 %6382
          %v6384 = vcvt.f32.s32 %v6383
          %v6385 = vcvt.f32.s32 %v6379
          %v6386 = vshll.u32 %v6385, 16
          %v6387 = vadd.s32 %v6386, %v6384
          %v6388 = vsel %vm4247, %v6316, 2147483647
          %v6389 = vand.u32 %v6388, 65535
          %v6390 = vshra.s32 %v6388, 16
          %v6391 = vcvt.s32.f32 %v6389
          %v6392 = vcvt.s32.f32 %v6390
          %6393 = vmin.xlane.f32.xlu0 %v6392
          %v6394 = vpop.xlane.xlu0 %6393
          %vm6395 = vcmp.eq.f32.partialorder %v6392, %v6394
          %v6396 = vsel %vm6395, %v6391, inf
          %6397 = vmin.xlane.f32.xlu0 %v6396
          %v6398 = vpop.xlane.xlu0 %6397
          %v6399 = vcvt.f32.s32 %v6398
          %v6400 = vcvt.f32.s32 %v6394
          %v6401 = vshll.u32 %v6400, 16
          %v6402 = vadd.s32 %v6401, %v6399
          %v6403 = vsel %vm4247, %v6317, 2147483647
          %v6404 = vand.u32 %v6403, 65535
          %v6405 = vshra.s32 %v6403, 16
          %v6406 = vcvt.s32.f32 %v6404
          %v6407 = vcvt.s32.f32 %v6405
          %6408 = vmin.xlane.f32.xlu0 %v6407
          %v6409 = vpop.xlane.xlu0 %6408
          %vm6410 = vcmp.eq.f32.partialorder %v6407, %v6409
          %v6411 = vsel %vm6410, %v6406, inf
          %6412 = vmin.xlane.f32.xlu0 %v6411
          %v6413 = vpop.xlane.xlu0 %6412
          %v6414 = vcvt.f32.s32 %v6413
          %v6415 = vcvt.f32.s32 %v6409
          %v6416 = vshll.u32 %v6415, 16
          %v6417 = vadd.s32 %v6416, %v6414
          %v6418 = vsel %vm4247, %v6318, 2147483647
          %v6419 = vand.u32 %v6418, 65535
          %v6420 = vshra.s32 %v6418, 16
          %v6421 = vcvt.s32.f32 %v6419
          %v6422 = vcvt.s32.f32 %v6420
          %6423 = vmin.xlane.f32.xlu0 %v6422
          %v6424 = vpop.xlane.xlu0 %6423
          %vm6425 = vcmp.eq.f32.partialorder %v6422, %v6424
          %v6426 = vsel %vm6425, %v6421, inf
          %6427 = vmin.xlane.f32.xlu0 %v6426
          %v6428 = vpop.xlane.xlu0 %6427
          %v6429 = vcvt.f32.s32 %v6428
          %v6430 = vcvt.f32.s32 %v6424
          %v6431 = vshll.u32 %v6430, 16
          %v6432 = vadd.s32 %v6431, %v6429
          %v6433 = vsel %vm4247, %v6319, 2147483647
          %v6434 = vand.u32 %v6433, 65535
          %v6435 = vshra.s32 %v6433, 16
          %v6436 = vcvt.s32.f32 %v6434
          %v6437 = vcvt.s32.f32 %v6435
          %6438 = vmin.xlane.f32.xlu0 %v6437
          %v6439 = vpop.xlane.xlu0 %6438
          %vm6440 = vcmp.eq.f32.partialorder %v6437, %v6439
          %v6441 = vsel %vm6440, %v6436, inf
          %6442 = vmin.xlane.f32.xlu0 %v6441
          %v6443 = vpop.xlane.xlu0 %6442
          %v6444 = vcvt.f32.s32 %v6443
          %v6445 = vcvt.f32.s32 %v6439
          %v6446 = vshll.u32 %v6445, 16
          %v6447 = vadd.s32 %v6446, %v6444
          %v6448 = vsel %vm4247, %v6320, 2147483647
          %v6449 = vand.u32 %v6448, 65535
          %v6450 = vshra.s32 %v6448, 16
          %v6451 = vcvt.s32.f32 %v6449
          %v6452 = vcvt.s32.f32 %v6450
          %6453 = vmin.xlane.f32.xlu0 %v6452
          %v6454 = vpop.xlane.xlu0 %6453
          %vm6455 = vcmp.eq.f32.partialorder %v6452, %v6454
          %v6456 = vsel %vm6455, %v6451, inf
          %6457 = vmin.xlane.f32.xlu0 %v6456
          %v6458 = vpop.xlane.xlu0 %6457
          %v6459 = vcvt.f32.s32 %v6458
          %v6460 = vcvt.f32.s32 %v6454
          %v6461 = vshll.u32 %v6460, 16
          %v6462 = vadd.s32 %v6461, %v6459
          %v6463 = vsel %vm4247, %v6321, 2147483647
          %v6464 = vand.u32 %v6463, 65535
          %v6465 = vshra.s32 %v6463, 16
          %v6466 = vcvt.s32.f32 %v6464
          %v6467 = vcvt.s32.f32 %v6465
          %6468 = vmin.xlane.f32.xlu0 %v6467
          %v6469 = vpop.xlane.xlu0 %6468
          %vm6470 = vcmp.eq.f32.partialorder %v6467, %v6469
          %v6471 = vsel %vm6470, %v6466, inf
          %6472 = vmin.xlane.f32.xlu0 %v6471
          %v6473 = vpop.xlane.xlu0 %6472
          %v6474 = vcvt.f32.s32 %v6473
          %v6475 = vcvt.f32.s32 %v6469
          %v6476 = vshll.u32 %v6475, 16
          %v6477 = vadd.s32 %v6476, %v6474
          %v6478 = vsel %vm4247, %v6322, 2147483647
          %v6479 = vand.u32 %v6478, 65535
          %v6480 = vshra.s32 %v6478, 16
          %v6481 = vcvt.s32.f32 %v6479
          %v6482 = vcvt.s32.f32 %v6480
          %6483 = vmin.xlane.f32.xlu0 %v6482
          %v6484 = vpop.xlane.xlu0 %6483
          %vm6485 = vcmp.eq.f32.partialorder %v6482, %v6484
          %v6486 = vsel %vm6485, %v6481, inf
          %6487 = vmin.xlane.f32.xlu0 %v6486
          %v6488 = vpop.xlane.xlu0 %6487
          %v6489 = vcvt.f32.s32 %v6488
          %v6490 = vcvt.f32.s32 %v6484
          %v6491 = vshll.u32 %v6490, 16
          %v6492 = vadd.s32 %v6491, %v6489
          %v6493 = vsel %vm4247, %v6323, 2147483647
          %v6494 = vand.u32 %v6493, 65535
          %v6495 = vshra.s32 %v6493, 16
          %v6496 = vcvt.s32.f32 %v6494
          %v6497 = vcvt.s32.f32 %v6495
          %6498 = vmin.xlane.f32.xlu0 %v6497
          %v6499 = vpop.xlane.xlu0 %6498
          %vm6500 = vcmp.eq.f32.partialorder %v6497, %v6499
          %v6501 = vsel %vm6500, %v6496, inf
          %6502 = vmin.xlane.f32.xlu0 %v6501
          %v6503 = vpop.xlane.xlu0 %6502
          %v6504 = vcvt.f32.s32 %v6503
          %v6505 = vcvt.f32.s32 %v6499
          %v6506 = vshll.u32 %v6505, 16
          %v6507 = vadd.s32 %v6506, %v6504
          %v6508 = vsel %vm4247, %v6324, 2147483647
          %v6509 = vand.u32 %v6508, 65535
          %v6510 = vshra.s32 %v6508, 16
          %v6511 = vcvt.s32.f32 %v6509
          %v6512 = vcvt.s32.f32 %v6510
          %6513 = vmin.xlane.f32.xlu0 %v6512
          %v6514 = vpop.xlane.xlu0 %6513
          %vm6515 = vcmp.eq.f32.partialorder %v6512, %v6514
          %v6516 = vsel %vm6515, %v6511, inf
          %6517 = vmin.xlane.f32.xlu0 %v6516
          %v6518 = vpop.xlane.xlu0 %6517
          %v6519 = vcvt.f32.s32 %v6518
          %v6520 = vcvt.f32.s32 %v6514
          %v6521 = vshll.u32 %v6520, 16
          %v6522 = vadd.s32 %v6521, %v6519
          %v6523 = vsel %vm4247, %v6325, 2147483647
          %v6524 = vand.u32 %v6523, 65535
          %v6525 = vshra.s32 %v6523, 16
          %v6526 = vcvt.s32.f32 %v6524
          %v6527 = vcvt.s32.f32 %v6525
          %6528 = vmin.xlane.f32.xlu0 %v6527
          %v6529 = vpop.xlane.xlu0 %6528
          %vm6530 = vcmp.eq.f32.partialorder %v6527, %v6529
          %v6531 = vsel %vm6530, %v6526, inf
          %6532 = vmin.xlane.f32.xlu0 %v6531
          %v6533 = vpop.xlane.xlu0 %6532
          %v6534 = vcvt.f32.s32 %v6533
          %v6535 = vcvt.f32.s32 %v6529
          %v6536 = vshll.u32 %v6535, 16
          %v6537 = vadd.s32 %v6536, %v6534
          %v6538 = vsel %vm4247, %v6326, 2147483647
          %v6539 = vand.u32 %v6538, 65535
          %v6540 = vshra.s32 %v6538, 16
          %v6541 = vcvt.s32.f32 %v6539
          %v6542 = vcvt.s32.f32 %v6540
          %6543 = vmin.xlane.f32.xlu0 %v6542
          %v6544 = vpop.xlane.xlu0 %6543
          %vm6545 = vcmp.eq.f32.partialorder %v6542, %v6544
          %v6546 = vsel %vm6545, %v6541, inf
          %6547 = vmin.xlane.f32.xlu0 %v6546
          %v6548 = vpop.xlane.xlu0 %6547
          %v6549 = vcvt.f32.s32 %v6548
          %v6550 = vcvt.f32.s32 %v6544
          %v6551 = vshll.u32 %v6550, 16
          %v6552 = vadd.s32 %v6551, %v6549
          %v6553 = vsel %vm4247, %v6327, 2147483647
          %v6554 = vand.u32 %v6553, 65535
          %v6555 = vshra.s32 %v6553, 16
          %v6556 = vcvt.s32.f32 %v6554
          %v6557 = vcvt.s32.f32 %v6555
          %6558 = vmin.xlane.f32.xlu0 %v6557
          %v6559 = vpop.xlane.xlu0 %6558
          %vm6560 = vcmp.eq.f32.partialorder %v6557, %v6559
          %v6561 = vsel %vm6560, %v6556, inf
          %6562 = vmin.xlane.f32.xlu0 %v6561
          %v6563 = vpop.xlane.xlu0 %6562
          %v6564 = vcvt.f32.s32 %v6563
          %v6565 = vcvt.f32.s32 %v6559
          %v6566 = vshll.u32 %v6565, 16
          %v6567 = vadd.s32 %v6566, %v6564
          %v6568 = vsel %vm3298, %v6250, %v6168
          %v6569 = vsel %vm3298, %v6253, %v6169
          %v6570 = vsel %vm3298, %v6256, %v6170
          %v6571 = vsel %vm3298, %v6259, %v6171
          %v6572 = vsel %vm3298, %v6262, %v6172
          %v6573 = vsel %vm3298, %v6265, %v6173
          %v6574 = vsel %vm3298, %v6268, %v6174
          %v6575 = vsel %vm3298, %v6271, %v6175
          %v6576 = vsel %vm3298, %v6274, %v6176
          %v6577 = vsel %vm3298, %v6277, %v6177
          %v6578 = vsel %vm3298, %v6280, %v6178
          %v6579 = vsel %vm3298, %v6283, %v6179
          %v6580 = vsel %vm3298, %v6286, %v6180
          %v6581 = vsel %vm3298, %v6289, %v6181
          %v6582 = vsel %vm3298, %v6292, %v6182
          %v6583 = vsel %vm3298, %v6295, %v6183
          %v6584 = vsel %vm3298, %v6342, %v6184
          %v6585 = vsel %vm3298, %v6357, %v6185
          %v6586 = vsel %vm3298, %v6372, %v6186
          %v6587 = vsel %vm3298, %v6387, %v6187
          %v6588 = vsel %vm3298, %v6402, %v6188
          %v6589 = vsel %vm3298, %v6417, %v6189
          %v6590 = vsel %vm3298, %v6432, %v6190
          %v6591 = vsel %vm3298, %v6447, %v6191
          %v6592 = vsel %vm3298, %v6462, %v6192
          %v6593 = vsel %vm3298, %v6477, %v6193
          %v6594 = vsel %vm3298, %v6492, %v6194
          %v6595 = vsel %vm3298, %v6507, %v6195
          %v6596 = vsel %vm3298, %v6522, %v6196
          %v6597 = vsel %vm3298, %v6537, %v6197
          %v6598 = vsel %vm3298, %v6552, %v6198
          %v6599 = vsel %vm3298, %v6567, %v6199
          %vm6600 = vcmp.eq.s32.totalorder %v6232, %v6342
          %vm6601 = vcmp.eq.s32.totalorder %v6233, %v6357
          %vm6602 = vcmp.eq.s32.totalorder %v6234, %v6372
          %vm6603 = vcmp.eq.s32.totalorder %v6235, %v6387
          %vm6604 = vcmp.eq.s32.totalorder %v6236, %v6402
          %vm6605 = vcmp.eq.s32.totalorder %v6237, %v6417
          %vm6606 = vcmp.eq.s32.totalorder %v6238, %v6432
          %vm6607 = vcmp.eq.s32.totalorder %v6239, %v6447
          %vm6608 = vcmp.eq.s32.totalorder %v6240, %v6462
          %vm6609 = vcmp.eq.s32.totalorder %v6241, %v6477
          %vm6610 = vcmp.eq.s32.totalorder %v6242, %v6492
          %vm6611 = vcmp.eq.s32.totalorder %v6243, %v6507
          %vm6612 = vcmp.eq.s32.totalorder %v6244, %v6522
          %vm6613 = vcmp.eq.s32.totalorder %v6245, %v6537
          %vm6614 = vcmp.eq.s32.totalorder %v6246, %v6552
          %vm6615 = vcmp.eq.s32.totalorder %v6247, %v6567
          %v6616 = vsel %vm6600, -inf, %v6216
          %v6617 = vsel %vm6601, -inf, %v6217
          %v6618 = vsel %vm6602, -inf, %v6218
          %v6619 = vsel %vm6603, -inf, %v6219
          %v6620 = vsel %vm6604, -inf, %v6220
          %v6621 = vsel %vm6605, -inf, %v6221
          %v6622 = vsel %vm6606, -inf, %v6222
          %v6623 = vsel %vm6607, -inf, %v6223
          %v6624 = vsel %vm6608, -inf, %v6224
          %v6625 = vsel %vm6609, -inf, %v6225
          %v6626 = vsel %vm6610, -inf, %v6226
          %v6627 = vsel %vm6611, -inf, %v6227
          %v6628 = vsel %vm6612, -inf, %v6228
          %v6629 = vsel %vm6613, -inf, %v6229
          %v6630 = vsel %vm6614, -inf, %v6230
          %v6631 = vsel %vm6615, -inf, %v6231
          %v6632 = vsel %vm6600, 2147483647, %v6232
          %v6633 = vsel %vm6601, 2147483647, %v6233
          %v6634 = vsel %vm6602, 2147483647, %v6234
          %v6635 = vsel %vm6603, 2147483647, %v6235
          %v6636 = vsel %vm6604, 2147483647, %v6236
          %v6637 = vsel %vm6605, 2147483647, %v6237
          %v6638 = vsel %vm6606, 2147483647, %v6238
          %v6639 = vsel %vm6607, 2147483647, %v6239
          %v6640 = vsel %vm6608, 2147483647, %v6240
          %v6641 = vsel %vm6609, 2147483647, %v6241
          %v6642 = vsel %vm6610, 2147483647, %v6242
          %v6643 = vsel %vm6611, 2147483647, %v6243
          %v6644 = vsel %vm6612, 2147483647, %v6244
          %v6645 = vsel %vm6613, 2147483647, %v6245
          %v6646 = vsel %vm6614, 2147483647, %v6246
          %v6647 = vsel %vm6615, 2147483647, %v6247
          %v6648 = vsel %vm4247, %v6616, -inf
          %6649 = vmax.xlane.f32.xlu0 %v6648
          %v6650 = vpop.xlane.xlu0 %6649
          %v6651 = vsel %vm4247, %v6617, -inf
          %6652 = vmax.xlane.f32.xlu0 %v6651
          %v6653 = vpop.xlane.xlu0 %6652
          %v6654 = vsel %vm4247, %v6618, -inf
          %6655 = vmax.xlane.f32.xlu0 %v6654
          %v6656 = vpop.xlane.xlu0 %6655
          %v6657 = vsel %vm4247, %v6619, -inf
          %6658 = vmax.xlane.f32.xlu0 %v6657
          %v6659 = vpop.xlane.xlu0 %6658
          %v6660 = vsel %vm4247, %v6620, -inf
          %6661 = vmax.xlane.f32.xlu0 %v6660
          %v6662 = vpop.xlane.xlu0 %6661
          %v6663 = vsel %vm4247, %v6621, -inf
          %6664 = vmax.xlane.f32.xlu0 %v6663
          %v6665 = vpop.xlane.xlu0 %6664
          %v6666 = vsel %vm4247, %v6622, -inf
          %6667 = vmax.xlane.f32.xlu0 %v6666
          %v6668 = vpop.xlane.xlu0 %6667
          %v6669 = vsel %vm4247, %v6623, -inf
          %6670 = vmax.xlane.f32.xlu0 %v6669
          %v6671 = vpop.xlane.xlu0 %6670
          %v6672 = vsel %vm4247, %v6624, -inf
          %6673 = vmax.xlane.f32.xlu0 %v6672
          %v6674 = vpop.xlane.xlu0 %6673
          %v6675 = vsel %vm4247, %v6625, -inf
          %6676 = vmax.xlane.f32.xlu0 %v6675
          %v6677 = vpop.xlane.xlu0 %6676
          %v6678 = vsel %vm4247, %v6626, -inf
          %6679 = vmax.xlane.f32.xlu0 %v6678
          %v6680 = vpop.xlane.xlu0 %6679
          %v6681 = vsel %vm4247, %v6627, -inf
          %6682 = vmax.xlane.f32.xlu0 %v6681
          %v6683 = vpop.xlane.xlu0 %6682
          %v6684 = vsel %vm4247, %v6628, -inf
          %6685 = vmax.xlane.f32.xlu0 %v6684
          %v6686 = vpop.xlane.xlu0 %6685
          %v6687 = vsel %vm4247, %v6629, -inf
          %6688 = vmax.xlane.f32.xlu0 %v6687
          %v6689 = vpop.xlane.xlu0 %6688
          %v6690 = vsel %vm4247, %v6630, -inf
          %6691 = vmax.xlane.f32.xlu0 %v6690
          %v6692 = vpop.xlane.xlu0 %6691
          %v6693 = vsel %vm4247, %v6631, -inf
          %6694 = vmax.xlane.f32.xlu0 %v6693
          %v6695 = vpop.xlane.xlu0 %6694
          %vm6696 = vcmp.eq.f32.partialorder %v6616, %v6650
          %vm6697 = vcmp.eq.f32.partialorder %v6617, %v6653
          %vm6698 = vcmp.eq.f32.partialorder %v6618, %v6656
          %vm6699 = vcmp.eq.f32.partialorder %v6619, %v6659
          %vm6700 = vcmp.eq.f32.partialorder %v6620, %v6662
          %vm6701 = vcmp.eq.f32.partialorder %v6621, %v6665
          %vm6702 = vcmp.eq.f32.partialorder %v6622, %v6668
          %vm6703 = vcmp.eq.f32.partialorder %v6623, %v6671
          %vm6704 = vcmp.eq.f32.partialorder %v6624, %v6674
          %vm6705 = vcmp.eq.f32.partialorder %v6625, %v6677
          %vm6706 = vcmp.eq.f32.partialorder %v6626, %v6680
          %vm6707 = vcmp.eq.f32.partialorder %v6627, %v6683
          %vm6708 = vcmp.eq.f32.partialorder %v6628, %v6686
          %vm6709 = vcmp.eq.f32.partialorder %v6629, %v6689
          %vm6710 = vcmp.eq.f32.partialorder %v6630, %v6692
          %vm6711 = vcmp.eq.f32.partialorder %v6631, %v6695
          %v6712 = vsel %vm6696, %v6632, 2147483647
          %v6713 = vsel %vm6697, %v6633, 2147483647
          %v6714 = vsel %vm6698, %v6634, 2147483647
          %v6715 = vsel %vm6699, %v6635, 2147483647
          %v6716 = vsel %vm6700, %v6636, 2147483647
          %v6717 = vsel %vm6701, %v6637, 2147483647
          %v6718 = vsel %vm6702, %v6638, 2147483647
          %v6719 = vsel %vm6703, %v6639, 2147483647
          %v6720 = vsel %vm6704, %v6640, 2147483647
          %v6721 = vsel %vm6705, %v6641, 2147483647
          %v6722 = vsel %vm6706, %v6642, 2147483647
          %v6723 = vsel %vm6707, %v6643, 2147483647
          %v6724 = vsel %vm6708, %v6644, 2147483647
          %v6725 = vsel %vm6709, %v6645, 2147483647
          %v6726 = vsel %vm6710, %v6646, 2147483647
          %v6727 = vsel %vm6711, %v6647, 2147483647
          %v6728 = vsel %vm4247, %v6712, 2147483647
          %v6729 = vand.u32 %v6728, 65535
          %v6730 = vshra.s32 %v6728, 16
          %v6731 = vcvt.s32.f32 %v6729
          %v6732 = vcvt.s32.f32 %v6730
          %6733 = vmin.xlane.f32.xlu0 %v6732
          %v6734 = vpop.xlane.xlu0 %6733
          %vm6735 = vcmp.eq.f32.partialorder %v6732, %v6734
          %v6736 = vsel %vm6735, %v6731, inf
          %6737 = vmin.xlane.f32.xlu0 %v6736
          %v6738 = vpop.xlane.xlu0 %6737
          %v6739 = vcvt.f32.s32 %v6738
          %v6740 = vcvt.f32.s32 %v6734
          %v6741 = vshll.u32 %v6740, 16
          %v6742 = vadd.s32 %v6741, %v6739
          %v6743 = vsel %vm4247, %v6713, 2147483647
          %v6744 = vand.u32 %v6743, 65535
          %v6745 = vshra.s32 %v6743, 16
          %v6746 = vcvt.s32.f32 %v6744
          %v6747 = vcvt.s32.f32 %v6745
          %6748 = vmin.xlane.f32.xlu0 %v6747
          %v6749 = vpop.xlane.xlu0 %6748
          %vm6750 = vcmp.eq.f32.partialorder %v6747, %v6749
          %v6751 = vsel %vm6750, %v6746, inf
          %6752 = vmin.xlane.f32.xlu0 %v6751
          %v6753 = vpop.xlane.xlu0 %6752
          %v6754 = vcvt.f32.s32 %v6753
          %v6755 = vcvt.f32.s32 %v6749
          %v6756 = vshll.u32 %v6755, 16
          %v6757 = vadd.s32 %v6756, %v6754
          %v6758 = vsel %vm4247, %v6714, 2147483647
          %v6759 = vand.u32 %v6758, 65535
          %v6760 = vshra.s32 %v6758, 16
          %v6761 = vcvt.s32.f32 %v6759
          %v6762 = vcvt.s32.f32 %v6760
          %6763 = vmin.xlane.f32.xlu0 %v6762
          %v6764 = vpop.xlane.xlu0 %6763
          %vm6765 = vcmp.eq.f32.partialorder %v6762, %v6764
          %v6766 = vsel %vm6765, %v6761, inf
          %6767 = vmin.xlane.f32.xlu0 %v6766
          %v6768 = vpop.xlane.xlu0 %6767
          %v6769 = vcvt.f32.s32 %v6768
          %v6770 = vcvt.f32.s32 %v6764
          %v6771 = vshll.u32 %v6770, 16
          %v6772 = vadd.s32 %v6771, %v6769
          %v6773 = vsel %vm4247, %v6715, 2147483647
          %v6774 = vand.u32 %v6773, 65535
          %v6775 = vshra.s32 %v6773, 16
          %v6776 = vcvt.s32.f32 %v6774
          %v6777 = vcvt.s32.f32 %v6775
          %6778 = vmin.xlane.f32.xlu0 %v6777
          %v6779 = vpop.xlane.xlu0 %6778
          %vm6780 = vcmp.eq.f32.partialorder %v6777, %v6779
          %v6781 = vsel %vm6780, %v6776, inf
          %6782 = vmin.xlane.f32.xlu0 %v6781
          %v6783 = vpop.xlane.xlu0 %6782
          %v6784 = vcvt.f32.s32 %v6783
          %v6785 = vcvt.f32.s32 %v6779
          %v6786 = vshll.u32 %v6785, 16
          %v6787 = vadd.s32 %v6786, %v6784
          %v6788 = vsel %vm4247, %v6716, 2147483647
          %v6789 = vand.u32 %v6788, 65535
          %v6790 = vshra.s32 %v6788, 16
          %v6791 = vcvt.s32.f32 %v6789
          %v6792 = vcvt.s32.f32 %v6790
          %6793 = vmin.xlane.f32.xlu0 %v6792
          %v6794 = vpop.xlane.xlu0 %6793
          %vm6795 = vcmp.eq.f32.partialorder %v6792, %v6794
          %v6796 = vsel %vm6795, %v6791, inf
          %6797 = vmin.xlane.f32.xlu0 %v6796
          %v6798 = vpop.xlane.xlu0 %6797
          %v6799 = vcvt.f32.s32 %v6798
          %v6800 = vcvt.f32.s32 %v6794
          %v6801 = vshll.u32 %v6800, 16
          %v6802 = vadd.s32 %v6801, %v6799
          %v6803 = vsel %vm4247, %v6717, 2147483647
          %v6804 = vand.u32 %v6803, 65535
          %v6805 = vshra.s32 %v6803, 16
          %v6806 = vcvt.s32.f32 %v6804
          %v6807 = vcvt.s32.f32 %v6805
          %6808 = vmin.xlane.f32.xlu0 %v6807
          %v6809 = vpop.xlane.xlu0 %6808
          %vm6810 = vcmp.eq.f32.partialorder %v6807, %v6809
          %v6811 = vsel %vm6810, %v6806, inf
          %6812 = vmin.xlane.f32.xlu0 %v6811
          %v6813 = vpop.xlane.xlu0 %6812
          %v6814 = vcvt.f32.s32 %v6813
          %v6815 = vcvt.f32.s32 %v6809
          %v6816 = vshll.u32 %v6815, 16
          %v6817 = vadd.s32 %v6816, %v6814
          %v6818 = vsel %vm4247, %v6718, 2147483647
          %v6819 = vand.u32 %v6818, 65535
          %v6820 = vshra.s32 %v6818, 16
          %v6821 = vcvt.s32.f32 %v6819
          %v6822 = vcvt.s32.f32 %v6820
          %6823 = vmin.xlane.f32.xlu0 %v6822
          %v6824 = vpop.xlane.xlu0 %6823
          %vm6825 = vcmp.eq.f32.partialorder %v6822, %v6824
          %v6826 = vsel %vm6825, %v6821, inf
          %6827 = vmin.xlane.f32.xlu0 %v6826
          %v6828 = vpop.xlane.xlu0 %6827
          %v6829 = vcvt.f32.s32 %v6828
          %v6830 = vcvt.f32.s32 %v6824
          %v6831 = vshll.u32 %v6830, 16
          %v6832 = vadd.s32 %v6831, %v6829
          %v6833 = vsel %vm4247, %v6719, 2147483647
          %v6834 = vand.u32 %v6833, 65535
          %v6835 = vshra.s32 %v6833, 16
          %v6836 = vcvt.s32.f32 %v6834
          %v6837 = vcvt.s32.f32 %v6835
          %6838 = vmin.xlane.f32.xlu0 %v6837
          %v6839 = vpop.xlane.xlu0 %6838
          %vm6840 = vcmp.eq.f32.partialorder %v6837, %v6839
          %v6841 = vsel %vm6840, %v6836, inf
          %6842 = vmin.xlane.f32.xlu0 %v6841
          %v6843 = vpop.xlane.xlu0 %6842
          %v6844 = vcvt.f32.s32 %v6843
          %v6845 = vcvt.f32.s32 %v6839
          %v6846 = vshll.u32 %v6845, 16
          %v6847 = vadd.s32 %v6846, %v6844
          %v6848 = vsel %vm4247, %v6720, 2147483647
          %v6849 = vand.u32 %v6848, 65535
          %v6850 = vshra.s32 %v6848, 16
          %v6851 = vcvt.s32.f32 %v6849
          %v6852 = vcvt.s32.f32 %v6850
          %6853 = vmin.xlane.f32.xlu0 %v6852
          %v6854 = vpop.xlane.xlu0 %6853
          %vm6855 = vcmp.eq.f32.partialorder %v6852, %v6854
          %v6856 = vsel %vm6855, %v6851, inf
          %6857 = vmin.xlane.f32.xlu0 %v6856
          %v6858 = vpop.xlane.xlu0 %6857
          %v6859 = vcvt.f32.s32 %v6858
          %v6860 = vcvt.f32.s32 %v6854
          %v6861 = vshll.u32 %v6860, 16
          %v6862 = vadd.s32 %v6861, %v6859
          %v6863 = vsel %vm4247, %v6721, 2147483647
          %v6864 = vand.u32 %v6863, 65535
          %v6865 = vshra.s32 %v6863, 16
          %v6866 = vcvt.s32.f32 %v6864
          %v6867 = vcvt.s32.f32 %v6865
          %6868 = vmin.xlane.f32.xlu0 %v6867
          %v6869 = vpop.xlane.xlu0 %6868
          %vm6870 = vcmp.eq.f32.partialorder %v6867, %v6869
          %v6871 = vsel %vm6870, %v6866, inf
          %6872 = vmin.xlane.f32.xlu0 %v6871
          %v6873 = vpop.xlane.xlu0 %6872
          %v6874 = vcvt.f32.s32 %v6873
          %v6875 = vcvt.f32.s32 %v6869
          %v6876 = vshll.u32 %v6875, 16
          %v6877 = vadd.s32 %v6876, %v6874
          %v6878 = vsel %vm4247, %v6722, 2147483647
          %v6879 = vand.u32 %v6878, 65535
          %v6880 = vshra.s32 %v6878, 16
          %v6881 = vcvt.s32.f32 %v6879
          %v6882 = vcvt.s32.f32 %v6880
          %6883 = vmin.xlane.f32.xlu0 %v6882
          %v6884 = vpop.xlane.xlu0 %6883
          %vm6885 = vcmp.eq.f32.partialorder %v6882, %v6884
          %v6886 = vsel %vm6885, %v6881, inf
          %6887 = vmin.xlane.f32.xlu0 %v6886
          %v6888 = vpop.xlane.xlu0 %6887
          %v6889 = vcvt.f32.s32 %v6888
          %v6890 = vcvt.f32.s32 %v6884
          %v6891 = vshll.u32 %v6890, 16
          %v6892 = vadd.s32 %v6891, %v6889
          %v6893 = vsel %vm4247, %v6723, 2147483647
          %v6894 = vand.u32 %v6893, 65535
          %v6895 = vshra.s32 %v6893, 16
          %v6896 = vcvt.s32.f32 %v6894
          %v6897 = vcvt.s32.f32 %v6895
          %6898 = vmin.xlane.f32.xlu0 %v6897
          %v6899 = vpop.xlane.xlu0 %6898
          %vm6900 = vcmp.eq.f32.partialorder %v6897, %v6899
          %v6901 = vsel %vm6900, %v6896, inf
          %6902 = vmin.xlane.f32.xlu0 %v6901
          %v6903 = vpop.xlane.xlu0 %6902
          %v6904 = vcvt.f32.s32 %v6903
          %v6905 = vcvt.f32.s32 %v6899
          %v6906 = vshll.u32 %v6905, 16
          %v6907 = vadd.s32 %v6906, %v6904
          %v6908 = vsel %vm4247, %v6724, 2147483647
          %v6909 = vand.u32 %v6908, 65535
          %v6910 = vshra.s32 %v6908, 16
          %v6911 = vcvt.s32.f32 %v6909
          %v6912 = vcvt.s32.f32 %v6910
          %6913 = vmin.xlane.f32.xlu0 %v6912
          %v6914 = vpop.xlane.xlu0 %6913
          %vm6915 = vcmp.eq.f32.partialorder %v6912, %v6914
          %v6916 = vsel %vm6915, %v6911, inf
          %6917 = vmin.xlane.f32.xlu0 %v6916
          %v6918 = vpop.xlane.xlu0 %6917
          %v6919 = vcvt.f32.s32 %v6918
          %v6920 = vcvt.f32.s32 %v6914
          %v6921 = vshll.u32 %v6920, 16
          %v6922 = vadd.s32 %v6921, %v6919
          %v6923 = vsel %vm4247, %v6725, 2147483647
          %v6924 = vand.u32 %v6923, 65535
          %v6925 = vshra.s32 %v6923, 16
          %v6926 = vcvt.s32.f32 %v6924
          %v6927 = vcvt.s32.f32 %v6925
          %6928 = vmin.xlane.f32.xlu0 %v6927
          %v6929 = vpop.xlane.xlu0 %6928
          %vm6930 = vcmp.eq.f32.partialorder %v6927, %v6929
          %v6931 = vsel %vm6930, %v6926, inf
          %6932 = vmin.xlane.f32.xlu0 %v6931
          %v6933 = vpop.xlane.xlu0 %6932
          %v6934 = vcvt.f32.s32 %v6933
          %v6935 = vcvt.f32.s32 %v6929
          %v6936 = vshll.u32 %v6935, 16
          %v6937 = vadd.s32 %v6936, %v6934
          %v6938 = vsel %vm4247, %v6726, 2147483647
          %v6939 = vand.u32 %v6938, 65535
          %v6940 = vshra.s32 %v6938, 16
          %v6941 = vcvt.s32.f32 %v6939
          %v6942 = vcvt.s32.f32 %v6940
          %6943 = vmin.xlane.f32.xlu0 %v6942
          %v6944 = vpop.xlane.xlu0 %6943
          %vm6945 = vcmp.eq.f32.partialorder %v6942, %v6944
          %v6946 = vsel %vm6945, %v6941, inf
          %6947 = vmin.xlane.f32.xlu0 %v6946
          %v6948 = vpop.xlane.xlu0 %6947
          %v6949 = vcvt.f32.s32 %v6948
          %v6950 = vcvt.f32.s32 %v6944
          %v6951 = vshll.u32 %v6950, 16
          %v6952 = vadd.s32 %v6951, %v6949
          %v6953 = vsel %vm4247, %v6727, 2147483647
          %v6954 = vand.u32 %v6953, 65535
          %v6955 = vshra.s32 %v6953, 16
          %v6956 = vcvt.s32.f32 %v6954
          %v6957 = vcvt.s32.f32 %v6955
          %6958 = vmin.xlane.f32.xlu0 %v6957
          %v6959 = vpop.xlane.xlu0 %6958
          %vm6960 = vcmp.eq.f32.partialorder %v6957, %v6959
          %v6961 = vsel %vm6960, %v6956, inf
          %6962 = vmin.xlane.f32.xlu0 %v6961
          %v6963 = vpop.xlane.xlu0 %6962
          %v6964 = vcvt.f32.s32 %v6963
          %v6965 = vcvt.f32.s32 %v6959
          %v6966 = vshll.u32 %v6965, 16
          %v6967 = vadd.s32 %v6966, %v6964
          %v6968 = vsel %vm3667, %v6650, %v6568
          %v6969 = vsel %vm3667, %v6653, %v6569
          %v6970 = vsel %vm3667, %v6656, %v6570
          %v6971 = vsel %vm3667, %v6659, %v6571
          %v6972 = vsel %vm3667, %v6662, %v6572
          %v6973 = vsel %vm3667, %v6665, %v6573
          %v6974 = vsel %vm3667, %v6668, %v6574
          %v6975 = vsel %vm3667, %v6671, %v6575
          %v6976 = vsel %vm3667, %v6674, %v6576
          %v6977 = vsel %vm3667, %v6677, %v6577
          %v6978 = vsel %vm3667, %v6680, %v6578
          %v6979 = vsel %vm3667, %v6683, %v6579
          %v6980 = vsel %vm3667, %v6686, %v6580
          %v6981 = vsel %vm3667, %v6689, %v6581
          %v6982 = vsel %vm3667, %v6692, %v6582
          %v6983 = vsel %vm3667, %v6695, %v6583
          %v6984 = vsel %vm3667, %v6742, %v6584
          %v6985 = vsel %vm3667, %v6757, %v6585
          %v6986 = vsel %vm3667, %v6772, %v6586
          %v6987 = vsel %vm3667, %v6787, %v6587
          %v6988 = vsel %vm3667, %v6802, %v6588
          %v6989 = vsel %vm3667, %v6817, %v6589
          %v6990 = vsel %vm3667, %v6832, %v6590
          %v6991 = vsel %vm3667, %v6847, %v6591
          %v6992 = vsel %vm3667, %v6862, %v6592
          %v6993 = vsel %vm3667, %v6877, %v6593
          %v6994 = vsel %vm3667, %v6892, %v6594
          %v6995 = vsel %vm3667, %v6907, %v6595
          %v6996 = vsel %vm3667, %v6922, %v6596
          %v6997 = vsel %vm3667, %v6937, %v6597
          %v6998 = vsel %vm3667, %v6952, %v6598
          %v6999 = vsel %vm3667, %v6967, %v6599
          %vm7000 = vcmp.eq.s32.totalorder %v6632, %v6742
          %vm7001 = vcmp.eq.s32.totalorder %v6633, %v6757
          %vm7002 = vcmp.eq.s32.totalorder %v6634, %v6772
          %vm7003 = vcmp.eq.s32.totalorder %v6635, %v6787
          %vm7004 = vcmp.eq.s32.totalorder %v6636, %v6802
          %vm7005 = vcmp.eq.s32.totalorder %v6637, %v6817
          %vm7006 = vcmp.eq.s32.totalorder %v6638, %v6832
          %vm7007 = vcmp.eq.s32.totalorder %v6639, %v6847
          %vm7008 = vcmp.eq.s32.totalorder %v6640, %v6862
          %vm7009 = vcmp.eq.s32.totalorder %v6641, %v6877
          %vm7010 = vcmp.eq.s32.totalorder %v6642, %v6892
          %vm7011 = vcmp.eq.s32.totalorder %v6643, %v6907
          %vm7012 = vcmp.eq.s32.totalorder %v6644, %v6922
          %vm7013 = vcmp.eq.s32.totalorder %v6645, %v6937
          %vm7014 = vcmp.eq.s32.totalorder %v6646, %v6952
          %vm7015 = vcmp.eq.s32.totalorder %v6647, %v6967
          %v7016 = vsel %vm7000, -inf, %v6616
          %v7017 = vsel %vm7001, -inf, %v6617
          %v7018 = vsel %vm7002, -inf, %v6618
          %v7019 = vsel %vm7003, -inf, %v6619
          %v7020 = vsel %vm7004, -inf, %v6620
          %v7021 = vsel %vm7005, -inf, %v6621
          %v7022 = vsel %vm7006, -inf, %v6622
          %v7023 = vsel %vm7007, -inf, %v6623
          %v7024 = vsel %vm7008, -inf, %v6624
          %v7025 = vsel %vm7009, -inf, %v6625
          %v7026 = vsel %vm7010, -inf, %v6626
          %v7027 = vsel %vm7011, -inf, %v6627
          %v7028 = vsel %vm7012, -inf, %v6628
          %v7029 = vsel %vm7013, -inf, %v6629
          %v7030 = vsel %vm7014, -inf, %v6630
          %v7031 = vsel %vm7015, -inf, %v6631
          %v7032 = vsel %vm7000, 2147483647, %v6632
          %v7033 = vsel %vm7001, 2147483647, %v6633
          %v7034 = vsel %vm7002, 2147483647, %v6634
          %v7035 = vsel %vm7003, 2147483647, %v6635
          %v7036 = vsel %vm7004, 2147483647, %v6636
          %v7037 = vsel %vm7005, 2147483647, %v6637
          %v7038 = vsel %vm7006, 2147483647, %v6638
          %v7039 = vsel %vm7007, 2147483647, %v6639
          %v7040 = vsel %vm7008, 2147483647, %v6640
          %v7041 = vsel %vm7009, 2147483647, %v6641
          %v7042 = vsel %vm7010, 2147483647, %v6642
          %v7043 = vsel %vm7011, 2147483647, %v6643
          %v7044 = vsel %vm7012, 2147483647, %v6644
          %v7045 = vsel %vm7013, 2147483647, %v6645
          %v7046 = vsel %vm7014, 2147483647, %v6646
          %v7047 = vsel %vm7015, 2147483647, %v6647
          %v7048 = vsel %vm4247, %v7016, -inf
          %7049 = vmax.xlane.f32.xlu0 %v7048
          %v7050 = vpop.xlane.xlu0 %7049
          %v7051 = vsel %vm4247, %v7017, -inf
          %7052 = vmax.xlane.f32.xlu0 %v7051
          %v7053 = vpop.xlane.xlu0 %7052
          %v7054 = vsel %vm4247, %v7018, -inf
          %7055 = vmax.xlane.f32.xlu0 %v7054
          %v7056 = vpop.xlane.xlu0 %7055
          %v7057 = vsel %vm4247, %v7019, -inf
          %7058 = vmax.xlane.f32.xlu0 %v7057
          %v7059 = vpop.xlane.xlu0 %7058
          %v7060 = vsel %vm4247, %v7020, -inf
          %7061 = vmax.xlane.f32.xlu0 %v7060
          %v7062 = vpop.xlane.xlu0 %7061
          %v7063 = vsel %vm4247, %v7021, -inf
          %7064 = vmax.xlane.f32.xlu0 %v7063
          %v7065 = vpop.xlane.xlu0 %7064
          %v7066 = vsel %vm4247, %v7022, -inf
          %7067 = vmax.xlane.f32.xlu0 %v7066
          %v7068 = vpop.xlane.xlu0 %7067
          %v7069 = vsel %vm4247, %v7023, -inf
          %7070 = vmax.xlane.f32.xlu0 %v7069
          %v7071 = vpop.xlane.xlu0 %7070
          %v7072 = vsel %vm4247, %v7024, -inf
          %7073 = vmax.xlane.f32.xlu0 %v7072
          %v7074 = vpop.xlane.xlu0 %7073
          %v7075 = vsel %vm4247, %v7025, -inf
          %7076 = vmax.xlane.f32.xlu0 %v7075
          %v7077 = vpop.xlane.xlu0 %7076
          %v7078 = vsel %vm4247, %v7026, -inf
          %7079 = vmax.xlane.f32.xlu0 %v7078
          %v7080 = vpop.xlane.xlu0 %7079
          %v7081 = vsel %vm4247, %v7027, -inf
          %7082 = vmax.xlane.f32.xlu0 %v7081
          %v7083 = vpop.xlane.xlu0 %7082
          %v7084 = vsel %vm4247, %v7028, -inf
          %7085 = vmax.xlane.f32.xlu0 %v7084
          %v7086 = vpop.xlane.xlu0 %7085
          %v7087 = vsel %vm4247, %v7029, -inf
          %7088 = vmax.xlane.f32.xlu0 %v7087
          %v7089 = vpop.xlane.xlu0 %7088
          %v7090 = vsel %vm4247, %v7030, -inf
          %7091 = vmax.xlane.f32.xlu0 %v7090
          %v7092 = vpop.xlane.xlu0 %7091
          %v7093 = vsel %vm4247, %v7031, -inf
          %7094 = vmax.xlane.f32.xlu0 %v7093
          %v7095 = vpop.xlane.xlu0 %7094
          %vm7096 = vcmp.eq.f32.partialorder %v7016, %v7050
          %vm7097 = vcmp.eq.f32.partialorder %v7017, %v7053
          %vm7098 = vcmp.eq.f32.partialorder %v7018, %v7056
          %vm7099 = vcmp.eq.f32.partialorder %v7019, %v7059
          %vm7100 = vcmp.eq.f32.partialorder %v7020, %v7062
          %vm7101 = vcmp.eq.f32.partialorder %v7021, %v7065
          %vm7102 = vcmp.eq.f32.partialorder %v7022, %v7068
          %vm7103 = vcmp.eq.f32.partialorder %v7023, %v7071
          %vm7104 = vcmp.eq.f32.partialorder %v7024, %v7074
          %vm7105 = vcmp.eq.f32.partialorder %v7025, %v7077
          %vm7106 = vcmp.eq.f32.partialorder %v7026, %v7080
          %vm7107 = vcmp.eq.f32.partialorder %v7027, %v7083
          %vm7108 = vcmp.eq.f32.partialorder %v7028, %v7086
          %vm7109 = vcmp.eq.f32.partialorder %v7029, %v7089
          %vm7110 = vcmp.eq.f32.partialorder %v7030, %v7092
          %vm7111 = vcmp.eq.f32.partialorder %v7031, %v7095
          %v7112 = vsel %vm7096, %v7032, 2147483647
          %v7113 = vsel %vm7097, %v7033, 2147483647
          %v7114 = vsel %vm7098, %v7034, 2147483647
          %v7115 = vsel %vm7099, %v7035, 2147483647
          %v7116 = vsel %vm7100, %v7036, 2147483647
          %v7117 = vsel %vm7101, %v7037, 2147483647
          %v7118 = vsel %vm7102, %v7038, 2147483647
          %v7119 = vsel %vm7103, %v7039, 2147483647
          %v7120 = vsel %vm7104, %v7040, 2147483647
          %v7121 = vsel %vm7105, %v7041, 2147483647
          %v7122 = vsel %vm7106, %v7042, 2147483647
          %v7123 = vsel %vm7107, %v7043, 2147483647
          %v7124 = vsel %vm7108, %v7044, 2147483647
          %v7125 = vsel %vm7109, %v7045, 2147483647
          %v7126 = vsel %vm7110, %v7046, 2147483647
          %v7127 = vsel %vm7111, %v7047, 2147483647
          %v7128 = vsel %vm4247, %v7112, 2147483647
          %v7129 = vand.u32 %v7128, 65535
          %v7130 = vshra.s32 %v7128, 16
          %v7131 = vcvt.s32.f32 %v7129
          %v7132 = vcvt.s32.f32 %v7130
          %7133 = vmin.xlane.f32.xlu0 %v7132
          %v7134 = vpop.xlane.xlu0 %7133
          %vm7135 = vcmp.eq.f32.partialorder %v7132, %v7134
          %v7136 = vsel %vm7135, %v7131, inf
          %7137 = vmin.xlane.f32.xlu0 %v7136
          %v7138 = vpop.xlane.xlu0 %7137
          %v7139 = vcvt.f32.s32 %v7138
          %v7140 = vcvt.f32.s32 %v7134
          %v7141 = vshll.u32 %v7140, 16
          %v7142 = vadd.s32 %v7141, %v7139
          %v7143 = vsel %vm4247, %v7113, 2147483647
          %v7144 = vand.u32 %v7143, 65535
          %v7145 = vshra.s32 %v7143, 16
          %v7146 = vcvt.s32.f32 %v7144
          %v7147 = vcvt.s32.f32 %v7145
          %7148 = vmin.xlane.f32.xlu0 %v7147
          %v7149 = vpop.xlane.xlu0 %7148
          %vm7150 = vcmp.eq.f32.partialorder %v7147, %v7149
          %v7151 = vsel %vm7150, %v7146, inf
          %7152 = vmin.xlane.f32.xlu0 %v7151
          %v7153 = vpop.xlane.xlu0 %7152
          %v7154 = vcvt.f32.s32 %v7153
          %v7155 = vcvt.f32.s32 %v7149
          %v7156 = vshll.u32 %v7155, 16
          %v7157 = vadd.s32 %v7156, %v7154
          %v7158 = vsel %vm4247, %v7114, 2147483647
          %v7159 = vand.u32 %v7158, 65535
          %v7160 = vshra.s32 %v7158, 16
          %v7161 = vcvt.s32.f32 %v7159
          %v7162 = vcvt.s32.f32 %v7160
          %7163 = vmin.xlane.f32.xlu0 %v7162
          %v7164 = vpop.xlane.xlu0 %7163
          %vm7165 = vcmp.eq.f32.partialorder %v7162, %v7164
          %v7166 = vsel %vm7165, %v7161, inf
          %7167 = vmin.xlane.f32.xlu0 %v7166
          %v7168 = vpop.xlane.xlu0 %7167
          %v7169 = vcvt.f32.s32 %v7168
          %v7170 = vcvt.f32.s32 %v7164
          %v7171 = vshll.u32 %v7170, 16
          %v7172 = vadd.s32 %v7171, %v7169
          %v7173 = vsel %vm4247, %v7115, 2147483647
          %v7174 = vand.u32 %v7173, 65535
          %v7175 = vshra.s32 %v7173, 16
          %v7176 = vcvt.s32.f32 %v7174
          %v7177 = vcvt.s32.f32 %v7175
          %7178 = vmin.xlane.f32.xlu0 %v7177
          %v7179 = vpop.xlane.xlu0 %7178
          %vm7180 = vcmp.eq.f32.partialorder %v7177, %v7179
          %v7181 = vsel %vm7180, %v7176, inf
          %7182 = vmin.xlane.f32.xlu0 %v7181
          %v7183 = vpop.xlane.xlu0 %7182
          %v7184 = vcvt.f32.s32 %v7183
          %v7185 = vcvt.f32.s32 %v7179
          %v7186 = vshll.u32 %v7185, 16
          %v7187 = vadd.s32 %v7186, %v7184
          %v7188 = vsel %vm4247, %v7116, 2147483647
          %v7189 = vand.u32 %v7188, 65535
          %v7190 = vshra.s32 %v7188, 16
          %v7191 = vcvt.s32.f32 %v7189
          %v7192 = vcvt.s32.f32 %v7190
          %7193 = vmin.xlane.f32.xlu0 %v7192
          %v7194 = vpop.xlane.xlu0 %7193
          %vm7195 = vcmp.eq.f32.partialorder %v7192, %v7194
          %v7196 = vsel %vm7195, %v7191, inf
          %7197 = vmin.xlane.f32.xlu0 %v7196
          %v7198 = vpop.xlane.xlu0 %7197
          %v7199 = vcvt.f32.s32 %v7198
          %v7200 = vcvt.f32.s32 %v7194
          %v7201 = vshll.u32 %v7200, 16
          %v7202 = vadd.s32 %v7201, %v7199
          %v7203 = vsel %vm4247, %v7117, 2147483647
          %v7204 = vand.u32 %v7203, 65535
          %v7205 = vshra.s32 %v7203, 16
          %v7206 = vcvt.s32.f32 %v7204
          %v7207 = vcvt.s32.f32 %v7205
          %7208 = vmin.xlane.f32.xlu0 %v7207
          %v7209 = vpop.xlane.xlu0 %7208
          %vm7210 = vcmp.eq.f32.partialorder %v7207, %v7209
          %v7211 = vsel %vm7210, %v7206, inf
          %7212 = vmin.xlane.f32.xlu0 %v7211
          %v7213 = vpop.xlane.xlu0 %7212
          %v7214 = vcvt.f32.s32 %v7213
          %v7215 = vcvt.f32.s32 %v7209
          %v7216 = vshll.u32 %v7215, 16
          %v7217 = vadd.s32 %v7216, %v7214
          %v7218 = vsel %vm4247, %v7118, 2147483647
          %v7219 = vand.u32 %v7218, 65535
          %v7220 = vshra.s32 %v7218, 16
          %v7221 = vcvt.s32.f32 %v7219
          %v7222 = vcvt.s32.f32 %v7220
          %7223 = vmin.xlane.f32.xlu0 %v7222
          %v7224 = vpop.xlane.xlu0 %7223
          %vm7225 = vcmp.eq.f32.partialorder %v7222, %v7224
          %v7226 = vsel %vm7225, %v7221, inf
          %7227 = vmin.xlane.f32.xlu0 %v7226
          %v7228 = vpop.xlane.xlu0 %7227
          %v7229 = vcvt.f32.s32 %v7228
          %v7230 = vcvt.f32.s32 %v7224
          %v7231 = vshll.u32 %v7230, 16
          %v7232 = vadd.s32 %v7231, %v7229
          %v7233 = vsel %vm4247, %v7119, 2147483647
          %v7234 = vand.u32 %v7233, 65535
          %v7235 = vshra.s32 %v7233, 16
          %v7236 = vcvt.s32.f32 %v7234
          %v7237 = vcvt.s32.f32 %v7235
          %7238 = vmin.xlane.f32.xlu0 %v7237
          %v7239 = vpop.xlane.xlu0 %7238
          %vm7240 = vcmp.eq.f32.partialorder %v7237, %v7239
          %v7241 = vsel %vm7240, %v7236, inf
          %7242 = vmin.xlane.f32.xlu0 %v7241
          %v7243 = vpop.xlane.xlu0 %7242
          %v7244 = vcvt.f32.s32 %v7243
          %v7245 = vcvt.f32.s32 %v7239
          %v7246 = vshll.u32 %v7245, 16
          %v7247 = vadd.s32 %v7246, %v7244
          %v7248 = vsel %vm4247, %v7120, 2147483647
          %v7249 = vand.u32 %v7248, 65535
          %v7250 = vshra.s32 %v7248, 16
          %v7251 = vcvt.s32.f32 %v7249
          %v7252 = vcvt.s32.f32 %v7250
          %7253 = vmin.xlane.f32.xlu0 %v7252
          %v7254 = vpop.xlane.xlu0 %7253
          %vm7255 = vcmp.eq.f32.partialorder %v7252, %v7254
          %v7256 = vsel %vm7255, %v7251, inf
          %7257 = vmin.xlane.f32.xlu0 %v7256
          %v7258 = vpop.xlane.xlu0 %7257
          %v7259 = vcvt.f32.s32 %v7258
          %v7260 = vcvt.f32.s32 %v7254
          %v7261 = vshll.u32 %v7260, 16
          %v7262 = vadd.s32 %v7261, %v7259
          %v7263 = vsel %vm4247, %v7121, 2147483647
          %v7264 = vand.u32 %v7263, 65535
          %v7265 = vshra.s32 %v7263, 16
          %v7266 = vcvt.s32.f32 %v7264
          %v7267 = vcvt.s32.f32 %v7265
          %7268 = vmin.xlane.f32.xlu0 %v7267
          %v7269 = vpop.xlane.xlu0 %7268
          %vm7270 = vcmp.eq.f32.partialorder %v7267, %v7269
          %v7271 = vsel %vm7270, %v7266, inf
          %7272 = vmin.xlane.f32.xlu0 %v7271
          %v7273 = vpop.xlane.xlu0 %7272
          %v7274 = vcvt.f32.s32 %v7273
          %v7275 = vcvt.f32.s32 %v7269
          %v7276 = vshll.u32 %v7275, 16
          %v7277 = vadd.s32 %v7276, %v7274
          %v7278 = vsel %vm4247, %v7122, 2147483647
          %v7279 = vand.u32 %v7278, 65535
          %v7280 = vshra.s32 %v7278, 16
          %v7281 = vcvt.s32.f32 %v7279
          %v7282 = vcvt.s32.f32 %v7280
          %7283 = vmin.xlane.f32.xlu0 %v7282
          %v7284 = vpop.xlane.xlu0 %7283
          %vm7285 = vcmp.eq.f32.partialorder %v7282, %v7284
          %v7286 = vsel %vm7285, %v7281, inf
          %7287 = vmin.xlane.f32.xlu0 %v7286
          %v7288 = vpop.xlane.xlu0 %7287
          %v7289 = vcvt.f32.s32 %v7288
          %v7290 = vcvt.f32.s32 %v7284
          %v7291 = vshll.u32 %v7290, 16
          %v7292 = vadd.s32 %v7291, %v7289
          %v7293 = vsel %vm4247, %v7123, 2147483647
          %v7294 = vand.u32 %v7293, 65535
          %v7295 = vshra.s32 %v7293, 16
          %v7296 = vcvt.s32.f32 %v7294
          %v7297 = vcvt.s32.f32 %v7295
          %7298 = vmin.xlane.f32.xlu0 %v7297
          %v7299 = vpop.xlane.xlu0 %7298
          %vm7300 = vcmp.eq.f32.partialorder %v7297, %v7299
          %v7301 = vsel %vm7300, %v7296, inf
          %7302 = vmin.xlane.f32.xlu0 %v7301
          %v7303 = vpop.xlane.xlu0 %7302
          %v7304 = vcvt.f32.s32 %v7303
          %v7305 = vcvt.f32.s32 %v7299
          %v7306 = vshll.u32 %v7305, 16
          %v7307 = vadd.s32 %v7306, %v7304
          %v7308 = vsel %vm4247, %v7124, 2147483647
          %v7309 = vand.u32 %v7308, 65535
          %v7310 = vshra.s32 %v7308, 16
          %v7311 = vcvt.s32.f32 %v7309
          %v7312 = vcvt.s32.f32 %v7310
          %7313 = vmin.xlane.f32.xlu0 %v7312
          %v7314 = vpop.xlane.xlu0 %7313
          %vm7315 = vcmp.eq.f32.partialorder %v7312, %v7314
          %v7316 = vsel %vm7315, %v7311, inf
          %7317 = vmin.xlane.f32.xlu0 %v7316
          %v7318 = vpop.xlane.xlu0 %7317
          %v7319 = vcvt.f32.s32 %v7318
          %v7320 = vcvt.f32.s32 %v7314
          %v7321 = vshll.u32 %v7320, 16
          %v7322 = vadd.s32 %v7321, %v7319
          %v7323 = vsel %vm4247, %v7125, 2147483647
          %v7324 = vand.u32 %v7323, 65535
          %v7325 = vshra.s32 %v7323, 16
          %v7326 = vcvt.s32.f32 %v7324
          %v7327 = vcvt.s32.f32 %v7325
          %7328 = vmin.xlane.f32.xlu0 %v7327
          %v7329 = vpop.xlane.xlu0 %7328
          %vm7330 = vcmp.eq.f32.partialorder %v7327, %v7329
          %v7331 = vsel %vm7330, %v7326, inf
          %7332 = vmin.xlane.f32.xlu0 %v7331
          %v7333 = vpop.xlane.xlu0 %7332
          %v7334 = vcvt.f32.s32 %v7333
          %v7335 = vcvt.f32.s32 %v7329
          %v7336 = vshll.u32 %v7335, 16
          %v7337 = vadd.s32 %v7336, %v7334
          %v7338 = vsel %vm4247, %v7126, 2147483647
          %v7339 = vand.u32 %v7338, 65535
          %v7340 = vshra.s32 %v7338, 16
          %v7341 = vcvt.s32.f32 %v7339
          %v7342 = vcvt.s32.f32 %v7340
          %7343 = vmin.xlane.f32.xlu0 %v7342
          %v7344 = vpop.xlane.xlu0 %7343
          %vm7345 = vcmp.eq.f32.partialorder %v7342, %v7344
          %v7346 = vsel %vm7345, %v7341, inf
          %7347 = vmin.xlane.f32.xlu0 %v7346
          %v7348 = vpop.xlane.xlu0 %7347
          %v7349 = vcvt.f32.s32 %v7348
          %v7350 = vcvt.f32.s32 %v7344
          %v7351 = vshll.u32 %v7350, 16
          %v7352 = vadd.s32 %v7351, %v7349
          %v7353 = vsel %vm4247, %v7127, 2147483647
          %v7354 = vand.u32 %v7353, 65535
          %v7355 = vshra.s32 %v7353, 16
          %v7356 = vcvt.s32.f32 %v7354
          %v7357 = vcvt.s32.f32 %v7355
          %7358 = vmin.xlane.f32.xlu0 %v7357
          %v7359 = vpop.xlane.xlu0 %7358
          %vm7360 = vcmp.eq.f32.partialorder %v7357, %v7359
          %v7361 = vsel %vm7360, %v7356, inf
          %7362 = vmin.xlane.f32.xlu0 %v7361
          %v7363 = vpop.xlane.xlu0 %7362
          %v7364 = vcvt.f32.s32 %v7363
          %v7365 = vcvt.f32.s32 %v7359
          %v7366 = vshll.u32 %v7365, 16
          %v7367 = vadd.s32 %v7366, %v7364
          %v7368 = vsel %vm4036, %v7050, %v6968
          %v7369 = vsel %vm4036, %v7053, %v6969
          %v7370 = vsel %vm4036, %v7056, %v6970
          %v7371 = vsel %vm4036, %v7059, %v6971
          %v7372 = vsel %vm4036, %v7062, %v6972
          %v7373 = vsel %vm4036, %v7065, %v6973
          %v7374 = vsel %vm4036, %v7068, %v6974
          %v7375 = vsel %vm4036, %v7071, %v6975
          %v7376 = vsel %vm4036, %v7074, %v6976
          %v7377 = vsel %vm4036, %v7077, %v6977
          %v7378 = vsel %vm4036, %v7080, %v6978
          %v7379 = vsel %vm4036, %v7083, %v6979
          %v7380 = vsel %vm4036, %v7086, %v6980
          %v7381 = vsel %vm4036, %v7089, %v6981
          %v7382 = vsel %vm4036, %v7092, %v6982
          %v7383 = vsel %vm4036, %v7095, %v6983
          %v7384 = vsel %vm4036, %v7142, %v6984
          %v7385 = vsel %vm4036, %v7157, %v6985
          %v7386 = vsel %vm4036, %v7172, %v6986
          %v7387 = vsel %vm4036, %v7187, %v6987
          %v7388 = vsel %vm4036, %v7202, %v6988
          %v7389 = vsel %vm4036, %v7217, %v6989
          %v7390 = vsel %vm4036, %v7232, %v6990
          %v7391 = vsel %vm4036, %v7247, %v6991
          %v7392 = vsel %vm4036, %v7262, %v6992
          %v7393 = vsel %vm4036, %v7277, %v6993
          %v7394 = vsel %vm4036, %v7292, %v6994
          %v7395 = vsel %vm4036, %v7307, %v6995
          %v7396 = vsel %vm4036, %v7322, %v6996
          %v7397 = vsel %vm4036, %v7337, %v6997
          %v7398 = vsel %vm4036, %v7352, %v6998
          %v7399 = vsel %vm4036, %v7367, %v6999
          %7400 = vst.msk [vmem:[#allocation3] sm:$0xff] %vm4166, %v7368
          %7401 = vst.msk [vmem:[#allocation3 + $0x8] sm:$0xff] %vm4166, %v7369
          %7402 = vst.msk [vmem:[#allocation3 + $0x10] sm:$0xff] %vm4166, %v7370
          %7403 = vst.msk [vmem:[#allocation3 + $0x18] sm:$0xff] %vm4166, %v7371
          %7404 = vst.msk [vmem:[#allocation3 + $0x20] sm:$0xff] %vm4166, %v7372
          %7405 = vst.msk [vmem:[#allocation3 + $0x28] sm:$0xff] %vm4166, %v7373
          %7406 = vst.msk [vmem:[#allocation3 + $0x30] sm:$0xff] %vm4166, %v7374
          %7407 = vst.msk [vmem:[#allocation3 + $0x38] sm:$0xff] %vm4166, %v7375
          %7408 = vst.msk [vmem:[#allocation3 + $0x40] sm:$0xff] %vm4166, %v7376
          %7409 = vst.msk [vmem:[#allocation3 + $0x48] sm:$0xff] %vm4166, %v7377
          %7410 = vst.msk [vmem:[#allocation3 + $0x50] sm:$0xff] %vm4166, %v7378
          %7411 = vst.msk [vmem:[#allocation3 + $0x58] sm:$0xff] %vm4166, %v7379
          %7412 = vst.msk [vmem:[#allocation3 + $0x60] sm:$0xff] %vm4166, %v7380
          %7413 = vst.msk [vmem:[#allocation3 + $0x68] sm:$0xff] %vm4166, %v7381
          %7414 = vst.msk [vmem:[#allocation3 + $0x70] sm:$0xff] %vm4166, %v7382
          %7415 = vst.msk [vmem:[#allocation3 + $0x78] sm:$0xff] %vm4166, %v7383
          %7416 = vst.msk [vmem:[#allocation4] sm:$0xff] %vm4166, %v7384
          %7417 = vst.msk [vmem:[#allocation4 + $0x8] sm:$0xff] %vm4166, %v7385
          %7418 = vst.msk [vmem:[#allocation4 + $0x10] sm:$0xff] %vm4166, %v7386
          %7419 = vst.msk [vmem:[#allocation4 + $0x18] sm:$0xff] %vm4166, %v7387
          %7420 = vst.msk [vmem:[#allocation4 + $0x20] sm:$0xff] %vm4166, %v7388
          %7421 = vst.msk [vmem:[#allocation4 + $0x28] sm:$0xff] %vm4166, %v7389
          %7422 = vst.msk [vmem:[#allocation4 + $0x30] sm:$0xff] %vm4166, %v7390
          %7423 = vst.msk [vmem:[#allocation4 + $0x38] sm:$0xff] %vm4166, %v7391
          %7424 = vst.msk [vmem:[#allocation4 + $0x40] sm:$0xff] %vm4166, %v7392
          %7425 = vst.msk [vmem:[#allocation4 + $0x48] sm:$0xff] %vm4166, %v7393
          %7426 = vst.msk [vmem:[#allocation4 + $0x50] sm:$0xff] %vm4166, %v7394
          %7427 = vst.msk [vmem:[#allocation4 + $0x58] sm:$0xff] %vm4166, %v7395
          %7428 = vst.msk [vmem:[#allocation4 + $0x60] sm:$0xff] %vm4166, %v7396
          %7429 = vst.msk [vmem:[#allocation4 + $0x68] sm:$0xff] %vm4166, %v7397
          %7430 = vst.msk [vmem:[#allocation4 + $0x70] sm:$0xff] %vm4166, %v7398
          %7431 = vst.msk [vmem:[#allocation4 + $0x78] sm:$0xff] %vm4166, %v7399
        $region85: #{tpu_custom_call.1} parent=72 // pred_fallthru
          _
        %p7432 = scmp.ge.s32.totalorder %s540, 2
        // Predicated region
        $region86: #{tpu_custom_call.1} parent=72 // pred_check
          %p7433 = pneg %p7432
        $region87: #{tpu_custom_call.1} parent=72 // pred_check_branch
          %7435 = sbr.rel (%p7433) target = $region89
        $region88: #{tpu_custom_call.1} parent=72 // pred_region
          %v7436 = vld [vmem:[#allocation3] sm:$0xff]
          %v7437 = vld [vmem:[#allocation3 + $0x8] sm:$0xff]
          %v7438 = vld [vmem:[#allocation3 + $0x10] sm:$0xff]
          %v7439 = vld [vmem:[#allocation3 + $0x18] sm:$0xff]
          %v7440 = vld [vmem:[#allocation3 + $0x20] sm:$0xff]
          %v7441 = vld [vmem:[#allocation3 + $0x28] sm:$0xff]
          %v7442 = vld [vmem:[#allocation3 + $0x30] sm:$0xff]
          %v7443 = vld [vmem:[#allocation3 + $0x38] sm:$0xff]
          %v7444 = vld [vmem:[#allocation3 + $0x40] sm:$0xff]
          %v7445 = vld [vmem:[#allocation3 + $0x48] sm:$0xff]
          %v7446 = vld [vmem:[#allocation3 + $0x50] sm:$0xff]
          %v7447 = vld [vmem:[#allocation3 + $0x58] sm:$0xff]
          %v7448 = vld [vmem:[#allocation3 + $0x60] sm:$0xff]
          %v7449 = vld [vmem:[#allocation3 + $0x68] sm:$0xff]
          %v7450 = vld [vmem:[#allocation3 + $0x70] sm:$0xff]
          %v7451 = vld [vmem:[#allocation3 + $0x78] sm:$0xff]
          %vm7452 = vcmask 64512
          %7453 = vst.msk [vmem:[%s498] sm:$0xff] %vm7452, %v7436
          %7454 = vst.msk [vmem:[%s498 + $0x8] sm:$0xff] %vm7452, %v7437
          %7455 = vst.msk [vmem:[%s498 + $0x10] sm:$0xff] %vm7452, %v7438
          %7456 = vst.msk [vmem:[%s498 + $0x18] sm:$0xff] %vm7452, %v7439
          %7457 = vst.msk [vmem:[%s498 + $0x20] sm:$0xff] %vm7452, %v7440
          %7458 = vst.msk [vmem:[%s498 + $0x28] sm:$0xff] %vm7452, %v7441
          %7459 = vst.msk [vmem:[%s498 + $0x30] sm:$0xff] %vm7452, %v7442
          %7460 = vst.msk [vmem:[%s498 + $0x38] sm:$0xff] %vm7452, %v7443
          %7461 = vst.msk [vmem:[%s498 + $0x40] sm:$0xff] %vm7452, %v7444
          %7462 = vst.msk [vmem:[%s498 + $0x48] sm:$0xff] %vm7452, %v7445
          %7463 = vst.msk [vmem:[%s498 + $0x50] sm:$0xff] %vm7452, %v7446
          %7464 = vst.msk [vmem:[%s498 + $0x58] sm:$0xff] %vm7452, %v7447
          %7465 = vst.msk [vmem:[%s498 + $0x60] sm:$0xff] %vm7452, %v7448
          %7466 = vst.msk [vmem:[%s498 + $0x68] sm:$0xff] %vm7452, %v7449
          %7467 = vst.msk [vmem:[%s498 + $0x70] sm:$0xff] %vm7452, %v7450
          %7468 = vst.msk [vmem:[%s498 + $0x78] sm:$0xff] %vm7452, %v7451
          %v7469 = vld [vmem:[#allocation4] sm:$0xff]
          %v7470 = vld [vmem:[#allocation4 + $0x8] sm:$0xff]
          %v7471 = vld [vmem:[#allocation4 + $0x10] sm:$0xff]
          %v7472 = vld [vmem:[#allocation4 + $0x18] sm:$0xff]
          %v7473 = vld [vmem:[#allocation4 + $0x20] sm:$0xff]
          %v7474 = vld [vmem:[#allocation4 + $0x28] sm:$0xff]
          %v7475 = vld [vmem:[#allocation4 + $0x30] sm:$0xff]
          %v7476 = vld [vmem:[#allocation4 + $0x38] sm:$0xff]
          %v7477 = vld [vmem:[#allocation4 + $0x40] sm:$0xff]
          %v7478 = vld [vmem:[#allocation4 + $0x48] sm:$0xff]
          %v7479 = vld [vmem:[#allocation4 + $0x50] sm:$0xff]
          %v7480 = vld [vmem:[#allocation4 + $0x58] sm:$0xff]
          %v7481 = vld [vmem:[#allocation4 + $0x60] sm:$0xff]
          %v7482 = vld [vmem:[#allocation4 + $0x68] sm:$0xff]
          %v7483 = vld [vmem:[#allocation4 + $0x70] sm:$0xff]
          %v7484 = vld [vmem:[#allocation4 + $0x78] sm:$0xff]
          %7485 = vst.msk [vmem:[%s520] sm:$0xff] %vm7452, %v7469
          %7486 = vst.msk [vmem:[%s520 + $0x8] sm:$0xff] %vm7452, %v7470
          %7487 = vst.msk [vmem:[%s520 + $0x10] sm:$0xff] %vm7452, %v7471
          %7488 = vst.msk [vmem:[%s520 + $0x18] sm:$0xff] %vm7452, %v7472
          %7489 = vst.msk [vmem:[%s520 + $0x20] sm:$0xff] %vm7452, %v7473
          %7490 = vst.msk [vmem:[%s520 + $0x28] sm:$0xff] %vm7452, %v7474
          %7491 = vst.msk [vmem:[%s520 + $0x30] sm:$0xff] %vm7452, %v7475
          %7492 = vst.msk [vmem:[%s520 + $0x38] sm:$0xff] %vm7452, %v7476
          %7493 = vst.msk [vmem:[%s520 + $0x40] sm:$0xff] %vm7452, %v7477
          %7494 = vst.msk [vmem:[%s520 + $0x48] sm:$0xff] %vm7452, %v7478
          %7495 = vst.msk [vmem:[%s520 + $0x50] sm:$0xff] %vm7452, %v7479
          %7496 = vst.msk [vmem:[%s520 + $0x58] sm:$0xff] %vm7452, %v7480
          %7497 = vst.msk [vmem:[%s520 + $0x60] sm:$0xff] %vm7452, %v7481
          %7498 = vst.msk [vmem:[%s520 + $0x68] sm:$0xff] %vm7452, %v7482
          %7499 = vst.msk [vmem:[%s520 + $0x70] sm:$0xff] %vm7452, %v7483
          %7500 = vst.msk [vmem:[%s520 + $0x78] sm:$0xff] %vm7452, %v7484
        $region89: #{tpu_custom_call.1} parent=72 // pred_fallthru
          _
        %s7501 = sshra.s32 %s39, 7
        %s7502 = sand.u32 %s39, 127
        %s7503 = sadd.s32 %s7501, %s38
        %s7504 = smul.u32 %s7503, 128
        %s7505 = sshra.s32 %s39, 7
        %s7506 = sand.u32 %s39, 127
        %s7507 = sadd.s32 %s7504, %s7506
        %s7508 = sld [smem:[#allocation6 + %s7507]]
        %s7509 = smul.u32 16, %s7508
        %p7510 = scmp.lt.s32.totalorder %s7509, 47
        %s7511 = scalar_select %p7510, %s7509, 47
        %s7512 = smul.addr %s7511, 8
        %s7513 = scalar_lea.vmem %s7, %s7512
        %s7514 = sshra.s32 %s39, 7
        %s7515 = sand.u32 %s39, 127
        %s7516 = sadd.s32 %s7514, %s38
        %s7517 = smul.u32 %s7516, 128
        %s7518 = sshra.s32 %s39, 7
        %s7519 = sand.u32 %s39, 127
        %s7520 = sadd.s32 %s7517, %s7519
        %s7521 = sld [smem:[#allocation6 + %s7520]]
        %s7522 = smul.u32 16, %s7521
        %p7523 = scmp.lt.s32.totalorder %s7522, 47
        %s7524 = scalar_select %p7523, %s7522, 47
        %s7525 = smul.addr %s7524, 8
        %s7526 = scalar_lea.vmem %s8, %s7525
        // Predicated region
        $region90: #{tpu_custom_call.1} parent=72 // pred_check
          %p7527 = pneg %p206
        $region91: #{tpu_custom_call.1} parent=72 // pred_check_branch
          %7529 = sbr.rel (%p7527) target = $region93
        $region92: #{tpu_custom_call.1} parent=72 // pred_region
          %s7530 = sshra.s32 %s39, 7
          %s7531 = sand.u32 %s39, 127
          %s7532 = sadd.s32 %s7530, %s38
          %s7533 = smul.u32 %s7532, 128
          %s7534 = sshra.s32 %s39, 7
          %s7535 = sand.u32 %s39, 127
          %s7536 = sadd.s32 %s7533, %s7535
          %s7537 = sld [smem:[#allocation6 + %s7536]]
          %s7538 = smul.u32 16, %s7537
        $region93: #{tpu_custom_call.1} parent=72 // pred_fallthru
          _
        // Predicated region
        $region94: #{tpu_custom_call.1} parent=72 // pred_check
          %p7539 = pneg %p248
        $region95: #{tpu_custom_call.1} parent=72 // pred_check_branch
          %7541 = sbr.rel (%p7539) target = $region97
        $region96: #{tpu_custom_call.1} parent=72 // pred_region
          %s7542 = sshra.s32 %s39, 7
          %s7543 = sand.u32 %s39, 127
          %s7544 = sadd.s32 %s7542, %s38
          %s7545 = smul.u32 %s7544, 128
          %s7546 = sshra.s32 %s39, 7
          %s7547 = sand.u32 %s39, 127
          %s7548 = sadd.s32 %s7545, %s7547
          %s7549 = sld [smem:[#allocation6 + %s7548]]
          %s7550 = smul.u32 16, %s7549
        $region97: #{tpu_custom_call.1} parent=72 // pred_fallthru
          _
      $region73: #{tpu_custom_call.1} parent=5 // pred_fallthru
        _
      %p7551 = scmp.le.s32.totalorder 2, %s29
      // Predicated region
      $region98: #{tpu_custom_call.1} parent=5 // pred_check
        %p7552 = pneg %p7551
      $region99: #{tpu_custom_call.1} parent=5 // pred_check_branch
        %7554 = sbr.rel (%p7552) target = $region101
      $region100: #{tpu_custom_call.1} parent=5 // pred_region
        %s7555 = ssub.s32 %s29, 2
        // Predicated region
        $region102: #{tpu_custom_call.1} parent=100 // pred_check
          %p7556 = pneg %p212
        $region103: #{tpu_custom_call.1} parent=100 // pred_check_branch
          %7558 = sbr.rel (%p7556) target = $region105
        $region104: #{tpu_custom_call.1} parent=100 // pred_region
          %s7559 = sshra.s32 %s41, 7
          %s7560 = sand.u32 %s41, 127
          %s7561 = sadd.s32 %s7559, %s40
          %s7562 = smul.u32 %s7561, 128
          %s7563 = sshra.s32 %s41, 7
          %s7564 = sand.u32 %s41, 127
          %s7565 = sadd.s32 %s7562, %s7564
          %s7566 = sld [smem:[#allocation6 + %s7565]]
          %s7567 = smul.u32 16, %s7566
          %p7568 = scmp.lt.s32.totalorder %s7567, 47
          %s7569 = scalar_select %p7568, %s7567, 47
          %s7570 = smul.addr %s7569, 8
          %s7571 = scalar_lea.vmem %s7, %s7570
        $region105: #{tpu_custom_call.1} parent=100 // pred_fallthru
          _
        // Predicated region
        $region106: #{tpu_custom_call.1} parent=100 // pred_check
          %p7572 = pneg %p254
        $region107: #{tpu_custom_call.1} parent=100 // pred_check_branch
          %7574 = sbr.rel (%p7572) target = $region109
        $region108: #{tpu_custom_call.1} parent=100 // pred_region
          %s7575 = sshra.s32 %s41, 7
          %s7576 = sand.u32 %s41, 127
          %s7577 = sadd.s32 %s7575, %s40
          %s7578 = smul.u32 %s7577, 128
          %s7579 = sshra.s32 %s41, 7
          %s7580 = sand.u32 %s41, 127
          %s7581 = sadd.s32 %s7578, %s7580
          %s7582 = sld [smem:[#allocation6 + %s7581]]
          %s7583 = smul.u32 16, %s7582
          %p7584 = scmp.lt.s32.totalorder %s7583, 47
          %s7585 = scalar_select %p7584, %s7583, 47
          %s7586 = smul.addr %s7585, 8
          %s7587 = scalar_lea.vmem %s8, %s7586
        $region109: #{tpu_custom_call.1} parent=100 // pred_fallthru
          _
      $region101: #{tpu_custom_call.1} parent=5 // pred_fallthru
        _
    $region6: #{tpu_custom_call.1} parent=1 // loop_footer
      %s33 = sadd.s32 1, %s29
    $region7: #{tpu_custom_call.1} parent=1 // loop_footer_branch
      %28 = sbr.rel target = $region3
    $region8: #{tpu_custom_call.1} parent=1 // loop_exit
      _

</llo_original>
